<compile_context>
chip_gen: v7x
topology: tpu7x:2x2x1
jax: 0.10.0
libtpu: 0.0.40
codegen_flags: <defaults>
</compile_context>

<pallas_src>
import functools

import jax
import jax.numpy as jnp
from jax.experimental import pallas as pl
from jax.experimental.pallas import tpu as pltpu


# ----------------------------------------------------------------------------
# Fused ResBlock kernel
# ----------------------------------------------------------------------------
def resblock_kernel(x_ref, w13_ref, g13_ref, b13_ref, w2_ref, g2_ref, b2_ref,
                    o_ref, xp_scr, hp_scr,
                    *, N, H, W, Cin, Cout, KH, KW, pad, eps):
    # x_ref   : (N, H, W, Cin) f32 input (NHWC)
    # w13_ref : (KH*KW*Cin, 2*Cout) bf16  -- conv1 and conv3 weights, fused
    # w2_ref  : (KH*KW*Cout, Cout)  bf16
    # g*/b*   : (1, C) f32 BN affine params (g13/b13 are [bn1 | bn3])
    # o_ref   : (N, H, W, Cout) f32 output
    # xp_scr  : (N, H+2p, W+2p, Cin)  f32 VMEM scratch (zero-padded x)
    # hp_scr  : (N, H+2p, W+2p, Cout) f32 VMEM scratch (zero-padded h)
    NHW = N * H * W
    inv_n = 1.0 / NHW

    def im2col(p_ref, cin):
        # Gather the KH*KW shifted windows and lay them out as one
        # (NHW, KH*KW*cin) matrix; ordering matches weight.reshape(KH*KW*cin, C).
        cols = [p_ref[:, kh:kh + H, kw:kw + W, :]
                for kh in range(KH) for kw in range(KW)]
        pat = jnp.concatenate(cols, axis=-1)                  # (N, H, W, KH*KW*cin)
        # collapse leading dims only (W multiple of 8 -> tile-preserving reshape)
        return pat.reshape(NHW, KH * KW * cin).astype(jnp.bfloat16)

    def batchnorm(acc, g, b):
        # training-mode BN: per-channel batch mean / biased variance, one pass
        mean = jnp.sum(acc, axis=0, keepdims=True) * inv_n
        msq = jnp.sum(acc * acc, axis=0, keepdims=True) * inv_n
        var = jnp.maximum(msq - mean * mean, 0.0)
        return (acc - mean) * jax.lax.rsqrt(var + eps) * g + b

    # ---- zero-padded copy of x built in VMEM (halo handled in-kernel) -------
    xp_scr[...] = jnp.zeros_like(xp_scr)
    xp_scr[:, pad:pad + H, pad:pad + W, :] = x_ref[...]

    # ---- conv1 & conv3 fused into one bf16 matmul, f32 accumulation ---------
    patch1 = im2col(xp_scr, Cin)                              # (NHW, KH*KW*Cin)
    acc13 = jnp.dot(patch1, w13_ref[...],
                    preferred_element_type=jnp.float32)       # (NHW, 2*Cout) f32
    y13 = batchnorm(acc13, g13_ref[...], b13_ref[...])
    h = jnp.maximum(y13[:, :Cout], 0.0)                       # block branch (ReLU)
    skip = y13[:, Cout:]                                      # conv3/bn3 branch

    # ---- zero-padded h in VMEM for conv2 ------------------------------------
    hp_scr[...] = jnp.zeros_like(hp_scr)
    hp_scr[:, pad:pad + H, pad:pad + W, :] = h.reshape(N, H, W, Cout)

    # ---- conv2 + BN2 + residual add + final ReLU -----------------------------
    patch2 = im2col(hp_scr, Cout)                             # (NHW, KH*KW*Cout)
    acc2 = jnp.dot(patch2, w2_ref[...],
                   preferred_element_type=jnp.float32)        # (NHW, Cout) f32
    out = batchnorm(acc2, g2_ref[...], b2_ref[...])
    y = jnp.maximum(out + skip, 0.0)

    o_ref[...] = y.reshape(N, H, W, Cout)


# ----------------------------------------------------------------------------
# Wrapper
# ----------------------------------------------------------------------------
def _vmem():
    return pl.BlockSpec(memory_space=pltpu.MemorySpace.VMEM)


def resblock_forward(x_nchw, params, *, pad=1):
    """Equivalent of ResBlock.forward (stride=1). Input/output NCHW like PyTorch."""
    # NCHW -> NHWC for the kernel.
    # TODO(synk): keep NHWC end-to-end across a full MUNet to drop these transposes.
    x = jnp.transpose(x_nchw, (0, 2, 3, 1)).astype(jnp.float32)
    N, H, W, Cin = x.shape
    w1, w2, w3 = params["w1"], params["w2"], params["w3"]
    KH, KW, _, Cout = w1.shape

    # Pre-flatten conv weights to 2-D slabs; fuse conv1 & conv3 (same input)
    # into one (KH*KW*Cin, 2*Cout) RHS.  Cast weights to bf16 for the MXU.
    w13 = jnp.concatenate([w1.reshape(KH * KW * Cin, Cout),
                           w3.reshape(KH * KW * Cin, Cout)],
                          axis=1).astype(jnp.bfloat16)
    w2f = w2.reshape(KH * KW * Cout, Cout).astype(jnp.bfloat16)
    g13 = jnp.concatenate([params["g1"], params["g3"]], axis=1)
    b13 = jnp.concatenate([params["b1"], params["b3"]], axis=1)

    kernel = functools.partial(
        resblock_kernel, N=N, H=H, W=W, Cin=Cin, Cout=Cout,
        KH=KH, KW=KW, pad=pad, eps=1e-5)

    y = pl.pallas_call(
        kernel,
        out_shape=jax.ShapeDtypeStruct((N, H, W, Cout), jnp.float32),
        in_specs=[_vmem() for _ in range(7)],
        out_specs=_vmem(),
        scratch_shapes=[
            pltpu.VMEM((N, H + 2 * pad, W + 2 * pad, Cin), jnp.float32),
            pltpu.VMEM((N, H + 2 * pad, W + 2 * pad, Cout), jnp.float32),
        ],
    )(x, w13, g13, b13, w2f, params["g2"], params["b2"])

    return jnp.transpose(y, (0, 3, 1, 2))   # NHWC -> NCHW


# ----------------------------------------------------------------------------
# Deterministic parameter init (shapes from ResBlock.__init__)
# ----------------------------------------------------------------------------
def init_params(key, in_channel, out_channel, kernel_size):
    k1, k2, k3 = jax.random.split(key, 3)

    def conv_w(k, cin, cout):
        # PyTorch Conv2d weight is (Cout, Cin, KH, KW); keep (KH, KW, Cin, Cout)
        w = jax.random.normal(k, (cout, cin, kernel_size, kernel_size),
                              jnp.float32) * 0.1
        return jnp.transpose(w, (2, 3, 1, 0))

    def bn_params(cout):
        return (jnp.ones((1, cout), jnp.float32),
                jnp.zeros((1, cout), jnp.float32))

    g1, b1 = bn_params(out_channel)
    g2, b2 = bn_params(out_channel)
    g3, b3 = bn_params(out_channel)
    return {
        "w1": conv_w(k1, in_channel, out_channel), "g1": g1, "b1": b1,
        "w2": conv_w(k2, out_channel, out_channel), "g2": g2, "b2": b2,
        "w3": conv_w(k3, in_channel, out_channel), "g3": g3, "b3": b3,
    }


if __name__ == "__main__":
    # ResBlock(in_channel=4, out_channel=8, kernel_size=3, strides=1, padding=1)
    # input NCHW (2, 4, 16, 16)
    key = jax.random.PRNGKey(0)
    kx, kp = jax.random.split(key)
    x = jax.random.normal(kx, (2, 4, 16, 16), jnp.float32)
    params = init_params(kp, in_channel=4, out_channel=8, kernel_size=3)

    fwd = jax.jit(resblock_forward)
    y = fwd(x, params)
    jax.block_until_ready(y)

    assert y.shape == (2, 8, 16, 16)
    assert bool(jnp.all(y >= 0.0))          # output of final ReLU
    assert bool(jnp.all(jnp.isfinite(y)))
    print("KERNEL_OK")
</pallas_src>

<mosaic_0001>
module attributes {stable_mosaic.version = 11 : i64} {
  func.func @resblock_kernel(%arg0: memref<2x16x16x4xf32, #tpu.memory_space<vmem>>, %arg1: memref<36x16xbf16, #tpu.memory_space<vmem>>, %arg2: memref<1x16xf32, #tpu.memory_space<vmem>>, %arg3: memref<1x16xf32, #tpu.memory_space<vmem>>, %arg4: memref<72x8xbf16, #tpu.memory_space<vmem>>, %arg5: memref<1x8xf32, #tpu.memory_space<vmem>>, %arg6: memref<1x8xf32, #tpu.memory_space<vmem>>, %arg7: memref<2x16x16x8xf32, #tpu.memory_space<vmem>>, %arg8: memref<2x18x18x4xf32, #tpu.memory_space<vmem>>, %arg9: memref<2x18x18x8xf32, #tpu.memory_space<vmem>>) attributes {dimension_semantics = [], scalar_prefetch = 0 : i64, scratch_operands = 2 : i64, tpu.core_type = #tpu.core_type<tc>} {
    %cst = arith.constant 0.000000e+00 : f32
    %0 = vector.broadcast %cst : f32 to vector<2x18x18x4xf32>
    %c0 = arith.constant 0 : index
    %c0_0 = arith.constant 0 : index
    %c0_1 = arith.constant 0 : index
    %c0_2 = arith.constant 0 : index
    %1 = vector.load %arg8[%c0, %c0_0, %c0_1, %c0_2] : memref<2x18x18x4xf32, #tpu.memory_space<vmem>>, vector<2x18x18x4xf32>
    tpu.vector_store %arg8[%c0, %c0_0, %c0_1, %c0_2], %0 {strides = array<i32>} : memref<2x18x18x4xf32, #tpu.memory_space<vmem>>, vector<2x18x18x4xf32>,
    %c0_3 = arith.constant 0 : index
    %c0_4 = arith.constant 0 : index
    %c0_5 = arith.constant 0 : index
    %c0_6 = arith.constant 0 : index
    %2 = vector.load %arg0[%c0_3, %c0_4, %c0_5, %c0_6] : memref<2x16x16x4xf32, #tpu.memory_space<vmem>>, vector<2x16x16x4xf32>
    %c0_7 = arith.constant 0 : index
    %c1 = arith.constant 1 : index
    %c1_8 = arith.constant 1 : index
    %c0_9 = arith.constant 0 : index
    %3 = vector.load %arg8[%c0_7, %c1, %c1_8, %c0_9] : memref<2x18x18x4xf32, #tpu.memory_space<vmem>>, vector<2x16x16x4xf32>
    tpu.vector_store %arg8[%c0_7, %c1, %c1_8, %c0_9], %2 {strides = array<i32>} : memref<2x18x18x4xf32, #tpu.memory_space<vmem>>, vector<2x16x16x4xf32>,
    %c0_10 = arith.constant 0 : index
    %c0_11 = arith.constant 0 : index
    %c0_12 = arith.constant 0 : index
    %c0_13 = arith.constant 0 : index
    %4 = vector.load %arg8[%c0_10, %c0_11, %c0_12, %c0_13] : memref<2x18x18x4xf32, #tpu.memory_space<vmem>>, vector<2x16x16x4xf32>
    %c0_14 = arith.constant 0 : index
    %c0_15 = arith.constant 0 : index
    %c1_16 = arith.constant 1 : index
    %c0_17 = arith.constant 0 : index
    %5 = vector.load %arg8[%c0_14, %c0_15, %c1_16, %c0_17] : memref<2x18x18x4xf32, #tpu.memory_space<vmem>>, vector<2x16x16x4xf32>
    %c0_18 = arith.constant 0 : index
    %c0_19 = arith.constant 0 : index
    %c2 = arith.constant 2 : index
    %c0_20 = arith.constant 0 : index
    %6 = vector.load %arg8[%c0_18, %c0_19, %c2, %c0_20] : memref<2x18x18x4xf32, #tpu.memory_space<vmem>>, vector<2x16x16x4xf32>
    %c0_21 = arith.constant 0 : index
    %c1_22 = arith.constant 1 : index
    %c0_23 = arith.constant 0 : index
    %c0_24 = arith.constant 0 : index
    %7 = vector.load %arg8[%c0_21, %c1_22, %c0_23, %c0_24] : memref<2x18x18x4xf32, #tpu.memory_space<vmem>>, vector<2x16x16x4xf32>
    %c0_25 = arith.constant 0 : index
    %c1_26 = arith.constant 1 : index
    %c1_27 = arith.constant 1 : index
    %c0_28 = arith.constant 0 : index
    %8 = vector.load %arg8[%c0_25, %c1_26, %c1_27, %c0_28] : memref<2x18x18x4xf32, #tpu.memory_space<vmem>>, vector<2x16x16x4xf32>
    %c0_29 = arith.constant 0 : index
    %c1_30 = arith.constant 1 : index
    %c2_31 = arith.constant 2 : index
    %c0_32 = arith.constant 0 : index
    %9 = vector.load %arg8[%c0_29, %c1_30, %c2_31, %c0_32] : memref<2x18x18x4xf32, #tpu.memory_space<vmem>>, vector<2x16x16x4xf32>
    %c0_33 = arith.constant 0 : index
    %c2_34 = arith.constant 2 : index
    %c0_35 = arith.constant 0 : index
    %c0_36 = arith.constant 0 : index
    %10 = vector.load %arg8[%c0_33, %c2_34, %c0_35, %c0_36] : memref<2x18x18x4xf32, #tpu.memory_space<vmem>>, vector<2x16x16x4xf32>
    %c0_37 = arith.constant 0 : index
    %c2_38 = arith.constant 2 : index
    %c1_39 = arith.constant 1 : index
    %c0_40 = arith.constant 0 : index
    %11 = vector.load %arg8[%c0_37, %c2_38, %c1_39, %c0_40] : memref<2x18x18x4xf32, #tpu.memory_space<vmem>>, vector<2x16x16x4xf32>
    %c0_41 = arith.constant 0 : index
    %c2_42 = arith.constant 2 : index
    %c2_43 = arith.constant 2 : index
    %c0_44 = arith.constant 0 : index
    %12 = vector.load %arg8[%c0_41, %c2_42, %c2_43, %c0_44] : memref<2x18x18x4xf32, #tpu.memory_space<vmem>>, vector<2x16x16x4xf32>
    %13 = tpu.concatenate %4, %5, %6, %7, %8, %9, %10, %11, %12 in 3 : vector<2x16x16x4xf32>, vector<2x16x16x4xf32>, vector<2x16x16x4xf32>, vector<2x16x16x4xf32>, vector<2x16x16x4xf32>, vector<2x16x16x4xf32>, vector<2x16x16x4xf32>, vector<2x16x16x4xf32>, vector<2x16x16x4xf32> -> vector<2x16x16x36xf32>
    %14 = vector.shape_cast %13 : vector<2x16x16x36xf32> to vector<512x36xf32>
    %15 = arith.truncf %14 : vector<512x36xf32> to vector<512x36xbf16>
    %c0_45 = arith.constant 0 : index
    %c0_46 = arith.constant 0 : index
    %16 = vector.load %arg1[%c0_45, %c0_46] : memref<36x16xbf16, #tpu.memory_space<vmem>>, vector<36x16xbf16>
    %cst_47 = arith.constant dense<0.000000e+00> : vector<512x16xf32>
    %17 = tpu.matmul %15, %16, %cst_47 {dimension_numbers = #tpu.dot_dimension_numbers<[1], [0], [0], [1], [0, 0, 1, 1], [], []>} : vector<512x36xbf16>, vector<36x16xbf16>, vector<512x16xf32> -> vector<512x16xf32>
    %c0_48 = arith.constant 0 : index
    %c0_49 = arith.constant 0 : index
    %18 = vector.load %arg2[%c0_48, %c0_49] : memref<1x16xf32, #tpu.memory_space<vmem>>, vector<1x16xf32>
    %c0_50 = arith.constant 0 : index
    %c0_51 = arith.constant 0 : index
    %19 = vector.load %arg3[%c0_50, %c0_51] : memref<1x16xf32, #tpu.memory_space<vmem>>, vector<1x16xf32>
    %cst_52 = arith.constant dense<0.000000e+00> : vector<16xf32>
    %20 = vector.multi_reduction <add>, %17, %cst_52 [0] : vector<512x16xf32> to vector<16xf32>
    %21 = vector.shape_cast %20 : vector<16xf32> to vector<1x16xf32>
    %cst_53 = arith.constant 0.001953125 : f32
    %22 = vector.broadcast %cst_53 : f32 to vector<1x16xf32>
    %23 = arith.mulf %21, %22 : vector<1x16xf32>
    %24 = arith.mulf %17, %17 : vector<512x16xf32>
    %cst_54 = arith.constant dense<0.000000e+00> : vector<16xf32>
    %25 = vector.multi_reduction <add>, %24, %cst_54 [0] : vector<512x16xf32> to vector<16xf32>
    %26 = vector.shape_cast %25 : vector<16xf32> to vector<1x16xf32>
    %cst_55 = arith.constant 0.001953125 : f32
    %27 = vector.broadcast %cst_55 : f32 to vector<1x16xf32>
    %28 = arith.mulf %26, %27 : vector<1x16xf32>
    %29 = arith.mulf %23, %23 : vector<1x16xf32>
    %30 = arith.subf %28, %29 : vector<1x16xf32>
    %cst_56 = arith.constant 0.000000e+00 : f32
    %31 = vector.broadcast %cst_56 : f32 to vector<1x16xf32>
    %32 = arith.maximumf %30, %31 : vector<1x16xf32>
    %33 = vector.broadcast %23 : vector<1x16xf32> to vector<512x16xf32>
    %34 = arith.subf %17, %33 : vector<512x16xf32>
    %cst_57 = arith.constant 9.99999974E-6 : f32
    %35 = vector.broadcast %cst_57 : f32 to vector<1x16xf32>
    %36 = arith.addf %32, %35 : vector<1x16xf32>
    %37 = math.rsqrt %36 : vector<1x16xf32>
    %38 = vector.broadcast %37 : vector<1x16xf32> to vector<512x16xf32>
    %39 = arith.mulf %34, %38 : vector<512x16xf32>
    %40 = vector.broadcast %18 : vector<1x16xf32> to vector<512x16xf32>
    %41 = arith.mulf %39, %40 : vector<512x16xf32>
    %42 = vector.broadcast %19 : vector<1x16xf32> to vector<512x16xf32>
    %43 = arith.addf %41, %42 : vector<512x16xf32>
    %44 = vector.extract_strided_slice %43 {offsets = [0, 0], sizes = [512, 8], strides = [1, 1]} : vector<512x16xf32> to vector<512x8xf32>
    %cst_58 = arith.constant 0.000000e+00 : f32
    %45 = vector.broadcast %cst_58 : f32 to vector<512x8xf32>
    %46 = arith.maximumf %44, %45 : vector<512x8xf32>
    %47 = vector.extract_strided_slice %43 {offsets = [0, 8], sizes = [512, 8], strides = [1, 1]} : vector<512x16xf32> to vector<512x8xf32>
    %cst_59 = arith.constant 0.000000e+00 : f32
    %48 = vector.broadcast %cst_59 : f32 to vector<2x18x18x8xf32>
    %c0_60 = arith.constant 0 : index
    %c0_61 = arith.constant 0 : index
    %c0_62 = arith.constant 0 : index
    %c0_63 = arith.constant 0 : index
    %49 = vector.load %arg9[%c0_60, %c0_61, %c0_62, %c0_63] : memref<2x18x18x8xf32, #tpu.memory_space<vmem>>, vector<2x18x18x8xf32>
    tpu.vector_store %arg9[%c0_60, %c0_61, %c0_62, %c0_63], %48 {strides = array<i32>} : memref<2x18x18x8xf32, #tpu.memory_space<vmem>>, vector<2x18x18x8xf32>,
    %50 = vector.shape_cast %46 : vector<512x8xf32> to vector<2x16x16x8xf32>
    %c0_64 = arith.constant 0 : index
    %c1_65 = arith.constant 1 : index
    %c1_66 = arith.constant 1 : index
    %c0_67 = arith.constant 0 : index
    %51 = vector.load %arg9[%c0_64, %c1_65, %c1_66, %c0_67] : memref<2x18x18x8xf32, #tpu.memory_space<vmem>>, vector<2x16x16x8xf32>
    tpu.vector_store %arg9[%c0_64, %c1_65, %c1_66, %c0_67], %50 {strides = array<i32>} : memref<2x18x18x8xf32, #tpu.memory_space<vmem>>, vector<2x16x16x8xf32>,
    %c0_68 = arith.constant 0 : index
    %c0_69 = arith.constant 0 : index
    %c0_70 = arith.constant 0 : index
    %c0_71 = arith.constant 0 : index
    %52 = vector.load %arg9[%c0_68, %c0_69, %c0_70, %c0_71] : memref<2x18x18x8xf32, #tpu.memory_space<vmem>>, vector<2x16x16x8xf32>
    %c0_72 = arith.constant 0 : index
    %c0_73 = arith.constant 0 : index
    %c1_74 = arith.constant 1 : index
    %c0_75 = arith.constant 0 : index
    %53 = vector.load %arg9[%c0_72, %c0_73, %c1_74, %c0_75] : memref<2x18x18x8xf32, #tpu.memory_space<vmem>>, vector<2x16x16x8xf32>
    %c0_76 = arith.constant 0 : index
    %c0_77 = arith.constant 0 : index
    %c2_78 = arith.constant 2 : index
    %c0_79 = arith.constant 0 : index
    %54 = vector.load %arg9[%c0_76, %c0_77, %c2_78, %c0_79] : memref<2x18x18x8xf32, #tpu.memory_space<vmem>>, vector<2x16x16x8xf32>
    %c0_80 = arith.constant 0 : index
    %c1_81 = arith.constant 1 : index
    %c0_82 = arith.constant 0 : index
    %c0_83 = arith.constant 0 : index
    %55 = vector.load %arg9[%c0_80, %c1_81, %c0_82, %c0_83] : memref<2x18x18x8xf32, #tpu.memory_space<vmem>>, vector<2x16x16x8xf32>
    %c0_84 = arith.constant 0 : index
    %c1_85 = arith.constant 1 : index
    %c1_86 = arith.constant 1 : index
    %c0_87 = arith.constant 0 : index
    %56 = vector.load %arg9[%c0_84, %c1_85, %c1_86, %c0_87] : memref<2x18x18x8xf32, #tpu.memory_space<vmem>>, vector<2x16x16x8xf32>
    %c0_88 = arith.constant 0 : index
    %c1_89 = arith.constant 1 : index
    %c2_90 = arith.constant 2 : index
    %c0_91 = arith.constant 0 : index
    %57 = vector.load %arg9[%c0_88, %c1_89, %c2_90, %c0_91] : memref<2x18x18x8xf32, #tpu.memory_space<vmem>>, vector<2x16x16x8xf32>
    %c0_92 = arith.constant 0 : index
    %c2_93 = arith.constant 2 : index
    %c0_94 = arith.constant 0 : index
    %c0_95 = arith.constant 0 : index
    %58 = vector.load %arg9[%c0_92, %c2_93, %c0_94, %c0_95] : memref<2x18x18x8xf32, #tpu.memory_space<vmem>>, vector<2x16x16x8xf32>
    %c0_96 = arith.constant 0 : index
    %c2_97 = arith.constant 2 : index
    %c1_98 = arith.constant 1 : index
    %c0_99 = arith.constant 0 : index
    %59 = vector.load %arg9[%c0_96, %c2_97, %c1_98, %c0_99] : memref<2x18x18x8xf32, #tpu.memory_space<vmem>>, vector<2x16x16x8xf32>
    %c0_100 = arith.constant 0 : index
    %c2_101 = arith.constant 2 : index
    %c2_102 = arith.constant 2 : index
    %c0_103 = arith.constant 0 : index
    %60 = vector.load %arg9[%c0_100, %c2_101, %c2_102, %c0_103] : memref<2x18x18x8xf32, #tpu.memory_space<vmem>>, vector<2x16x16x8xf32>
    %61 = tpu.concatenate %52, %53, %54, %55, %56, %57, %58, %59, %60 in 3 : vector<2x16x16x8xf32>, vector<2x16x16x8xf32>, vector<2x16x16x8xf32>, vector<2x16x16x8xf32>, vector<2x16x16x8xf32>, vector<2x16x16x8xf32>, vector<2x16x16x8xf32>, vector<2x16x16x8xf32>, vector<2x16x16x8xf32> -> vector<2x16x16x72xf32>
    %62 = vector.shape_cast %61 : vector<2x16x16x72xf32> to vector<512x72xf32>
    %63 = arith.truncf %62 : vector<512x72xf32> to vector<512x72xbf16>
    %c0_104 = arith.constant 0 : index
    %c0_105 = arith.constant 0 : index
    %64 = vector.load %arg4[%c0_104, %c0_105] : memref<72x8xbf16, #tpu.memory_space<vmem>>, vector<72x8xbf16>
    %cst_106 = arith.constant dense<0.000000e+00> : vector<512x8xf32>
    %65 = tpu.matmul %63, %64, %cst_106 {dimension_numbers = #tpu.dot_dimension_numbers<[1], [0], [0], [1], [0, 0, 1, 1], [], []>} : vector<512x72xbf16>, vector<72x8xbf16>, vector<512x8xf32> -> vector<512x8xf32>
    %c0_107 = arith.constant 0 : index
    %c0_108 = arith.constant 0 : index
    %66 = vector.load %arg5[%c0_107, %c0_108] : memref<1x8xf32, #tpu.memory_space<vmem>>, vector<1x8xf32>
    %c0_109 = arith.constant 0 : index
    %c0_110 = arith.constant 0 : index
    %67 = vector.load %arg6[%c0_109, %c0_110] : memref<1x8xf32, #tpu.memory_space<vmem>>, vector<1x8xf32>
    %cst_111 = arith.constant dense<0.000000e+00> : vector<8xf32>
    %68 = vector.multi_reduction <add>, %65, %cst_111 [0] : vector<512x8xf32> to vector<8xf32>
    %69 = vector.shape_cast %68 : vector<8xf32> to vector<1x8xf32>
    %cst_112 = arith.constant 0.001953125 : f32
    %70 = vector.broadcast %cst_112 : f32 to vector<1x8xf32>
    %71 = arith.mulf %69, %70 : vector<1x8xf32>
    %72 = arith.mulf %65, %65 : vector<512x8xf32>
    %cst_113 = arith.constant dense<0.000000e+00> : vector<8xf32>
    %73 = vector.multi_reduction <add>, %72, %cst_113 [0] : vector<512x8xf32> to vector<8xf32>
    %74 = vector.shape_cast %73 : vector<8xf32> to vector<1x8xf32>
    %cst_114 = arith.constant 0.001953125 : f32
    %75 = vector.broadcast %cst_114 : f32 to vector<1x8xf32>
    %76 = arith.mulf %74, %75 : vector<1x8xf32>
    %77 = arith.mulf %71, %71 : vector<1x8xf32>
    %78 = arith.subf %76, %77 : vector<1x8xf32>
    %cst_115 = arith.constant 0.000000e+00 : f32
    %79 = vector.broadcast %cst_115 : f32 to vector<1x8xf32>
    %80 = arith.maximumf %78, %79 : vector<1x8xf32>
    %81 = vector.broadcast %71 : vector<1x8xf32> to vector<512x8xf32>
    %82 = arith.subf %65, %81 : vector<512x8xf32>
    %cst_116 = arith.constant 9.99999974E-6 : f32
    %83 = vector.broadcast %cst_116 : f32 to vector<1x8xf32>
    %84 = arith.addf %80, %83 : vector<1x8xf32>
    %85 = math.rsqrt %84 : vector<1x8xf32>
    %86 = vector.broadcast %85 : vector<1x8xf32> to vector<512x8xf32>
    %87 = arith.mulf %82, %86 : vector<512x8xf32>
    %88 = vector.broadcast %66 : vector<1x8xf32> to vector<512x8xf32>
    %89 = arith.mulf %87, %88 : vector<512x8xf32>
    %90 = vector.broadcast %67 : vector<1x8xf32> to vector<512x8xf32>
    %91 = arith.addf %89, %90 : vector<512x8xf32>
    %92 = arith.addf %91, %47 : vector<512x8xf32>
    %cst_117 = arith.constant 0.000000e+00 : f32
    %93 = vector.broadcast %cst_117 : f32 to vector<512x8xf32>
    %94 = arith.maximumf %92, %93 : vector<512x8xf32>
    %95 = vector.shape_cast %94 : vector<512x8xf32> to vector<2x16x16x8xf32>
    %c0_118 = arith.constant 0 : index
    %c0_119 = arith.constant 0 : index
    %c0_120 = arith.constant 0 : index
    %c0_121 = arith.constant 0 : index
    %96 = vector.load %arg7[%c0_118, %c0_119, %c0_120, %c0_121] : memref<2x16x16x8xf32, #tpu.memory_space<vmem>>, vector<2x16x16x8xf32>
    tpu.vector_store %arg7[%c0_118, %c0_119, %c0_120, %c0_121], %95 {strides = array<i32>} : memref<2x16x16x8xf32, #tpu.memory_space<vmem>>, vector<2x16x16x8xf32>,
    return
  }
}

</mosaic_0001>

<llo_original>
// kernel: resblock_forward.1
$region0: #{resblock_forward.1}
  #allocation0 [shape = 'u32[]', space=smem, size = 0x4, offset = 0x4, fixed_abs, tag = 'smem constant byte address 0x4 - core index']
  #allocation1 [shape = 'u32[144,128]{1,0:T(1,128)}', space=vmem, size = 0x12000, scoped, tag = 'internal scratch']
  #allocation2 [shape = 'f32[2,18,18,4]{3,2,1,0:T(8,128)}', space=vmem, size = 0x6c000, scoped, tag = 'scratch operand']
  #allocation3 [shape = 'f32[2,18,18,8]{3,2,1,0:T(8,128)}', space=vmem, size = 0x6c000, scoped, tag = 'scratch operand']
  %s0 = inlined_call_operand.vmem [shape: f32[2,16,16,4], index: 0, kind: input, shape index: {}]
  %s1 = inlined_call_operand.vmem [shape: bf16[36,16], index: 1, kind: input, shape index: {}]
  %s2 = inlined_call_operand.vmem [shape: f32[1,16], index: 2, kind: input, shape index: {}]
  %s3 = inlined_call_operand.vmem [shape: f32[1,16], index: 3, kind: input, shape index: {}]
  %s4 = inlined_call_operand.vmem [shape: bf16[72,8], index: 4, kind: input, shape index: {}]
  %s5 = inlined_call_operand.vmem [shape: f32[1,8], index: 5, kind: input, shape index: {}]
  %s6 = inlined_call_operand.vmem [shape: f32[1,8], index: 6, kind: input, shape index: {}]
  %s7 = inlined_call_operand.vmem [shape: f32[2,16,16,8], index: 7, kind: output, shape index: {}]
  %s8 = sld [smem:[#allocation0]]
  $region38: #{resblock_forward.1} parent=0
    _
  %s10 = ssub.s32 1, %s8
  %s11 = scalar_select 0, %s10, %s8
  // Predicated region
  $region2: #{resblock_forward.1} parent=0 // pred_check
    _
  $region3: #{resblock_forward.1} parent=0 // pred_check_branch
    %13 = sbr.rel (0) target = $region5
  $region4: #{resblock_forward.1} parent=0 // pred_region
    _
  $region5: #{resblock_forward.1} parent=0 // pred_fallthru
    _
  // Predicated region
  $region6: #{resblock_forward.1} parent=0 // pred_check
    _
  $region7: #{resblock_forward.1} parent=0 // pred_check_branch
    %15 = sbr.rel (0) target = $region9
  $region8: #{resblock_forward.1} parent=0 // pred_region
    _
  $region9: #{resblock_forward.1} parent=0 // pred_fallthru
    _
  // Predicated region
  $region10: #{resblock_forward.1} parent=0 // pred_check
    _
  $region11: #{resblock_forward.1} parent=0 // pred_check_branch
    %17 = sbr.rel (0) target = $region13
  $region12: #{resblock_forward.1} parent=0 // pred_region
    _
  $region13: #{resblock_forward.1} parent=0 // pred_fallthru
    _
  // Predicated region
  $region14: #{resblock_forward.1} parent=0 // pred_check
    _
  $region15: #{resblock_forward.1} parent=0 // pred_check_branch
    %19 = sbr.rel (0) target = $region17
  $region16: #{resblock_forward.1} parent=0 // pred_region
    _
  $region17: #{resblock_forward.1} parent=0 // pred_fallthru
    _
  // Predicated region
  $region18: #{resblock_forward.1} parent=0 // pred_check
    _
  $region19: #{resblock_forward.1} parent=0 // pred_check_branch
    %21 = sbr.rel (0) target = $region21
  $region20: #{resblock_forward.1} parent=0 // pred_region
    _
  $region21: #{resblock_forward.1} parent=0 // pred_fallthru
    _
  // Predicated region
  $region22: #{resblock_forward.1} parent=0 // pred_check
    _
  $region23: #{resblock_forward.1} parent=0 // pred_check_branch
    %23 = sbr.rel (0) target = $region25
  $region24: #{resblock_forward.1} parent=0 // pred_region
    _
  $region25: #{resblock_forward.1} parent=0 // pred_fallthru
    _
  // Predicated region
  $region26: #{resblock_forward.1} parent=0 // pred_check
    _
  $region27: #{resblock_forward.1} parent=0 // pred_check_branch
    %25 = sbr.rel (0) target = $region29
  $region28: #{resblock_forward.1} parent=0 // pred_region
    _
  $region29: #{resblock_forward.1} parent=0 // pred_fallthru
    _
  %vm27 = vcmask 31744
  %28 = vst.msk [vmem:[#allocation2] sm:$0xff] %vm27, 0.0
  %29 = vst.msk [vmem:[#allocation2 + $0x8] sm:$0xff] %vm27, 0.0
  %vm30 = vcmask 25600
  %31 = vst.msk [vmem:[#allocation2 + $0x10] sm:$0x3] %vm30, 0.0
  %32 = vst.msk [vmem:[#allocation2 + $0x18] sm:$0xff] %vm27, 0.0
  %33 = vst.msk [vmem:[#allocation2 + $0x20] sm:$0xff] %vm27, 0.0
  %34 = vst.msk [vmem:[#allocation2 + $0x28] sm:$0x3] %vm30, 0.0
  %35 = vst.msk [vmem:[#allocation2 + $0x30] sm:$0xff] %vm27, 0.0
  %36 = vst.msk [vmem:[#allocation2 + $0x38] sm:$0xff] %vm27, 0.0
  %37 = vst.msk [vmem:[#allocation2 + $0x40] sm:$0x3] %vm30, 0.0
  %38 = vst.msk [vmem:[#allocation2 + $0x48] sm:$0xff] %vm27, 0.0
  %39 = vst.msk [vmem:[#allocation2 + $0x50] sm:$0xff] %vm27, 0.0
  %40 = vst.msk [vmem:[#allocation2 + $0x58] sm:$0x3] %vm30, 0.0
  %41 = vst.msk [vmem:[#allocation2 + $0x60] sm:$0xff] %vm27, 0.0
  %42 = vst.msk [vmem:[#allocation2 + $0x68] sm:$0xff] %vm27, 0.0
  %43 = vst.msk [vmem:[#allocation2 + $0x70] sm:$0x3] %vm30, 0.0
  %44 = vst.msk [vmem:[#allocation2 + $0x78] sm:$0xff] %vm27, 0.0
  %45 = vst.msk [vmem:[#allocation2 + $0x80] sm:$0xff] %vm27, 0.0
  %46 = vst.msk [vmem:[#allocation2 + $0x88] sm:$0x3] %vm30, 0.0
  %47 = vst.msk [vmem:[#allocation2 + $0x90] sm:$0xff] %vm27, 0.0
  %48 = vst.msk [vmem:[#allocation2 + $0x98] sm:$0xff] %vm27, 0.0
  %49 = vst.msk [vmem:[#allocation2 + $0xa0] sm:$0x3] %vm30, 0.0
  %50 = vst.msk [vmem:[#allocation2 + $0xa8] sm:$0xff] %vm27, 0.0
  %51 = vst.msk [vmem:[#allocation2 + $0xb0] sm:$0xff] %vm27, 0.0
  %52 = vst.msk [vmem:[#allocation2 + $0xb8] sm:$0x3] %vm30, 0.0
  %53 = vst.msk [vmem:[#allocation2 + $0xc0] sm:$0xff] %vm27, 0.0
  %54 = vst.msk [vmem:[#allocation2 + $0xc8] sm:$0xff] %vm27, 0.0
  %55 = vst.msk [vmem:[#allocation2 + $0xd0] sm:$0x3] %vm30, 0.0
  %56 = vst.msk [vmem:[#allocation2 + $0xd8] sm:$0xff] %vm27, 0.0
  %57 = vst.msk [vmem:[#allocation2 + $0xe0] sm:$0xff] %vm27, 0.0
  %58 = vst.msk [vmem:[#allocation2 + $0xe8] sm:$0x3] %vm30, 0.0
  %59 = vst.msk [vmem:[#allocation2 + $0xf0] sm:$0xff] %vm27, 0.0
  %60 = vst.msk [vmem:[#allocation2 + $0xf8] sm:$0xff] %vm27, 0.0
  %61 = vst.msk [vmem:[#allocation2 + $0x100] sm:$0x3] %vm30, 0.0
  %62 = vst.msk [vmem:[#allocation2 + $0x108] sm:$0xff] %vm27, 0.0
  %63 = vst.msk [vmem:[#allocation2 + $0x110] sm:$0xff] %vm27, 0.0
  %64 = vst.msk [vmem:[#allocation2 + $0x118] sm:$0x3] %vm30, 0.0
  %65 = vst.msk [vmem:[#allocation2 + $0x120] sm:$0xff] %vm27, 0.0
  %66 = vst.msk [vmem:[#allocation2 + $0x128] sm:$0xff] %vm27, 0.0
  %67 = vst.msk [vmem:[#allocation2 + $0x130] sm:$0x3] %vm30, 0.0
  %68 = vst.msk [vmem:[#allocation2 + $0x138] sm:$0xff] %vm27, 0.0
  %69 = vst.msk [vmem:[#allocation2 + $0x140] sm:$0xff] %vm27, 0.0
  %70 = vst.msk [vmem:[#allocation2 + $0x148] sm:$0x3] %vm30, 0.0
  %71 = vst.msk [vmem:[#allocation2 + $0x150] sm:$0xff] %vm27, 0.0
  %72 = vst.msk [vmem:[#allocation2 + $0x158] sm:$0xff] %vm27, 0.0
  %73 = vst.msk [vmem:[#allocation2 + $0x160] sm:$0x3] %vm30, 0.0
  %74 = vst.msk [vmem:[#allocation2 + $0x168] sm:$0xff] %vm27, 0.0
  %75 = vst.msk [vmem:[#allocation2 + $0x170] sm:$0xff] %vm27, 0.0
  %76 = vst.msk [vmem:[#allocation2 + $0x178] sm:$0x3] %vm30, 0.0
  %77 = vst.msk [vmem:[#allocation2 + $0x180] sm:$0xff] %vm27, 0.0
  %78 = vst.msk [vmem:[#allocation2 + $0x188] sm:$0xff] %vm27, 0.0
  %79 = vst.msk [vmem:[#allocation2 + $0x190] sm:$0x3] %vm30, 0.0
  %80 = vst.msk [vmem:[#allocation2 + $0x198] sm:$0xff] %vm27, 0.0
  %81 = vst.msk [vmem:[#allocation2 + $0x1a0] sm:$0xff] %vm27, 0.0
  %82 = vst.msk [vmem:[#allocation2 + $0x1a8] sm:$0x3] %vm30, 0.0
  %83 = vst.msk [vmem:[#allocation2 + $0x1b0] sm:$0xff] %vm27, 0.0
  %84 = vst.msk [vmem:[#allocation2 + $0x1b8] sm:$0xff] %vm27, 0.0
  %85 = vst.msk [vmem:[#allocation2 + $0x1c0] sm:$0x3] %vm30, 0.0
  %86 = vst.msk [vmem:[#allocation2 + $0x1c8] sm:$0xff] %vm27, 0.0
  %87 = vst.msk [vmem:[#allocation2 + $0x1d0] sm:$0xff] %vm27, 0.0
  %88 = vst.msk [vmem:[#allocation2 + $0x1d8] sm:$0x3] %vm30, 0.0
  %89 = vst.msk [vmem:[#allocation2 + $0x1e0] sm:$0xff] %vm27, 0.0
  %90 = vst.msk [vmem:[#allocation2 + $0x1e8] sm:$0xff] %vm27, 0.0
  %91 = vst.msk [vmem:[#allocation2 + $0x1f0] sm:$0x3] %vm30, 0.0
  %92 = vst.msk [vmem:[#allocation2 + $0x1f8] sm:$0xff] %vm27, 0.0
  %93 = vst.msk [vmem:[#allocation2 + $0x200] sm:$0xff] %vm27, 0.0
  %94 = vst.msk [vmem:[#allocation2 + $0x208] sm:$0x3] %vm30, 0.0
  %95 = vst.msk [vmem:[#allocation2 + $0x210] sm:$0xff] %vm27, 0.0
  %96 = vst.msk [vmem:[#allocation2 + $0x218] sm:$0xff] %vm27, 0.0
  %97 = vst.msk [vmem:[#allocation2 + $0x220] sm:$0x3] %vm30, 0.0
  %98 = vst.msk [vmem:[#allocation2 + $0x228] sm:$0xff] %vm27, 0.0
  %99 = vst.msk [vmem:[#allocation2 + $0x230] sm:$0xff] %vm27, 0.0
  %100 = vst.msk [vmem:[#allocation2 + $0x238] sm:$0x3] %vm30, 0.0
  %101 = vst.msk [vmem:[#allocation2 + $0x240] sm:$0xff] %vm27, 0.0
  %102 = vst.msk [vmem:[#allocation2 + $0x248] sm:$0xff] %vm27, 0.0
  %103 = vst.msk [vmem:[#allocation2 + $0x250] sm:$0x3] %vm30, 0.0
  %104 = vst.msk [vmem:[#allocation2 + $0x258] sm:$0xff] %vm27, 0.0
  %105 = vst.msk [vmem:[#allocation2 + $0x260] sm:$0xff] %vm27, 0.0
  %106 = vst.msk [vmem:[#allocation2 + $0x268] sm:$0x3] %vm30, 0.0
  %107 = vst.msk [vmem:[#allocation2 + $0x270] sm:$0xff] %vm27, 0.0
  %108 = vst.msk [vmem:[#allocation2 + $0x278] sm:$0xff] %vm27, 0.0
  %109 = vst.msk [vmem:[#allocation2 + $0x280] sm:$0x3] %vm30, 0.0
  %110 = vst.msk [vmem:[#allocation2 + $0x288] sm:$0xff] %vm27, 0.0
  %111 = vst.msk [vmem:[#allocation2 + $0x290] sm:$0xff] %vm27, 0.0
  %112 = vst.msk [vmem:[#allocation2 + $0x298] sm:$0x3] %vm30, 0.0
  %113 = vst.msk [vmem:[#allocation2 + $0x2a0] sm:$0xff] %vm27, 0.0
  %114 = vst.msk [vmem:[#allocation2 + $0x2a8] sm:$0xff] %vm27, 0.0
  %115 = vst.msk [vmem:[#allocation2 + $0x2b0] sm:$0x3] %vm30, 0.0
  %116 = vst.msk [vmem:[#allocation2 + $0x2b8] sm:$0xff] %vm27, 0.0
  %117 = vst.msk [vmem:[#allocation2 + $0x2c0] sm:$0xff] %vm27, 0.0
  %118 = vst.msk [vmem:[#allocation2 + $0x2c8] sm:$0x3] %vm30, 0.0
  %119 = vst.msk [vmem:[#allocation2 + $0x2d0] sm:$0xff] %vm27, 0.0
  %120 = vst.msk [vmem:[#allocation2 + $0x2d8] sm:$0xff] %vm27, 0.0
  %121 = vst.msk [vmem:[#allocation2 + $0x2e0] sm:$0x3] %vm30, 0.0
  %122 = vst.msk [vmem:[#allocation2 + $0x2e8] sm:$0xff] %vm27, 0.0
  %123 = vst.msk [vmem:[#allocation2 + $0x2f0] sm:$0xff] %vm27, 0.0
  %124 = vst.msk [vmem:[#allocation2 + $0x2f8] sm:$0x3] %vm30, 0.0
  %125 = vst.msk [vmem:[#allocation2 + $0x300] sm:$0xff] %vm27, 0.0
  %126 = vst.msk [vmem:[#allocation2 + $0x308] sm:$0xff] %vm27, 0.0
  %127 = vst.msk [vmem:[#allocation2 + $0x310] sm:$0x3] %vm30, 0.0
  %128 = vst.msk [vmem:[#allocation2 + $0x318] sm:$0xff] %vm27, 0.0
  %129 = vst.msk [vmem:[#allocation2 + $0x320] sm:$0xff] %vm27, 0.0
  %130 = vst.msk [vmem:[#allocation2 + $0x328] sm:$0x3] %vm30, 0.0
  %131 = vst.msk [vmem:[#allocation2 + $0x330] sm:$0xff] %vm27, 0.0
  %132 = vst.msk [vmem:[#allocation2 + $0x338] sm:$0xff] %vm27, 0.0
  %133 = vst.msk [vmem:[#allocation2 + $0x340] sm:$0x3] %vm30, 0.0
  %134 = vst.msk [vmem:[#allocation2 + $0x348] sm:$0xff] %vm27, 0.0
  %135 = vst.msk [vmem:[#allocation2 + $0x350] sm:$0xff] %vm27, 0.0
  %136 = vst.msk [vmem:[#allocation2 + $0x358] sm:$0x3] %vm30, 0.0
  %v137 = vld [vmem:[%s0] sm:$0xff]
  %v138 = vld [vmem:[%s0 + $0x8] sm:$0xff]
  %v139 = vld [vmem:[%s0 + $0x10] sm:$0xff]
  %v140 = vld [vmem:[%s0 + $0x18] sm:$0xff]
  %v141 = vld [vmem:[%s0 + $0x20] sm:$0xff]
  %v142 = vld [vmem:[%s0 + $0x28] sm:$0xff]
  %v143 = vld [vmem:[%s0 + $0x30] sm:$0xff]
  %v144 = vld [vmem:[%s0 + $0x38] sm:$0xff]
  %v145 = vld [vmem:[%s0 + $0x40] sm:$0xff]
  %v146 = vld [vmem:[%s0 + $0x48] sm:$0xff]
  %v147 = vld [vmem:[%s0 + $0x50] sm:$0xff]
  %v148 = vld [vmem:[%s0 + $0x58] sm:$0xff]
  %v149 = vld [vmem:[%s0 + $0x60] sm:$0xff]
  %v150 = vld [vmem:[%s0 + $0x68] sm:$0xff]
  %v151 = vld [vmem:[%s0 + $0x70] sm:$0xff]
  %v152 = vld [vmem:[%s0 + $0x78] sm:$0xff]
  %v153 = vld [vmem:[%s0 + $0x80] sm:$0xff]
  %v154 = vld [vmem:[%s0 + $0x88] sm:$0xff]
  %v155 = vld [vmem:[%s0 + $0x90] sm:$0xff]
  %v156 = vld [vmem:[%s0 + $0x98] sm:$0xff]
  %v157 = vld [vmem:[%s0 + $0xa0] sm:$0xff]
  %v158 = vld [vmem:[%s0 + $0xa8] sm:$0xff]
  %v159 = vld [vmem:[%s0 + $0xb0] sm:$0xff]
  %v160 = vld [vmem:[%s0 + $0xb8] sm:$0xff]
  %v161 = vld [vmem:[%s0 + $0xc0] sm:$0xff]
  %v162 = vld [vmem:[%s0 + $0xc8] sm:$0xff]
  %v163 = vld [vmem:[%s0 + $0xd0] sm:$0xff]
  %v164 = vld [vmem:[%s0 + $0xd8] sm:$0xff]
  %v165 = vld [vmem:[%s0 + $0xe0] sm:$0xff]
  %v166 = vld [vmem:[%s0 + $0xe8] sm:$0xff]
  %v167 = vld [vmem:[%s0 + $0xf0] sm:$0xff]
  %v168 = vld [vmem:[%s0 + $0xf8] sm:$0xff]
  %v169 = vld [vmem:[%s0 + $0x100] sm:$0xff]
  %v170 = vld [vmem:[%s0 + $0x108] sm:$0xff]
  %v171 = vld [vmem:[%s0 + $0x110] sm:$0xff]
  %v172 = vld [vmem:[%s0 + $0x118] sm:$0xff]
  %v173 = vld [vmem:[%s0 + $0x120] sm:$0xff]
  %v174 = vld [vmem:[%s0 + $0x128] sm:$0xff]
  %v175 = vld [vmem:[%s0 + $0x130] sm:$0xff]
  %v176 = vld [vmem:[%s0 + $0x138] sm:$0xff]
  %v177 = vld [vmem:[%s0 + $0x140] sm:$0xff]
  %v178 = vld [vmem:[%s0 + $0x148] sm:$0xff]
  %v179 = vld [vmem:[%s0 + $0x150] sm:$0xff]
  %v180 = vld [vmem:[%s0 + $0x158] sm:$0xff]
  %v181 = vld [vmem:[%s0 + $0x160] sm:$0xff]
  %v182 = vld [vmem:[%s0 + $0x168] sm:$0xff]
  %v183 = vld [vmem:[%s0 + $0x170] sm:$0xff]
  %v184 = vld [vmem:[%s0 + $0x178] sm:$0xff]
  %v185 = vld [vmem:[%s0 + $0x180] sm:$0xff]
  %v186 = vld [vmem:[%s0 + $0x188] sm:$0xff]
  %v187 = vld [vmem:[%s0 + $0x190] sm:$0xff]
  %v188 = vld [vmem:[%s0 + $0x198] sm:$0xff]
  %v189 = vld [vmem:[%s0 + $0x1a0] sm:$0xff]
  %v190 = vld [vmem:[%s0 + $0x1a8] sm:$0xff]
  %v191 = vld [vmem:[%s0 + $0x1b0] sm:$0xff]
  %v192 = vld [vmem:[%s0 + $0x1b8] sm:$0xff]
  %v193 = vld [vmem:[%s0 + $0x1c0] sm:$0xff]
  %v194 = vld [vmem:[%s0 + $0x1c8] sm:$0xff]
  %v195 = vld [vmem:[%s0 + $0x1d0] sm:$0xff]
  %v196 = vld [vmem:[%s0 + $0x1d8] sm:$0xff]
  %v197 = vld [vmem:[%s0 + $0x1e0] sm:$0xff]
  %v198 = vld [vmem:[%s0 + $0x1e8] sm:$0xff]
  %v199 = vld [vmem:[%s0 + $0x1f0] sm:$0xff]
  %v200 = vld [vmem:[%s0 + $0x1f8] sm:$0xff]
  %s201 = scalar_lea.vmem [#allocation2], 24
  %202 = vst.msk [vmem:[%s201 + $0x1] sm:$0xff] %vm27, %v137
  %203 = vst.msk [vmem:[%s201 + $0x9] sm:$0xff] %vm27, %v138
  %204 = vst.msk [vmem:[%s201 + $0x19] sm:$0xff] %vm27, %v139
  %205 = vst.msk [vmem:[%s201 + $0x21] sm:$0xff] %vm27, %v140
  %206 = vst.msk [vmem:[%s201 + $0x31] sm:$0xff] %vm27, %v141
  %207 = vst.msk [vmem:[%s201 + $0x39] sm:$0xff] %vm27, %v142
  %208 = vst.msk [vmem:[%s201 + $0x49] sm:$0xff] %vm27, %v143
  %209 = vst.msk [vmem:[%s201 + $0x51] sm:$0xff] %vm27, %v144
  %210 = vst.msk [vmem:[%s201 + $0x61] sm:$0xff] %vm27, %v145
  %211 = vst.msk [vmem:[%s201 + $0x69] sm:$0xff] %vm27, %v146
  %212 = vst.msk [vmem:[%s201 + $0x79] sm:$0xff] %vm27, %v147
  %213 = vst.msk [vmem:[%s201 + $0x81] sm:$0xff] %vm27, %v148
  %214 = vst.msk [vmem:[%s201 + $0x91] sm:$0xff] %vm27, %v149
  %215 = vst.msk [vmem:[%s201 + $0x99] sm:$0xff] %vm27, %v150
  %216 = vst.msk [vmem:[%s201 + $0xa9] sm:$0xff] %vm27, %v151
  %217 = vst.msk [vmem:[%s201 + $0xb1] sm:$0xff] %vm27, %v152
  %218 = vst.msk [vmem:[%s201 + $0xc1] sm:$0xff] %vm27, %v153
  %219 = vst.msk [vmem:[%s201 + $0xc9] sm:$0xff] %vm27, %v154
  %220 = vst.msk [vmem:[%s201 + $0xd9] sm:$0xff] %vm27, %v155
  %221 = vst.msk [vmem:[%s201 + $0xe1] sm:$0xff] %vm27, %v156
  %222 = vst.msk [vmem:[%s201 + $0xf1] sm:$0xff] %vm27, %v157
  %223 = vst.msk [vmem:[%s201 + $0xf9] sm:$0xff] %vm27, %v158
  %224 = vst.msk [vmem:[%s201 + $0x109] sm:$0xff] %vm27, %v159
  %225 = vst.msk [vmem:[%s201 + $0x111] sm:$0xff] %vm27, %v160
  %226 = vst.msk [vmem:[%s201 + $0x121] sm:$0xff] %vm27, %v161
  %227 = vst.msk [vmem:[%s201 + $0x129] sm:$0xff] %vm27, %v162
  %228 = vst.msk [vmem:[%s201 + $0x139] sm:$0xff] %vm27, %v163
  %229 = vst.msk [vmem:[%s201 + $0x141] sm:$0xff] %vm27, %v164
  %230 = vst.msk [vmem:[%s201 + $0x151] sm:$0xff] %vm27, %v165
  %231 = vst.msk [vmem:[%s201 + $0x159] sm:$0xff] %vm27, %v166
  %232 = vst.msk [vmem:[%s201 + $0x169] sm:$0xff] %vm27, %v167
  %233 = vst.msk [vmem:[%s201 + $0x171] sm:$0xff] %vm27, %v168
  %234 = vst.msk [vmem:[%s201 + $0x1b1] sm:$0xff] %vm27, %v169
  %235 = vst.msk [vmem:[%s201 + $0x1b9] sm:$0xff] %vm27, %v170
  %236 = vst.msk [vmem:[%s201 + $0x1c9] sm:$0xff] %vm27, %v171
  %237 = vst.msk [vmem:[%s201 + $0x1d1] sm:$0xff] %vm27, %v172
  %238 = vst.msk [vmem:[%s201 + $0x1e1] sm:$0xff] %vm27, %v173
  %239 = vst.msk [vmem:[%s201 + $0x1e9] sm:$0xff] %vm27, %v174
  %240 = vst.msk [vmem:[%s201 + $0x1f9] sm:$0xff] %vm27, %v175
  %241 = vst.msk [vmem:[%s201 + $0x201] sm:$0xff] %vm27, %v176
  %242 = vst.msk [vmem:[%s201 + $0x211] sm:$0xff] %vm27, %v177
  %243 = vst.msk [vmem:[%s201 + $0x219] sm:$0xff] %vm27, %v178
  %244 = vst.msk [vmem:[%s201 + $0x229] sm:$0xff] %vm27, %v179
  %245 = vst.msk [vmem:[%s201 + $0x231] sm:$0xff] %vm27, %v180
  %246 = vst.msk [vmem:[%s201 + $0x241] sm:$0xff] %vm27, %v181
  %247 = vst.msk [vmem:[%s201 + $0x249] sm:$0xff] %vm27, %v182
  %248 = vst.msk [vmem:[%s201 + $0x259] sm:$0xff] %vm27, %v183
  %249 = vst.msk [vmem:[%s201 + $0x261] sm:$0xff] %vm27, %v184
  %250 = vst.msk [vmem:[%s201 + $0x271] sm:$0xff] %vm27, %v185
  %251 = vst.msk [vmem:[%s201 + $0x279] sm:$0xff] %vm27, %v186
  %252 = vst.msk [vmem:[%s201 + $0x289] sm:$0xff] %vm27, %v187
  %253 = vst.msk [vmem:[%s201 + $0x291] sm:$0xff] %vm27, %v188
  %254 = vst.msk [vmem:[%s201 + $0x2a1] sm:$0xff] %vm27, %v189
  %255 = vst.msk [vmem:[%s201 + $0x2a9] sm:$0xff] %vm27, %v190
  %256 = vst.msk [vmem:[%s201 + $0x2b9] sm:$0xff] %vm27, %v191
  %257 = vst.msk [vmem:[%s201 + $0x2c1] sm:$0xff] %vm27, %v192
  %258 = vst.msk [vmem:[%s201 + $0x2d1] sm:$0xff] %vm27, %v193
  %259 = vst.msk [vmem:[%s201 + $0x2d9] sm:$0xff] %vm27, %v194
  %260 = vst.msk [vmem:[%s201 + $0x2e9] sm:$0xff] %vm27, %v195
  %261 = vst.msk [vmem:[%s201 + $0x2f1] sm:$0xff] %vm27, %v196
  %262 = vst.msk [vmem:[%s201 + $0x301] sm:$0xff] %vm27, %v197
  %263 = vst.msk [vmem:[%s201 + $0x309] sm:$0xff] %vm27, %v198
  %264 = vst.msk [vmem:[%s201 + $0x319] sm:$0xff] %vm27, %v199
  %265 = vst.msk [vmem:[%s201 + $0x321] sm:$0xff] %vm27, %v200
  %v266 = vld [vmem:[#allocation2] sm:$0xff]
  %v267 = vld [vmem:[#allocation2 + $0x8] sm:$0xff]
  %v268 = vld [vmem:[#allocation2 + $0x18] sm:$0xff]
  %v269 = vld [vmem:[#allocation2 + $0x20] sm:$0xff]
  %v270 = vld [vmem:[#allocation2 + $0x30] sm:$0xff]
  %v271 = vld [vmem:[#allocation2 + $0x38] sm:$0xff]
  %v272 = vld [vmem:[#allocation2 + $0x48] sm:$0xff]
  %v273 = vld [vmem:[#allocation2 + $0x50] sm:$0xff]
  %v274 = vld [vmem:[#allocation2 + $0x60] sm:$0xff]
  %v275 = vld [vmem:[#allocation2 + $0x68] sm:$0xff]
  %v276 = vld [vmem:[#allocation2 + $0x78] sm:$0xff]
  %v277 = vld [vmem:[#allocation2 + $0x80] sm:$0xff]
  %v278 = vld [vmem:[#allocation2 + $0x90] sm:$0xff]
  %v279 = vld [vmem:[#allocation2 + $0x98] sm:$0xff]
  %v280 = vld [vmem:[#allocation2 + $0xa8] sm:$0xff]
  %v281 = vld [vmem:[#allocation2 + $0xb0] sm:$0xff]
  %v282 = vld [vmem:[#allocation2 + $0xc0] sm:$0xff]
  %v283 = vld [vmem:[#allocation2 + $0xc8] sm:$0xff]
  %v284 = vld [vmem:[#allocation2 + $0xd8] sm:$0xff]
  %v285 = vld [vmem:[#allocation2 + $0xe0] sm:$0xff]
  %v286 = vld [vmem:[#allocation2 + $0xf0] sm:$0xff]
  %v287 = vld [vmem:[#allocation2 + $0xf8] sm:$0xff]
  %v288 = vld [vmem:[#allocation2 + $0x108] sm:$0xff]
  %v289 = vld [vmem:[#allocation2 + $0x110] sm:$0xff]
  %v290 = vld [vmem:[#allocation2 + $0x120] sm:$0xff]
  %v291 = vld [vmem:[#allocation2 + $0x128] sm:$0xff]
  %v292 = vld [vmem:[#allocation2 + $0x138] sm:$0xff]
  %v293 = vld [vmem:[#allocation2 + $0x140] sm:$0xff]
  %v294 = vld [vmem:[#allocation2 + $0x150] sm:$0xff]
  %v295 = vld [vmem:[#allocation2 + $0x158] sm:$0xff]
  %v296 = vld [vmem:[#allocation2 + $0x168] sm:$0xff]
  %v297 = vld [vmem:[#allocation2 + $0x170] sm:$0xff]
  %v298 = vld [vmem:[#allocation2 + $0x1b0] sm:$0xff]
  %v299 = vld [vmem:[#allocation2 + $0x1b8] sm:$0xff]
  %v300 = vld [vmem:[#allocation2 + $0x1c8] sm:$0xff]
  %v301 = vld [vmem:[#allocation2 + $0x1d0] sm:$0xff]
  %v302 = vld [vmem:[#allocation2 + $0x1e0] sm:$0xff]
  %v303 = vld [vmem:[#allocation2 + $0x1e8] sm:$0xff]
  %v304 = vld [vmem:[#allocation2 + $0x1f8] sm:$0xff]
  %v305 = vld [vmem:[#allocation2 + $0x200] sm:$0xff]
  %v306 = vld [vmem:[#allocation2 + $0x210] sm:$0xff]
  %v307 = vld [vmem:[#allocation2 + $0x218] sm:$0xff]
  %v308 = vld [vmem:[#allocation2 + $0x228] sm:$0xff]
  %v309 = vld [vmem:[#allocation2 + $0x230] sm:$0xff]
  %v310 = vld [vmem:[#allocation2 + $0x240] sm:$0xff]
  %v311 = vld [vmem:[#allocation2 + $0x248] sm:$0xff]
  %v312 = vld [vmem:[#allocation2 + $0x258] sm:$0xff]
  %v313 = vld [vmem:[#allocation2 + $0x260] sm:$0xff]
  %v314 = vld [vmem:[#allocation2 + $0x270] sm:$0xff]
  %v315 = vld [vmem:[#allocation2 + $0x278] sm:$0xff]
  %v316 = vld [vmem:[#allocation2 + $0x288] sm:$0xff]
  %v317 = vld [vmem:[#allocation2 + $0x290] sm:$0xff]
  %v318 = vld [vmem:[#allocation2 + $0x2a0] sm:$0xff]
  %v319 = vld [vmem:[#allocation2 + $0x2a8] sm:$0xff]
  %v320 = vld [vmem:[#allocation2 + $0x2b8] sm:$0xff]
  %v321 = vld [vmem:[#allocation2 + $0x2c0] sm:$0xff]
  %v322 = vld [vmem:[#allocation2 + $0x2d0] sm:$0xff]
  %v323 = vld [vmem:[#allocation2 + $0x2d8] sm:$0xff]
  %v324 = vld [vmem:[#allocation2 + $0x2e8] sm:$0xff]
  %v325 = vld [vmem:[#allocation2 + $0x2f0] sm:$0xff]
  %v326 = vld [vmem:[#allocation2 + $0x300] sm:$0xff]
  %v327 = vld [vmem:[#allocation2 + $0x308] sm:$0xff]
  %v328 = vld [vmem:[#allocation2 + $0x318] sm:$0xff]
  %v329 = vld [vmem:[#allocation2 + $0x320] sm:$0xff]
  %v330 = vld [vmem:[#allocation2 + $0x1] sm:$0xff]
  %v331 = vld [vmem:[#allocation2 + $0x9] sm:$0xff]
  %v332 = vld [vmem:[#allocation2 + $0x19] sm:$0xff]
  %v333 = vld [vmem:[#allocation2 + $0x21] sm:$0xff]
  %v334 = vld [vmem:[#allocation2 + $0x31] sm:$0xff]
  %v335 = vld [vmem:[#allocation2 + $0x39] sm:$0xff]
  %v336 = vld [vmem:[#allocation2 + $0x49] sm:$0xff]
  %v337 = vld [vmem:[#allocation2 + $0x51] sm:$0xff]
  %v338 = vld [vmem:[#allocation2 + $0x61] sm:$0xff]
  %v339 = vld [vmem:[#allocation2 + $0x69] sm:$0xff]
  %v340 = vld [vmem:[#allocation2 + $0x79] sm:$0xff]
  %v341 = vld [vmem:[#allocation2 + $0x81] sm:$0xff]
  %v342 = vld [vmem:[#allocation2 + $0x91] sm:$0xff]
  %v343 = vld [vmem:[#allocation2 + $0x99] sm:$0xff]
  %v344 = vld [vmem:[#allocation2 + $0xa9] sm:$0xff]
  %v345 = vld [vmem:[#allocation2 + $0xb1] sm:$0xff]
  %v346 = vld [vmem:[#allocation2 + $0xc1] sm:$0xff]
  %v347 = vld [vmem:[#allocation2 + $0xc9] sm:$0xff]
  %v348 = vld [vmem:[#allocation2 + $0xd9] sm:$0xff]
  %v349 = vld [vmem:[#allocation2 + $0xe1] sm:$0xff]
  %v350 = vld [vmem:[#allocation2 + $0xf1] sm:$0xff]
  %v351 = vld [vmem:[#allocation2 + $0xf9] sm:$0xff]
  %v352 = vld [vmem:[#allocation2 + $0x109] sm:$0xff]
  %v353 = vld [vmem:[#allocation2 + $0x111] sm:$0xff]
  %v354 = vld [vmem:[#allocation2 + $0x121] sm:$0xff]
  %v355 = vld [vmem:[#allocation2 + $0x129] sm:$0xff]
  %v356 = vld [vmem:[#allocation2 + $0x139] sm:$0xff]
  %v357 = vld [vmem:[#allocation2 + $0x141] sm:$0xff]
  %v358 = vld [vmem:[#allocation2 + $0x151] sm:$0xff]
  %v359 = vld [vmem:[#allocation2 + $0x159] sm:$0xff]
  %v360 = vld [vmem:[#allocation2 + $0x169] sm:$0xff]
  %v361 = vld [vmem:[#allocation2 + $0x171] sm:$0xff]
  %v362 = vld [vmem:[#allocation2 + $0x1b1] sm:$0xff]
  %v363 = vld [vmem:[#allocation2 + $0x1b9] sm:$0xff]
  %v364 = vld [vmem:[#allocation2 + $0x1c9] sm:$0xff]
  %v365 = vld [vmem:[#allocation2 + $0x1d1] sm:$0xff]
  %v366 = vld [vmem:[#allocation2 + $0x1e1] sm:$0xff]
  %v367 = vld [vmem:[#allocation2 + $0x1e9] sm:$0xff]
  %v368 = vld [vmem:[#allocation2 + $0x1f9] sm:$0xff]
  %v369 = vld [vmem:[#allocation2 + $0x201] sm:$0xff]
  %v370 = vld [vmem:[#allocation2 + $0x211] sm:$0xff]
  %v371 = vld [vmem:[#allocation2 + $0x219] sm:$0xff]
  %v372 = vld [vmem:[#allocation2 + $0x229] sm:$0xff]
  %v373 = vld [vmem:[#allocation2 + $0x231] sm:$0xff]
  %v374 = vld [vmem:[#allocation2 + $0x241] sm:$0xff]
  %v375 = vld [vmem:[#allocation2 + $0x249] sm:$0xff]
  %v376 = vld [vmem:[#allocation2 + $0x259] sm:$0xff]
  %v377 = vld [vmem:[#allocation2 + $0x261] sm:$0xff]
  %v378 = vld [vmem:[#allocation2 + $0x271] sm:$0xff]
  %v379 = vld [vmem:[#allocation2 + $0x279] sm:$0xff]
  %v380 = vld [vmem:[#allocation2 + $0x289] sm:$0xff]
  %v381 = vld [vmem:[#allocation2 + $0x291] sm:$0xff]
  %v382 = vld [vmem:[#allocation2 + $0x2a1] sm:$0xff]
  %v383 = vld [vmem:[#allocation2 + $0x2a9] sm:$0xff]
  %v384 = vld [vmem:[#allocation2 + $0x2b9] sm:$0xff]
  %v385 = vld [vmem:[#allocation2 + $0x2c1] sm:$0xff]
  %v386 = vld [vmem:[#allocation2 + $0x2d1] sm:$0xff]
  %v387 = vld [vmem:[#allocation2 + $0x2d9] sm:$0xff]
  %v388 = vld [vmem:[#allocation2 + $0x2e9] sm:$0xff]
  %v389 = vld [vmem:[#allocation2 + $0x2f1] sm:$0xff]
  %v390 = vld [vmem:[#allocation2 + $0x301] sm:$0xff]
  %v391 = vld [vmem:[#allocation2 + $0x309] sm:$0xff]
  %v392 = vld [vmem:[#allocation2 + $0x319] sm:$0xff]
  %v393 = vld [vmem:[#allocation2 + $0x321] sm:$0xff]
  %v394 = vld [vmem:[#allocation2 + $0x2] sm:$0xff]
  %v395 = vld [vmem:[#allocation2 + $0xa] sm:$0xff]
  %v396 = vld [vmem:[#allocation2 + $0x1a] sm:$0xff]
  %v397 = vld [vmem:[#allocation2 + $0x22] sm:$0xff]
  %v398 = vld [vmem:[#allocation2 + $0x32] sm:$0xff]
  %v399 = vld [vmem:[#allocation2 + $0x3a] sm:$0xff]
  %v400 = vld [vmem:[#allocation2 + $0x4a] sm:$0xff]
  %v401 = vld [vmem:[#allocation2 + $0x52] sm:$0xff]
  %v402 = vld [vmem:[#allocation2 + $0x62] sm:$0xff]
  %v403 = vld [vmem:[#allocation2 + $0x6a] sm:$0xff]
  %v404 = vld [vmem:[#allocation2 + $0x7a] sm:$0xff]
  %v405 = vld [vmem:[#allocation2 + $0x82] sm:$0xff]
  %v406 = vld [vmem:[#allocation2 + $0x92] sm:$0xff]
  %v407 = vld [vmem:[#allocation2 + $0x9a] sm:$0xff]
  %v408 = vld [vmem:[#allocation2 + $0xaa] sm:$0xff]
  %v409 = vld [vmem:[#allocation2 + $0xb2] sm:$0xff]
  %v410 = vld [vmem:[#allocation2 + $0xc2] sm:$0xff]
  %v411 = vld [vmem:[#allocation2 + $0xca] sm:$0xff]
  %v412 = vld [vmem:[#allocation2 + $0xda] sm:$0xff]
  %v413 = vld [vmem:[#allocation2 + $0xe2] sm:$0xff]
  %v414 = vld [vmem:[#allocation2 + $0xf2] sm:$0xff]
  %v415 = vld [vmem:[#allocation2 + $0xfa] sm:$0xff]
  %v416 = vld [vmem:[#allocation2 + $0x10a] sm:$0xff]
  %v417 = vld [vmem:[#allocation2 + $0x112] sm:$0xff]
  %v418 = vld [vmem:[#allocation2 + $0x122] sm:$0xff]
  %v419 = vld [vmem:[#allocation2 + $0x12a] sm:$0xff]
  %v420 = vld [vmem:[#allocation2 + $0x13a] sm:$0xff]
  %v421 = vld [vmem:[#allocation2 + $0x142] sm:$0xff]
  %v422 = vld [vmem:[#allocation2 + $0x152] sm:$0xff]
  %v423 = vld [vmem:[#allocation2 + $0x15a] sm:$0xff]
  %v424 = vld [vmem:[#allocation2 + $0x16a] sm:$0xff]
  %v425 = vld [vmem:[#allocation2 + $0x172] sm:$0xff]
  %v426 = vld [vmem:[#allocation2 + $0x1b2] sm:$0xff]
  %v427 = vld [vmem:[#allocation2 + $0x1ba] sm:$0xff]
  %v428 = vld [vmem:[#allocation2 + $0x1ca] sm:$0xff]
  %v429 = vld [vmem:[#allocation2 + $0x1d2] sm:$0xff]
  %v430 = vld [vmem:[#allocation2 + $0x1e2] sm:$0xff]
  %v431 = vld [vmem:[#allocation2 + $0x1ea] sm:$0xff]
  %v432 = vld [vmem:[#allocation2 + $0x1fa] sm:$0xff]
  %v433 = vld [vmem:[#allocation2 + $0x202] sm:$0xff]
  %v434 = vld [vmem:[#allocation2 + $0x212] sm:$0xff]
  %v435 = vld [vmem:[#allocation2 + $0x21a] sm:$0xff]
  %v436 = vld [vmem:[#allocation2 + $0x22a] sm:$0xff]
  %v437 = vld [vmem:[#allocation2 + $0x232] sm:$0xff]
  %v438 = vld [vmem:[#allocation2 + $0x242] sm:$0xff]
  %v439 = vld [vmem:[#allocation2 + $0x24a] sm:$0xff]
  %v440 = vld [vmem:[#allocation2 + $0x25a] sm:$0xff]
  %v441 = vld [vmem:[#allocation2 + $0x262] sm:$0xff]
  %v442 = vld [vmem:[#allocation2 + $0x272] sm:$0xff]
  %v443 = vld [vmem:[#allocation2 + $0x27a] sm:$0xff]
  %v444 = vld [vmem:[#allocation2 + $0x28a] sm:$0xff]
  %v445 = vld [vmem:[#allocation2 + $0x292] sm:$0xff]
  %v446 = vld [vmem:[#allocation2 + $0x2a2] sm:$0xff]
  %v447 = vld [vmem:[#allocation2 + $0x2aa] sm:$0xff]
  %v448 = vld [vmem:[#allocation2 + $0x2ba] sm:$0xff]
  %v449 = vld [vmem:[#allocation2 + $0x2c2] sm:$0xff]
  %v450 = vld [vmem:[#allocation2 + $0x2d2] sm:$0xff]
  %v451 = vld [vmem:[#allocation2 + $0x2da] sm:$0xff]
  %v452 = vld [vmem:[#allocation2 + $0x2ea] sm:$0xff]
  %v453 = vld [vmem:[#allocation2 + $0x2f2] sm:$0xff]
  %v454 = vld [vmem:[#allocation2 + $0x302] sm:$0xff]
  %v455 = vld [vmem:[#allocation2 + $0x30a] sm:$0xff]
  %v456 = vld [vmem:[#allocation2 + $0x31a] sm:$0xff]
  %v457 = vld [vmem:[#allocation2 + $0x322] sm:$0xff]
  %v458 = vld [vmem:[%s201] sm:$0xff]
  %v459 = vld [vmem:[%s201 + $0x8] sm:$0xff]
  %v460 = vld [vmem:[%s201 + $0x18] sm:$0xff]
  %v461 = vld [vmem:[%s201 + $0x20] sm:$0xff]
  %v462 = vld [vmem:[%s201 + $0x30] sm:$0xff]
  %v463 = vld [vmem:[%s201 + $0x38] sm:$0xff]
  %v464 = vld [vmem:[%s201 + $0x48] sm:$0xff]
  %v465 = vld [vmem:[%s201 + $0x50] sm:$0xff]
  %v466 = vld [vmem:[%s201 + $0x60] sm:$0xff]
  %v467 = vld [vmem:[%s201 + $0x68] sm:$0xff]
  %v468 = vld [vmem:[%s201 + $0x78] sm:$0xff]
  %v469 = vld [vmem:[%s201 + $0x80] sm:$0xff]
  %v470 = vld [vmem:[%s201 + $0x90] sm:$0xff]
  %v471 = vld [vmem:[%s201 + $0x98] sm:$0xff]
  %v472 = vld [vmem:[%s201 + $0xa8] sm:$0xff]
  %v473 = vld [vmem:[%s201 + $0xb0] sm:$0xff]
  %v474 = vld [vmem:[%s201 + $0xc0] sm:$0xff]
  %v475 = vld [vmem:[%s201 + $0xc8] sm:$0xff]
  %v476 = vld [vmem:[%s201 + $0xd8] sm:$0xff]
  %v477 = vld [vmem:[%s201 + $0xe0] sm:$0xff]
  %v478 = vld [vmem:[%s201 + $0xf0] sm:$0xff]
  %v479 = vld [vmem:[%s201 + $0xf8] sm:$0xff]
  %v480 = vld [vmem:[%s201 + $0x108] sm:$0xff]
  %v481 = vld [vmem:[%s201 + $0x110] sm:$0xff]
  %v482 = vld [vmem:[%s201 + $0x120] sm:$0xff]
  %v483 = vld [vmem:[%s201 + $0x128] sm:$0xff]
  %v484 = vld [vmem:[%s201 + $0x138] sm:$0xff]
  %v485 = vld [vmem:[%s201 + $0x140] sm:$0xff]
  %v486 = vld [vmem:[%s201 + $0x150] sm:$0xff]
  %v487 = vld [vmem:[%s201 + $0x158] sm:$0xff]
  %v488 = vld [vmem:[%s201 + $0x168] sm:$0xff]
  %v489 = vld [vmem:[%s201 + $0x170] sm:$0xff]
  %v490 = vld [vmem:[%s201 + $0x1b0] sm:$0xff]
  %v491 = vld [vmem:[%s201 + $0x1b8] sm:$0xff]
  %v492 = vld [vmem:[%s201 + $0x1c8] sm:$0xff]
  %v493 = vld [vmem:[%s201 + $0x1d0] sm:$0xff]
  %v494 = vld [vmem:[%s201 + $0x1e0] sm:$0xff]
  %v495 = vld [vmem:[%s201 + $0x1e8] sm:$0xff]
  %v496 = vld [vmem:[%s201 + $0x1f8] sm:$0xff]
  %v497 = vld [vmem:[%s201 + $0x200] sm:$0xff]
  %v498 = vld [vmem:[%s201 + $0x210] sm:$0xff]
  %v499 = vld [vmem:[%s201 + $0x218] sm:$0xff]
  %v500 = vld [vmem:[%s201 + $0x228] sm:$0xff]
  %v501 = vld [vmem:[%s201 + $0x230] sm:$0xff]
  %v502 = vld [vmem:[%s201 + $0x240] sm:$0xff]
  %v503 = vld [vmem:[%s201 + $0x248] sm:$0xff]
  %v504 = vld [vmem:[%s201 + $0x258] sm:$0xff]
  %v505 = vld [vmem:[%s201 + $0x260] sm:$0xff]
  %v506 = vld [vmem:[%s201 + $0x270] sm:$0xff]
  %v507 = vld [vmem:[%s201 + $0x278] sm:$0xff]
  %v508 = vld [vmem:[%s201 + $0x288] sm:$0xff]
  %v509 = vld [vmem:[%s201 + $0x290] sm:$0xff]
  %v510 = vld [vmem:[%s201 + $0x2a0] sm:$0xff]
  %v511 = vld [vmem:[%s201 + $0x2a8] sm:$0xff]
  %v512 = vld [vmem:[%s201 + $0x2b8] sm:$0xff]
  %v513 = vld [vmem:[%s201 + $0x2c0] sm:$0xff]
  %v514 = vld [vmem:[%s201 + $0x2d0] sm:$0xff]
  %v515 = vld [vmem:[%s201 + $0x2d8] sm:$0xff]
  %v516 = vld [vmem:[%s201 + $0x2e8] sm:$0xff]
  %v517 = vld [vmem:[%s201 + $0x2f0] sm:$0xff]
  %v518 = vld [vmem:[%s201 + $0x300] sm:$0xff]
  %v519 = vld [vmem:[%s201 + $0x308] sm:$0xff]
  %v520 = vld [vmem:[%s201 + $0x318] sm:$0xff]
  %v521 = vld [vmem:[%s201 + $0x320] sm:$0xff]
  %v522 = vld [vmem:[%s201 + $0x1] sm:$0xff]
  %v523 = vld [vmem:[%s201 + $0x9] sm:$0xff]
  %v524 = vld [vmem:[%s201 + $0x19] sm:$0xff]
  %v525 = vld [vmem:[%s201 + $0x21] sm:$0xff]
  %v526 = vld [vmem:[%s201 + $0x31] sm:$0xff]
  %v527 = vld [vmem:[%s201 + $0x39] sm:$0xff]
  %v528 = vld [vmem:[%s201 + $0x49] sm:$0xff]
  %v529 = vld [vmem:[%s201 + $0x51] sm:$0xff]
  %v530 = vld [vmem:[%s201 + $0x61] sm:$0xff]
  %v531 = vld [vmem:[%s201 + $0x69] sm:$0xff]
  %v532 = vld [vmem:[%s201 + $0x79] sm:$0xff]
  %v533 = vld [vmem:[%s201 + $0x81] sm:$0xff]
  %v534 = vld [vmem:[%s201 + $0x91] sm:$0xff]
  %v535 = vld [vmem:[%s201 + $0x99] sm:$0xff]
  %v536 = vld [vmem:[%s201 + $0xa9] sm:$0xff]
  %v537 = vld [vmem:[%s201 + $0xb1] sm:$0xff]
  %v538 = vld [vmem:[%s201 + $0xc1] sm:$0xff]
  %v539 = vld [vmem:[%s201 + $0xc9] sm:$0xff]
  %v540 = vld [vmem:[%s201 + $0xd9] sm:$0xff]
  %v541 = vld [vmem:[%s201 + $0xe1] sm:$0xff]
  %v542 = vld [vmem:[%s201 + $0xf1] sm:$0xff]
  %v543 = vld [vmem:[%s201 + $0xf9] sm:$0xff]
  %v544 = vld [vmem:[%s201 + $0x109] sm:$0xff]
  %v545 = vld [vmem:[%s201 + $0x111] sm:$0xff]
  %v546 = vld [vmem:[%s201 + $0x121] sm:$0xff]
  %v547 = vld [vmem:[%s201 + $0x129] sm:$0xff]
  %v548 = vld [vmem:[%s201 + $0x139] sm:$0xff]
  %v549 = vld [vmem:[%s201 + $0x141] sm:$0xff]
  %v550 = vld [vmem:[%s201 + $0x151] sm:$0xff]
  %v551 = vld [vmem:[%s201 + $0x159] sm:$0xff]
  %v552 = vld [vmem:[%s201 + $0x169] sm:$0xff]
  %v553 = vld [vmem:[%s201 + $0x171] sm:$0xff]
  %v554 = vld [vmem:[%s201 + $0x1b1] sm:$0xff]
  %v555 = vld [vmem:[%s201 + $0x1b9] sm:$0xff]
  %v556 = vld [vmem:[%s201 + $0x1c9] sm:$0xff]
  %v557 = vld [vmem:[%s201 + $0x1d1] sm:$0xff]
  %v558 = vld [vmem:[%s201 + $0x1e1] sm:$0xff]
  %v559 = vld [vmem:[%s201 + $0x1e9] sm:$0xff]
  %v560 = vld [vmem:[%s201 + $0x1f9] sm:$0xff]
  %v561 = vld [vmem:[%s201 + $0x201] sm:$0xff]
  %v562 = vld [vmem:[%s201 + $0x211] sm:$0xff]
  %v563 = vld [vmem:[%s201 + $0x219] sm:$0xff]
  %v564 = vld [vmem:[%s201 + $0x229] sm:$0xff]
  %v565 = vld [vmem:[%s201 + $0x231] sm:$0xff]
  %v566 = vld [vmem:[%s201 + $0x241] sm:$0xff]
  %v567 = vld [vmem:[%s201 + $0x249] sm:$0xff]
  %v568 = vld [vmem:[%s201 + $0x259] sm:$0xff]
  %v569 = vld [vmem:[%s201 + $0x261] sm:$0xff]
  %v570 = vld [vmem:[%s201 + $0x271] sm:$0xff]
  %v571 = vld [vmem:[%s201 + $0x279] sm:$0xff]
  %v572 = vld [vmem:[%s201 + $0x289] sm:$0xff]
  %v573 = vld [vmem:[%s201 + $0x291] sm:$0xff]
  %v574 = vld [vmem:[%s201 + $0x2a1] sm:$0xff]
  %v575 = vld [vmem:[%s201 + $0x2a9] sm:$0xff]
  %v576 = vld [vmem:[%s201 + $0x2b9] sm:$0xff]
  %v577 = vld [vmem:[%s201 + $0x2c1] sm:$0xff]
  %v578 = vld [vmem:[%s201 + $0x2d1] sm:$0xff]
  %v579 = vld [vmem:[%s201 + $0x2d9] sm:$0xff]
  %v580 = vld [vmem:[%s201 + $0x2e9] sm:$0xff]
  %v581 = vld [vmem:[%s201 + $0x2f1] sm:$0xff]
  %v582 = vld [vmem:[%s201 + $0x301] sm:$0xff]
  %v583 = vld [vmem:[%s201 + $0x309] sm:$0xff]
  %v584 = vld [vmem:[%s201 + $0x319] sm:$0xff]
  %v585 = vld [vmem:[%s201 + $0x321] sm:$0xff]
  %v586 = vld [vmem:[%s201 + $0x2] sm:$0xff]
  %v587 = vld [vmem:[%s201 + $0xa] sm:$0xff]
  %v588 = vld [vmem:[%s201 + $0x1a] sm:$0xff]
  %v589 = vld [vmem:[%s201 + $0x22] sm:$0xff]
  %v590 = vld [vmem:[%s201 + $0x32] sm:$0xff]
  %v591 = vld [vmem:[%s201 + $0x3a] sm:$0xff]
  %v592 = vld [vmem:[%s201 + $0x4a] sm:$0xff]
  %v593 = vld [vmem:[%s201 + $0x52] sm:$0xff]
  %v594 = vld [vmem:[%s201 + $0x62] sm:$0xff]
  %v595 = vld [vmem:[%s201 + $0x6a] sm:$0xff]
  %v596 = vld [vmem:[%s201 + $0x7a] sm:$0xff]
  %v597 = vld [vmem:[%s201 + $0x82] sm:$0xff]
  %v598 = vld [vmem:[%s201 + $0x92] sm:$0xff]
  %v599 = vld [vmem:[%s201 + $0x9a] sm:$0xff]
  %v600 = vld [vmem:[%s201 + $0xaa] sm:$0xff]
  %v601 = vld [vmem:[%s201 + $0xb2] sm:$0xff]
  %v602 = vld [vmem:[%s201 + $0xc2] sm:$0xff]
  %v603 = vld [vmem:[%s201 + $0xca] sm:$0xff]
  %v604 = vld [vmem:[%s201 + $0xda] sm:$0xff]
  %v605 = vld [vmem:[%s201 + $0xe2] sm:$0xff]
  %v606 = vld [vmem:[%s201 + $0xf2] sm:$0xff]
  %v607 = vld [vmem:[%s201 + $0xfa] sm:$0xff]
  %v608 = vld [vmem:[%s201 + $0x10a] sm:$0xff]
  %v609 = vld [vmem:[%s201 + $0x112] sm:$0xff]
  %v610 = vld [vmem:[%s201 + $0x122] sm:$0xff]
  %v611 = vld [vmem:[%s201 + $0x12a] sm:$0xff]
  %v612 = vld [vmem:[%s201 + $0x13a] sm:$0xff]
  %v613 = vld [vmem:[%s201 + $0x142] sm:$0xff]
  %v614 = vld [vmem:[%s201 + $0x152] sm:$0xff]
  %v615 = vld [vmem:[%s201 + $0x15a] sm:$0xff]
  %v616 = vld [vmem:[%s201 + $0x16a] sm:$0xff]
  %v617 = vld [vmem:[%s201 + $0x172] sm:$0xff]
  %v618 = vld [vmem:[%s201 + $0x1b2] sm:$0xff]
  %v619 = vld [vmem:[%s201 + $0x1ba] sm:$0xff]
  %v620 = vld [vmem:[%s201 + $0x1ca] sm:$0xff]
  %v621 = vld [vmem:[%s201 + $0x1d2] sm:$0xff]
  %v622 = vld [vmem:[%s201 + $0x1e2] sm:$0xff]
  %v623 = vld [vmem:[%s201 + $0x1ea] sm:$0xff]
  %v624 = vld [vmem:[%s201 + $0x1fa] sm:$0xff]
  %v625 = vld [vmem:[%s201 + $0x202] sm:$0xff]
  %v626 = vld [vmem:[%s201 + $0x212] sm:$0xff]
  %v627 = vld [vmem:[%s201 + $0x21a] sm:$0xff]
  %v628 = vld [vmem:[%s201 + $0x22a] sm:$0xff]
  %v629 = vld [vmem:[%s201 + $0x232] sm:$0xff]
  %v630 = vld [vmem:[%s201 + $0x242] sm:$0xff]
  %v631 = vld [vmem:[%s201 + $0x24a] sm:$0xff]
  %v632 = vld [vmem:[%s201 + $0x25a] sm:$0xff]
  %v633 = vld [vmem:[%s201 + $0x262] sm:$0xff]
  %v634 = vld [vmem:[%s201 + $0x272] sm:$0xff]
  %v635 = vld [vmem:[%s201 + $0x27a] sm:$0xff]
  %v636 = vld [vmem:[%s201 + $0x28a] sm:$0xff]
  %v637 = vld [vmem:[%s201 + $0x292] sm:$0xff]
  %v638 = vld [vmem:[%s201 + $0x2a2] sm:$0xff]
  %v639 = vld [vmem:[%s201 + $0x2aa] sm:$0xff]
  %v640 = vld [vmem:[%s201 + $0x2ba] sm:$0xff]
  %v641 = vld [vmem:[%s201 + $0x2c2] sm:$0xff]
  %v642 = vld [vmem:[%s201 + $0x2d2] sm:$0xff]
  %v643 = vld [vmem:[%s201 + $0x2da] sm:$0xff]
  %v644 = vld [vmem:[%s201 + $0x2ea] sm:$0xff]
  %v645 = vld [vmem:[%s201 + $0x2f2] sm:$0xff]
  %v646 = vld [vmem:[%s201 + $0x302] sm:$0xff]
  %v647 = vld [vmem:[%s201 + $0x30a] sm:$0xff]
  %v648 = vld [vmem:[%s201 + $0x31a] sm:$0xff]
  %v649 = vld [vmem:[%s201 + $0x322] sm:$0xff]
  %s650 = scalar_lea.vmem [#allocation2], 48
  %v651 = vld [vmem:[%s650] sm:$0xff]
  %v652 = vld [vmem:[%s650 + $0x8] sm:$0xff]
  %v653 = vld [vmem:[%s650 + $0x18] sm:$0xff]
  %v654 = vld [vmem:[%s650 + $0x20] sm:$0xff]
  %v655 = vld [vmem:[%s650 + $0x30] sm:$0xff]
  %v656 = vld [vmem:[%s650 + $0x38] sm:$0xff]
  %v657 = vld [vmem:[%s650 + $0x48] sm:$0xff]
  %v658 = vld [vmem:[%s650 + $0x50] sm:$0xff]
  %v659 = vld [vmem:[%s650 + $0x60] sm:$0xff]
  %v660 = vld [vmem:[%s650 + $0x68] sm:$0xff]
  %v661 = vld [vmem:[%s650 + $0x78] sm:$0xff]
  %v662 = vld [vmem:[%s650 + $0x80] sm:$0xff]
  %v663 = vld [vmem:[%s650 + $0x90] sm:$0xff]
  %v664 = vld [vmem:[%s650 + $0x98] sm:$0xff]
  %v665 = vld [vmem:[%s650 + $0xa8] sm:$0xff]
  %v666 = vld [vmem:[%s650 + $0xb0] sm:$0xff]
  %v667 = vld [vmem:[%s650 + $0xc0] sm:$0xff]
  %v668 = vld [vmem:[%s650 + $0xc8] sm:$0xff]
  %v669 = vld [vmem:[%s650 + $0xd8] sm:$0xff]
  %v670 = vld [vmem:[%s650 + $0xe0] sm:$0xff]
  %v671 = vld [vmem:[%s650 + $0xf0] sm:$0xff]
  %v672 = vld [vmem:[%s650 + $0xf8] sm:$0xff]
  %v673 = vld [vmem:[%s650 + $0x108] sm:$0xff]
  %v674 = vld [vmem:[%s650 + $0x110] sm:$0xff]
  %v675 = vld [vmem:[%s650 + $0x120] sm:$0xff]
  %v676 = vld [vmem:[%s650 + $0x128] sm:$0xff]
  %v677 = vld [vmem:[%s650 + $0x138] sm:$0xff]
  %v678 = vld [vmem:[%s650 + $0x140] sm:$0xff]
  %v679 = vld [vmem:[%s650 + $0x150] sm:$0xff]
  %v680 = vld [vmem:[%s650 + $0x158] sm:$0xff]
  %v681 = vld [vmem:[%s650 + $0x168] sm:$0xff]
  %v682 = vld [vmem:[%s650 + $0x170] sm:$0xff]
  %v683 = vld [vmem:[%s650 + $0x1b0] sm:$0xff]
  %v684 = vld [vmem:[%s650 + $0x1b8] sm:$0xff]
  %v685 = vld [vmem:[%s650 + $0x1c8] sm:$0xff]
  %v686 = vld [vmem:[%s650 + $0x1d0] sm:$0xff]
  %v687 = vld [vmem:[%s650 + $0x1e0] sm:$0xff]
  %v688 = vld [vmem:[%s650 + $0x1e8] sm:$0xff]
  %v689 = vld [vmem:[%s650 + $0x1f8] sm:$0xff]
  %v690 = vld [vmem:[%s650 + $0x200] sm:$0xff]
  %v691 = vld [vmem:[%s650 + $0x210] sm:$0xff]
  %v692 = vld [vmem:[%s650 + $0x218] sm:$0xff]
  %v693 = vld [vmem:[%s650 + $0x228] sm:$0xff]
  %v694 = vld [vmem:[%s650 + $0x230] sm:$0xff]
  %v695 = vld [vmem:[%s650 + $0x240] sm:$0xff]
  %v696 = vld [vmem:[%s650 + $0x248] sm:$0xff]
  %v697 = vld [vmem:[%s650 + $0x258] sm:$0xff]
  %v698 = vld [vmem:[%s650 + $0x260] sm:$0xff]
  %v699 = vld [vmem:[%s650 + $0x270] sm:$0xff]
  %v700 = vld [vmem:[%s650 + $0x278] sm:$0xff]
  %v701 = vld [vmem:[%s650 + $0x288] sm:$0xff]
  %v702 = vld [vmem:[%s650 + $0x290] sm:$0xff]
  %v703 = vld [vmem:[%s650 + $0x2a0] sm:$0xff]
  %v704 = vld [vmem:[%s650 + $0x2a8] sm:$0xff]
  %v705 = vld [vmem:[%s650 + $0x2b8] sm:$0xff]
  %v706 = vld [vmem:[%s650 + $0x2c0] sm:$0xff]
  %v707 = vld [vmem:[%s650 + $0x2d0] sm:$0xff]
  %v708 = vld [vmem:[%s650 + $0x2d8] sm:$0xff]
  %v709 = vld [vmem:[%s650 + $0x2e8] sm:$0xff]
  %v710 = vld [vmem:[%s650 + $0x2f0] sm:$0xff]
  %v711 = vld [vmem:[%s650 + $0x300] sm:$0xff]
  %v712 = vld [vmem:[%s650 + $0x308] sm:$0xff]
  %v713 = vld [vmem:[%s650 + $0x318] sm:$0xff]
  %v714 = vld [vmem:[%s650 + $0x320] sm:$0xff]
  %v715 = vld [vmem:[%s650 + $0x1] sm:$0xff]
  %v716 = vld [vmem:[%s650 + $0x9] sm:$0xff]
  %v717 = vld [vmem:[%s650 + $0x19] sm:$0xff]
  %v718 = vld [vmem:[%s650 + $0x21] sm:$0xff]
  %v719 = vld [vmem:[%s650 + $0x31] sm:$0xff]
  %v720 = vld [vmem:[%s650 + $0x39] sm:$0xff]
  %v721 = vld [vmem:[%s650 + $0x49] sm:$0xff]
  %v722 = vld [vmem:[%s650 + $0x51] sm:$0xff]
  %v723 = vld [vmem:[%s650 + $0x61] sm:$0xff]
  %v724 = vld [vmem:[%s650 + $0x69] sm:$0xff]
  %v725 = vld [vmem:[%s650 + $0x79] sm:$0xff]
  %v726 = vld [vmem:[%s650 + $0x81] sm:$0xff]
  %v727 = vld [vmem:[%s650 + $0x91] sm:$0xff]
  %v728 = vld [vmem:[%s650 + $0x99] sm:$0xff]
  %v729 = vld [vmem:[%s650 + $0xa9] sm:$0xff]
  %v730 = vld [vmem:[%s650 + $0xb1] sm:$0xff]
  %v731 = vld [vmem:[%s650 + $0xc1] sm:$0xff]
  %v732 = vld [vmem:[%s650 + $0xc9] sm:$0xff]
  %v733 = vld [vmem:[%s650 + $0xd9] sm:$0xff]
  %v734 = vld [vmem:[%s650 + $0xe1] sm:$0xff]
  %v735 = vld [vmem:[%s650 + $0xf1] sm:$0xff]
  %v736 = vld [vmem:[%s650 + $0xf9] sm:$0xff]
  %v737 = vld [vmem:[%s650 + $0x109] sm:$0xff]
  %v738 = vld [vmem:[%s650 + $0x111] sm:$0xff]
  %v739 = vld [vmem:[%s650 + $0x121] sm:$0xff]
  %v740 = vld [vmem:[%s650 + $0x129] sm:$0xff]
  %v741 = vld [vmem:[%s650 + $0x139] sm:$0xff]
  %v742 = vld [vmem:[%s650 + $0x141] sm:$0xff]
  %v743 = vld [vmem:[%s650 + $0x151] sm:$0xff]
  %v744 = vld [vmem:[%s650 + $0x159] sm:$0xff]
  %v745 = vld [vmem:[%s650 + $0x169] sm:$0xff]
  %v746 = vld [vmem:[%s650 + $0x171] sm:$0xff]
  %v747 = vld [vmem:[%s650 + $0x1b1] sm:$0xff]
  %v748 = vld [vmem:[%s650 + $0x1b9] sm:$0xff]
  %v749 = vld [vmem:[%s650 + $0x1c9] sm:$0xff]
  %v750 = vld [vmem:[%s650 + $0x1d1] sm:$0xff]
  %v751 = vld [vmem:[%s650 + $0x1e1] sm:$0xff]
  %v752 = vld [vmem:[%s650 + $0x1e9] sm:$0xff]
  %v753 = vld [vmem:[%s650 + $0x1f9] sm:$0xff]
  %v754 = vld [vmem:[%s650 + $0x201] sm:$0xff]
  %v755 = vld [vmem:[%s650 + $0x211] sm:$0xff]
  %v756 = vld [vmem:[%s650 + $0x219] sm:$0xff]
  %v757 = vld [vmem:[%s650 + $0x229] sm:$0xff]
  %v758 = vld [vmem:[%s650 + $0x231] sm:$0xff]
  %v759 = vld [vmem:[%s650 + $0x241] sm:$0xff]
  %v760 = vld [vmem:[%s650 + $0x249] sm:$0xff]
  %v761 = vld [vmem:[%s650 + $0x259] sm:$0xff]
  %v762 = vld [vmem:[%s650 + $0x261] sm:$0xff]
  %v763 = vld [vmem:[%s650 + $0x271] sm:$0xff]
  %v764 = vld [vmem:[%s650 + $0x279] sm:$0xff]
  %v765 = vld [vmem:[%s650 + $0x289] sm:$0xff]
  %v766 = vld [vmem:[%s650 + $0x291] sm:$0xff]
  %v767 = vld [vmem:[%s650 + $0x2a1] sm:$0xff]
  %v768 = vld [vmem:[%s650 + $0x2a9] sm:$0xff]
  %v769 = vld [vmem:[%s650 + $0x2b9] sm:$0xff]
  %v770 = vld [vmem:[%s650 + $0x2c1] sm:$0xff]
  %v771 = vld [vmem:[%s650 + $0x2d1] sm:$0xff]
  %v772 = vld [vmem:[%s650 + $0x2d9] sm:$0xff]
  %v773 = vld [vmem:[%s650 + $0x2e9] sm:$0xff]
  %v774 = vld [vmem:[%s650 + $0x2f1] sm:$0xff]
  %v775 = vld [vmem:[%s650 + $0x301] sm:$0xff]
  %v776 = vld [vmem:[%s650 + $0x309] sm:$0xff]
  %v777 = vld [vmem:[%s650 + $0x319] sm:$0xff]
  %v778 = vld [vmem:[%s650 + $0x321] sm:$0xff]
  %v779 = vld [vmem:[%s650 + $0x2] sm:$0xff]
  %v780 = vld [vmem:[%s650 + $0xa] sm:$0xff]
  %v781 = vld [vmem:[%s650 + $0x1a] sm:$0xff]
  %v782 = vld [vmem:[%s650 + $0x22] sm:$0xff]
  %v783 = vld [vmem:[%s650 + $0x32] sm:$0xff]
  %v784 = vld [vmem:[%s650 + $0x3a] sm:$0xff]
  %v785 = vld [vmem:[%s650 + $0x4a] sm:$0xff]
  %v786 = vld [vmem:[%s650 + $0x52] sm:$0xff]
  %v787 = vld [vmem:[%s650 + $0x62] sm:$0xff]
  %v788 = vld [vmem:[%s650 + $0x6a] sm:$0xff]
  %v789 = vld [vmem:[%s650 + $0x7a] sm:$0xff]
  %v790 = vld [vmem:[%s650 + $0x82] sm:$0xff]
  %v791 = vld [vmem:[%s650 + $0x92] sm:$0xff]
  %v792 = vld [vmem:[%s650 + $0x9a] sm:$0xff]
  %v793 = vld [vmem:[%s650 + $0xaa] sm:$0xff]
  %v794 = vld [vmem:[%s650 + $0xb2] sm:$0xff]
  %v795 = vld [vmem:[%s650 + $0xc2] sm:$0xff]
  %v796 = vld [vmem:[%s650 + $0xca] sm:$0xff]
  %v797 = vld [vmem:[%s650 + $0xda] sm:$0xff]
  %v798 = vld [vmem:[%s650 + $0xe2] sm:$0xff]
  %v799 = vld [vmem:[%s650 + $0xf2] sm:$0xff]
  %v800 = vld [vmem:[%s650 + $0xfa] sm:$0xff]
  %v801 = vld [vmem:[%s650 + $0x10a] sm:$0xff]
  %v802 = vld [vmem:[%s650 + $0x112] sm:$0xff]
  %v803 = vld [vmem:[%s650 + $0x122] sm:$0xff]
  %v804 = vld [vmem:[%s650 + $0x12a] sm:$0xff]
  %v805 = vld [vmem:[%s650 + $0x13a] sm:$0xff]
  %v806 = vld [vmem:[%s650 + $0x142] sm:$0xff]
  %v807 = vld [vmem:[%s650 + $0x152] sm:$0xff]
  %v808 = vld [vmem:[%s650 + $0x15a] sm:$0xff]
  %v809 = vld [vmem:[%s650 + $0x16a] sm:$0xff]
  %v810 = vld [vmem:[%s650 + $0x172] sm:$0xff]
  %v811 = vld [vmem:[%s650 + $0x1b2] sm:$0xff]
  %v812 = vld [vmem:[%s650 + $0x1ba] sm:$0xff]
  %v813 = vld [vmem:[%s650 + $0x1ca] sm:$0xff]
  %v814 = vld [vmem:[%s650 + $0x1d2] sm:$0xff]
  %v815 = vld [vmem:[%s650 + $0x1e2] sm:$0xff]
  %v816 = vld [vmem:[%s650 + $0x1ea] sm:$0xff]
  %v817 = vld [vmem:[%s650 + $0x1fa] sm:$0xff]
  %v818 = vld [vmem:[%s650 + $0x202] sm:$0xff]
  %v819 = vld [vmem:[%s650 + $0x212] sm:$0xff]
  %v820 = vld [vmem:[%s650 + $0x21a] sm:$0xff]
  %v821 = vld [vmem:[%s650 + $0x22a] sm:$0xff]
  %v822 = vld [vmem:[%s650 + $0x232] sm:$0xff]
  %v823 = vld [vmem:[%s650 + $0x242] sm:$0xff]
  %v824 = vld [vmem:[%s650 + $0x24a] sm:$0xff]
  %v825 = vld [vmem:[%s650 + $0x25a] sm:$0xff]
  %v826 = vld [vmem:[%s650 + $0x262] sm:$0xff]
  %v827 = vld [vmem:[%s650 + $0x272] sm:$0xff]
  %v828 = vld [vmem:[%s650 + $0x27a] sm:$0xff]
  %v829 = vld [vmem:[%s650 + $0x28a] sm:$0xff]
  %v830 = vld [vmem:[%s650 + $0x292] sm:$0xff]
  %v831 = vld [vmem:[%s650 + $0x2a2] sm:$0xff]
  %v832 = vld [vmem:[%s650 + $0x2aa] sm:$0xff]
  %v833 = vld [vmem:[%s650 + $0x2ba] sm:$0xff]
  %v834 = vld [vmem:[%s650 + $0x2c2] sm:$0xff]
  %v835 = vld [vmem:[%s650 + $0x2d2] sm:$0xff]
  %v836 = vld [vmem:[%s650 + $0x2da] sm:$0xff]
  %v837 = vld [vmem:[%s650 + $0x2ea] sm:$0xff]
  %v838 = vld [vmem:[%s650 + $0x2f2] sm:$0xff]
  %v839 = vld [vmem:[%s650 + $0x302] sm:$0xff]
  %v840 = vld [vmem:[%s650 + $0x30a] sm:$0xff]
  %v841 = vld [vmem:[%s650 + $0x31a] sm:$0xff]
  %v842 = vld [vmem:[%s650 + $0x322] sm:$0xff]
  %907 = vrot.lane.b32.xlu0 %v330, 4
  %v908 = vpop.permute.xlu0 %907
  %909 = vrot.lane.b32.xlu0 %v331, 4
  %v910 = vpop.permute.xlu0 %909
  %911 = vrot.lane.b32.xlu0 %v332, 4
  %v912 = vpop.permute.xlu0 %911
  %913 = vrot.lane.b32.xlu0 %v333, 4
  %v914 = vpop.permute.xlu0 %913
  %915 = vrot.lane.b32.xlu0 %v334, 4
  %v916 = vpop.permute.xlu0 %915
  %917 = vrot.lane.b32.xlu0 %v335, 4
  %v918 = vpop.permute.xlu0 %917
  %919 = vrot.lane.b32.xlu0 %v336, 4
  %v920 = vpop.permute.xlu0 %919
  %921 = vrot.lane.b32.xlu0 %v337, 4
  %v922 = vpop.permute.xlu0 %921
  %923 = vrot.lane.b32.xlu0 %v338, 4
  %v924 = vpop.permute.xlu0 %923
  %925 = vrot.lane.b32.xlu0 %v339, 4
  %v926 = vpop.permute.xlu0 %925
  %927 = vrot.lane.b32.xlu0 %v340, 4
  %v928 = vpop.permute.xlu0 %927
  %929 = vrot.lane.b32.xlu0 %v341, 4
  %v930 = vpop.permute.xlu0 %929
  %931 = vrot.lane.b32.xlu0 %v342, 4
  %v932 = vpop.permute.xlu0 %931
  %933 = vrot.lane.b32.xlu0 %v343, 4
  %v934 = vpop.permute.xlu0 %933
  %935 = vrot.lane.b32.xlu0 %v344, 4
  %v936 = vpop.permute.xlu0 %935
  %937 = vrot.lane.b32.xlu0 %v345, 4
  %v938 = vpop.permute.xlu0 %937
  %939 = vrot.lane.b32.xlu0 %v346, 4
  %v940 = vpop.permute.xlu0 %939
  %941 = vrot.lane.b32.xlu0 %v347, 4
  %v942 = vpop.permute.xlu0 %941
  %943 = vrot.lane.b32.xlu0 %v348, 4
  %v944 = vpop.permute.xlu0 %943
  %945 = vrot.lane.b32.xlu0 %v349, 4
  %v946 = vpop.permute.xlu0 %945
  %947 = vrot.lane.b32.xlu0 %v350, 4
  %v948 = vpop.permute.xlu0 %947
  %949 = vrot.lane.b32.xlu0 %v351, 4
  %v950 = vpop.permute.xlu0 %949
  %951 = vrot.lane.b32.xlu0 %v352, 4
  %v952 = vpop.permute.xlu0 %951
  %953 = vrot.lane.b32.xlu0 %v353, 4
  %v954 = vpop.permute.xlu0 %953
  %955 = vrot.lane.b32.xlu0 %v354, 4
  %v956 = vpop.permute.xlu0 %955
  %957 = vrot.lane.b32.xlu0 %v355, 4
  %v958 = vpop.permute.xlu0 %957
  %959 = vrot.lane.b32.xlu0 %v356, 4
  %v960 = vpop.permute.xlu0 %959
  %961 = vrot.lane.b32.xlu0 %v357, 4
  %v962 = vpop.permute.xlu0 %961
  %963 = vrot.lane.b32.xlu0 %v358, 4
  %v964 = vpop.permute.xlu0 %963
  %965 = vrot.lane.b32.xlu0 %v359, 4
  %v966 = vpop.permute.xlu0 %965
  %967 = vrot.lane.b32.xlu0 %v360, 4
  %v968 = vpop.permute.xlu0 %967
  %969 = vrot.lane.b32.xlu0 %v361, 4
  %v970 = vpop.permute.xlu0 %969
  %971 = vrot.lane.b32.xlu0 %v362, 4
  %v972 = vpop.permute.xlu0 %971
  %973 = vrot.lane.b32.xlu0 %v363, 4
  %v974 = vpop.permute.xlu0 %973
  %975 = vrot.lane.b32.xlu0 %v364, 4
  %v976 = vpop.permute.xlu0 %975
  %977 = vrot.lane.b32.xlu0 %v365, 4
  %v978 = vpop.permute.xlu0 %977
  %979 = vrot.lane.b32.xlu0 %v366, 4
  %v980 = vpop.permute.xlu0 %979
  %981 = vrot.lane.b32.xlu0 %v367, 4
  %v982 = vpop.permute.xlu0 %981
  %983 = vrot.lane.b32.xlu0 %v368, 4
  %v984 = vpop.permute.xlu0 %983
  %985 = vrot.lane.b32.xlu0 %v369, 4
  %v986 = vpop.permute.xlu0 %985
  %987 = vrot.lane.b32.xlu0 %v370, 4
  %v988 = vpop.permute.xlu0 %987
  %989 = vrot.lane.b32.xlu0 %v371, 4
  %v990 = vpop.permute.xlu0 %989
  %991 = vrot.lane.b32.xlu0 %v372, 4
  %v992 = vpop.permute.xlu0 %991
  %993 = vrot.lane.b32.xlu0 %v373, 4
  %v994 = vpop.permute.xlu0 %993
  %995 = vrot.lane.b32.xlu0 %v374, 4
  %v996 = vpop.permute.xlu0 %995
  %997 = vrot.lane.b32.xlu0 %v375, 4
  %v998 = vpop.permute.xlu0 %997
  %999 = vrot.lane.b32.xlu0 %v376, 4
  %v1000 = vpop.permute.xlu0 %999
  %1001 = vrot.lane.b32.xlu0 %v377, 4
  %v1002 = vpop.permute.xlu0 %1001
  %1003 = vrot.lane.b32.xlu0 %v378, 4
  %v1004 = vpop.permute.xlu0 %1003
  %1005 = vrot.lane.b32.xlu0 %v379, 4
  %v1006 = vpop.permute.xlu0 %1005
  %1007 = vrot.lane.b32.xlu0 %v380, 4
  %v1008 = vpop.permute.xlu0 %1007
  %1009 = vrot.lane.b32.xlu0 %v381, 4
  %v1010 = vpop.permute.xlu0 %1009
  %1011 = vrot.lane.b32.xlu0 %v382, 4
  %v1012 = vpop.permute.xlu0 %1011
  %1013 = vrot.lane.b32.xlu0 %v383, 4
  %v1014 = vpop.permute.xlu0 %1013
  %1015 = vrot.lane.b32.xlu0 %v384, 4
  %v1016 = vpop.permute.xlu0 %1015
  %1017 = vrot.lane.b32.xlu0 %v385, 4
  %v1018 = vpop.permute.xlu0 %1017
  %1019 = vrot.lane.b32.xlu0 %v386, 4
  %v1020 = vpop.permute.xlu0 %1019
  %1021 = vrot.lane.b32.xlu0 %v387, 4
  %v1022 = vpop.permute.xlu0 %1021
  %1023 = vrot.lane.b32.xlu0 %v388, 4
  %v1024 = vpop.permute.xlu0 %1023
  %1025 = vrot.lane.b32.xlu0 %v389, 4
  %v1026 = vpop.permute.xlu0 %1025
  %1027 = vrot.lane.b32.xlu0 %v390, 4
  %v1028 = vpop.permute.xlu0 %1027
  %1029 = vrot.lane.b32.xlu0 %v391, 4
  %v1030 = vpop.permute.xlu0 %1029
  %1031 = vrot.lane.b32.xlu0 %v392, 4
  %v1032 = vpop.permute.xlu0 %1031
  %1033 = vrot.lane.b32.xlu0 %v393, 4
  %v1034 = vpop.permute.xlu0 %1033
  %1163 = vrot.lane.b32.xlu0 %v394, 8
  %v1164 = vpop.permute.xlu0 %1163
  %1165 = vrot.lane.b32.xlu0 %v395, 8
  %v1166 = vpop.permute.xlu0 %1165
  %1167 = vrot.lane.b32.xlu0 %v396, 8
  %v1168 = vpop.permute.xlu0 %1167
  %1169 = vrot.lane.b32.xlu0 %v397, 8
  %v1170 = vpop.permute.xlu0 %1169
  %1171 = vrot.lane.b32.xlu0 %v398, 8
  %v1172 = vpop.permute.xlu0 %1171
  %1173 = vrot.lane.b32.xlu0 %v399, 8
  %v1174 = vpop.permute.xlu0 %1173
  %1175 = vrot.lane.b32.xlu0 %v400, 8
  %v1176 = vpop.permute.xlu0 %1175
  %1177 = vrot.lane.b32.xlu0 %v401, 8
  %v1178 = vpop.permute.xlu0 %1177
  %1179 = vrot.lane.b32.xlu0 %v402, 8
  %v1180 = vpop.permute.xlu0 %1179
  %1181 = vrot.lane.b32.xlu0 %v403, 8
  %v1182 = vpop.permute.xlu0 %1181
  %1183 = vrot.lane.b32.xlu0 %v404, 8
  %v1184 = vpop.permute.xlu0 %1183
  %1185 = vrot.lane.b32.xlu0 %v405, 8
  %v1186 = vpop.permute.xlu0 %1185
  %1187 = vrot.lane.b32.xlu0 %v406, 8
  %v1188 = vpop.permute.xlu0 %1187
  %1189 = vrot.lane.b32.xlu0 %v407, 8
  %v1190 = vpop.permute.xlu0 %1189
  %1191 = vrot.lane.b32.xlu0 %v408, 8
  %v1192 = vpop.permute.xlu0 %1191
  %1193 = vrot.lane.b32.xlu0 %v409, 8
  %v1194 = vpop.permute.xlu0 %1193
  %1195 = vrot.lane.b32.xlu0 %v410, 8
  %v1196 = vpop.permute.xlu0 %1195
  %1197 = vrot.lane.b32.xlu0 %v411, 8
  %v1198 = vpop.permute.xlu0 %1197
  %1199 = vrot.lane.b32.xlu0 %v412, 8
  %v1200 = vpop.permute.xlu0 %1199
  %1201 = vrot.lane.b32.xlu0 %v413, 8
  %v1202 = vpop.permute.xlu0 %1201
  %1203 = vrot.lane.b32.xlu0 %v414, 8
  %v1204 = vpop.permute.xlu0 %1203
  %1205 = vrot.lane.b32.xlu0 %v415, 8
  %v1206 = vpop.permute.xlu0 %1205
  %1207 = vrot.lane.b32.xlu0 %v416, 8
  %v1208 = vpop.permute.xlu0 %1207
  %1209 = vrot.lane.b32.xlu0 %v417, 8
  %v1210 = vpop.permute.xlu0 %1209
  %1211 = vrot.lane.b32.xlu0 %v418, 8
  %v1212 = vpop.permute.xlu0 %1211
  %1213 = vrot.lane.b32.xlu0 %v419, 8
  %v1214 = vpop.permute.xlu0 %1213
  %1215 = vrot.lane.b32.xlu0 %v420, 8
  %v1216 = vpop.permute.xlu0 %1215
  %1217 = vrot.lane.b32.xlu0 %v421, 8
  %v1218 = vpop.permute.xlu0 %1217
  %1219 = vrot.lane.b32.xlu0 %v422, 8
  %v1220 = vpop.permute.xlu0 %1219
  %1221 = vrot.lane.b32.xlu0 %v423, 8
  %v1222 = vpop.permute.xlu0 %1221
  %1223 = vrot.lane.b32.xlu0 %v424, 8
  %v1224 = vpop.permute.xlu0 %1223
  %1225 = vrot.lane.b32.xlu0 %v425, 8
  %v1226 = vpop.permute.xlu0 %1225
  %1227 = vrot.lane.b32.xlu0 %v426, 8
  %v1228 = vpop.permute.xlu0 %1227
  %1229 = vrot.lane.b32.xlu0 %v427, 8
  %v1230 = vpop.permute.xlu0 %1229
  %1231 = vrot.lane.b32.xlu0 %v428, 8
  %v1232 = vpop.permute.xlu0 %1231
  %1233 = vrot.lane.b32.xlu0 %v429, 8
  %v1234 = vpop.permute.xlu0 %1233
  %1235 = vrot.lane.b32.xlu0 %v430, 8
  %v1236 = vpop.permute.xlu0 %1235
  %1237 = vrot.lane.b32.xlu0 %v431, 8
  %v1238 = vpop.permute.xlu0 %1237
  %1239 = vrot.lane.b32.xlu0 %v432, 8
  %v1240 = vpop.permute.xlu0 %1239
  %1241 = vrot.lane.b32.xlu0 %v433, 8
  %v1242 = vpop.permute.xlu0 %1241
  %1243 = vrot.lane.b32.xlu0 %v434, 8
  %v1244 = vpop.permute.xlu0 %1243
  %1245 = vrot.lane.b32.xlu0 %v435, 8
  %v1246 = vpop.permute.xlu0 %1245
  %1247 = vrot.lane.b32.xlu0 %v436, 8
  %v1248 = vpop.permute.xlu0 %1247
  %1249 = vrot.lane.b32.xlu0 %v437, 8
  %v1250 = vpop.permute.xlu0 %1249
  %1251 = vrot.lane.b32.xlu0 %v438, 8
  %v1252 = vpop.permute.xlu0 %1251
  %1253 = vrot.lane.b32.xlu0 %v439, 8
  %v1254 = vpop.permute.xlu0 %1253
  %1255 = vrot.lane.b32.xlu0 %v440, 8
  %v1256 = vpop.permute.xlu0 %1255
  %1257 = vrot.lane.b32.xlu0 %v441, 8
  %v1258 = vpop.permute.xlu0 %1257
  %1259 = vrot.lane.b32.xlu0 %v442, 8
  %v1260 = vpop.permute.xlu0 %1259
  %1261 = vrot.lane.b32.xlu0 %v443, 8
  %v1262 = vpop.permute.xlu0 %1261
  %1263 = vrot.lane.b32.xlu0 %v444, 8
  %v1264 = vpop.permute.xlu0 %1263
  %1265 = vrot.lane.b32.xlu0 %v445, 8
  %v1266 = vpop.permute.xlu0 %1265
  %1267 = vrot.lane.b32.xlu0 %v446, 8
  %v1268 = vpop.permute.xlu0 %1267
  %1269 = vrot.lane.b32.xlu0 %v447, 8
  %v1270 = vpop.permute.xlu0 %1269
  %1271 = vrot.lane.b32.xlu0 %v448, 8
  %v1272 = vpop.permute.xlu0 %1271
  %1273 = vrot.lane.b32.xlu0 %v449, 8
  %v1274 = vpop.permute.xlu0 %1273
  %1275 = vrot.lane.b32.xlu0 %v450, 8
  %v1276 = vpop.permute.xlu0 %1275
  %1277 = vrot.lane.b32.xlu0 %v451, 8
  %v1278 = vpop.permute.xlu0 %1277
  %1279 = vrot.lane.b32.xlu0 %v452, 8
  %v1280 = vpop.permute.xlu0 %1279
  %1281 = vrot.lane.b32.xlu0 %v453, 8
  %v1282 = vpop.permute.xlu0 %1281
  %1283 = vrot.lane.b32.xlu0 %v454, 8
  %v1284 = vpop.permute.xlu0 %1283
  %1285 = vrot.lane.b32.xlu0 %v455, 8
  %v1286 = vpop.permute.xlu0 %1285
  %1287 = vrot.lane.b32.xlu0 %v456, 8
  %v1288 = vpop.permute.xlu0 %1287
  %1289 = vrot.lane.b32.xlu0 %v457, 8
  %v1290 = vpop.permute.xlu0 %1289
  %1419 = vrot.lane.b32.xlu0 %v458, 12
  %v1420 = vpop.permute.xlu0 %1419
  %1421 = vrot.lane.b32.xlu0 %v459, 12
  %v1422 = vpop.permute.xlu0 %1421
  %1423 = vrot.lane.b32.xlu0 %v460, 12
  %v1424 = vpop.permute.xlu0 %1423
  %1425 = vrot.lane.b32.xlu0 %v461, 12
  %v1426 = vpop.permute.xlu0 %1425
  %1427 = vrot.lane.b32.xlu0 %v462, 12
  %v1428 = vpop.permute.xlu0 %1427
  %1429 = vrot.lane.b32.xlu0 %v463, 12
  %v1430 = vpop.permute.xlu0 %1429
  %1431 = vrot.lane.b32.xlu0 %v464, 12
  %v1432 = vpop.permute.xlu0 %1431
  %1433 = vrot.lane.b32.xlu0 %v465, 12
  %v1434 = vpop.permute.xlu0 %1433
  %1435 = vrot.lane.b32.xlu0 %v466, 12
  %v1436 = vpop.permute.xlu0 %1435
  %1437 = vrot.lane.b32.xlu0 %v467, 12
  %v1438 = vpop.permute.xlu0 %1437
  %1439 = vrot.lane.b32.xlu0 %v468, 12
  %v1440 = vpop.permute.xlu0 %1439
  %1441 = vrot.lane.b32.xlu0 %v469, 12
  %v1442 = vpop.permute.xlu0 %1441
  %1443 = vrot.lane.b32.xlu0 %v470, 12
  %v1444 = vpop.permute.xlu0 %1443
  %1445 = vrot.lane.b32.xlu0 %v471, 12
  %v1446 = vpop.permute.xlu0 %1445
  %1447 = vrot.lane.b32.xlu0 %v472, 12
  %v1448 = vpop.permute.xlu0 %1447
  %1449 = vrot.lane.b32.xlu0 %v473, 12
  %v1450 = vpop.permute.xlu0 %1449
  %1451 = vrot.lane.b32.xlu0 %v474, 12
  %v1452 = vpop.permute.xlu0 %1451
  %1453 = vrot.lane.b32.xlu0 %v475, 12
  %v1454 = vpop.permute.xlu0 %1453
  %1455 = vrot.lane.b32.xlu0 %v476, 12
  %v1456 = vpop.permute.xlu0 %1455
  %1457 = vrot.lane.b32.xlu0 %v477, 12
  %v1458 = vpop.permute.xlu0 %1457
  %1459 = vrot.lane.b32.xlu0 %v478, 12
  %v1460 = vpop.permute.xlu0 %1459
  %1461 = vrot.lane.b32.xlu0 %v479, 12
  %v1462 = vpop.permute.xlu0 %1461
  %1463 = vrot.lane.b32.xlu0 %v480, 12
  %v1464 = vpop.permute.xlu0 %1463
  %1465 = vrot.lane.b32.xlu0 %v481, 12
  %v1466 = vpop.permute.xlu0 %1465
  %1467 = vrot.lane.b32.xlu0 %v482, 12
  %v1468 = vpop.permute.xlu0 %1467
  %1469 = vrot.lane.b32.xlu0 %v483, 12
  %v1470 = vpop.permute.xlu0 %1469
  %1471 = vrot.lane.b32.xlu0 %v484, 12
  %v1472 = vpop.permute.xlu0 %1471
  %1473 = vrot.lane.b32.xlu0 %v485, 12
  %v1474 = vpop.permute.xlu0 %1473
  %1475 = vrot.lane.b32.xlu0 %v486, 12
  %v1476 = vpop.permute.xlu0 %1475
  %1477 = vrot.lane.b32.xlu0 %v487, 12
  %v1478 = vpop.permute.xlu0 %1477
  %1479 = vrot.lane.b32.xlu0 %v488, 12
  %v1480 = vpop.permute.xlu0 %1479
  %1481 = vrot.lane.b32.xlu0 %v489, 12
  %v1482 = vpop.permute.xlu0 %1481
  %1483 = vrot.lane.b32.xlu0 %v490, 12
  %v1484 = vpop.permute.xlu0 %1483
  %1485 = vrot.lane.b32.xlu0 %v491, 12
  %v1486 = vpop.permute.xlu0 %1485
  %1487 = vrot.lane.b32.xlu0 %v492, 12
  %v1488 = vpop.permute.xlu0 %1487
  %1489 = vrot.lane.b32.xlu0 %v493, 12
  %v1490 = vpop.permute.xlu0 %1489
  %1491 = vrot.lane.b32.xlu0 %v494, 12
  %v1492 = vpop.permute.xlu0 %1491
  %1493 = vrot.lane.b32.xlu0 %v495, 12
  %v1494 = vpop.permute.xlu0 %1493
  %1495 = vrot.lane.b32.xlu0 %v496, 12
  %v1496 = vpop.permute.xlu0 %1495
  %1497 = vrot.lane.b32.xlu0 %v497, 12
  %v1498 = vpop.permute.xlu0 %1497
  %1499 = vrot.lane.b32.xlu0 %v498, 12
  %v1500 = vpop.permute.xlu0 %1499
  %1501 = vrot.lane.b32.xlu0 %v499, 12
  %v1502 = vpop.permute.xlu0 %1501
  %1503 = vrot.lane.b32.xlu0 %v500, 12
  %v1504 = vpop.permute.xlu0 %1503
  %1505 = vrot.lane.b32.xlu0 %v501, 12
  %v1506 = vpop.permute.xlu0 %1505
  %1507 = vrot.lane.b32.xlu0 %v502, 12
  %v1508 = vpop.permute.xlu0 %1507
  %1509 = vrot.lane.b32.xlu0 %v503, 12
  %v1510 = vpop.permute.xlu0 %1509
  %1511 = vrot.lane.b32.xlu0 %v504, 12
  %v1512 = vpop.permute.xlu0 %1511
  %1513 = vrot.lane.b32.xlu0 %v505, 12
  %v1514 = vpop.permute.xlu0 %1513
  %1515 = vrot.lane.b32.xlu0 %v506, 12
  %v1516 = vpop.permute.xlu0 %1515
  %1517 = vrot.lane.b32.xlu0 %v507, 12
  %v1518 = vpop.permute.xlu0 %1517
  %1519 = vrot.lane.b32.xlu0 %v508, 12
  %v1520 = vpop.permute.xlu0 %1519
  %1521 = vrot.lane.b32.xlu0 %v509, 12
  %v1522 = vpop.permute.xlu0 %1521
  %1523 = vrot.lane.b32.xlu0 %v510, 12
  %v1524 = vpop.permute.xlu0 %1523
  %1525 = vrot.lane.b32.xlu0 %v511, 12
  %v1526 = vpop.permute.xlu0 %1525
  %1527 = vrot.lane.b32.xlu0 %v512, 12
  %v1528 = vpop.permute.xlu0 %1527
  %1529 = vrot.lane.b32.xlu0 %v513, 12
  %v1530 = vpop.permute.xlu0 %1529
  %1531 = vrot.lane.b32.xlu0 %v514, 12
  %v1532 = vpop.permute.xlu0 %1531
  %1533 = vrot.lane.b32.xlu0 %v515, 12
  %v1534 = vpop.permute.xlu0 %1533
  %1535 = vrot.lane.b32.xlu0 %v516, 12
  %v1536 = vpop.permute.xlu0 %1535
  %1537 = vrot.lane.b32.xlu0 %v517, 12
  %v1538 = vpop.permute.xlu0 %1537
  %1539 = vrot.lane.b32.xlu0 %v518, 12
  %v1540 = vpop.permute.xlu0 %1539
  %1541 = vrot.lane.b32.xlu0 %v519, 12
  %v1542 = vpop.permute.xlu0 %1541
  %1543 = vrot.lane.b32.xlu0 %v520, 12
  %v1544 = vpop.permute.xlu0 %1543
  %1545 = vrot.lane.b32.xlu0 %v521, 12
  %v1546 = vpop.permute.xlu0 %1545
  %1675 = vrot.lane.b32.xlu0 %v522, 16
  %v1676 = vpop.permute.xlu0 %1675
  %1677 = vrot.lane.b32.xlu0 %v523, 16
  %v1678 = vpop.permute.xlu0 %1677
  %1679 = vrot.lane.b32.xlu0 %v524, 16
  %v1680 = vpop.permute.xlu0 %1679
  %1681 = vrot.lane.b32.xlu0 %v525, 16
  %v1682 = vpop.permute.xlu0 %1681
  %1683 = vrot.lane.b32.xlu0 %v526, 16
  %v1684 = vpop.permute.xlu0 %1683
  %1685 = vrot.lane.b32.xlu0 %v527, 16
  %v1686 = vpop.permute.xlu0 %1685
  %1687 = vrot.lane.b32.xlu0 %v528, 16
  %v1688 = vpop.permute.xlu0 %1687
  %1689 = vrot.lane.b32.xlu0 %v529, 16
  %v1690 = vpop.permute.xlu0 %1689
  %1691 = vrot.lane.b32.xlu0 %v530, 16
  %v1692 = vpop.permute.xlu0 %1691
  %1693 = vrot.lane.b32.xlu0 %v531, 16
  %v1694 = vpop.permute.xlu0 %1693
  %1695 = vrot.lane.b32.xlu0 %v532, 16
  %v1696 = vpop.permute.xlu0 %1695
  %1697 = vrot.lane.b32.xlu0 %v533, 16
  %v1698 = vpop.permute.xlu0 %1697
  %1699 = vrot.lane.b32.xlu0 %v534, 16
  %v1700 = vpop.permute.xlu0 %1699
  %1701 = vrot.lane.b32.xlu0 %v535, 16
  %v1702 = vpop.permute.xlu0 %1701
  %1703 = vrot.lane.b32.xlu0 %v536, 16
  %v1704 = vpop.permute.xlu0 %1703
  %1705 = vrot.lane.b32.xlu0 %v537, 16
  %v1706 = vpop.permute.xlu0 %1705
  %1707 = vrot.lane.b32.xlu0 %v538, 16
  %v1708 = vpop.permute.xlu0 %1707
  %1709 = vrot.lane.b32.xlu0 %v539, 16
  %v1710 = vpop.permute.xlu0 %1709
  %1711 = vrot.lane.b32.xlu0 %v540, 16
  %v1712 = vpop.permute.xlu0 %1711
  %1713 = vrot.lane.b32.xlu0 %v541, 16
  %v1714 = vpop.permute.xlu0 %1713
  %1715 = vrot.lane.b32.xlu0 %v542, 16
  %v1716 = vpop.permute.xlu0 %1715
  %1717 = vrot.lane.b32.xlu0 %v543, 16
  %v1718 = vpop.permute.xlu0 %1717
  %1719 = vrot.lane.b32.xlu0 %v544, 16
  %v1720 = vpop.permute.xlu0 %1719
  %1721 = vrot.lane.b32.xlu0 %v545, 16
  %v1722 = vpop.permute.xlu0 %1721
  %1723 = vrot.lane.b32.xlu0 %v546, 16
  %v1724 = vpop.permute.xlu0 %1723
  %1725 = vrot.lane.b32.xlu0 %v547, 16
  %v1726 = vpop.permute.xlu0 %1725
  %1727 = vrot.lane.b32.xlu0 %v548, 16
  %v1728 = vpop.permute.xlu0 %1727
  %1729 = vrot.lane.b32.xlu0 %v549, 16
  %v1730 = vpop.permute.xlu0 %1729
  %1731 = vrot.lane.b32.xlu0 %v550, 16
  %v1732 = vpop.permute.xlu0 %1731
  %1733 = vrot.lane.b32.xlu0 %v551, 16
  %v1734 = vpop.permute.xlu0 %1733
  %1735 = vrot.lane.b32.xlu0 %v552, 16
  %v1736 = vpop.permute.xlu0 %1735
  %1737 = vrot.lane.b32.xlu0 %v553, 16
  %v1738 = vpop.permute.xlu0 %1737
  %1739 = vrot.lane.b32.xlu0 %v554, 16
  %v1740 = vpop.permute.xlu0 %1739
  %1741 = vrot.lane.b32.xlu0 %v555, 16
  %v1742 = vpop.permute.xlu0 %1741
  %1743 = vrot.lane.b32.xlu0 %v556, 16
  %v1744 = vpop.permute.xlu0 %1743
  %1745 = vrot.lane.b32.xlu0 %v557, 16
  %v1746 = vpop.permute.xlu0 %1745
  %1747 = vrot.lane.b32.xlu0 %v558, 16
  %v1748 = vpop.permute.xlu0 %1747
  %1749 = vrot.lane.b32.xlu0 %v559, 16
  %v1750 = vpop.permute.xlu0 %1749
  %1751 = vrot.lane.b32.xlu0 %v560, 16
  %v1752 = vpop.permute.xlu0 %1751
  %1753 = vrot.lane.b32.xlu0 %v561, 16
  %v1754 = vpop.permute.xlu0 %1753
  %1755 = vrot.lane.b32.xlu0 %v562, 16
  %v1756 = vpop.permute.xlu0 %1755
  %1757 = vrot.lane.b32.xlu0 %v563, 16
  %v1758 = vpop.permute.xlu0 %1757
  %1759 = vrot.lane.b32.xlu0 %v564, 16
  %v1760 = vpop.permute.xlu0 %1759
  %1761 = vrot.lane.b32.xlu0 %v565, 16
  %v1762 = vpop.permute.xlu0 %1761
  %1763 = vrot.lane.b32.xlu0 %v566, 16
  %v1764 = vpop.permute.xlu0 %1763
  %1765 = vrot.lane.b32.xlu0 %v567, 16
  %v1766 = vpop.permute.xlu0 %1765
  %1767 = vrot.lane.b32.xlu0 %v568, 16
  %v1768 = vpop.permute.xlu0 %1767
  %1769 = vrot.lane.b32.xlu0 %v569, 16
  %v1770 = vpop.permute.xlu0 %1769
  %1771 = vrot.lane.b32.xlu0 %v570, 16
  %v1772 = vpop.permute.xlu0 %1771
  %1773 = vrot.lane.b32.xlu0 %v571, 16
  %v1774 = vpop.permute.xlu0 %1773
  %1775 = vrot.lane.b32.xlu0 %v572, 16
  %v1776 = vpop.permute.xlu0 %1775
  %1777 = vrot.lane.b32.xlu0 %v573, 16
  %v1778 = vpop.permute.xlu0 %1777
  %1779 = vrot.lane.b32.xlu0 %v574, 16
  %v1780 = vpop.permute.xlu0 %1779
  %1781 = vrot.lane.b32.xlu0 %v575, 16
  %v1782 = vpop.permute.xlu0 %1781
  %1783 = vrot.lane.b32.xlu0 %v576, 16
  %v1784 = vpop.permute.xlu0 %1783
  %1785 = vrot.lane.b32.xlu0 %v577, 16
  %v1786 = vpop.permute.xlu0 %1785
  %1787 = vrot.lane.b32.xlu0 %v578, 16
  %v1788 = vpop.permute.xlu0 %1787
  %1789 = vrot.lane.b32.xlu0 %v579, 16
  %v1790 = vpop.permute.xlu0 %1789
  %1791 = vrot.lane.b32.xlu0 %v580, 16
  %v1792 = vpop.permute.xlu0 %1791
  %1793 = vrot.lane.b32.xlu0 %v581, 16
  %v1794 = vpop.permute.xlu0 %1793
  %1795 = vrot.lane.b32.xlu0 %v582, 16
  %v1796 = vpop.permute.xlu0 %1795
  %1797 = vrot.lane.b32.xlu0 %v583, 16
  %v1798 = vpop.permute.xlu0 %1797
  %1799 = vrot.lane.b32.xlu0 %v584, 16
  %v1800 = vpop.permute.xlu0 %1799
  %1801 = vrot.lane.b32.xlu0 %v585, 16
  %v1802 = vpop.permute.xlu0 %1801
  %1931 = vrot.lane.b32.xlu0 %v586, 20
  %v1932 = vpop.permute.xlu0 %1931
  %1933 = vrot.lane.b32.xlu0 %v587, 20
  %v1934 = vpop.permute.xlu0 %1933
  %1935 = vrot.lane.b32.xlu0 %v588, 20
  %v1936 = vpop.permute.xlu0 %1935
  %1937 = vrot.lane.b32.xlu0 %v589, 20
  %v1938 = vpop.permute.xlu0 %1937
  %1939 = vrot.lane.b32.xlu0 %v590, 20
  %v1940 = vpop.permute.xlu0 %1939
  %1941 = vrot.lane.b32.xlu0 %v591, 20
  %v1942 = vpop.permute.xlu0 %1941
  %1943 = vrot.lane.b32.xlu0 %v592, 20
  %v1944 = vpop.permute.xlu0 %1943
  %1945 = vrot.lane.b32.xlu0 %v593, 20
  %v1946 = vpop.permute.xlu0 %1945
  %1947 = vrot.lane.b32.xlu0 %v594, 20
  %v1948 = vpop.permute.xlu0 %1947
  %1949 = vrot.lane.b32.xlu0 %v595, 20
  %v1950 = vpop.permute.xlu0 %1949
  %1951 = vrot.lane.b32.xlu0 %v596, 20
  %v1952 = vpop.permute.xlu0 %1951
  %1953 = vrot.lane.b32.xlu0 %v597, 20
  %v1954 = vpop.permute.xlu0 %1953
  %1955 = vrot.lane.b32.xlu0 %v598, 20
  %v1956 = vpop.permute.xlu0 %1955
  %1957 = vrot.lane.b32.xlu0 %v599, 20
  %v1958 = vpop.permute.xlu0 %1957
  %1959 = vrot.lane.b32.xlu0 %v600, 20
  %v1960 = vpop.permute.xlu0 %1959
  %1961 = vrot.lane.b32.xlu0 %v601, 20
  %v1962 = vpop.permute.xlu0 %1961
  %1963 = vrot.lane.b32.xlu0 %v602, 20
  %v1964 = vpop.permute.xlu0 %1963
  %1965 = vrot.lane.b32.xlu0 %v603, 20
  %v1966 = vpop.permute.xlu0 %1965
  %1967 = vrot.lane.b32.xlu0 %v604, 20
  %v1968 = vpop.permute.xlu0 %1967
  %1969 = vrot.lane.b32.xlu0 %v605, 20
  %v1970 = vpop.permute.xlu0 %1969
  %1971 = vrot.lane.b32.xlu0 %v606, 20
  %v1972 = vpop.permute.xlu0 %1971
  %1973 = vrot.lane.b32.xlu0 %v607, 20
  %v1974 = vpop.permute.xlu0 %1973
  %1975 = vrot.lane.b32.xlu0 %v608, 20
  %v1976 = vpop.permute.xlu0 %1975
  %1977 = vrot.lane.b32.xlu0 %v609, 20
  %v1978 = vpop.permute.xlu0 %1977
  %1979 = vrot.lane.b32.xlu0 %v610, 20
  %v1980 = vpop.permute.xlu0 %1979
  %1981 = vrot.lane.b32.xlu0 %v611, 20
  %v1982 = vpop.permute.xlu0 %1981
  %1983 = vrot.lane.b32.xlu0 %v612, 20
  %v1984 = vpop.permute.xlu0 %1983
  %1985 = vrot.lane.b32.xlu0 %v613, 20
  %v1986 = vpop.permute.xlu0 %1985
  %1987 = vrot.lane.b32.xlu0 %v614, 20
  %v1988 = vpop.permute.xlu0 %1987
  %1989 = vrot.lane.b32.xlu0 %v615, 20
  %v1990 = vpop.permute.xlu0 %1989
  %1991 = vrot.lane.b32.xlu0 %v616, 20
  %v1992 = vpop.permute.xlu0 %1991
  %1993 = vrot.lane.b32.xlu0 %v617, 20
  %v1994 = vpop.permute.xlu0 %1993
  %1995 = vrot.lane.b32.xlu0 %v618, 20
  %v1996 = vpop.permute.xlu0 %1995
  %1997 = vrot.lane.b32.xlu0 %v619, 20
  %v1998 = vpop.permute.xlu0 %1997
  %1999 = vrot.lane.b32.xlu0 %v620, 20
  %v2000 = vpop.permute.xlu0 %1999
  %2001 = vrot.lane.b32.xlu0 %v621, 20
  %v2002 = vpop.permute.xlu0 %2001
  %2003 = vrot.lane.b32.xlu0 %v622, 20
  %v2004 = vpop.permute.xlu0 %2003
  %2005 = vrot.lane.b32.xlu0 %v623, 20
  %v2006 = vpop.permute.xlu0 %2005
  %2007 = vrot.lane.b32.xlu0 %v624, 20
  %v2008 = vpop.permute.xlu0 %2007
  %2009 = vrot.lane.b32.xlu0 %v625, 20
  %v2010 = vpop.permute.xlu0 %2009
  %2011 = vrot.lane.b32.xlu0 %v626, 20
  %v2012 = vpop.permute.xlu0 %2011
  %2013 = vrot.lane.b32.xlu0 %v627, 20
  %v2014 = vpop.permute.xlu0 %2013
  %2015 = vrot.lane.b32.xlu0 %v628, 20
  %v2016 = vpop.permute.xlu0 %2015
  %2017 = vrot.lane.b32.xlu0 %v629, 20
  %v2018 = vpop.permute.xlu0 %2017
  %2019 = vrot.lane.b32.xlu0 %v630, 20
  %v2020 = vpop.permute.xlu0 %2019
  %2021 = vrot.lane.b32.xlu0 %v631, 20
  %v2022 = vpop.permute.xlu0 %2021
  %2023 = vrot.lane.b32.xlu0 %v632, 20
  %v2024 = vpop.permute.xlu0 %2023
  %2025 = vrot.lane.b32.xlu0 %v633, 20
  %v2026 = vpop.permute.xlu0 %2025
  %2027 = vrot.lane.b32.xlu0 %v634, 20
  %v2028 = vpop.permute.xlu0 %2027
  %2029 = vrot.lane.b32.xlu0 %v635, 20
  %v2030 = vpop.permute.xlu0 %2029
  %2031 = vrot.lane.b32.xlu0 %v636, 20
  %v2032 = vpop.permute.xlu0 %2031
  %2033 = vrot.lane.b32.xlu0 %v637, 20
  %v2034 = vpop.permute.xlu0 %2033
  %2035 = vrot.lane.b32.xlu0 %v638, 20
  %v2036 = vpop.permute.xlu0 %2035
  %2037 = vrot.lane.b32.xlu0 %v639, 20
  %v2038 = vpop.permute.xlu0 %2037
  %2039 = vrot.lane.b32.xlu0 %v640, 20
  %v2040 = vpop.permute.xlu0 %2039
  %2041 = vrot.lane.b32.xlu0 %v641, 20
  %v2042 = vpop.permute.xlu0 %2041
  %2043 = vrot.lane.b32.xlu0 %v642, 20
  %v2044 = vpop.permute.xlu0 %2043
  %2045 = vrot.lane.b32.xlu0 %v643, 20
  %v2046 = vpop.permute.xlu0 %2045
  %2047 = vrot.lane.b32.xlu0 %v644, 20
  %v2048 = vpop.permute.xlu0 %2047
  %2049 = vrot.lane.b32.xlu0 %v645, 20
  %v2050 = vpop.permute.xlu0 %2049
  %2051 = vrot.lane.b32.xlu0 %v646, 20
  %v2052 = vpop.permute.xlu0 %2051
  %2053 = vrot.lane.b32.xlu0 %v647, 20
  %v2054 = vpop.permute.xlu0 %2053
  %2055 = vrot.lane.b32.xlu0 %v648, 20
  %v2056 = vpop.permute.xlu0 %2055
  %2057 = vrot.lane.b32.xlu0 %v649, 20
  %v2058 = vpop.permute.xlu0 %2057
  %2187 = vrot.lane.b32.xlu0 %v651, 24
  %v2188 = vpop.permute.xlu0 %2187
  %2189 = vrot.lane.b32.xlu0 %v652, 24
  %v2190 = vpop.permute.xlu0 %2189
  %2191 = vrot.lane.b32.xlu0 %v653, 24
  %v2192 = vpop.permute.xlu0 %2191
  %2193 = vrot.lane.b32.xlu0 %v654, 24
  %v2194 = vpop.permute.xlu0 %2193
  %2195 = vrot.lane.b32.xlu0 %v655, 24
  %v2196 = vpop.permute.xlu0 %2195
  %2197 = vrot.lane.b32.xlu0 %v656, 24
  %v2198 = vpop.permute.xlu0 %2197
  %2199 = vrot.lane.b32.xlu0 %v657, 24
  %v2200 = vpop.permute.xlu0 %2199
  %2201 = vrot.lane.b32.xlu0 %v658, 24
  %v2202 = vpop.permute.xlu0 %2201
  %2203 = vrot.lane.b32.xlu0 %v659, 24
  %v2204 = vpop.permute.xlu0 %2203
  %2205 = vrot.lane.b32.xlu0 %v660, 24
  %v2206 = vpop.permute.xlu0 %2205
  %2207 = vrot.lane.b32.xlu0 %v661, 24
  %v2208 = vpop.permute.xlu0 %2207
  %2209 = vrot.lane.b32.xlu0 %v662, 24
  %v2210 = vpop.permute.xlu0 %2209
  %2211 = vrot.lane.b32.xlu0 %v663, 24
  %v2212 = vpop.permute.xlu0 %2211
  %2213 = vrot.lane.b32.xlu0 %v664, 24
  %v2214 = vpop.permute.xlu0 %2213
  %2215 = vrot.lane.b32.xlu0 %v665, 24
  %v2216 = vpop.permute.xlu0 %2215
  %2217 = vrot.lane.b32.xlu0 %v666, 24
  %v2218 = vpop.permute.xlu0 %2217
  %2219 = vrot.lane.b32.xlu0 %v667, 24
  %v2220 = vpop.permute.xlu0 %2219
  %2221 = vrot.lane.b32.xlu0 %v668, 24
  %v2222 = vpop.permute.xlu0 %2221
  %2223 = vrot.lane.b32.xlu0 %v669, 24
  %v2224 = vpop.permute.xlu0 %2223
  %2225 = vrot.lane.b32.xlu0 %v670, 24
  %v2226 = vpop.permute.xlu0 %2225
  %2227 = vrot.lane.b32.xlu0 %v671, 24
  %v2228 = vpop.permute.xlu0 %2227
  %2229 = vrot.lane.b32.xlu0 %v672, 24
  %v2230 = vpop.permute.xlu0 %2229
  %2231 = vrot.lane.b32.xlu0 %v673, 24
  %v2232 = vpop.permute.xlu0 %2231
  %2233 = vrot.lane.b32.xlu0 %v674, 24
  %v2234 = vpop.permute.xlu0 %2233
  %2235 = vrot.lane.b32.xlu0 %v675, 24
  %v2236 = vpop.permute.xlu0 %2235
  %2237 = vrot.lane.b32.xlu0 %v676, 24
  %v2238 = vpop.permute.xlu0 %2237
  %2239 = vrot.lane.b32.xlu0 %v677, 24
  %v2240 = vpop.permute.xlu0 %2239
  %2241 = vrot.lane.b32.xlu0 %v678, 24
  %v2242 = vpop.permute.xlu0 %2241
  %2243 = vrot.lane.b32.xlu0 %v679, 24
  %v2244 = vpop.permute.xlu0 %2243
  %2245 = vrot.lane.b32.xlu0 %v680, 24
  %v2246 = vpop.permute.xlu0 %2245
  %2247 = vrot.lane.b32.xlu0 %v681, 24
  %v2248 = vpop.permute.xlu0 %2247
  %2249 = vrot.lane.b32.xlu0 %v682, 24
  %v2250 = vpop.permute.xlu0 %2249
  %2251 = vrot.lane.b32.xlu0 %v683, 24
  %v2252 = vpop.permute.xlu0 %2251
  %2253 = vrot.lane.b32.xlu0 %v684, 24
  %v2254 = vpop.permute.xlu0 %2253
  %2255 = vrot.lane.b32.xlu0 %v685, 24
  %v2256 = vpop.permute.xlu0 %2255
  %2257 = vrot.lane.b32.xlu0 %v686, 24
  %v2258 = vpop.permute.xlu0 %2257
  %2259 = vrot.lane.b32.xlu0 %v687, 24
  %v2260 = vpop.permute.xlu0 %2259
  %2261 = vrot.lane.b32.xlu0 %v688, 24
  %v2262 = vpop.permute.xlu0 %2261
  %2263 = vrot.lane.b32.xlu0 %v689, 24
  %v2264 = vpop.permute.xlu0 %2263
  %2265 = vrot.lane.b32.xlu0 %v690, 24
  %v2266 = vpop.permute.xlu0 %2265
  %2267 = vrot.lane.b32.xlu0 %v691, 24
  %v2268 = vpop.permute.xlu0 %2267
  %2269 = vrot.lane.b32.xlu0 %v692, 24
  %v2270 = vpop.permute.xlu0 %2269
  %2271 = vrot.lane.b32.xlu0 %v693, 24
  %v2272 = vpop.permute.xlu0 %2271
  %2273 = vrot.lane.b32.xlu0 %v694, 24
  %v2274 = vpop.permute.xlu0 %2273
  %2275 = vrot.lane.b32.xlu0 %v695, 24
  %v2276 = vpop.permute.xlu0 %2275
  %2277 = vrot.lane.b32.xlu0 %v696, 24
  %v2278 = vpop.permute.xlu0 %2277
  %2279 = vrot.lane.b32.xlu0 %v697, 24
  %v2280 = vpop.permute.xlu0 %2279
  %2281 = vrot.lane.b32.xlu0 %v698, 24
  %v2282 = vpop.permute.xlu0 %2281
  %2283 = vrot.lane.b32.xlu0 %v699, 24
  %v2284 = vpop.permute.xlu0 %2283
  %2285 = vrot.lane.b32.xlu0 %v700, 24
  %v2286 = vpop.permute.xlu0 %2285
  %2287 = vrot.lane.b32.xlu0 %v701, 24
  %v2288 = vpop.permute.xlu0 %2287
  %2289 = vrot.lane.b32.xlu0 %v702, 24
  %v2290 = vpop.permute.xlu0 %2289
  %2291 = vrot.lane.b32.xlu0 %v703, 24
  %v2292 = vpop.permute.xlu0 %2291
  %2293 = vrot.lane.b32.xlu0 %v704, 24
  %v2294 = vpop.permute.xlu0 %2293
  %2295 = vrot.lane.b32.xlu0 %v705, 24
  %v2296 = vpop.permute.xlu0 %2295
  %2297 = vrot.lane.b32.xlu0 %v706, 24
  %v2298 = vpop.permute.xlu0 %2297
  %2299 = vrot.lane.b32.xlu0 %v707, 24
  %v2300 = vpop.permute.xlu0 %2299
  %2301 = vrot.lane.b32.xlu0 %v708, 24
  %v2302 = vpop.permute.xlu0 %2301
  %2303 = vrot.lane.b32.xlu0 %v709, 24
  %v2304 = vpop.permute.xlu0 %2303
  %2305 = vrot.lane.b32.xlu0 %v710, 24
  %v2306 = vpop.permute.xlu0 %2305
  %2307 = vrot.lane.b32.xlu0 %v711, 24
  %v2308 = vpop.permute.xlu0 %2307
  %2309 = vrot.lane.b32.xlu0 %v712, 24
  %v2310 = vpop.permute.xlu0 %2309
  %2311 = vrot.lane.b32.xlu0 %v713, 24
  %v2312 = vpop.permute.xlu0 %2311
  %2313 = vrot.lane.b32.xlu0 %v714, 24
  %v2314 = vpop.permute.xlu0 %2313
  %2443 = vrot.lane.b32.xlu0 %v715, 28
  %v2444 = vpop.permute.xlu0 %2443
  %2445 = vrot.lane.b32.xlu0 %v716, 28
  %v2446 = vpop.permute.xlu0 %2445
  %2447 = vrot.lane.b32.xlu0 %v717, 28
  %v2448 = vpop.permute.xlu0 %2447
  %2449 = vrot.lane.b32.xlu0 %v718, 28
  %v2450 = vpop.permute.xlu0 %2449
  %2451 = vrot.lane.b32.xlu0 %v719, 28
  %v2452 = vpop.permute.xlu0 %2451
  %2453 = vrot.lane.b32.xlu0 %v720, 28
  %v2454 = vpop.permute.xlu0 %2453
  %2455 = vrot.lane.b32.xlu0 %v721, 28
  %v2456 = vpop.permute.xlu0 %2455
  %2457 = vrot.lane.b32.xlu0 %v722, 28
  %v2458 = vpop.permute.xlu0 %2457
  %2459 = vrot.lane.b32.xlu0 %v723, 28
  %v2460 = vpop.permute.xlu0 %2459
  %2461 = vrot.lane.b32.xlu0 %v724, 28
  %v2462 = vpop.permute.xlu0 %2461
  %2463 = vrot.lane.b32.xlu0 %v725, 28
  %v2464 = vpop.permute.xlu0 %2463
  %2465 = vrot.lane.b32.xlu0 %v726, 28
  %v2466 = vpop.permute.xlu0 %2465
  %2467 = vrot.lane.b32.xlu0 %v727, 28
  %v2468 = vpop.permute.xlu0 %2467
  %2469 = vrot.lane.b32.xlu0 %v728, 28
  %v2470 = vpop.permute.xlu0 %2469
  %2471 = vrot.lane.b32.xlu0 %v729, 28
  %v2472 = vpop.permute.xlu0 %2471
  %2473 = vrot.lane.b32.xlu0 %v730, 28
  %v2474 = vpop.permute.xlu0 %2473
  %2475 = vrot.lane.b32.xlu0 %v731, 28
  %v2476 = vpop.permute.xlu0 %2475
  %2477 = vrot.lane.b32.xlu0 %v732, 28
  %v2478 = vpop.permute.xlu0 %2477
  %2479 = vrot.lane.b32.xlu0 %v733, 28
  %v2480 = vpop.permute.xlu0 %2479
  %2481 = vrot.lane.b32.xlu0 %v734, 28
  %v2482 = vpop.permute.xlu0 %2481
  %2483 = vrot.lane.b32.xlu0 %v735, 28
  %v2484 = vpop.permute.xlu0 %2483
  %2485 = vrot.lane.b32.xlu0 %v736, 28
  %v2486 = vpop.permute.xlu0 %2485
  %2487 = vrot.lane.b32.xlu0 %v737, 28
  %v2488 = vpop.permute.xlu0 %2487
  %2489 = vrot.lane.b32.xlu0 %v738, 28
  %v2490 = vpop.permute.xlu0 %2489
  %2491 = vrot.lane.b32.xlu0 %v739, 28
  %v2492 = vpop.permute.xlu0 %2491
  %2493 = vrot.lane.b32.xlu0 %v740, 28
  %v2494 = vpop.permute.xlu0 %2493
  %2495 = vrot.lane.b32.xlu0 %v741, 28
  %v2496 = vpop.permute.xlu0 %2495
  %2497 = vrot.lane.b32.xlu0 %v742, 28
  %v2498 = vpop.permute.xlu0 %2497
  %2499 = vrot.lane.b32.xlu0 %v743, 28
  %v2500 = vpop.permute.xlu0 %2499
  %2501 = vrot.lane.b32.xlu0 %v744, 28
  %v2502 = vpop.permute.xlu0 %2501
  %2503 = vrot.lane.b32.xlu0 %v745, 28
  %v2504 = vpop.permute.xlu0 %2503
  %2505 = vrot.lane.b32.xlu0 %v746, 28
  %v2506 = vpop.permute.xlu0 %2505
  %2507 = vrot.lane.b32.xlu0 %v747, 28
  %v2508 = vpop.permute.xlu0 %2507
  %2509 = vrot.lane.b32.xlu0 %v748, 28
  %v2510 = vpop.permute.xlu0 %2509
  %2511 = vrot.lane.b32.xlu0 %v749, 28
  %v2512 = vpop.permute.xlu0 %2511
  %2513 = vrot.lane.b32.xlu0 %v750, 28
  %v2514 = vpop.permute.xlu0 %2513
  %2515 = vrot.lane.b32.xlu0 %v751, 28
  %v2516 = vpop.permute.xlu0 %2515
  %2517 = vrot.lane.b32.xlu0 %v752, 28
  %v2518 = vpop.permute.xlu0 %2517
  %2519 = vrot.lane.b32.xlu0 %v753, 28
  %v2520 = vpop.permute.xlu0 %2519
  %2521 = vrot.lane.b32.xlu0 %v754, 28
  %v2522 = vpop.permute.xlu0 %2521
  %2523 = vrot.lane.b32.xlu0 %v755, 28
  %v2524 = vpop.permute.xlu0 %2523
  %2525 = vrot.lane.b32.xlu0 %v756, 28
  %v2526 = vpop.permute.xlu0 %2525
  %2527 = vrot.lane.b32.xlu0 %v757, 28
  %v2528 = vpop.permute.xlu0 %2527
  %2529 = vrot.lane.b32.xlu0 %v758, 28
  %v2530 = vpop.permute.xlu0 %2529
  %2531 = vrot.lane.b32.xlu0 %v759, 28
  %v2532 = vpop.permute.xlu0 %2531
  %2533 = vrot.lane.b32.xlu0 %v760, 28
  %v2534 = vpop.permute.xlu0 %2533
  %2535 = vrot.lane.b32.xlu0 %v761, 28
  %v2536 = vpop.permute.xlu0 %2535
  %2537 = vrot.lane.b32.xlu0 %v762, 28
  %v2538 = vpop.permute.xlu0 %2537
  %2539 = vrot.lane.b32.xlu0 %v763, 28
  %v2540 = vpop.permute.xlu0 %2539
  %2541 = vrot.lane.b32.xlu0 %v764, 28
  %v2542 = vpop.permute.xlu0 %2541
  %2543 = vrot.lane.b32.xlu0 %v765, 28
  %v2544 = vpop.permute.xlu0 %2543
  %2545 = vrot.lane.b32.xlu0 %v766, 28
  %v2546 = vpop.permute.xlu0 %2545
  %2547 = vrot.lane.b32.xlu0 %v767, 28
  %v2548 = vpop.permute.xlu0 %2547
  %2549 = vrot.lane.b32.xlu0 %v768, 28
  %v2550 = vpop.permute.xlu0 %2549
  %2551 = vrot.lane.b32.xlu0 %v769, 28
  %v2552 = vpop.permute.xlu0 %2551
  %2553 = vrot.lane.b32.xlu0 %v770, 28
  %v2554 = vpop.permute.xlu0 %2553
  %2555 = vrot.lane.b32.xlu0 %v771, 28
  %v2556 = vpop.permute.xlu0 %2555
  %2557 = vrot.lane.b32.xlu0 %v772, 28
  %v2558 = vpop.permute.xlu0 %2557
  %2559 = vrot.lane.b32.xlu0 %v773, 28
  %v2560 = vpop.permute.xlu0 %2559
  %2561 = vrot.lane.b32.xlu0 %v774, 28
  %v2562 = vpop.permute.xlu0 %2561
  %2563 = vrot.lane.b32.xlu0 %v775, 28
  %v2564 = vpop.permute.xlu0 %2563
  %2565 = vrot.lane.b32.xlu0 %v776, 28
  %v2566 = vpop.permute.xlu0 %2565
  %2567 = vrot.lane.b32.xlu0 %v777, 28
  %v2568 = vpop.permute.xlu0 %2567
  %2569 = vrot.lane.b32.xlu0 %v778, 28
  %v2570 = vpop.permute.xlu0 %2569
  %2699 = vrot.lane.b32.xlu0 %v779, 32
  %v2700 = vpop.permute.xlu0 %2699
  %2701 = vrot.lane.b32.xlu0 %v780, 32
  %v2702 = vpop.permute.xlu0 %2701
  %2703 = vrot.lane.b32.xlu0 %v781, 32
  %v2704 = vpop.permute.xlu0 %2703
  %2705 = vrot.lane.b32.xlu0 %v782, 32
  %v2706 = vpop.permute.xlu0 %2705
  %2707 = vrot.lane.b32.xlu0 %v783, 32
  %v2708 = vpop.permute.xlu0 %2707
  %2709 = vrot.lane.b32.xlu0 %v784, 32
  %v2710 = vpop.permute.xlu0 %2709
  %2711 = vrot.lane.b32.xlu0 %v785, 32
  %v2712 = vpop.permute.xlu0 %2711
  %2713 = vrot.lane.b32.xlu0 %v786, 32
  %v2714 = vpop.permute.xlu0 %2713
  %2715 = vrot.lane.b32.xlu0 %v787, 32
  %v2716 = vpop.permute.xlu0 %2715
  %2717 = vrot.lane.b32.xlu0 %v788, 32
  %v2718 = vpop.permute.xlu0 %2717
  %2719 = vrot.lane.b32.xlu0 %v789, 32
  %v2720 = vpop.permute.xlu0 %2719
  %2721 = vrot.lane.b32.xlu0 %v790, 32
  %v2722 = vpop.permute.xlu0 %2721
  %2723 = vrot.lane.b32.xlu0 %v791, 32
  %v2724 = vpop.permute.xlu0 %2723
  %2725 = vrot.lane.b32.xlu0 %v792, 32
  %v2726 = vpop.permute.xlu0 %2725
  %2727 = vrot.lane.b32.xlu0 %v793, 32
  %v2728 = vpop.permute.xlu0 %2727
  %2729 = vrot.lane.b32.xlu0 %v794, 32
  %v2730 = vpop.permute.xlu0 %2729
  %2731 = vrot.lane.b32.xlu0 %v795, 32
  %v2732 = vpop.permute.xlu0 %2731
  %2733 = vrot.lane.b32.xlu0 %v796, 32
  %v2734 = vpop.permute.xlu0 %2733
  %2735 = vrot.lane.b32.xlu0 %v797, 32
  %v2736 = vpop.permute.xlu0 %2735
  %2737 = vrot.lane.b32.xlu0 %v798, 32
  %v2738 = vpop.permute.xlu0 %2737
  %2739 = vrot.lane.b32.xlu0 %v799, 32
  %v2740 = vpop.permute.xlu0 %2739
  %2741 = vrot.lane.b32.xlu0 %v800, 32
  %v2742 = vpop.permute.xlu0 %2741
  %2743 = vrot.lane.b32.xlu0 %v801, 32
  %v2744 = vpop.permute.xlu0 %2743
  %2745 = vrot.lane.b32.xlu0 %v802, 32
  %v2746 = vpop.permute.xlu0 %2745
  %2747 = vrot.lane.b32.xlu0 %v803, 32
  %v2748 = vpop.permute.xlu0 %2747
  %2749 = vrot.lane.b32.xlu0 %v804, 32
  %v2750 = vpop.permute.xlu0 %2749
  %2751 = vrot.lane.b32.xlu0 %v805, 32
  %v2752 = vpop.permute.xlu0 %2751
  %2753 = vrot.lane.b32.xlu0 %v806, 32
  %v2754 = vpop.permute.xlu0 %2753
  %2755 = vrot.lane.b32.xlu0 %v807, 32
  %v2756 = vpop.permute.xlu0 %2755
  %2757 = vrot.lane.b32.xlu0 %v808, 32
  %v2758 = vpop.permute.xlu0 %2757
  %2759 = vrot.lane.b32.xlu0 %v809, 32
  %v2760 = vpop.permute.xlu0 %2759
  %2761 = vrot.lane.b32.xlu0 %v810, 32
  %v2762 = vpop.permute.xlu0 %2761
  %2763 = vrot.lane.b32.xlu0 %v811, 32
  %v2764 = vpop.permute.xlu0 %2763
  %2765 = vrot.lane.b32.xlu0 %v812, 32
  %v2766 = vpop.permute.xlu0 %2765
  %2767 = vrot.lane.b32.xlu0 %v813, 32
  %v2768 = vpop.permute.xlu0 %2767
  %2769 = vrot.lane.b32.xlu0 %v814, 32
  %v2770 = vpop.permute.xlu0 %2769
  %2771 = vrot.lane.b32.xlu0 %v815, 32
  %v2772 = vpop.permute.xlu0 %2771
  %2773 = vrot.lane.b32.xlu0 %v816, 32
  %v2774 = vpop.permute.xlu0 %2773
  %2775 = vrot.lane.b32.xlu0 %v817, 32
  %v2776 = vpop.permute.xlu0 %2775
  %2777 = vrot.lane.b32.xlu0 %v818, 32
  %v2778 = vpop.permute.xlu0 %2777
  %2779 = vrot.lane.b32.xlu0 %v819, 32
  %v2780 = vpop.permute.xlu0 %2779
  %2781 = vrot.lane.b32.xlu0 %v820, 32
  %v2782 = vpop.permute.xlu0 %2781
  %2783 = vrot.lane.b32.xlu0 %v821, 32
  %v2784 = vpop.permute.xlu0 %2783
  %2785 = vrot.lane.b32.xlu0 %v822, 32
  %v2786 = vpop.permute.xlu0 %2785
  %2787 = vrot.lane.b32.xlu0 %v823, 32
  %v2788 = vpop.permute.xlu0 %2787
  %2789 = vrot.lane.b32.xlu0 %v824, 32
  %v2790 = vpop.permute.xlu0 %2789
  %2791 = vrot.lane.b32.xlu0 %v825, 32
  %v2792 = vpop.permute.xlu0 %2791
  %2793 = vrot.lane.b32.xlu0 %v826, 32
  %v2794 = vpop.permute.xlu0 %2793
  %2795 = vrot.lane.b32.xlu0 %v827, 32
  %v2796 = vpop.permute.xlu0 %2795
  %2797 = vrot.lane.b32.xlu0 %v828, 32
  %v2798 = vpop.permute.xlu0 %2797
  %2799 = vrot.lane.b32.xlu0 %v829, 32
  %v2800 = vpop.permute.xlu0 %2799
  %2801 = vrot.lane.b32.xlu0 %v830, 32
  %v2802 = vpop.permute.xlu0 %2801
  %2803 = vrot.lane.b32.xlu0 %v831, 32
  %v2804 = vpop.permute.xlu0 %2803
  %2805 = vrot.lane.b32.xlu0 %v832, 32
  %v2806 = vpop.permute.xlu0 %2805
  %2807 = vrot.lane.b32.xlu0 %v833, 32
  %v2808 = vpop.permute.xlu0 %2807
  %2809 = vrot.lane.b32.xlu0 %v834, 32
  %v2810 = vpop.permute.xlu0 %2809
  %2811 = vrot.lane.b32.xlu0 %v835, 32
  %v2812 = vpop.permute.xlu0 %2811
  %2813 = vrot.lane.b32.xlu0 %v836, 32
  %v2814 = vpop.permute.xlu0 %2813
  %2815 = vrot.lane.b32.xlu0 %v837, 32
  %v2816 = vpop.permute.xlu0 %2815
  %2817 = vrot.lane.b32.xlu0 %v838, 32
  %v2818 = vpop.permute.xlu0 %2817
  %2819 = vrot.lane.b32.xlu0 %v839, 32
  %v2820 = vpop.permute.xlu0 %2819
  %2821 = vrot.lane.b32.xlu0 %v840, 32
  %v2822 = vpop.permute.xlu0 %2821
  %2823 = vrot.lane.b32.xlu0 %v841, 32
  %v2824 = vpop.permute.xlu0 %2823
  %2825 = vrot.lane.b32.xlu0 %v842, 32
  %v2826 = vpop.permute.xlu0 %2825
  %v2891 = vsel %vm27, %v266, %v908
  %v2892 = vsel %vm27, %v267, %v910
  %v2893 = vsel %vm27, %v268, %v912
  %v2894 = vsel %vm27, %v269, %v914
  %v2895 = vsel %vm27, %v270, %v916
  %v2896 = vsel %vm27, %v271, %v918
  %v2897 = vsel %vm27, %v272, %v920
  %v2898 = vsel %vm27, %v273, %v922
  %v2899 = vsel %vm27, %v274, %v924
  %v2900 = vsel %vm27, %v275, %v926
  %v2901 = vsel %vm27, %v276, %v928
  %v2902 = vsel %vm27, %v277, %v930
  %v2903 = vsel %vm27, %v278, %v932
  %v2904 = vsel %vm27, %v279, %v934
  %v2905 = vsel %vm27, %v280, %v936
  %v2906 = vsel %vm27, %v281, %v938
  %v2907 = vsel %vm27, %v282, %v940
  %v2908 = vsel %vm27, %v283, %v942
  %v2909 = vsel %vm27, %v284, %v944
  %v2910 = vsel %vm27, %v285, %v946
  %v2911 = vsel %vm27, %v286, %v948
  %v2912 = vsel %vm27, %v287, %v950
  %v2913 = vsel %vm27, %v288, %v952
  %v2914 = vsel %vm27, %v289, %v954
  %v2915 = vsel %vm27, %v290, %v956
  %v2916 = vsel %vm27, %v291, %v958
  %v2917 = vsel %vm27, %v292, %v960
  %v2918 = vsel %vm27, %v293, %v962
  %v2919 = vsel %vm27, %v294, %v964
  %v2920 = vsel %vm27, %v295, %v966
  %v2921 = vsel %vm27, %v296, %v968
  %v2922 = vsel %vm27, %v297, %v970
  %v2923 = vsel %vm27, %v298, %v972
  %v2924 = vsel %vm27, %v299, %v974
  %v2925 = vsel %vm27, %v300, %v976
  %v2926 = vsel %vm27, %v301, %v978
  %v2927 = vsel %vm27, %v302, %v980
  %v2928 = vsel %vm27, %v303, %v982
  %v2929 = vsel %vm27, %v304, %v984
  %v2930 = vsel %vm27, %v305, %v986
  %v2931 = vsel %vm27, %v306, %v988
  %v2932 = vsel %vm27, %v307, %v990
  %v2933 = vsel %vm27, %v308, %v992
  %v2934 = vsel %vm27, %v309, %v994
  %v2935 = vsel %vm27, %v310, %v996
  %v2936 = vsel %vm27, %v311, %v998
  %v2937 = vsel %vm27, %v312, %v1000
  %v2938 = vsel %vm27, %v313, %v1002
  %v2939 = vsel %vm27, %v314, %v1004
  %v2940 = vsel %vm27, %v315, %v1006
  %v2941 = vsel %vm27, %v316, %v1008
  %v2942 = vsel %vm27, %v317, %v1010
  %v2943 = vsel %vm27, %v318, %v1012
  %v2944 = vsel %vm27, %v319, %v1014
  %v2945 = vsel %vm27, %v320, %v1016
  %v2946 = vsel %vm27, %v321, %v1018
  %v2947 = vsel %vm27, %v322, %v1020
  %v2948 = vsel %vm27, %v323, %v1022
  %v2949 = vsel %vm27, %v324, %v1024
  %v2950 = vsel %vm27, %v325, %v1026
  %v2951 = vsel %vm27, %v326, %v1028
  %v2952 = vsel %vm27, %v327, %v1030
  %v2953 = vsel %vm27, %v328, %v1032
  %v2954 = vsel %vm27, %v329, %v1034
  %vm2955 = vcmask 64512
  %v2956 = vsel %vm2955, %v2891, %v1164
  %v2957 = vsel %vm2955, %v2892, %v1166
  %v2958 = vsel %vm2955, %v2893, %v1168
  %v2959 = vsel %vm2955, %v2894, %v1170
  %v2960 = vsel %vm2955, %v2895, %v1172
  %v2961 = vsel %vm2955, %v2896, %v1174
  %v2962 = vsel %vm2955, %v2897, %v1176
  %v2963 = vsel %vm2955, %v2898, %v1178
  %v2964 = vsel %vm2955, %v2899, %v1180
  %v2965 = vsel %vm2955, %v2900, %v1182
  %v2966 = vsel %vm2955, %v2901, %v1184
  %v2967 = vsel %vm2955, %v2902, %v1186
  %v2968 = vsel %vm2955, %v2903, %v1188
  %v2969 = vsel %vm2955, %v2904, %v1190
  %v2970 = vsel %vm2955, %v2905, %v1192
  %v2971 = vsel %vm2955, %v2906, %v1194
  %v2972 = vsel %vm2955, %v2907, %v1196
  %v2973 = vsel %vm2955, %v2908, %v1198
  %v2974 = vsel %vm2955, %v2909, %v1200
  %v2975 = vsel %vm2955, %v2910, %v1202
  %v2976 = vsel %vm2955, %v2911, %v1204
  %v2977 = vsel %vm2955, %v2912, %v1206
  %v2978 = vsel %vm2955, %v2913, %v1208
  %v2979 = vsel %vm2955, %v2914, %v1210
  %v2980 = vsel %vm2955, %v2915, %v1212
  %v2981 = vsel %vm2955, %v2916, %v1214
  %v2982 = vsel %vm2955, %v2917, %v1216
  %v2983 = vsel %vm2955, %v2918, %v1218
  %v2984 = vsel %vm2955, %v2919, %v1220
  %v2985 = vsel %vm2955, %v2920, %v1222
  %v2986 = vsel %vm2955, %v2921, %v1224
  %v2987 = vsel %vm2955, %v2922, %v1226
  %v2988 = vsel %vm2955, %v2923, %v1228
  %v2989 = vsel %vm2955, %v2924, %v1230
  %v2990 = vsel %vm2955, %v2925, %v1232
  %v2991 = vsel %vm2955, %v2926, %v1234
  %v2992 = vsel %vm2955, %v2927, %v1236
  %v2993 = vsel %vm2955, %v2928, %v1238
  %v2994 = vsel %vm2955, %v2929, %v1240
  %v2995 = vsel %vm2955, %v2930, %v1242
  %v2996 = vsel %vm2955, %v2931, %v1244
  %v2997 = vsel %vm2955, %v2932, %v1246
  %v2998 = vsel %vm2955, %v2933, %v1248
  %v2999 = vsel %vm2955, %v2934, %v1250
  %v3000 = vsel %vm2955, %v2935, %v1252
  %v3001 = vsel %vm2955, %v2936, %v1254
  %v3002 = vsel %vm2955, %v2937, %v1256
  %v3003 = vsel %vm2955, %v2938, %v1258
  %v3004 = vsel %vm2955, %v2939, %v1260
  %v3005 = vsel %vm2955, %v2940, %v1262
  %v3006 = vsel %vm2955, %v2941, %v1264
  %v3007 = vsel %vm2955, %v2942, %v1266
  %v3008 = vsel %vm2955, %v2943, %v1268
  %v3009 = vsel %vm2955, %v2944, %v1270
  %v3010 = vsel %vm2955, %v2945, %v1272
  %v3011 = vsel %vm2955, %v2946, %v1274
  %v3012 = vsel %vm2955, %v2947, %v1276
  %v3013 = vsel %vm2955, %v2948, %v1278
  %v3014 = vsel %vm2955, %v2949, %v1280
  %v3015 = vsel %vm2955, %v2950, %v1282
  %v3016 = vsel %vm2955, %v2951, %v1284
  %v3017 = vsel %vm2955, %v2952, %v1286
  %v3018 = vsel %vm2955, %v2953, %v1288
  %v3019 = vsel %vm2955, %v2954, %v1290
  %vm3020 = vcmask 97280
  %v3021 = vsel %vm3020, %v2956, %v1420
  %v3022 = vsel %vm3020, %v2957, %v1422
  %v3023 = vsel %vm3020, %v2958, %v1424
  %v3024 = vsel %vm3020, %v2959, %v1426
  %v3025 = vsel %vm3020, %v2960, %v1428
  %v3026 = vsel %vm3020, %v2961, %v1430
  %v3027 = vsel %vm3020, %v2962, %v1432
  %v3028 = vsel %vm3020, %v2963, %v1434
  %v3029 = vsel %vm3020, %v2964, %v1436
  %v3030 = vsel %vm3020, %v2965, %v1438
  %v3031 = vsel %vm3020, %v2966, %v1440
  %v3032 = vsel %vm3020, %v2967, %v1442
  %v3033 = vsel %vm3020, %v2968, %v1444
  %v3034 = vsel %vm3020, %v2969, %v1446
  %v3035 = vsel %vm3020, %v2970, %v1448
  %v3036 = vsel %vm3020, %v2971, %v1450
  %v3037 = vsel %vm3020, %v2972, %v1452
  %v3038 = vsel %vm3020, %v2973, %v1454
  %v3039 = vsel %vm3020, %v2974, %v1456
  %v3040 = vsel %vm3020, %v2975, %v1458
  %v3041 = vsel %vm3020, %v2976, %v1460
  %v3042 = vsel %vm3020, %v2977, %v1462
  %v3043 = vsel %vm3020, %v2978, %v1464
  %v3044 = vsel %vm3020, %v2979, %v1466
  %v3045 = vsel %vm3020, %v2980, %v1468
  %v3046 = vsel %vm3020, %v2981, %v1470
  %v3047 = vsel %vm3020, %v2982, %v1472
  %v3048 = vsel %vm3020, %v2983, %v1474
  %v3049 = vsel %vm3020, %v2984, %v1476
  %v3050 = vsel %vm3020, %v2985, %v1478
  %v3051 = vsel %vm3020, %v2986, %v1480
  %v3052 = vsel %vm3020, %v2987, %v1482
  %v3053 = vsel %vm3020, %v2988, %v1484
  %v3054 = vsel %vm3020, %v2989, %v1486
  %v3055 = vsel %vm3020, %v2990, %v1488
  %v3056 = vsel %vm3020, %v2991, %v1490
  %v3057 = vsel %vm3020, %v2992, %v1492
  %v3058 = vsel %vm3020, %v2993, %v1494
  %v3059 = vsel %vm3020, %v2994, %v1496
  %v3060 = vsel %vm3020, %v2995, %v1498
  %v3061 = vsel %vm3020, %v2996, %v1500
  %v3062 = vsel %vm3020, %v2997, %v1502
  %v3063 = vsel %vm3020, %v2998, %v1504
  %v3064 = vsel %vm3020, %v2999, %v1506
  %v3065 = vsel %vm3020, %v3000, %v1508
  %v3066 = vsel %vm3020, %v3001, %v1510
  %v3067 = vsel %vm3020, %v3002, %v1512
  %v3068 = vsel %vm3020, %v3003, %v1514
  %v3069 = vsel %vm3020, %v3004, %v1516
  %v3070 = vsel %vm3020, %v3005, %v1518
  %v3071 = vsel %vm3020, %v3006, %v1520
  %v3072 = vsel %vm3020, %v3007, %v1522
  %v3073 = vsel %vm3020, %v3008, %v1524
  %v3074 = vsel %vm3020, %v3009, %v1526
  %v3075 = vsel %vm3020, %v3010, %v1528
  %v3076 = vsel %vm3020, %v3011, %v1530
  %v3077 = vsel %vm3020, %v3012, %v1532
  %v3078 = vsel %vm3020, %v3013, %v1534
  %v3079 = vsel %vm3020, %v3014, %v1536
  %v3080 = vsel %vm3020, %v3015, %v1538
  %v3081 = vsel %vm3020, %v3016, %v1540
  %v3082 = vsel %vm3020, %v3017, %v1542
  %v3083 = vsel %vm3020, %v3018, %v1544
  %v3084 = vsel %vm3020, %v3019, %v1546
  %vm3085 = vcmask 130048
  %v3086 = vsel %vm3085, %v3021, %v1676
  %v3087 = vsel %vm3085, %v3022, %v1678
  %v3088 = vsel %vm3085, %v3023, %v1680
  %v3089 = vsel %vm3085, %v3024, %v1682
  %v3090 = vsel %vm3085, %v3025, %v1684
  %v3091 = vsel %vm3085, %v3026, %v1686
  %v3092 = vsel %vm3085, %v3027, %v1688
  %v3093 = vsel %vm3085, %v3028, %v1690
  %v3094 = vsel %vm3085, %v3029, %v1692
  %v3095 = vsel %vm3085, %v3030, %v1694
  %v3096 = vsel %vm3085, %v3031, %v1696
  %v3097 = vsel %vm3085, %v3032, %v1698
  %v3098 = vsel %vm3085, %v3033, %v1700
  %v3099 = vsel %vm3085, %v3034, %v1702
  %v3100 = vsel %vm3085, %v3035, %v1704
  %v3101 = vsel %vm3085, %v3036, %v1706
  %v3102 = vsel %vm3085, %v3037, %v1708
  %v3103 = vsel %vm3085, %v3038, %v1710
  %v3104 = vsel %vm3085, %v3039, %v1712
  %v3105 = vsel %vm3085, %v3040, %v1714
  %v3106 = vsel %vm3085, %v3041, %v1716
  %v3107 = vsel %vm3085, %v3042, %v1718
  %v3108 = vsel %vm3085, %v3043, %v1720
  %v3109 = vsel %vm3085, %v3044, %v1722
  %v3110 = vsel %vm3085, %v3045, %v1724
  %v3111 = vsel %vm3085, %v3046, %v1726
  %v3112 = vsel %vm3085, %v3047, %v1728
  %v3113 = vsel %vm3085, %v3048, %v1730
  %v3114 = vsel %vm3085, %v3049, %v1732
  %v3115 = vsel %vm3085, %v3050, %v1734
  %v3116 = vsel %vm3085, %v3051, %v1736
  %v3117 = vsel %vm3085, %v3052, %v1738
  %v3118 = vsel %vm3085, %v3053, %v1740
  %v3119 = vsel %vm3085, %v3054, %v1742
  %v3120 = vsel %vm3085, %v3055, %v1744
  %v3121 = vsel %vm3085, %v3056, %v1746
  %v3122 = vsel %vm3085, %v3057, %v1748
  %v3123 = vsel %vm3085, %v3058, %v1750
  %v3124 = vsel %vm3085, %v3059, %v1752
  %v3125 = vsel %vm3085, %v3060, %v1754
  %v3126 = vsel %vm3085, %v3061, %v1756
  %v3127 = vsel %vm3085, %v3062, %v1758
  %v3128 = vsel %vm3085, %v3063, %v1760
  %v3129 = vsel %vm3085, %v3064, %v1762
  %v3130 = vsel %vm3085, %v3065, %v1764
  %v3131 = vsel %vm3085, %v3066, %v1766
  %v3132 = vsel %vm3085, %v3067, %v1768
  %v3133 = vsel %vm3085, %v3068, %v1770
  %v3134 = vsel %vm3085, %v3069, %v1772
  %v3135 = vsel %vm3085, %v3070, %v1774
  %v3136 = vsel %vm3085, %v3071, %v1776
  %v3137 = vsel %vm3085, %v3072, %v1778
  %v3138 = vsel %vm3085, %v3073, %v1780
  %v3139 = vsel %vm3085, %v3074, %v1782
  %v3140 = vsel %vm3085, %v3075, %v1784
  %v3141 = vsel %vm3085, %v3076, %v1786
  %v3142 = vsel %vm3085, %v3077, %v1788
  %v3143 = vsel %vm3085, %v3078, %v1790
  %v3144 = vsel %vm3085, %v3079, %v1792
  %v3145 = vsel %vm3085, %v3080, %v1794
  %v3146 = vsel %vm3085, %v3081, %v1796
  %v3147 = vsel %vm3085, %v3082, %v1798
  %v3148 = vsel %vm3085, %v3083, %v1800
  %v3149 = vsel %vm3085, %v3084, %v1802
  %vm3150 = vcmask 162816
  %v3151 = vsel %vm3150, %v3086, %v1932
  %v3152 = vsel %vm3150, %v3087, %v1934
  %v3153 = vsel %vm3150, %v3088, %v1936
  %v3154 = vsel %vm3150, %v3089, %v1938
  %v3155 = vsel %vm3150, %v3090, %v1940
  %v3156 = vsel %vm3150, %v3091, %v1942
  %v3157 = vsel %vm3150, %v3092, %v1944
  %v3158 = vsel %vm3150, %v3093, %v1946
  %v3159 = vsel %vm3150, %v3094, %v1948
  %v3160 = vsel %vm3150, %v3095, %v1950
  %v3161 = vsel %vm3150, %v3096, %v1952
  %v3162 = vsel %vm3150, %v3097, %v1954
  %v3163 = vsel %vm3150, %v3098, %v1956
  %v3164 = vsel %vm3150, %v3099, %v1958
  %v3165 = vsel %vm3150, %v3100, %v1960
  %v3166 = vsel %vm3150, %v3101, %v1962
  %v3167 = vsel %vm3150, %v3102, %v1964
  %v3168 = vsel %vm3150, %v3103, %v1966
  %v3169 = vsel %vm3150, %v3104, %v1968
  %v3170 = vsel %vm3150, %v3105, %v1970
  %v3171 = vsel %vm3150, %v3106, %v1972
  %v3172 = vsel %vm3150, %v3107, %v1974
  %v3173 = vsel %vm3150, %v3108, %v1976
  %v3174 = vsel %vm3150, %v3109, %v1978
  %v3175 = vsel %vm3150, %v3110, %v1980
  %v3176 = vsel %vm3150, %v3111, %v1982
  %v3177 = vsel %vm3150, %v3112, %v1984
  %v3178 = vsel %vm3150, %v3113, %v1986
  %v3179 = vsel %vm3150, %v3114, %v1988
  %v3180 = vsel %vm3150, %v3115, %v1990
  %v3181 = vsel %vm3150, %v3116, %v1992
  %v3182 = vsel %vm3150, %v3117, %v1994
  %v3183 = vsel %vm3150, %v3118, %v1996
  %v3184 = vsel %vm3150, %v3119, %v1998
  %v3185 = vsel %vm3150, %v3120, %v2000
  %v3186 = vsel %vm3150, %v3121, %v2002
  %v3187 = vsel %vm3150, %v3122, %v2004
  %v3188 = vsel %vm3150, %v3123, %v2006
  %v3189 = vsel %vm3150, %v3124, %v2008
  %v3190 = vsel %vm3150, %v3125, %v2010
  %v3191 = vsel %vm3150, %v3126, %v2012
  %v3192 = vsel %vm3150, %v3127, %v2014
  %v3193 = vsel %vm3150, %v3128, %v2016
  %v3194 = vsel %vm3150, %v3129, %v2018
  %v3195 = vsel %vm3150, %v3130, %v2020
  %v3196 = vsel %vm3150, %v3131, %v2022
  %v3197 = vsel %vm3150, %v3132, %v2024
  %v3198 = vsel %vm3150, %v3133, %v2026
  %v3199 = vsel %vm3150, %v3134, %v2028
  %v3200 = vsel %vm3150, %v3135, %v2030
  %v3201 = vsel %vm3150, %v3136, %v2032
  %v3202 = vsel %vm3150, %v3137, %v2034
  %v3203 = vsel %vm3150, %v3138, %v2036
  %v3204 = vsel %vm3150, %v3139, %v2038
  %v3205 = vsel %vm3150, %v3140, %v2040
  %v3206 = vsel %vm3150, %v3141, %v2042
  %v3207 = vsel %vm3150, %v3142, %v2044
  %v3208 = vsel %vm3150, %v3143, %v2046
  %v3209 = vsel %vm3150, %v3144, %v2048
  %v3210 = vsel %vm3150, %v3145, %v2050
  %v3211 = vsel %vm3150, %v3146, %v2052
  %v3212 = vsel %vm3150, %v3147, %v2054
  %v3213 = vsel %vm3150, %v3148, %v2056
  %v3214 = vsel %vm3150, %v3149, %v2058
  %vm3215 = vcmask 195584
  %v3216 = vsel %vm3215, %v3151, %v2188
  %v3217 = vsel %vm3215, %v3152, %v2190
  %v3218 = vsel %vm3215, %v3153, %v2192
  %v3219 = vsel %vm3215, %v3154, %v2194
  %v3220 = vsel %vm3215, %v3155, %v2196
  %v3221 = vsel %vm3215, %v3156, %v2198
  %v3222 = vsel %vm3215, %v3157, %v2200
  %v3223 = vsel %vm3215, %v3158, %v2202
  %v3224 = vsel %vm3215, %v3159, %v2204
  %v3225 = vsel %vm3215, %v3160, %v2206
  %v3226 = vsel %vm3215, %v3161, %v2208
  %v3227 = vsel %vm3215, %v3162, %v2210
  %v3228 = vsel %vm3215, %v3163, %v2212
  %v3229 = vsel %vm3215, %v3164, %v2214
  %v3230 = vsel %vm3215, %v3165, %v2216
  %v3231 = vsel %vm3215, %v3166, %v2218
  %v3232 = vsel %vm3215, %v3167, %v2220
  %v3233 = vsel %vm3215, %v3168, %v2222
  %v3234 = vsel %vm3215, %v3169, %v2224
  %v3235 = vsel %vm3215, %v3170, %v2226
  %v3236 = vsel %vm3215, %v3171, %v2228
  %v3237 = vsel %vm3215, %v3172, %v2230
  %v3238 = vsel %vm3215, %v3173, %v2232
  %v3239 = vsel %vm3215, %v3174, %v2234
  %v3240 = vsel %vm3215, %v3175, %v2236
  %v3241 = vsel %vm3215, %v3176, %v2238
  %v3242 = vsel %vm3215, %v3177, %v2240
  %v3243 = vsel %vm3215, %v3178, %v2242
  %v3244 = vsel %vm3215, %v3179, %v2244
  %v3245 = vsel %vm3215, %v3180, %v2246
  %v3246 = vsel %vm3215, %v3181, %v2248
  %v3247 = vsel %vm3215, %v3182, %v2250
  %v3248 = vsel %vm3215, %v3183, %v2252
  %v3249 = vsel %vm3215, %v3184, %v2254
  %v3250 = vsel %vm3215, %v3185, %v2256
  %v3251 = vsel %vm3215, %v3186, %v2258
  %v3252 = vsel %vm3215, %v3187, %v2260
  %v3253 = vsel %vm3215, %v3188, %v2262
  %v3254 = vsel %vm3215, %v3189, %v2264
  %v3255 = vsel %vm3215, %v3190, %v2266
  %v3256 = vsel %vm3215, %v3191, %v2268
  %v3257 = vsel %vm3215, %v3192, %v2270
  %v3258 = vsel %vm3215, %v3193, %v2272
  %v3259 = vsel %vm3215, %v3194, %v2274
  %v3260 = vsel %vm3215, %v3195, %v2276
  %v3261 = vsel %vm3215, %v3196, %v2278
  %v3262 = vsel %vm3215, %v3197, %v2280
  %v3263 = vsel %vm3215, %v3198, %v2282
  %v3264 = vsel %vm3215, %v3199, %v2284
  %v3265 = vsel %vm3215, %v3200, %v2286
  %v3266 = vsel %vm3215, %v3201, %v2288
  %v3267 = vsel %vm3215, %v3202, %v2290
  %v3268 = vsel %vm3215, %v3203, %v2292
  %v3269 = vsel %vm3215, %v3204, %v2294
  %v3270 = vsel %vm3215, %v3205, %v2296
  %v3271 = vsel %vm3215, %v3206, %v2298
  %v3272 = vsel %vm3215, %v3207, %v2300
  %v3273 = vsel %vm3215, %v3208, %v2302
  %v3274 = vsel %vm3215, %v3209, %v2304
  %v3275 = vsel %vm3215, %v3210, %v2306
  %v3276 = vsel %vm3215, %v3211, %v2308
  %v3277 = vsel %vm3215, %v3212, %v2310
  %v3278 = vsel %vm3215, %v3213, %v2312
  %v3279 = vsel %vm3215, %v3214, %v2314
  %vm3280 = vcmask 228352
  %v3281 = vsel %vm3280, %v3216, %v2444
  %v3282 = vsel %vm3280, %v3217, %v2446
  %v3283 = vsel %vm3280, %v3218, %v2448
  %v3284 = vsel %vm3280, %v3219, %v2450
  %v3285 = vsel %vm3280, %v3220, %v2452
  %v3286 = vsel %vm3280, %v3221, %v2454
  %v3287 = vsel %vm3280, %v3222, %v2456
  %v3288 = vsel %vm3280, %v3223, %v2458
  %v3289 = vsel %vm3280, %v3224, %v2460
  %v3290 = vsel %vm3280, %v3225, %v2462
  %v3291 = vsel %vm3280, %v3226, %v2464
  %v3292 = vsel %vm3280, %v3227, %v2466
  %v3293 = vsel %vm3280, %v3228, %v2468
  %v3294 = vsel %vm3280, %v3229, %v2470
  %v3295 = vsel %vm3280, %v3230, %v2472
  %v3296 = vsel %vm3280, %v3231, %v2474
  %v3297 = vsel %vm3280, %v3232, %v2476
  %v3298 = vsel %vm3280, %v3233, %v2478
  %v3299 = vsel %vm3280, %v3234, %v2480
  %v3300 = vsel %vm3280, %v3235, %v2482
  %v3301 = vsel %vm3280, %v3236, %v2484
  %v3302 = vsel %vm3280, %v3237, %v2486
  %v3303 = vsel %vm3280, %v3238, %v2488
  %v3304 = vsel %vm3280, %v3239, %v2490
  %v3305 = vsel %vm3280, %v3240, %v2492
  %v3306 = vsel %vm3280, %v3241, %v2494
  %v3307 = vsel %vm3280, %v3242, %v2496
  %v3308 = vsel %vm3280, %v3243, %v2498
  %v3309 = vsel %vm3280, %v3244, %v2500
  %v3310 = vsel %vm3280, %v3245, %v2502
  %v3311 = vsel %vm3280, %v3246, %v2504
  %v3312 = vsel %vm3280, %v3247, %v2506
  %v3313 = vsel %vm3280, %v3248, %v2508
  %v3314 = vsel %vm3280, %v3249, %v2510
  %v3315 = vsel %vm3280, %v3250, %v2512
  %v3316 = vsel %vm3280, %v3251, %v2514
  %v3317 = vsel %vm3280, %v3252, %v2516
  %v3318 = vsel %vm3280, %v3253, %v2518
  %v3319 = vsel %vm3280, %v3254, %v2520
  %v3320 = vsel %vm3280, %v3255, %v2522
  %v3321 = vsel %vm3280, %v3256, %v2524
  %v3322 = vsel %vm3280, %v3257, %v2526
  %v3323 = vsel %vm3280, %v3258, %v2528
  %v3324 = vsel %vm3280, %v3259, %v2530
  %v3325 = vsel %vm3280, %v3260, %v2532
  %v3326 = vsel %vm3280, %v3261, %v2534
  %v3327 = vsel %vm3280, %v3262, %v2536
  %v3328 = vsel %vm3280, %v3263, %v2538
  %v3329 = vsel %vm3280, %v3264, %v2540
  %v3330 = vsel %vm3280, %v3265, %v2542
  %v3331 = vsel %vm3280, %v3266, %v2544
  %v3332 = vsel %vm3280, %v3267, %v2546
  %v3333 = vsel %vm3280, %v3268, %v2548
  %v3334 = vsel %vm3280, %v3269, %v2550
  %v3335 = vsel %vm3280, %v3270, %v2552
  %v3336 = vsel %vm3280, %v3271, %v2554
  %v3337 = vsel %vm3280, %v3272, %v2556
  %v3338 = vsel %vm3280, %v3273, %v2558
  %v3339 = vsel %vm3280, %v3274, %v2560
  %v3340 = vsel %vm3280, %v3275, %v2562
  %v3341 = vsel %vm3280, %v3276, %v2564
  %v3342 = vsel %vm3280, %v3277, %v2566
  %v3343 = vsel %vm3280, %v3278, %v2568
  %v3344 = vsel %vm3280, %v3279, %v2570
  %vm3345 = vcmask 261120
  %v3346 = vsel %vm3345, %v3281, %v2700
  %v3347 = vsel %vm3345, %v3282, %v2702
  %v3348 = vsel %vm3345, %v3283, %v2704
  %v3349 = vsel %vm3345, %v3284, %v2706
  %v3350 = vsel %vm3345, %v3285, %v2708
  %v3351 = vsel %vm3345, %v3286, %v2710
  %v3352 = vsel %vm3345, %v3287, %v2712
  %v3353 = vsel %vm3345, %v3288, %v2714
  %v3354 = vsel %vm3345, %v3289, %v2716
  %v3355 = vsel %vm3345, %v3290, %v2718
  %v3356 = vsel %vm3345, %v3291, %v2720
  %v3357 = vsel %vm3345, %v3292, %v2722
  %v3358 = vsel %vm3345, %v3293, %v2724
  %v3359 = vsel %vm3345, %v3294, %v2726
  %v3360 = vsel %vm3345, %v3295, %v2728
  %v3361 = vsel %vm3345, %v3296, %v2730
  %v3362 = vsel %vm3345, %v3297, %v2732
  %v3363 = vsel %vm3345, %v3298, %v2734
  %v3364 = vsel %vm3345, %v3299, %v2736
  %v3365 = vsel %vm3345, %v3300, %v2738
  %v3366 = vsel %vm3345, %v3301, %v2740
  %v3367 = vsel %vm3345, %v3302, %v2742
  %v3368 = vsel %vm3345, %v3303, %v2744
  %v3369 = vsel %vm3345, %v3304, %v2746
  %v3370 = vsel %vm3345, %v3305, %v2748
  %v3371 = vsel %vm3345, %v3306, %v2750
  %v3372 = vsel %vm3345, %v3307, %v2752
  %v3373 = vsel %vm3345, %v3308, %v2754
  %v3374 = vsel %vm3345, %v3309, %v2756
  %v3375 = vsel %vm3345, %v3310, %v2758
  %v3376 = vsel %vm3345, %v3311, %v2760
  %v3377 = vsel %vm3345, %v3312, %v2762
  %v3378 = vsel %vm3345, %v3313, %v2764
  %v3379 = vsel %vm3345, %v3314, %v2766
  %v3380 = vsel %vm3345, %v3315, %v2768
  %v3381 = vsel %vm3345, %v3316, %v2770
  %v3382 = vsel %vm3345, %v3317, %v2772
  %v3383 = vsel %vm3345, %v3318, %v2774
  %v3384 = vsel %vm3345, %v3319, %v2776
  %v3385 = vsel %vm3345, %v3320, %v2778
  %v3386 = vsel %vm3345, %v3321, %v2780
  %v3387 = vsel %vm3345, %v3322, %v2782
  %v3388 = vsel %vm3345, %v3323, %v2784
  %v3389 = vsel %vm3345, %v3324, %v2786
  %v3390 = vsel %vm3345, %v3325, %v2788
  %v3391 = vsel %vm3345, %v3326, %v2790
  %v3392 = vsel %vm3345, %v3327, %v2792
  %v3393 = vsel %vm3345, %v3328, %v2794
  %v3394 = vsel %vm3345, %v3329, %v2796
  %v3395 = vsel %vm3345, %v3330, %v2798
  %v3396 = vsel %vm3345, %v3331, %v2800
  %v3397 = vsel %vm3345, %v3332, %v2802
  %v3398 = vsel %vm3345, %v3333, %v2804
  %v3399 = vsel %vm3345, %v3334, %v2806
  %v3400 = vsel %vm3345, %v3335, %v2808
  %v3401 = vsel %vm3345, %v3336, %v2810
  %v3402 = vsel %vm3345, %v3337, %v2812
  %v3403 = vsel %vm3345, %v3338, %v2814
  %v3404 = vsel %vm3345, %v3339, %v2816
  %v3405 = vsel %vm3345, %v3340, %v2818
  %v3406 = vsel %vm3345, %v3341, %v2820
  %v3407 = vsel %vm3345, %v3342, %v2822
  %v3408 = vsel %vm3345, %v3343, %v2824
  %v3409 = vsel %vm3345, %v3344, %v2826
  %v3410 = vpack.c.bf16 %v3347, %v3346
  %v3411 = vpack.c.bf16 %v3349, %v3348
  %v3412 = vpack.c.bf16 %v3351, %v3350
  %v3413 = vpack.c.bf16 %v3353, %v3352
  %v3414 = vpack.c.bf16 %v3355, %v3354
  %v3415 = vpack.c.bf16 %v3357, %v3356
  %v3416 = vpack.c.bf16 %v3359, %v3358
  %v3417 = vpack.c.bf16 %v3361, %v3360
  %v3418 = vpack.c.bf16 %v3363, %v3362
  %v3419 = vpack.c.bf16 %v3365, %v3364
  %v3420 = vpack.c.bf16 %v3367, %v3366
  %v3421 = vpack.c.bf16 %v3369, %v3368
  %v3422 = vpack.c.bf16 %v3371, %v3370
  %v3423 = vpack.c.bf16 %v3373, %v3372
  %v3424 = vpack.c.bf16 %v3375, %v3374
  %v3425 = vpack.c.bf16 %v3377, %v3376
  %v3426 = vpack.c.bf16 %v3379, %v3378
  %v3427 = vpack.c.bf16 %v3381, %v3380
  %v3428 = vpack.c.bf16 %v3383, %v3382
  %v3429 = vpack.c.bf16 %v3385, %v3384
  %v3430 = vpack.c.bf16 %v3387, %v3386
  %v3431 = vpack.c.bf16 %v3389, %v3388
  %v3432 = vpack.c.bf16 %v3391, %v3390
  %v3433 = vpack.c.bf16 %v3393, %v3392
  %v3434 = vpack.c.bf16 %v3395, %v3394
  %v3435 = vpack.c.bf16 %v3397, %v3396
  %v3436 = vpack.c.bf16 %v3399, %v3398
  %v3437 = vpack.c.bf16 %v3401, %v3400
  %v3438 = vpack.c.bf16 %v3403, %v3402
  %v3439 = vpack.c.bf16 %v3405, %v3404
  %v3440 = vpack.c.bf16 %v3407, %v3406
  %v3441 = vpack.c.bf16 %v3409, %v3408
  %v3442 = vld [vmem:[%s1] sm:$0xf]
  %v3443 = vld [vmem:[%s1 + $0x4] sm:$0xf]
  %v3444 = vld [vmem:[%s1 + $0x8] sm:$0xf]
  %v3445 = vld [vmem:[%s1 + $0xc] sm:$0xf]
  %v3446 = vld [vmem:[%s1 + $0x10] sm:$0x3]
  %v3452 = vunpack.c.l.b16 %v3442
  %v3453 = vunpack.c.l.b16 %v3443
  %v3454 = vunpack.c.l.b16 %v3444
  %v3455 = vunpack.c.l.b16 %v3445
  %v3456 = vunpack.c.l.b16 %v3446
  %v3457 = vpack.c.b16 %v3453, %v3452
  %v3458 = vpack.c.b16 %v3455, %v3454
  %v3459 = vpack.c.b16 %v3456, %v3456
  %vm3462 = vcmask 293888
  %v3464 = vsel %vm3462, %v3410, 0
  %v3467 = vsel %vm3462, %v3411, 0
  %v3470 = vsel %vm3462, %v3412, 0
  %v3473 = vsel %vm3462, %v3413, 0
  %v3476 = vsel %vm3462, %v3414, 0
  %v3479 = vsel %vm3462, %v3415, 0
  %v3482 = vsel %vm3462, %v3416, 0
  %v3485 = vsel %vm3462, %v3417, 0
  %v3488 = vsel %vm3462, %v3418, 0
  %v3491 = vsel %vm3462, %v3419, 0
  %v3494 = vsel %vm3462, %v3420, 0
  %v3497 = vsel %vm3462, %v3421, 0
  %v3500 = vsel %vm3462, %v3422, 0
  %v3503 = vsel %vm3462, %v3423, 0
  %v3506 = vsel %vm3462, %v3424, 0
  %v3509 = vsel %vm3462, %v3425, 0
  %v3512 = vsel %vm3462, %v3426, 0
  %v3515 = vsel %vm3462, %v3427, 0
  %v3518 = vsel %vm3462, %v3428, 0
  %v3521 = vsel %vm3462, %v3429, 0
  %v3524 = vsel %vm3462, %v3430, 0
  %v3527 = vsel %vm3462, %v3431, 0
  %v3530 = vsel %vm3462, %v3432, 0
  %v3533 = vsel %vm3462, %v3433, 0
  %v3536 = vsel %vm3462, %v3434, 0
  %v3539 = vsel %vm3462, %v3435, 0
  %v3542 = vsel %vm3462, %v3436, 0
  %v3545 = vsel %vm3462, %v3437, 0
  %v3548 = vsel %vm3462, %v3438, 0
  %v3551 = vsel %vm3462, %v3439, 0
  %v3554 = vsel %vm3462, %v3440, 0
  %v3557 = vsel %vm3462, %v3441, 0
  %vm3559 = vcmask 1041408
  %v3561 = vsel %vm3559, %v3459, 0
  %3563 = vmatprep.subr.bf16.mxu0 0
  %3564 = vmatpush1.bf16.msra.mxu0 %v3457
  %3565 = vmatprep.subr.bf16.mxu0 0
  %3566 = vmatpush1.bf16.msra.mxu0 %v3458
  %3567 = vmatprep.subr.bf16.mxu0 0
  %3568 = vmatpush1.bf16.msra.mxu0 %v3561
  %3569 = vmatprep.subr.bf16.mxu0 0
  %3570 = vmatpush1.bf16.msra.mxu0 0
  %3571 = vmatprep.subr.bf16.mxu0 0
  %3572 = vmatpush1.bf16.msra.mxu0 0
  %3573 = vmatprep.subr.bf16.mxu0 0
  %3574 = vmatpush1.bf16.msra.mxu0 0
  %3575 = vmatprep.subr.bf16.mxu0 0
  %3576 = vmatpush1.bf16.msra.mxu0 0
  %3577 = vmatprep.subr.bf16.mxu0 0
  %3578 = vmatpush1.bf16.msra.mxu0 0
  %3579 = vmatprep.subr.bf16.mxu0 0
  %3580 = vmatpush1.bf16.msra.mxu0 0
  %3581 = vmatprep.subr.bf16.mxu0 0
  %3582 = vmatpush1.bf16.msra.mxu0 0
  %3583 = vmatprep.subr.bf16.mxu0 0
  %3584 = vmatpush1.bf16.msra.mxu0 0
  %3585 = vmatprep.subr.bf16.mxu0 0
  %3586 = vmatpush1.bf16.msra.mxu0 0
  %3587 = vmatprep.subr.bf16.mxu0 0
  %3588 = vmatpush1.bf16.msra.mxu0 0
  %3589 = vmatprep.subr.bf16.mxu0 0
  %3590 = vmatpush1.bf16.msra.mxu0 0
  %3591 = vmatprep.subr.bf16.mxu0 0
  %3592 = vmatpush1.bf16.msra.mxu0 0
  %3593 = vmatprep.subr.bf16.mxu0 0
  %3594 = vmatpush1.bf16.msra.mxu0 0
  %3595 = vmatprep.mubr.bf16.mxu0 0
  %3596 = vmatmul.mubr.bf16.gmra.mrb[0].mxu0 %v3464
  %v3597 = vpop.f32.mrb[0].mxu0
  %v3598 = vadd.f32 0.0, %v3597
  %v3599 = vpop.f32.mrb[0].mxu0
  %v3600 = vpop.f32.mrb[0].mxu0
  %v3601 = vadd.f32 0.0, %v3600
  %v3602 = vpop.f32.mrb[0].mxu0
  %3603 = vmatprep.mubr.bf16.mxu0 0
  %3604 = vmatmul.mubr.bf16.gmra.mrb[0].mxu0 %v3467
  %v3605 = vpop.f32.mrb[0].mxu0
  %v3606 = vadd.f32 0.0, %v3605
  %v3607 = vpop.f32.mrb[0].mxu0
  %v3608 = vpop.f32.mrb[0].mxu0
  %v3609 = vadd.f32 0.0, %v3608
  %v3610 = vpop.f32.mrb[0].mxu0
  %3611 = vmatprep.mubr.bf16.mxu0 0
  %3612 = vmatmul.mubr.bf16.gmra.mrb[0].mxu0 %v3470
  %v3613 = vpop.f32.mrb[0].mxu0
  %v3614 = vadd.f32 0.0, %v3613
  %v3615 = vpop.f32.mrb[0].mxu0
  %v3616 = vpop.f32.mrb[0].mxu0
  %v3617 = vadd.f32 0.0, %v3616
  %v3618 = vpop.f32.mrb[0].mxu0
  %3619 = vmatprep.mubr.bf16.mxu0 0
  %3620 = vmatmul.mubr.bf16.gmra.mrb[0].mxu0 %v3473
  %v3621 = vpop.f32.mrb[0].mxu0
  %v3622 = vadd.f32 0.0, %v3621
  %v3623 = vpop.f32.mrb[0].mxu0
  %v3624 = vpop.f32.mrb[0].mxu0
  %v3625 = vadd.f32 0.0, %v3624
  %v3626 = vpop.f32.mrb[0].mxu0
  %3627 = vmatprep.mubr.bf16.mxu0 0
  %3628 = vmatmul.mubr.bf16.gmra.mrb[0].mxu0 %v3476
  %v3629 = vpop.f32.mrb[0].mxu0
  %v3630 = vadd.f32 0.0, %v3629
  %v3631 = vpop.f32.mrb[0].mxu0
  %v3632 = vpop.f32.mrb[0].mxu0
  %v3633 = vadd.f32 0.0, %v3632
  %v3634 = vpop.f32.mrb[0].mxu0
  %3635 = vmatprep.mubr.bf16.mxu0 0
  %3636 = vmatmul.mubr.bf16.gmra.mrb[0].mxu0 %v3479
  %v3637 = vpop.f32.mrb[0].mxu0
  %v3638 = vadd.f32 0.0, %v3637
  %v3639 = vpop.f32.mrb[0].mxu0
  %v3640 = vpop.f32.mrb[0].mxu0
  %v3641 = vadd.f32 0.0, %v3640
  %v3642 = vpop.f32.mrb[0].mxu0
  %3643 = vmatprep.mubr.bf16.mxu0 0
  %3644 = vmatmul.mubr.bf16.gmra.mrb[0].mxu0 %v3482
  %v3645 = vpop.f32.mrb[0].mxu0
  %v3646 = vadd.f32 0.0, %v3645
  %v3647 = vpop.f32.mrb[0].mxu0
  %v3648 = vpop.f32.mrb[0].mxu0
  %v3649 = vadd.f32 0.0, %v3648
  %v3650 = vpop.f32.mrb[0].mxu0
  %3651 = vmatprep.mubr.bf16.mxu0 0
  %3652 = vmatmul.mubr.bf16.gmra.mrb[0].mxu0 %v3485
  %v3653 = vpop.f32.mrb[0].mxu0
  %v3654 = vadd.f32 0.0, %v3653
  %v3655 = vpop.f32.mrb[0].mxu0
  %v3656 = vpop.f32.mrb[0].mxu0
  %v3657 = vadd.f32 0.0, %v3656
  %v3658 = vpop.f32.mrb[0].mxu0
  %3659 = vmatprep.mubr.bf16.mxu0 0
  %3660 = vmatmul.mubr.bf16.gmra.mrb[0].mxu0 %v3488
  %v3661 = vpop.f32.mrb[0].mxu0
  %v3662 = vadd.f32 0.0, %v3661
  %v3663 = vpop.f32.mrb[0].mxu0
  %v3664 = vpop.f32.mrb[0].mxu0
  %v3665 = vadd.f32 0.0, %v3664
  %v3666 = vpop.f32.mrb[0].mxu0
  %3667 = vmatprep.mubr.bf16.mxu0 0
  %3668 = vmatmul.mubr.bf16.gmra.mrb[0].mxu0 %v3491
  %v3669 = vpop.f32.mrb[0].mxu0
  %v3670 = vadd.f32 0.0, %v3669
  %v3671 = vpop.f32.mrb[0].mxu0
  %v3672 = vpop.f32.mrb[0].mxu0
  %v3673 = vadd.f32 0.0, %v3672
  %v3674 = vpop.f32.mrb[0].mxu0
  %3675 = vmatprep.mubr.bf16.mxu0 0
  %3676 = vmatmul.mubr.bf16.gmra.mrb[0].mxu0 %v3494
  %v3677 = vpop.f32.mrb[0].mxu0
  %v3678 = vadd.f32 0.0, %v3677
  %v3679 = vpop.f32.mrb[0].mxu0
  %v3680 = vpop.f32.mrb[0].mxu0
  %v3681 = vadd.f32 0.0, %v3680
  %v3682 = vpop.f32.mrb[0].mxu0
  %3683 = vmatprep.mubr.bf16.mxu0 0
  %3684 = vmatmul.mubr.bf16.gmra.mrb[0].mxu0 %v3497
  %v3685 = vpop.f32.mrb[0].mxu0
  %v3686 = vadd.f32 0.0, %v3685
  %v3687 = vpop.f32.mrb[0].mxu0
  %v3688 = vpop.f32.mrb[0].mxu0
  %v3689 = vadd.f32 0.0, %v3688
  %v3690 = vpop.f32.mrb[0].mxu0
  %3691 = vmatprep.mubr.bf16.mxu0 0
  %3692 = vmatmul.mubr.bf16.gmra.mrb[0].mxu0 %v3500
  %v3693 = vpop.f32.mrb[0].mxu0
  %v3694 = vadd.f32 0.0, %v3693
  %v3695 = vpop.f32.mrb[0].mxu0
  %v3696 = vpop.f32.mrb[0].mxu0
  %v3697 = vadd.f32 0.0, %v3696
  %v3698 = vpop.f32.mrb[0].mxu0
  %3699 = vmatprep.mubr.bf16.mxu0 0
  %3700 = vmatmul.mubr.bf16.gmra.mrb[0].mxu0 %v3503
  %v3701 = vpop.f32.mrb[0].mxu0
  %v3702 = vadd.f32 0.0, %v3701
  %v3703 = vpop.f32.mrb[0].mxu0
  %v3704 = vpop.f32.mrb[0].mxu0
  %v3705 = vadd.f32 0.0, %v3704
  %v3706 = vpop.f32.mrb[0].mxu0
  %3707 = vmatprep.mubr.bf16.mxu0 0
  %3708 = vmatmul.mubr.bf16.gmra.mrb[0].mxu0 %v3506
  %v3709 = vpop.f32.mrb[0].mxu0
  %v3710 = vadd.f32 0.0, %v3709
  %v3711 = vpop.f32.mrb[0].mxu0
  %v3712 = vpop.f32.mrb[0].mxu0
  %v3713 = vadd.f32 0.0, %v3712
  %v3714 = vpop.f32.mrb[0].mxu0
  %3715 = vmatprep.mubr.bf16.mxu0 0
  %3716 = vmatmul.mubr.bf16.gmra.mrb[0].mxu0 %v3509
  %v3717 = vpop.f32.mrb[0].mxu0
  %v3718 = vadd.f32 0.0, %v3717
  %v3719 = vpop.f32.mrb[0].mxu0
  %v3720 = vpop.f32.mrb[0].mxu0
  %v3721 = vadd.f32 0.0, %v3720
  %v3722 = vpop.f32.mrb[0].mxu0
  %3723 = vmatprep.mubr.bf16.mxu0 0
  %3724 = vmatmul.mubr.bf16.gmra.mrb[0].mxu0 %v3512
  %v3725 = vpop.f32.mrb[0].mxu0
  %v3726 = vadd.f32 0.0, %v3725
  %v3727 = vpop.f32.mrb[0].mxu0
  %v3728 = vpop.f32.mrb[0].mxu0
  %v3729 = vadd.f32 0.0, %v3728
  %v3730 = vpop.f32.mrb[0].mxu0
  %3731 = vmatprep.mubr.bf16.mxu0 0
  %3732 = vmatmul.mubr.bf16.gmra.mrb[0].mxu0 %v3515
  %v3733 = vpop.f32.mrb[0].mxu0
  %v3734 = vadd.f32 0.0, %v3733
  %v3735 = vpop.f32.mrb[0].mxu0
  %v3736 = vpop.f32.mrb[0].mxu0
  %v3737 = vadd.f32 0.0, %v3736
  %v3738 = vpop.f32.mrb[0].mxu0
  %3739 = vmatprep.mubr.bf16.mxu0 0
  %3740 = vmatmul.mubr.bf16.gmra.mrb[0].mxu0 %v3518
  %v3741 = vpop.f32.mrb[0].mxu0
  %v3742 = vadd.f32 0.0, %v3741
  %v3743 = vpop.f32.mrb[0].mxu0
  %v3744 = vpop.f32.mrb[0].mxu0
  %v3745 = vadd.f32 0.0, %v3744
  %v3746 = vpop.f32.mrb[0].mxu0
  %3747 = vmatprep.mubr.bf16.mxu0 0
  %3748 = vmatmul.mubr.bf16.gmra.mrb[0].mxu0 %v3521
  %v3749 = vpop.f32.mrb[0].mxu0
  %v3750 = vadd.f32 0.0, %v3749
  %v3751 = vpop.f32.mrb[0].mxu0
  %v3752 = vpop.f32.mrb[0].mxu0
  %v3753 = vadd.f32 0.0, %v3752
  %v3754 = vpop.f32.mrb[0].mxu0
  %3755 = vmatprep.mubr.bf16.mxu0 0
  %3756 = vmatmul.mubr.bf16.gmra.mrb[0].mxu0 %v3524
  %v3757 = vpop.f32.mrb[0].mxu0
  %v3758 = vadd.f32 0.0, %v3757
  %v3759 = vpop.f32.mrb[0].mxu0
  %v3760 = vpop.f32.mrb[0].mxu0
  %v3761 = vadd.f32 0.0, %v3760
  %v3762 = vpop.f32.mrb[0].mxu0
  %3763 = vmatprep.mubr.bf16.mxu0 0
  %3764 = vmatmul.mubr.bf16.gmra.mrb[0].mxu0 %v3527
  %v3765 = vpop.f32.mrb[0].mxu0
  %v3766 = vadd.f32 0.0, %v3765
  %v3767 = vpop.f32.mrb[0].mxu0
  %v3768 = vpop.f32.mrb[0].mxu0
  %v3769 = vadd.f32 0.0, %v3768
  %v3770 = vpop.f32.mrb[0].mxu0
  %3771 = vmatprep.mubr.bf16.mxu0 0
  %3772 = vmatmul.mubr.bf16.gmra.mrb[0].mxu0 %v3530
  %v3773 = vpop.f32.mrb[0].mxu0
  %v3774 = vadd.f32 0.0, %v3773
  %v3775 = vpop.f32.mrb[0].mxu0
  %v3776 = vpop.f32.mrb[0].mxu0
  %v3777 = vadd.f32 0.0, %v3776
  %v3778 = vpop.f32.mrb[0].mxu0
  %3779 = vmatprep.mubr.bf16.mxu0 0
  %3780 = vmatmul.mubr.bf16.gmra.mrb[0].mxu0 %v3533
  %v3781 = vpop.f32.mrb[0].mxu0
  %v3782 = vadd.f32 0.0, %v3781
  %v3783 = vpop.f32.mrb[0].mxu0
  %v3784 = vpop.f32.mrb[0].mxu0
  %v3785 = vadd.f32 0.0, %v3784
  %v3786 = vpop.f32.mrb[0].mxu0
  %3787 = vmatprep.mubr.bf16.mxu0 0
  %3788 = vmatmul.mubr.bf16.gmra.mrb[0].mxu0 %v3536
  %v3789 = vpop.f32.mrb[0].mxu0
  %v3790 = vadd.f32 0.0, %v3789
  %v3791 = vpop.f32.mrb[0].mxu0
  %v3792 = vpop.f32.mrb[0].mxu0
  %v3793 = vadd.f32 0.0, %v3792
  %v3794 = vpop.f32.mrb[0].mxu0
  %3795 = vmatprep.mubr.bf16.mxu0 0
  %3796 = vmatmul.mubr.bf16.gmra.mrb[0].mxu0 %v3539
  %v3797 = vpop.f32.mrb[0].mxu0
  %v3798 = vadd.f32 0.0, %v3797
  %v3799 = vpop.f32.mrb[0].mxu0
  %v3800 = vpop.f32.mrb[0].mxu0
  %v3801 = vadd.f32 0.0, %v3800
  %v3802 = vpop.f32.mrb[0].mxu0
  %3803 = vmatprep.mubr.bf16.mxu0 0
  %3804 = vmatmul.mubr.bf16.gmra.mrb[0].mxu0 %v3542
  %v3805 = vpop.f32.mrb[0].mxu0
  %v3806 = vadd.f32 0.0, %v3805
  %v3807 = vpop.f32.mrb[0].mxu0
  %v3808 = vpop.f32.mrb[0].mxu0
  %v3809 = vadd.f32 0.0, %v3808
  %v3810 = vpop.f32.mrb[0].mxu0
  %3811 = vmatprep.mubr.bf16.mxu0 0
  %3812 = vmatmul.mubr.bf16.gmra.mrb[0].mxu0 %v3545
  %v3813 = vpop.f32.mrb[0].mxu0
  %v3814 = vadd.f32 0.0, %v3813
  %v3815 = vpop.f32.mrb[0].mxu0
  %v3816 = vpop.f32.mrb[0].mxu0
  %v3817 = vadd.f32 0.0, %v3816
  %v3818 = vpop.f32.mrb[0].mxu0
  %3819 = vmatprep.mubr.bf16.mxu0 0
  %3820 = vmatmul.mubr.bf16.gmra.mrb[0].mxu0 %v3548
  %v3821 = vpop.f32.mrb[0].mxu0
  %v3822 = vadd.f32 0.0, %v3821
  %v3823 = vpop.f32.mrb[0].mxu0
  %v3824 = vpop.f32.mrb[0].mxu0
  %v3825 = vadd.f32 0.0, %v3824
  %v3826 = vpop.f32.mrb[0].mxu0
  %3827 = vmatprep.mubr.bf16.mxu0 0
  %3828 = vmatmul.mubr.bf16.gmra.mrb[0].mxu0 %v3551
  %v3829 = vpop.f32.mrb[0].mxu0
  %v3830 = vadd.f32 0.0, %v3829
  %v3831 = vpop.f32.mrb[0].mxu0
  %v3832 = vpop.f32.mrb[0].mxu0
  %v3833 = vadd.f32 0.0, %v3832
  %v3834 = vpop.f32.mrb[0].mxu0
  %3835 = vmatprep.mubr.bf16.mxu0 0
  %3836 = vmatmul.mubr.bf16.gmra.mrb[0].mxu0 %v3554
  %v3837 = vpop.f32.mrb[0].mxu0
  %v3838 = vadd.f32 0.0, %v3837
  %v3839 = vpop.f32.mrb[0].mxu0
  %v3840 = vpop.f32.mrb[0].mxu0
  %v3841 = vadd.f32 0.0, %v3840
  %v3842 = vpop.f32.mrb[0].mxu0
  %3843 = vmatprep.mubr.bf16.mxu0 0
  %3844 = vmatmul.mubr.bf16.gmra.mrb[0].mxu0 %v3557
  %v3845 = vpop.f32.mrb[0].mxu0
  %v3846 = vadd.f32 0.0, %v3845
  %v3847 = vpop.f32.mrb[0].mxu0
  %v3848 = vpop.f32.mrb[0].mxu0
  %v3849 = vadd.f32 0.0, %v3848
  %v3850 = vpop.f32.mrb[0].mxu0
  %3851 = vdwg.mxu0
  %v3852 = vld [vmem:[%s2] sm:$0x1]
  %v3853 = vld [vmem:[%s3] sm:$0x1]
  %v3854 = vsel %vm3085, %v3598, 0.0
  %v3855 = vsel %vm3085, %v3601, 0.0
  %v3856 = vadd.f32 %v3854, %v3855
  %v3857 = vsel %vm3085, %v3606, 0.0
  %v3858 = vadd.f32 %v3856, %v3857
  %v3859 = vsel %vm3085, %v3609, 0.0
  %v3860 = vadd.f32 %v3858, %v3859
  %v3861 = vsel %vm3085, %v3614, 0.0
  %v3862 = vadd.f32 %v3860, %v3861
  %v3863 = vsel %vm3085, %v3617, 0.0
  %v3864 = vadd.f32 %v3862, %v3863
  %v3865 = vsel %vm3085, %v3622, 0.0
  %v3866 = vadd.f32 %v3864, %v3865
  %v3867 = vsel %vm3085, %v3625, 0.0
  %v3868 = vadd.f32 %v3866, %v3867
  %v3869 = vsel %vm3085, %v3630, 0.0
  %v3870 = vadd.f32 %v3868, %v3869
  %v3871 = vsel %vm3085, %v3633, 0.0
  %v3872 = vadd.f32 %v3870, %v3871
  %v3873 = vsel %vm3085, %v3638, 0.0
  %v3874 = vadd.f32 %v3872, %v3873
  %v3875 = vsel %vm3085, %v3641, 0.0
  %v3876 = vadd.f32 %v3874, %v3875
  %v3877 = vsel %vm3085, %v3646, 0.0
  %v3878 = vadd.f32 %v3876, %v3877
  %v3879 = vsel %vm3085, %v3649, 0.0
  %v3880 = vadd.f32 %v3878, %v3879
  %v3881 = vsel %vm3085, %v3654, 0.0
  %v3882 = vadd.f32 %v3880, %v3881
  %v3883 = vsel %vm3085, %v3657, 0.0
  %v3884 = vadd.f32 %v3882, %v3883
  %v3885 = vsel %vm3085, %v3662, 0.0
  %v3886 = vadd.f32 %v3884, %v3885
  %v3887 = vsel %vm3085, %v3665, 0.0
  %v3888 = vadd.f32 %v3886, %v3887
  %v3889 = vsel %vm3085, %v3670, 0.0
  %v3890 = vadd.f32 %v3888, %v3889
  %v3891 = vsel %vm3085, %v3673, 0.0
  %v3892 = vadd.f32 %v3890, %v3891
  %v3893 = vsel %vm3085, %v3678, 0.0
  %v3894 = vadd.f32 %v3892, %v3893
  %v3895 = vsel %vm3085, %v3681, 0.0
  %v3896 = vadd.f32 %v3894, %v3895
  %v3897 = vsel %vm3085, %v3686, 0.0
  %v3898 = vadd.f32 %v3896, %v3897
  %v3899 = vsel %vm3085, %v3689, 0.0
  %v3900 = vadd.f32 %v3898, %v3899
  %v3901 = vsel %vm3085, %v3694, 0.0
  %v3902 = vadd.f32 %v3900, %v3901
  %v3903 = vsel %vm3085, %v3697, 0.0
  %v3904 = vadd.f32 %v3902, %v3903
  %v3905 = vsel %vm3085, %v3702, 0.0
  %v3906 = vadd.f32 %v3904, %v3905
  %v3907 = vsel %vm3085, %v3705, 0.0
  %v3908 = vadd.f32 %v3906, %v3907
  %v3909 = vsel %vm3085, %v3710, 0.0
  %v3910 = vadd.f32 %v3908, %v3909
  %v3911 = vsel %vm3085, %v3713, 0.0
  %v3912 = vadd.f32 %v3910, %v3911
  %v3913 = vsel %vm3085, %v3718, 0.0
  %v3914 = vadd.f32 %v3912, %v3913
  %v3915 = vsel %vm3085, %v3721, 0.0
  %v3916 = vadd.f32 %v3914, %v3915
  %v3917 = vsel %vm3085, %v3726, 0.0
  %v3918 = vadd.f32 %v3916, %v3917
  %v3919 = vsel %vm3085, %v3729, 0.0
  %v3920 = vadd.f32 %v3918, %v3919
  %v3921 = vsel %vm3085, %v3734, 0.0
  %v3922 = vadd.f32 %v3920, %v3921
  %v3923 = vsel %vm3085, %v3737, 0.0
  %v3924 = vadd.f32 %v3922, %v3923
  %v3925 = vsel %vm3085, %v3742, 0.0
  %v3926 = vadd.f32 %v3924, %v3925
  %v3927 = vsel %vm3085, %v3745, 0.0
  %v3928 = vadd.f32 %v3926, %v3927
  %v3929 = vsel %vm3085, %v3750, 0.0
  %v3930 = vadd.f32 %v3928, %v3929
  %v3931 = vsel %vm3085, %v3753, 0.0
  %v3932 = vadd.f32 %v3930, %v3931
  %v3933 = vsel %vm3085, %v3758, 0.0
  %v3934 = vadd.f32 %v3932, %v3933
  %v3935 = vsel %vm3085, %v3761, 0.0
  %v3936 = vadd.f32 %v3934, %v3935
  %v3937 = vsel %vm3085, %v3766, 0.0
  %v3938 = vadd.f32 %v3936, %v3937
  %v3939 = vsel %vm3085, %v3769, 0.0
  %v3940 = vadd.f32 %v3938, %v3939
  %v3941 = vsel %vm3085, %v3774, 0.0
  %v3942 = vadd.f32 %v3940, %v3941
  %v3943 = vsel %vm3085, %v3777, 0.0
  %v3944 = vadd.f32 %v3942, %v3943
  %v3945 = vsel %vm3085, %v3782, 0.0
  %v3946 = vadd.f32 %v3944, %v3945
  %v3947 = vsel %vm3085, %v3785, 0.0
  %v3948 = vadd.f32 %v3946, %v3947
  %v3949 = vsel %vm3085, %v3790, 0.0
  %v3950 = vadd.f32 %v3948, %v3949
  %v3951 = vsel %vm3085, %v3793, 0.0
  %v3952 = vadd.f32 %v3950, %v3951
  %v3953 = vsel %vm3085, %v3798, 0.0
  %v3954 = vadd.f32 %v3952, %v3953
  %v3955 = vsel %vm3085, %v3801, 0.0
  %v3956 = vadd.f32 %v3954, %v3955
  %v3957 = vsel %vm3085, %v3806, 0.0
  %v3958 = vadd.f32 %v3956, %v3957
  %v3959 = vsel %vm3085, %v3809, 0.0
  %v3960 = vadd.f32 %v3958, %v3959
  %v3961 = vsel %vm3085, %v3814, 0.0
  %v3962 = vadd.f32 %v3960, %v3961
  %v3963 = vsel %vm3085, %v3817, 0.0
  %v3964 = vadd.f32 %v3962, %v3963
  %v3965 = vsel %vm3085, %v3822, 0.0
  %v3966 = vadd.f32 %v3964, %v3965
  %v3967 = vsel %vm3085, %v3825, 0.0
  %v3968 = vadd.f32 %v3966, %v3967
  %v3969 = vsel %vm3085, %v3830, 0.0
  %v3970 = vadd.f32 %v3968, %v3969
  %v3971 = vsel %vm3085, %v3833, 0.0
  %v3972 = vadd.f32 %v3970, %v3971
  %v3973 = vsel %vm3085, %v3838, 0.0
  %v3974 = vadd.f32 %v3972, %v3973
  %v3975 = vsel %vm3085, %v3841, 0.0
  %v3976 = vadd.f32 %v3974, %v3975
  %v3977 = vsel %vm3085, %v3846, 0.0
  %v3978 = vadd.f32 %v3976, %v3977
  %v3979 = vsel %vm3085, %v3849, 0.0
  %v3980 = vadd.f32 %v3978, %v3979
  %v3981 = vrot.slane %v3980, 4
  %v3982 = vadd.f32 %v3980, %v3981
  %v3983 = vrot.slane %v3982, 2
  %v3984 = vadd.f32 %v3982, %v3983
  %v3985 = vrot.slane %v3984, 1
  %v3986 = vadd.f32 %v3984, %v3985
  %v3987 = vmul.f32 %v3986, 0.001953125
  %v3988 = vmul.f32 %v3598, %v3598
  %v3989 = vmul.f32 %v3601, %v3601
  %v3990 = vmul.f32 %v3606, %v3606
  %v3991 = vmul.f32 %v3609, %v3609
  %v3992 = vmul.f32 %v3614, %v3614
  %v3993 = vmul.f32 %v3617, %v3617
  %v3994 = vmul.f32 %v3622, %v3622
  %v3995 = vmul.f32 %v3625, %v3625
  %v3996 = vmul.f32 %v3630, %v3630
  %v3997 = vmul.f32 %v3633, %v3633
  %v3998 = vmul.f32 %v3638, %v3638
  %v3999 = vmul.f32 %v3641, %v3641
  %v4000 = vmul.f32 %v3646, %v3646
  %v4001 = vmul.f32 %v3649, %v3649
  %v4002 = vmul.f32 %v3654, %v3654
  %v4003 = vmul.f32 %v3657, %v3657
  %v4004 = vmul.f32 %v3662, %v3662
  %v4005 = vmul.f32 %v3665, %v3665
  %v4006 = vmul.f32 %v3670, %v3670
  %v4007 = vmul.f32 %v3673, %v3673
  %v4008 = vmul.f32 %v3678, %v3678
  %v4009 = vmul.f32 %v3681, %v3681
  %v4010 = vmul.f32 %v3686, %v3686
  %v4011 = vmul.f32 %v3689, %v3689
  %v4012 = vmul.f32 %v3694, %v3694
  %v4013 = vmul.f32 %v3697, %v3697
  %v4014 = vmul.f32 %v3702, %v3702
  %v4015 = vmul.f32 %v3705, %v3705
  %v4016 = vmul.f32 %v3710, %v3710
  %v4017 = vmul.f32 %v3713, %v3713
  %v4018 = vmul.f32 %v3718, %v3718
  %v4019 = vmul.f32 %v3721, %v3721
  %v4020 = vmul.f32 %v3726, %v3726
  %v4021 = vmul.f32 %v3729, %v3729
  %v4022 = vmul.f32 %v3734, %v3734
  %v4023 = vmul.f32 %v3737, %v3737
  %v4024 = vmul.f32 %v3742, %v3742
  %v4025 = vmul.f32 %v3745, %v3745
  %v4026 = vmul.f32 %v3750, %v3750
  %v4027 = vmul.f32 %v3753, %v3753
  %v4028 = vmul.f32 %v3758, %v3758
  %v4029 = vmul.f32 %v3761, %v3761
  %v4030 = vmul.f32 %v3766, %v3766
  %v4031 = vmul.f32 %v3769, %v3769
  %v4032 = vmul.f32 %v3774, %v3774
  %v4033 = vmul.f32 %v3777, %v3777
  %v4034 = vmul.f32 %v3782, %v3782
  %v4035 = vmul.f32 %v3785, %v3785
  %v4036 = vmul.f32 %v3790, %v3790
  %v4037 = vmul.f32 %v3793, %v3793
  %v4038 = vmul.f32 %v3798, %v3798
  %v4039 = vmul.f32 %v3801, %v3801
  %v4040 = vmul.f32 %v3806, %v3806
  %v4041 = vmul.f32 %v3809, %v3809
  %v4042 = vmul.f32 %v3814, %v3814
  %v4043 = vmul.f32 %v3817, %v3817
  %v4044 = vmul.f32 %v3822, %v3822
  %v4045 = vmul.f32 %v3825, %v3825
  %v4046 = vmul.f32 %v3830, %v3830
  %v4047 = vmul.f32 %v3833, %v3833
  %v4048 = vmul.f32 %v3838, %v3838
  %v4049 = vmul.f32 %v3841, %v3841
  %v4050 = vmul.f32 %v3846, %v3846
  %v4051 = vmul.f32 %v3849, %v3849
  %v4052 = vsel %vm3085, %v3988, 0.0
  %v4053 = vsel %vm3085, %v3989, 0.0
  %v4054 = vadd.f32 %v4052, %v4053
  %v4055 = vsel %vm3085, %v3990, 0.0
  %v4056 = vadd.f32 %v4054, %v4055
  %v4057 = vsel %vm3085, %v3991, 0.0
  %v4058 = vadd.f32 %v4056, %v4057
  %v4059 = vsel %vm3085, %v3992, 0.0
  %v4060 = vadd.f32 %v4058, %v4059
  %v4061 = vsel %vm3085, %v3993, 0.0
  %v4062 = vadd.f32 %v4060, %v4061
  %v4063 = vsel %vm3085, %v3994, 0.0
  %v4064 = vadd.f32 %v4062, %v4063
  %v4065 = vsel %vm3085, %v3995, 0.0
  %v4066 = vadd.f32 %v4064, %v4065
  %v4067 = vsel %vm3085, %v3996, 0.0
  %v4068 = vadd.f32 %v4066, %v4067
  %v4069 = vsel %vm3085, %v3997, 0.0
  %v4070 = vadd.f32 %v4068, %v4069
  %v4071 = vsel %vm3085, %v3998, 0.0
  %v4072 = vadd.f32 %v4070, %v4071
  %v4073 = vsel %vm3085, %v3999, 0.0
  %v4074 = vadd.f32 %v4072, %v4073
  %v4075 = vsel %vm3085, %v4000, 0.0
  %v4076 = vadd.f32 %v4074, %v4075
  %v4077 = vsel %vm3085, %v4001, 0.0
  %v4078 = vadd.f32 %v4076, %v4077
  %v4079 = vsel %vm3085, %v4002, 0.0
  %v4080 = vadd.f32 %v4078, %v4079
  %v4081 = vsel %vm3085, %v4003, 0.0
  %v4082 = vadd.f32 %v4080, %v4081
  %v4083 = vsel %vm3085, %v4004, 0.0
  %v4084 = vadd.f32 %v4082, %v4083
  %v4085 = vsel %vm3085, %v4005, 0.0
  %v4086 = vadd.f32 %v4084, %v4085
  %v4087 = vsel %vm3085, %v4006, 0.0
  %v4088 = vadd.f32 %v4086, %v4087
  %v4089 = vsel %vm3085, %v4007, 0.0
  %v4090 = vadd.f32 %v4088, %v4089
  %v4091 = vsel %vm3085, %v4008, 0.0
  %v4092 = vadd.f32 %v4090, %v4091
  %v4093 = vsel %vm3085, %v4009, 0.0
  %v4094 = vadd.f32 %v4092, %v4093
  %v4095 = vsel %vm3085, %v4010, 0.0
  %v4096 = vadd.f32 %v4094, %v4095
  %v4097 = vsel %vm3085, %v4011, 0.0
  %v4098 = vadd.f32 %v4096, %v4097
  %v4099 = vsel %vm3085, %v4012, 0.0
  %v4100 = vadd.f32 %v4098, %v4099
  %v4101 = vsel %vm3085, %v4013, 0.0
  %v4102 = vadd.f32 %v4100, %v4101
  %v4103 = vsel %vm3085, %v4014, 0.0
  %v4104 = vadd.f32 %v4102, %v4103
  %v4105 = vsel %vm3085, %v4015, 0.0
  %v4106 = vadd.f32 %v4104, %v4105
  %v4107 = vsel %vm3085, %v4016, 0.0
  %v4108 = vadd.f32 %v4106, %v4107
  %v4109 = vsel %vm3085, %v4017, 0.0
  %v4110 = vadd.f32 %v4108, %v4109
  %v4111 = vsel %vm3085, %v4018, 0.0
  %v4112 = vadd.f32 %v4110, %v4111
  %v4113 = vsel %vm3085, %v4019, 0.0
  %v4114 = vadd.f32 %v4112, %v4113
  %v4115 = vsel %vm3085, %v4020, 0.0
  %v4116 = vadd.f32 %v4114, %v4115
  %v4117 = vsel %vm3085, %v4021, 0.0
  %v4118 = vadd.f32 %v4116, %v4117
  %v4119 = vsel %vm3085, %v4022, 0.0
  %v4120 = vadd.f32 %v4118, %v4119
  %v4121 = vsel %vm3085, %v4023, 0.0
  %v4122 = vadd.f32 %v4120, %v4121
  %v4123 = vsel %vm3085, %v4024, 0.0
  %v4124 = vadd.f32 %v4122, %v4123
  %v4125 = vsel %vm3085, %v4025, 0.0
  %v4126 = vadd.f32 %v4124, %v4125
  %v4127 = vsel %vm3085, %v4026, 0.0
  %v4128 = vadd.f32 %v4126, %v4127
  %v4129 = vsel %vm3085, %v4027, 0.0
  %v4130 = vadd.f32 %v4128, %v4129
  %v4131 = vsel %vm3085, %v4028, 0.0
  %v4132 = vadd.f32 %v4130, %v4131
  %v4133 = vsel %vm3085, %v4029, 0.0
  %v4134 = vadd.f32 %v4132, %v4133
  %v4135 = vsel %vm3085, %v4030, 0.0
  %v4136 = vadd.f32 %v4134, %v4135
  %v4137 = vsel %vm3085, %v4031, 0.0
  %v4138 = vadd.f32 %v4136, %v4137
  %v4139 = vsel %vm3085, %v4032, 0.0
  %v4140 = vadd.f32 %v4138, %v4139
  %v4141 = vsel %vm3085, %v4033, 0.0
  %v4142 = vadd.f32 %v4140, %v4141
  %v4143 = vsel %vm3085, %v4034, 0.0
  %v4144 = vadd.f32 %v4142, %v4143
  %v4145 = vsel %vm3085, %v4035, 0.0
  %v4146 = vadd.f32 %v4144, %v4145
  %v4147 = vsel %vm3085, %v4036, 0.0
  %v4148 = vadd.f32 %v4146, %v4147
  %v4149 = vsel %vm3085, %v4037, 0.0
  %v4150 = vadd.f32 %v4148, %v4149
  %v4151 = vsel %vm3085, %v4038, 0.0
  %v4152 = vadd.f32 %v4150, %v4151
  %v4153 = vsel %vm3085, %v4039, 0.0
  %v4154 = vadd.f32 %v4152, %v4153
  %v4155 = vsel %vm3085, %v4040, 0.0
  %v4156 = vadd.f32 %v4154, %v4155
  %v4157 = vsel %vm3085, %v4041, 0.0
  %v4158 = vadd.f32 %v4156, %v4157
  %v4159 = vsel %vm3085, %v4042, 0.0
  %v4160 = vadd.f32 %v4158, %v4159
  %v4161 = vsel %vm3085, %v4043, 0.0
  %v4162 = vadd.f32 %v4160, %v4161
  %v4163 = vsel %vm3085, %v4044, 0.0
  %v4164 = vadd.f32 %v4162, %v4163
  %v4165 = vsel %vm3085, %v4045, 0.0
  %v4166 = vadd.f32 %v4164, %v4165
  %v4167 = vsel %vm3085, %v4046, 0.0
  %v4168 = vadd.f32 %v4166, %v4167
  %v4169 = vsel %vm3085, %v4047, 0.0
  %v4170 = vadd.f32 %v4168, %v4169
  %v4171 = vsel %vm3085, %v4048, 0.0
  %v4172 = vadd.f32 %v4170, %v4171
  %v4173 = vsel %vm3085, %v4049, 0.0
  %v4174 = vadd.f32 %v4172, %v4173
  %v4175 = vsel %vm3085, %v4050, 0.0
  %v4176 = vadd.f32 %v4174, %v4175
  %v4177 = vsel %vm3085, %v4051, 0.0
  %v4178 = vadd.f32 %v4176, %v4177
  %v4179 = vrot.slane %v4178, 4
  %v4180 = vadd.f32 %v4178, %v4179
  %v4181 = vrot.slane %v4180, 2
  %v4182 = vadd.f32 %v4180, %v4181
  %v4183 = vrot.slane %v4182, 1
  %v4184 = vadd.f32 %v4182, %v4183
  %v4185 = vmul.f32 %v4184, 0.001953125
  %v4186 = vmul.f32 %v3987, %v3987
  %v4187 = vsub.f32 %v4185, %v4186
  %v4188 = vmax.f32 %v4187, 0.0
  %v4189 = vsub.f32 %v3598, %v3987
  %v4190 = vsub.f32 %v3601, %v3987
  %v4191 = vsub.f32 %v3606, %v3987
  %v4192 = vsub.f32 %v3609, %v3987
  %v4193 = vsub.f32 %v3614, %v3987
  %v4194 = vsub.f32 %v3617, %v3987
  %v4195 = vsub.f32 %v3622, %v3987
  %v4196 = vsub.f32 %v3625, %v3987
  %v4197 = vsub.f32 %v3630, %v3987
  %v4198 = vsub.f32 %v3633, %v3987
  %v4199 = vsub.f32 %v3638, %v3987
  %v4200 = vsub.f32 %v3641, %v3987
  %v4201 = vsub.f32 %v3646, %v3987
  %v4202 = vsub.f32 %v3649, %v3987
  %v4203 = vsub.f32 %v3654, %v3987
  %v4204 = vsub.f32 %v3657, %v3987
  %v4205 = vsub.f32 %v3662, %v3987
  %v4206 = vsub.f32 %v3665, %v3987
  %v4207 = vsub.f32 %v3670, %v3987
  %v4208 = vsub.f32 %v3673, %v3987
  %v4209 = vsub.f32 %v3678, %v3987
  %v4210 = vsub.f32 %v3681, %v3987
  %v4211 = vsub.f32 %v3686, %v3987
  %v4212 = vsub.f32 %v3689, %v3987
  %v4213 = vsub.f32 %v3694, %v3987
  %v4214 = vsub.f32 %v3697, %v3987
  %v4215 = vsub.f32 %v3702, %v3987
  %v4216 = vsub.f32 %v3705, %v3987
  %v4217 = vsub.f32 %v3710, %v3987
  %v4218 = vsub.f32 %v3713, %v3987
  %v4219 = vsub.f32 %v3718, %v3987
  %v4220 = vsub.f32 %v3721, %v3987
  %v4221 = vsub.f32 %v3726, %v3987
  %v4222 = vsub.f32 %v3729, %v3987
  %v4223 = vsub.f32 %v3734, %v3987
  %v4224 = vsub.f32 %v3737, %v3987
  %v4225 = vsub.f32 %v3742, %v3987
  %v4226 = vsub.f32 %v3745, %v3987
  %v4227 = vsub.f32 %v3750, %v3987
  %v4228 = vsub.f32 %v3753, %v3987
  %v4229 = vsub.f32 %v3758, %v3987
  %v4230 = vsub.f32 %v3761, %v3987
  %v4231 = vsub.f32 %v3766, %v3987
  %v4232 = vsub.f32 %v3769, %v3987
  %v4233 = vsub.f32 %v3774, %v3987
  %v4234 = vsub.f32 %v3777, %v3987
  %v4235 = vsub.f32 %v3782, %v3987
  %v4236 = vsub.f32 %v3785, %v3987
  %v4237 = vsub.f32 %v3790, %v3987
  %v4238 = vsub.f32 %v3793, %v3987
  %v4239 = vsub.f32 %v3798, %v3987
  %v4240 = vsub.f32 %v3801, %v3987
  %v4241 = vsub.f32 %v3806, %v3987
  %v4242 = vsub.f32 %v3809, %v3987
  %v4243 = vsub.f32 %v3814, %v3987
  %v4244 = vsub.f32 %v3817, %v3987
  %v4245 = vsub.f32 %v3822, %v3987
  %v4246 = vsub.f32 %v3825, %v3987
  %v4247 = vsub.f32 %v3830, %v3987
  %v4248 = vsub.f32 %v3833, %v3987
  %v4249 = vsub.f32 %v3838, %v3987
  %v4250 = vsub.f32 %v3841, %v3987
  %v4251 = vsub.f32 %v3846, %v3987
  %v4252 = vsub.f32 %v3849, %v3987
  %v4253 = vadd.f32 %v4188, 1e-05
  %v4254 = vrsqrt.pop %v4253
  %v4255 = vmul.f32 %v4189, %v4254
  %v4256 = vmul.f32 %v4190, %v4254
  %v4257 = vmul.f32 %v4191, %v4254
  %v4258 = vmul.f32 %v4192, %v4254
  %v4259 = vmul.f32 %v4193, %v4254
  %v4260 = vmul.f32 %v4194, %v4254
  %v4261 = vmul.f32 %v4195, %v4254
  %v4262 = vmul.f32 %v4196, %v4254
  %v4263 = vmul.f32 %v4197, %v4254
  %v4264 = vmul.f32 %v4198, %v4254
  %v4265 = vmul.f32 %v4199, %v4254
  %v4266 = vmul.f32 %v4200, %v4254
  %v4267 = vmul.f32 %v4201, %v4254
  %v4268 = vmul.f32 %v4202, %v4254
  %v4269 = vmul.f32 %v4203, %v4254
  %v4270 = vmul.f32 %v4204, %v4254
  %v4271 = vmul.f32 %v4205, %v4254
  %v4272 = vmul.f32 %v4206, %v4254
  %v4273 = vmul.f32 %v4207, %v4254
  %v4274 = vmul.f32 %v4208, %v4254
  %v4275 = vmul.f32 %v4209, %v4254
  %v4276 = vmul.f32 %v4210, %v4254
  %v4277 = vmul.f32 %v4211, %v4254
  %v4278 = vmul.f32 %v4212, %v4254
  %v4279 = vmul.f32 %v4213, %v4254
  %v4280 = vmul.f32 %v4214, %v4254
  %v4281 = vmul.f32 %v4215, %v4254
  %v4282 = vmul.f32 %v4216, %v4254
  %v4283 = vmul.f32 %v4217, %v4254
  %v4284 = vmul.f32 %v4218, %v4254
  %v4285 = vmul.f32 %v4219, %v4254
  %v4286 = vmul.f32 %v4220, %v4254
  %v4287 = vmul.f32 %v4221, %v4254
  %v4288 = vmul.f32 %v4222, %v4254
  %v4289 = vmul.f32 %v4223, %v4254
  %v4290 = vmul.f32 %v4224, %v4254
  %v4291 = vmul.f32 %v4225, %v4254
  %v4292 = vmul.f32 %v4226, %v4254
  %v4293 = vmul.f32 %v4227, %v4254
  %v4294 = vmul.f32 %v4228, %v4254
  %v4295 = vmul.f32 %v4229, %v4254
  %v4296 = vmul.f32 %v4230, %v4254
  %v4297 = vmul.f32 %v4231, %v4254
  %v4298 = vmul.f32 %v4232, %v4254
  %v4299 = vmul.f32 %v4233, %v4254
  %v4300 = vmul.f32 %v4234, %v4254
  %v4301 = vmul.f32 %v4235, %v4254
  %v4302 = vmul.f32 %v4236, %v4254
  %v4303 = vmul.f32 %v4237, %v4254
  %v4304 = vmul.f32 %v4238, %v4254
  %v4305 = vmul.f32 %v4239, %v4254
  %v4306 = vmul.f32 %v4240, %v4254
  %v4307 = vmul.f32 %v4241, %v4254
  %v4308 = vmul.f32 %v4242, %v4254
  %v4309 = vmul.f32 %v4243, %v4254
  %v4310 = vmul.f32 %v4244, %v4254
  %v4311 = vmul.f32 %v4245, %v4254
  %v4312 = vmul.f32 %v4246, %v4254
  %v4313 = vmul.f32 %v4247, %v4254
  %v4314 = vmul.f32 %v4248, %v4254
  %v4315 = vmul.f32 %v4249, %v4254
  %v4316 = vmul.f32 %v4250, %v4254
  %v4317 = vmul.f32 %v4251, %v4254
  %v4318 = vmul.f32 %v4252, %v4254
  %v4320 = vlaneseq
  %v4321 = vshrl.u32 %v4320, 7
  %v4322 = vsub.s32 0, %v4321
  %v4323 = vrot.slane %v3852, %v4322
  %v4325 = vmul.f32 %v4255, %v4323
  %v4326 = vmul.f32 %v4256, %v4323
  %v4327 = vmul.f32 %v4257, %v4323
  %v4328 = vmul.f32 %v4258, %v4323
  %v4329 = vmul.f32 %v4259, %v4323
  %v4330 = vmul.f32 %v4260, %v4323
  %v4331 = vmul.f32 %v4261, %v4323
  %v4332 = vmul.f32 %v4262, %v4323
  %v4333 = vmul.f32 %v4263, %v4323
  %v4334 = vmul.f32 %v4264, %v4323
  %v4335 = vmul.f32 %v4265, %v4323
  %v4336 = vmul.f32 %v4266, %v4323
  %v4337 = vmul.f32 %v4267, %v4323
  %v4338 = vmul.f32 %v4268, %v4323
  %v4339 = vmul.f32 %v4269, %v4323
  %v4340 = vmul.f32 %v4270, %v4323
  %v4341 = vmul.f32 %v4271, %v4323
  %v4342 = vmul.f32 %v4272, %v4323
  %v4343 = vmul.f32 %v4273, %v4323
  %v4344 = vmul.f32 %v4274, %v4323
  %v4345 = vmul.f32 %v4275, %v4323
  %v4346 = vmul.f32 %v4276, %v4323
  %v4347 = vmul.f32 %v4277, %v4323
  %v4348 = vmul.f32 %v4278, %v4323
  %v4349 = vmul.f32 %v4279, %v4323
  %v4350 = vmul.f32 %v4280, %v4323
  %v4351 = vmul.f32 %v4281, %v4323
  %v4352 = vmul.f32 %v4282, %v4323
  %v4353 = vmul.f32 %v4283, %v4323
  %v4354 = vmul.f32 %v4284, %v4323
  %v4355 = vmul.f32 %v4285, %v4323
  %v4356 = vmul.f32 %v4286, %v4323
  %v4357 = vmul.f32 %v4287, %v4323
  %v4358 = vmul.f32 %v4288, %v4323
  %v4359 = vmul.f32 %v4289, %v4323
  %v4360 = vmul.f32 %v4290, %v4323
  %v4361 = vmul.f32 %v4291, %v4323
  %v4362 = vmul.f32 %v4292, %v4323
  %v4363 = vmul.f32 %v4293, %v4323
  %v4364 = vmul.f32 %v4294, %v4323
  %v4365 = vmul.f32 %v4295, %v4323
  %v4366 = vmul.f32 %v4296, %v4323
  %v4367 = vmul.f32 %v4297, %v4323
  %v4368 = vmul.f32 %v4298, %v4323
  %v4369 = vmul.f32 %v4299, %v4323
  %v4370 = vmul.f32 %v4300, %v4323
  %v4371 = vmul.f32 %v4301, %v4323
  %v4372 = vmul.f32 %v4302, %v4323
  %v4373 = vmul.f32 %v4303, %v4323
  %v4374 = vmul.f32 %v4304, %v4323
  %v4375 = vmul.f32 %v4305, %v4323
  %v4376 = vmul.f32 %v4306, %v4323
  %v4377 = vmul.f32 %v4307, %v4323
  %v4378 = vmul.f32 %v4308, %v4323
  %v4379 = vmul.f32 %v4309, %v4323
  %v4380 = vmul.f32 %v4310, %v4323
  %v4381 = vmul.f32 %v4311, %v4323
  %v4382 = vmul.f32 %v4312, %v4323
  %v4383 = vmul.f32 %v4313, %v4323
  %v4384 = vmul.f32 %v4314, %v4323
  %v4385 = vmul.f32 %v4315, %v4323
  %v4386 = vmul.f32 %v4316, %v4323
  %v4387 = vmul.f32 %v4317, %v4323
  %v4388 = vmul.f32 %v4318, %v4323
  %v4390 = vlaneseq
  %v4391 = vshrl.u32 %v4390, 7
  %v4392 = vsub.s32 0, %v4391
  %v4393 = vrot.slane %v3853, %v4392
  %v4395 = vadd.f32 %v4325, %v4393
  %v4396 = vadd.f32 %v4326, %v4393
  %v4397 = vadd.f32 %v4327, %v4393
  %v4398 = vadd.f32 %v4328, %v4393
  %v4399 = vadd.f32 %v4329, %v4393
  %v4400 = vadd.f32 %v4330, %v4393
  %v4401 = vadd.f32 %v4331, %v4393
  %v4402 = vadd.f32 %v4332, %v4393
  %v4403 = vadd.f32 %v4333, %v4393
  %v4404 = vadd.f32 %v4334, %v4393
  %v4405 = vadd.f32 %v4335, %v4393
  %v4406 = vadd.f32 %v4336, %v4393
  %v4407 = vadd.f32 %v4337, %v4393
  %v4408 = vadd.f32 %v4338, %v4393
  %v4409 = vadd.f32 %v4339, %v4393
  %v4410 = vadd.f32 %v4340, %v4393
  %v4411 = vadd.f32 %v4341, %v4393
  %v4412 = vadd.f32 %v4342, %v4393
  %v4413 = vadd.f32 %v4343, %v4393
  %v4414 = vadd.f32 %v4344, %v4393
  %v4415 = vadd.f32 %v4345, %v4393
  %v4416 = vadd.f32 %v4346, %v4393
  %v4417 = vadd.f32 %v4347, %v4393
  %v4418 = vadd.f32 %v4348, %v4393
  %v4419 = vadd.f32 %v4349, %v4393
  %v4420 = vadd.f32 %v4350, %v4393
  %v4421 = vadd.f32 %v4351, %v4393
  %v4422 = vadd.f32 %v4352, %v4393
  %v4423 = vadd.f32 %v4353, %v4393
  %v4424 = vadd.f32 %v4354, %v4393
  %v4425 = vadd.f32 %v4355, %v4393
  %v4426 = vadd.f32 %v4356, %v4393
  %v4427 = vadd.f32 %v4357, %v4393
  %v4428 = vadd.f32 %v4358, %v4393
  %v4429 = vadd.f32 %v4359, %v4393
  %v4430 = vadd.f32 %v4360, %v4393
  %v4431 = vadd.f32 %v4361, %v4393
  %v4432 = vadd.f32 %v4362, %v4393
  %v4433 = vadd.f32 %v4363, %v4393
  %v4434 = vadd.f32 %v4364, %v4393
  %v4435 = vadd.f32 %v4365, %v4393
  %v4436 = vadd.f32 %v4366, %v4393
  %v4437 = vadd.f32 %v4367, %v4393
  %v4438 = vadd.f32 %v4368, %v4393
  %v4439 = vadd.f32 %v4369, %v4393
  %v4440 = vadd.f32 %v4370, %v4393
  %v4441 = vadd.f32 %v4371, %v4393
  %v4442 = vadd.f32 %v4372, %v4393
  %v4443 = vadd.f32 %v4373, %v4393
  %v4444 = vadd.f32 %v4374, %v4393
  %v4445 = vadd.f32 %v4375, %v4393
  %v4446 = vadd.f32 %v4376, %v4393
  %v4447 = vadd.f32 %v4377, %v4393
  %v4448 = vadd.f32 %v4378, %v4393
  %v4449 = vadd.f32 %v4379, %v4393
  %v4450 = vadd.f32 %v4380, %v4393
  %v4451 = vadd.f32 %v4381, %v4393
  %v4452 = vadd.f32 %v4382, %v4393
  %v4453 = vadd.f32 %v4383, %v4393
  %v4454 = vadd.f32 %v4384, %v4393
  %v4455 = vadd.f32 %v4385, %v4393
  %v4456 = vadd.f32 %v4386, %v4393
  %v4457 = vadd.f32 %v4387, %v4393
  %v4458 = vadd.f32 %v4388, %v4393
  %v4459 = vmax.f32 %v4395, 0.0
  %v4460 = vmax.f32 %v4396, 0.0
  %v4461 = vmax.f32 %v4397, 0.0
  %v4462 = vmax.f32 %v4398, 0.0
  %v4463 = vmax.f32 %v4399, 0.0
  %v4464 = vmax.f32 %v4400, 0.0
  %v4465 = vmax.f32 %v4401, 0.0
  %v4466 = vmax.f32 %v4402, 0.0
  %v4467 = vmax.f32 %v4403, 0.0
  %v4468 = vmax.f32 %v4404, 0.0
  %v4469 = vmax.f32 %v4405, 0.0
  %v4470 = vmax.f32 %v4406, 0.0
  %v4471 = vmax.f32 %v4407, 0.0
  %v4472 = vmax.f32 %v4408, 0.0
  %v4473 = vmax.f32 %v4409, 0.0
  %v4474 = vmax.f32 %v4410, 0.0
  %v4475 = vmax.f32 %v4411, 0.0
  %v4476 = vmax.f32 %v4412, 0.0
  %v4477 = vmax.f32 %v4413, 0.0
  %v4478 = vmax.f32 %v4414, 0.0
  %v4479 = vmax.f32 %v4415, 0.0
  %v4480 = vmax.f32 %v4416, 0.0
  %v4481 = vmax.f32 %v4417, 0.0
  %v4482 = vmax.f32 %v4418, 0.0
  %v4483 = vmax.f32 %v4419, 0.0
  %v4484 = vmax.f32 %v4420, 0.0
  %v4485 = vmax.f32 %v4421, 0.0
  %v4486 = vmax.f32 %v4422, 0.0
  %v4487 = vmax.f32 %v4423, 0.0
  %v4488 = vmax.f32 %v4424, 0.0
  %v4489 = vmax.f32 %v4425, 0.0
  %v4490 = vmax.f32 %v4426, 0.0
  %v4491 = vmax.f32 %v4427, 0.0
  %v4492 = vmax.f32 %v4428, 0.0
  %v4493 = vmax.f32 %v4429, 0.0
  %v4494 = vmax.f32 %v4430, 0.0
  %v4495 = vmax.f32 %v4431, 0.0
  %v4496 = vmax.f32 %v4432, 0.0
  %v4497 = vmax.f32 %v4433, 0.0
  %v4498 = vmax.f32 %v4434, 0.0
  %v4499 = vmax.f32 %v4435, 0.0
  %v4500 = vmax.f32 %v4436, 0.0
  %v4501 = vmax.f32 %v4437, 0.0
  %v4502 = vmax.f32 %v4438, 0.0
  %v4503 = vmax.f32 %v4439, 0.0
  %v4504 = vmax.f32 %v4440, 0.0
  %v4505 = vmax.f32 %v4441, 0.0
  %v4506 = vmax.f32 %v4442, 0.0
  %v4507 = vmax.f32 %v4443, 0.0
  %v4508 = vmax.f32 %v4444, 0.0
  %v4509 = vmax.f32 %v4445, 0.0
  %v4510 = vmax.f32 %v4446, 0.0
  %v4511 = vmax.f32 %v4447, 0.0
  %v4512 = vmax.f32 %v4448, 0.0
  %v4513 = vmax.f32 %v4449, 0.0
  %v4514 = vmax.f32 %v4450, 0.0
  %v4515 = vmax.f32 %v4451, 0.0
  %v4516 = vmax.f32 %v4452, 0.0
  %v4517 = vmax.f32 %v4453, 0.0
  %v4518 = vmax.f32 %v4454, 0.0
  %v4519 = vmax.f32 %v4455, 0.0
  %v4520 = vmax.f32 %v4456, 0.0
  %v4521 = vmax.f32 %v4457, 0.0
  %v4522 = vmax.f32 %v4458, 0.0
  %4523 = vst.msk [vmem:[#allocation3] sm:$0xff] %vm2955, 0.0
  %4524 = vst.msk [vmem:[#allocation3 + $0x8] sm:$0xff] %vm2955, 0.0
  %vm4525 = vcmask 58368
  %4526 = vst.msk [vmem:[#allocation3 + $0x10] sm:$0x3] %vm4525, 0.0
  %4527 = vst.msk [vmem:[#allocation3 + $0x18] sm:$0xff] %vm2955, 0.0
  %4528 = vst.msk [vmem:[#allocation3 + $0x20] sm:$0xff] %vm2955, 0.0
  %4529 = vst.msk [vmem:[#allocation3 + $0x28] sm:$0x3] %vm4525, 0.0
  %4530 = vst.msk [vmem:[#allocation3 + $0x30] sm:$0xff] %vm2955, 0.0
  %4531 = vst.msk [vmem:[#allocation3 + $0x38] sm:$0xff] %vm2955, 0.0
  %4532 = vst.msk [vmem:[#allocation3 + $0x40] sm:$0x3] %vm4525, 0.0
  %4533 = vst.msk [vmem:[#allocation3 + $0x48] sm:$0xff] %vm2955, 0.0
  %4534 = vst.msk [vmem:[#allocation3 + $0x50] sm:$0xff] %vm2955, 0.0
  %4535 = vst.msk [vmem:[#allocation3 + $0x58] sm:$0x3] %vm4525, 0.0
  %4536 = vst.msk [vmem:[#allocation3 + $0x60] sm:$0xff] %vm2955, 0.0
  %4537 = vst.msk [vmem:[#allocation3 + $0x68] sm:$0xff] %vm2955, 0.0
  %4538 = vst.msk [vmem:[#allocation3 + $0x70] sm:$0x3] %vm4525, 0.0
  %4539 = vst.msk [vmem:[#allocation3 + $0x78] sm:$0xff] %vm2955, 0.0
  %4540 = vst.msk [vmem:[#allocation3 + $0x80] sm:$0xff] %vm2955, 0.0
  %4541 = vst.msk [vmem:[#allocation3 + $0x88] sm:$0x3] %vm4525, 0.0
  %4542 = vst.msk [vmem:[#allocation3 + $0x90] sm:$0xff] %vm2955, 0.0
  %4543 = vst.msk [vmem:[#allocation3 + $0x98] sm:$0xff] %vm2955, 0.0
  %4544 = vst.msk [vmem:[#allocation3 + $0xa0] sm:$0x3] %vm4525, 0.0
  %4545 = vst.msk [vmem:[#allocation3 + $0xa8] sm:$0xff] %vm2955, 0.0
  %4546 = vst.msk [vmem:[#allocation3 + $0xb0] sm:$0xff] %vm2955, 0.0
  %4547 = vst.msk [vmem:[#allocation3 + $0xb8] sm:$0x3] %vm4525, 0.0
  %4548 = vst.msk [vmem:[#allocation3 + $0xc0] sm:$0xff] %vm2955, 0.0
  %4549 = vst.msk [vmem:[#allocation3 + $0xc8] sm:$0xff] %vm2955, 0.0
  %4550 = vst.msk [vmem:[#allocation3 + $0xd0] sm:$0x3] %vm4525, 0.0
  %4551 = vst.msk [vmem:[#allocation3 + $0xd8] sm:$0xff] %vm2955, 0.0
  %4552 = vst.msk [vmem:[#allocation3 + $0xe0] sm:$0xff] %vm2955, 0.0
  %4553 = vst.msk [vmem:[#allocation3 + $0xe8] sm:$0x3] %vm4525, 0.0
  %4554 = vst.msk [vmem:[#allocation3 + $0xf0] sm:$0xff] %vm2955, 0.0
  %4555 = vst.msk [vmem:[#allocation3 + $0xf8] sm:$0xff] %vm2955, 0.0
  %4556 = vst.msk [vmem:[#allocation3 + $0x100] sm:$0x3] %vm4525, 0.0
  %4557 = vst.msk [vmem:[#allocation3 + $0x108] sm:$0xff] %vm2955, 0.0
  %4558 = vst.msk [vmem:[#allocation3 + $0x110] sm:$0xff] %vm2955, 0.0
  %4559 = vst.msk [vmem:[#allocation3 + $0x118] sm:$0x3] %vm4525, 0.0
  %4560 = vst.msk [vmem:[#allocation3 + $0x120] sm:$0xff] %vm2955, 0.0
  %4561 = vst.msk [vmem:[#allocation3 + $0x128] sm:$0xff] %vm2955, 0.0
  %4562 = vst.msk [vmem:[#allocation3 + $0x130] sm:$0x3] %vm4525, 0.0
  %4563 = vst.msk [vmem:[#allocation3 + $0x138] sm:$0xff] %vm2955, 0.0
  %4564 = vst.msk [vmem:[#allocation3 + $0x140] sm:$0xff] %vm2955, 0.0
  %4565 = vst.msk [vmem:[#allocation3 + $0x148] sm:$0x3] %vm4525, 0.0
  %4566 = vst.msk [vmem:[#allocation3 + $0x150] sm:$0xff] %vm2955, 0.0
  %4567 = vst.msk [vmem:[#allocation3 + $0x158] sm:$0xff] %vm2955, 0.0
  %4568 = vst.msk [vmem:[#allocation3 + $0x160] sm:$0x3] %vm4525, 0.0
  %4569 = vst.msk [vmem:[#allocation3 + $0x168] sm:$0xff] %vm2955, 0.0
  %4570 = vst.msk [vmem:[#allocation3 + $0x170] sm:$0xff] %vm2955, 0.0
  %4571 = vst.msk [vmem:[#allocation3 + $0x178] sm:$0x3] %vm4525, 0.0
  %4572 = vst.msk [vmem:[#allocation3 + $0x180] sm:$0xff] %vm2955, 0.0
  %4573 = vst.msk [vmem:[#allocation3 + $0x188] sm:$0xff] %vm2955, 0.0
  %4574 = vst.msk [vmem:[#allocation3 + $0x190] sm:$0x3] %vm4525, 0.0
  %4575 = vst.msk [vmem:[#allocation3 + $0x198] sm:$0xff] %vm2955, 0.0
  %4576 = vst.msk [vmem:[#allocation3 + $0x1a0] sm:$0xff] %vm2955, 0.0
  %4577 = vst.msk [vmem:[#allocation3 + $0x1a8] sm:$0x3] %vm4525, 0.0
  %4578 = vst.msk [vmem:[#allocation3 + $0x1b0] sm:$0xff] %vm2955, 0.0
  %4579 = vst.msk [vmem:[#allocation3 + $0x1b8] sm:$0xff] %vm2955, 0.0
  %4580 = vst.msk [vmem:[#allocation3 + $0x1c0] sm:$0x3] %vm4525, 0.0
  %4581 = vst.msk [vmem:[#allocation3 + $0x1c8] sm:$0xff] %vm2955, 0.0
  %4582 = vst.msk [vmem:[#allocation3 + $0x1d0] sm:$0xff] %vm2955, 0.0
  %4583 = vst.msk [vmem:[#allocation3 + $0x1d8] sm:$0x3] %vm4525, 0.0
  %4584 = vst.msk [vmem:[#allocation3 + $0x1e0] sm:$0xff] %vm2955, 0.0
  %4585 = vst.msk [vmem:[#allocation3 + $0x1e8] sm:$0xff] %vm2955, 0.0
  %4586 = vst.msk [vmem:[#allocation3 + $0x1f0] sm:$0x3] %vm4525, 0.0
  %4587 = vst.msk [vmem:[#allocation3 + $0x1f8] sm:$0xff] %vm2955, 0.0
  %4588 = vst.msk [vmem:[#allocation3 + $0x200] sm:$0xff] %vm2955, 0.0
  %4589 = vst.msk [vmem:[#allocation3 + $0x208] sm:$0x3] %vm4525, 0.0
  %4590 = vst.msk [vmem:[#allocation3 + $0x210] sm:$0xff] %vm2955, 0.0
  %4591 = vst.msk [vmem:[#allocation3 + $0x218] sm:$0xff] %vm2955, 0.0
  %4592 = vst.msk [vmem:[#allocation3 + $0x220] sm:$0x3] %vm4525, 0.0
  %4593 = vst.msk [vmem:[#allocation3 + $0x228] sm:$0xff] %vm2955, 0.0
  %4594 = vst.msk [vmem:[#allocation3 + $0x230] sm:$0xff] %vm2955, 0.0
  %4595 = vst.msk [vmem:[#allocation3 + $0x238] sm:$0x3] %vm4525, 0.0
  %4596 = vst.msk [vmem:[#allocation3 + $0x240] sm:$0xff] %vm2955, 0.0
  %4597 = vst.msk [vmem:[#allocation3 + $0x248] sm:$0xff] %vm2955, 0.0
  %4598 = vst.msk [vmem:[#allocation3 + $0x250] sm:$0x3] %vm4525, 0.0
  %4599 = vst.msk [vmem:[#allocation3 + $0x258] sm:$0xff] %vm2955, 0.0
  %4600 = vst.msk [vmem:[#allocation3 + $0x260] sm:$0xff] %vm2955, 0.0
  %4601 = vst.msk [vmem:[#allocation3 + $0x268] sm:$0x3] %vm4525, 0.0
  %4602 = vst.msk [vmem:[#allocation3 + $0x270] sm:$0xff] %vm2955, 0.0
  %4603 = vst.msk [vmem:[#allocation3 + $0x278] sm:$0xff] %vm2955, 0.0
  %4604 = vst.msk [vmem:[#allocation3 + $0x280] sm:$0x3] %vm4525, 0.0
  %4605 = vst.msk [vmem:[#allocation3 + $0x288] sm:$0xff] %vm2955, 0.0
  %4606 = vst.msk [vmem:[#allocation3 + $0x290] sm:$0xff] %vm2955, 0.0
  %4607 = vst.msk [vmem:[#allocation3 + $0x298] sm:$0x3] %vm4525, 0.0
  %4608 = vst.msk [vmem:[#allocation3 + $0x2a0] sm:$0xff] %vm2955, 0.0
  %4609 = vst.msk [vmem:[#allocation3 + $0x2a8] sm:$0xff] %vm2955, 0.0
  %4610 = vst.msk [vmem:[#allocation3 + $0x2b0] sm:$0x3] %vm4525, 0.0
  %4611 = vst.msk [vmem:[#allocation3 + $0x2b8] sm:$0xff] %vm2955, 0.0
  %4612 = vst.msk [vmem:[#allocation3 + $0x2c0] sm:$0xff] %vm2955, 0.0
  %4613 = vst.msk [vmem:[#allocation3 + $0x2c8] sm:$0x3] %vm4525, 0.0
  %4614 = vst.msk [vmem:[#allocation3 + $0x2d0] sm:$0xff] %vm2955, 0.0
  %4615 = vst.msk [vmem:[#allocation3 + $0x2d8] sm:$0xff] %vm2955, 0.0
  %4616 = vst.msk [vmem:[#allocation3 + $0x2e0] sm:$0x3] %vm4525, 0.0
  %4617 = vst.msk [vmem:[#allocation3 + $0x2e8] sm:$0xff] %vm2955, 0.0
  %4618 = vst.msk [vmem:[#allocation3 + $0x2f0] sm:$0xff] %vm2955, 0.0
  %4619 = vst.msk [vmem:[#allocation3 + $0x2f8] sm:$0x3] %vm4525, 0.0
  %4620 = vst.msk [vmem:[#allocation3 + $0x300] sm:$0xff] %vm2955, 0.0
  %4621 = vst.msk [vmem:[#allocation3 + $0x308] sm:$0xff] %vm2955, 0.0
  %4622 = vst.msk [vmem:[#allocation3 + $0x310] sm:$0x3] %vm4525, 0.0
  %4623 = vst.msk [vmem:[#allocation3 + $0x318] sm:$0xff] %vm2955, 0.0
  %4624 = vst.msk [vmem:[#allocation3 + $0x320] sm:$0xff] %vm2955, 0.0
  %4625 = vst.msk [vmem:[#allocation3 + $0x328] sm:$0x3] %vm4525, 0.0
  %4626 = vst.msk [vmem:[#allocation3 + $0x330] sm:$0xff] %vm2955, 0.0
  %4627 = vst.msk [vmem:[#allocation3 + $0x338] sm:$0xff] %vm2955, 0.0
  %4628 = vst.msk [vmem:[#allocation3 + $0x340] sm:$0x3] %vm4525, 0.0
  %4629 = vst.msk [vmem:[#allocation3 + $0x348] sm:$0xff] %vm2955, 0.0
  %4630 = vst.msk [vmem:[#allocation3 + $0x350] sm:$0xff] %vm2955, 0.0
  %4631 = vst.msk [vmem:[#allocation3 + $0x358] sm:$0x3] %vm4525, 0.0
  %s4632 = scalar_lea.vmem [#allocation3], 24
  %4633 = vst.msk [vmem:[%s4632 + $0x1] sm:$0xff] %vm2955, %v4459
  %4634 = vst.msk [vmem:[%s4632 + $0x9] sm:$0xff] %vm2955, %v4460
  %4635 = vst.msk [vmem:[%s4632 + $0x19] sm:$0xff] %vm2955, %v4461
  %4636 = vst.msk [vmem:[%s4632 + $0x21] sm:$0xff] %vm2955, %v4462
  %4637 = vst.msk [vmem:[%s4632 + $0x31] sm:$0xff] %vm2955, %v4463
  %4638 = vst.msk [vmem:[%s4632 + $0x39] sm:$0xff] %vm2955, %v4464
  %4639 = vst.msk [vmem:[%s4632 + $0x49] sm:$0xff] %vm2955, %v4465
  %4640 = vst.msk [vmem:[%s4632 + $0x51] sm:$0xff] %vm2955, %v4466
  %4641 = vst.msk [vmem:[%s4632 + $0x61] sm:$0xff] %vm2955, %v4467
  %4642 = vst.msk [vmem:[%s4632 + $0x69] sm:$0xff] %vm2955, %v4468
  %4643 = vst.msk [vmem:[%s4632 + $0x79] sm:$0xff] %vm2955, %v4469
  %4644 = vst.msk [vmem:[%s4632 + $0x81] sm:$0xff] %vm2955, %v4470
  %4645 = vst.msk [vmem:[%s4632 + $0x91] sm:$0xff] %vm2955, %v4471
  %4646 = vst.msk [vmem:[%s4632 + $0x99] sm:$0xff] %vm2955, %v4472
  %4647 = vst.msk [vmem:[%s4632 + $0xa9] sm:$0xff] %vm2955, %v4473
  %4648 = vst.msk [vmem:[%s4632 + $0xb1] sm:$0xff] %vm2955, %v4474
  %4649 = vst.msk [vmem:[%s4632 + $0xc1] sm:$0xff] %vm2955, %v4475
  %4650 = vst.msk [vmem:[%s4632 + $0xc9] sm:$0xff] %vm2955, %v4476
  %4651 = vst.msk [vmem:[%s4632 + $0xd9] sm:$0xff] %vm2955, %v4477
  %4652 = vst.msk [vmem:[%s4632 + $0xe1] sm:$0xff] %vm2955, %v4478
  %4653 = vst.msk [vmem:[%s4632 + $0xf1] sm:$0xff] %vm2955, %v4479
  %4654 = vst.msk [vmem:[%s4632 + $0xf9] sm:$0xff] %vm2955, %v4480
  %4655 = vst.msk [vmem:[%s4632 + $0x109] sm:$0xff] %vm2955, %v4481
  %4656 = vst.msk [vmem:[%s4632 + $0x111] sm:$0xff] %vm2955, %v4482
  %4657 = vst.msk [vmem:[%s4632 + $0x121] sm:$0xff] %vm2955, %v4483
  %4658 = vst.msk [vmem:[%s4632 + $0x129] sm:$0xff] %vm2955, %v4484
  %4659 = vst.msk [vmem:[%s4632 + $0x139] sm:$0xff] %vm2955, %v4485
  %4660 = vst.msk [vmem:[%s4632 + $0x141] sm:$0xff] %vm2955, %v4486
  %4661 = vst.msk [vmem:[%s4632 + $0x151] sm:$0xff] %vm2955, %v4487
  %4662 = vst.msk [vmem:[%s4632 + $0x159] sm:$0xff] %vm2955, %v4488
  %4663 = vst.msk [vmem:[%s4632 + $0x169] sm:$0xff] %vm2955, %v4489
  %4664 = vst.msk [vmem:[%s4632 + $0x171] sm:$0xff] %vm2955, %v4490
  %4665 = vst.msk [vmem:[%s4632 + $0x1b1] sm:$0xff] %vm2955, %v4491
  %4666 = vst.msk [vmem:[%s4632 + $0x1b9] sm:$0xff] %vm2955, %v4492
  %4667 = vst.msk [vmem:[%s4632 + $0x1c9] sm:$0xff] %vm2955, %v4493
  %4668 = vst.msk [vmem:[%s4632 + $0x1d1] sm:$0xff] %vm2955, %v4494
  %4669 = vst.msk [vmem:[%s4632 + $0x1e1] sm:$0xff] %vm2955, %v4495
  %4670 = vst.msk [vmem:[%s4632 + $0x1e9] sm:$0xff] %vm2955, %v4496
  %4671 = vst.msk [vmem:[%s4632 + $0x1f9] sm:$0xff] %vm2955, %v4497
  %4672 = vst.msk [vmem:[%s4632 + $0x201] sm:$0xff] %vm2955, %v4498
  %4673 = vst.msk [vmem:[%s4632 + $0x211] sm:$0xff] %vm2955, %v4499
  %4674 = vst.msk [vmem:[%s4632 + $0x219] sm:$0xff] %vm2955, %v4500
  %4675 = vst.msk [vmem:[%s4632 + $0x229] sm:$0xff] %vm2955, %v4501
  %4676 = vst.msk [vmem:[%s4632 + $0x231] sm:$0xff] %vm2955, %v4502
  %4677 = vst.msk [vmem:[%s4632 + $0x241] sm:$0xff] %vm2955, %v4503
  %4678 = vst.msk [vmem:[%s4632 + $0x249] sm:$0xff] %vm2955, %v4504
  %4679 = vst.msk [vmem:[%s4632 + $0x259] sm:$0xff] %vm2955, %v4505
  %4680 = vst.msk [vmem:[%s4632 + $0x261] sm:$0xff] %vm2955, %v4506
  %4681 = vst.msk [vmem:[%s4632 + $0x271] sm:$0xff] %vm2955, %v4507
  %4682 = vst.msk [vmem:[%s4632 + $0x279] sm:$0xff] %vm2955, %v4508
  %4683 = vst.msk [vmem:[%s4632 + $0x289] sm:$0xff] %vm2955, %v4509
  %4684 = vst.msk [vmem:[%s4632 + $0x291] sm:$0xff] %vm2955, %v4510
  %4685 = vst.msk [vmem:[%s4632 + $0x2a1] sm:$0xff] %vm2955, %v4511
  %4686 = vst.msk [vmem:[%s4632 + $0x2a9] sm:$0xff] %vm2955, %v4512
  %4687 = vst.msk [vmem:[%s4632 + $0x2b9] sm:$0xff] %vm2955, %v4513
  %4688 = vst.msk [vmem:[%s4632 + $0x2c1] sm:$0xff] %vm2955, %v4514
  %4689 = vst.msk [vmem:[%s4632 + $0x2d1] sm:$0xff] %vm2955, %v4515
  %4690 = vst.msk [vmem:[%s4632 + $0x2d9] sm:$0xff] %vm2955, %v4516
  %4691 = vst.msk [vmem:[%s4632 + $0x2e9] sm:$0xff] %vm2955, %v4517
  %4692 = vst.msk [vmem:[%s4632 + $0x2f1] sm:$0xff] %vm2955, %v4518
  %4693 = vst.msk [vmem:[%s4632 + $0x301] sm:$0xff] %vm2955, %v4519
  %4694 = vst.msk [vmem:[%s4632 + $0x309] sm:$0xff] %vm2955, %v4520
  %4695 = vst.msk [vmem:[%s4632 + $0x319] sm:$0xff] %vm2955, %v4521
  %4696 = vst.msk [vmem:[%s4632 + $0x321] sm:$0xff] %vm2955, %v4522
  %v4697 = vld [vmem:[#allocation3] sm:$0xff]
  %v4698 = vld [vmem:[#allocation3 + $0x8] sm:$0xff]
  %v4699 = vld [vmem:[#allocation3 + $0x18] sm:$0xff]
  %v4700 = vld [vmem:[#allocation3 + $0x20] sm:$0xff]
  %v4701 = vld [vmem:[#allocation3 + $0x30] sm:$0xff]
  %v4702 = vld [vmem:[#allocation3 + $0x38] sm:$0xff]
  %v4703 = vld [vmem:[#allocation3 + $0x48] sm:$0xff]
  %v4704 = vld [vmem:[#allocation3 + $0x50] sm:$0xff]
  %v4705 = vld [vmem:[#allocation3 + $0x60] sm:$0xff]
  %v4706 = vld [vmem:[#allocation3 + $0x68] sm:$0xff]
  %v4707 = vld [vmem:[#allocation3 + $0x78] sm:$0xff]
  %v4708 = vld [vmem:[#allocation3 + $0x80] sm:$0xff]
  %v4709 = vld [vmem:[#allocation3 + $0x90] sm:$0xff]
  %v4710 = vld [vmem:[#allocation3 + $0x98] sm:$0xff]
  %v4711 = vld [vmem:[#allocation3 + $0xa8] sm:$0xff]
  %v4712 = vld [vmem:[#allocation3 + $0xb0] sm:$0xff]
  %v4713 = vld [vmem:[#allocation3 + $0xc0] sm:$0xff]
  %v4714 = vld [vmem:[#allocation3 + $0xc8] sm:$0xff]
  %v4715 = vld [vmem:[#allocation3 + $0xd8] sm:$0xff]
  %v4716 = vld [vmem:[#allocation3 + $0xe0] sm:$0xff]
  %v4717 = vld [vmem:[#allocation3 + $0xf0] sm:$0xff]
  %v4718 = vld [vmem:[#allocation3 + $0xf8] sm:$0xff]
  %v4719 = vld [vmem:[#allocation3 + $0x108] sm:$0xff]
  %v4720 = vld [vmem:[#allocation3 + $0x110] sm:$0xff]
  %v4721 = vld [vmem:[#allocation3 + $0x120] sm:$0xff]
  %v4722 = vld [vmem:[#allocation3 + $0x128] sm:$0xff]
  %v4723 = vld [vmem:[#allocation3 + $0x138] sm:$0xff]
  %v4724 = vld [vmem:[#allocation3 + $0x140] sm:$0xff]
  %v4725 = vld [vmem:[#allocation3 + $0x150] sm:$0xff]
  %v4726 = vld [vmem:[#allocation3 + $0x158] sm:$0xff]
  %v4727 = vld [vmem:[#allocation3 + $0x168] sm:$0xff]
  %v4728 = vld [vmem:[#allocation3 + $0x170] sm:$0xff]
  %v4729 = vld [vmem:[#allocation3 + $0x1b0] sm:$0xff]
  %v4730 = vld [vmem:[#allocation3 + $0x1b8] sm:$0xff]
  %v4731 = vld [vmem:[#allocation3 + $0x1c8] sm:$0xff]
  %v4732 = vld [vmem:[#allocation3 + $0x1d0] sm:$0xff]
  %v4733 = vld [vmem:[#allocation3 + $0x1e0] sm:$0xff]
  %v4734 = vld [vmem:[#allocation3 + $0x1e8] sm:$0xff]
  %v4735 = vld [vmem:[#allocation3 + $0x1f8] sm:$0xff]
  %v4736 = vld [vmem:[#allocation3 + $0x200] sm:$0xff]
  %v4737 = vld [vmem:[#allocation3 + $0x210] sm:$0xff]
  %v4738 = vld [vmem:[#allocation3 + $0x218] sm:$0xff]
  %v4739 = vld [vmem:[#allocation3 + $0x228] sm:$0xff]
  %v4740 = vld [vmem:[#allocation3 + $0x230] sm:$0xff]
  %v4741 = vld [vmem:[#allocation3 + $0x240] sm:$0xff]
  %v4742 = vld [vmem:[#allocation3 + $0x248] sm:$0xff]
  %v4743 = vld [vmem:[#allocation3 + $0x258] sm:$0xff]
  %v4744 = vld [vmem:[#allocation3 + $0x260] sm:$0xff]
  %v4745 = vld [vmem:[#allocation3 + $0x270] sm:$0xff]
  %v4746 = vld [vmem:[#allocation3 + $0x278] sm:$0xff]
  %v4747 = vld [vmem:[#allocation3 + $0x288] sm:$0xff]
  %v4748 = vld [vmem:[#allocation3 + $0x290] sm:$0xff]
  %v4749 = vld [vmem:[#allocation3 + $0x2a0] sm:$0xff]
  %v4750 = vld [vmem:[#allocation3 + $0x2a8] sm:$0xff]
  %v4751 = vld [vmem:[#allocation3 + $0x2b8] sm:$0xff]
  %v4752 = vld [vmem:[#allocation3 + $0x2c0] sm:$0xff]
  %v4753 = vld [vmem:[#allocation3 + $0x2d0] sm:$0xff]
  %v4754 = vld [vmem:[#allocation3 + $0x2d8] sm:$0xff]
  %v4755 = vld [vmem:[#allocation3 + $0x2e8] sm:$0xff]
  %v4756 = vld [vmem:[#allocation3 + $0x2f0] sm:$0xff]
  %v4757 = vld [vmem:[#allocation3 + $0x300] sm:$0xff]
  %v4758 = vld [vmem:[#allocation3 + $0x308] sm:$0xff]
  %v4759 = vld [vmem:[#allocation3 + $0x318] sm:$0xff]
  %v4760 = vld [vmem:[#allocation3 + $0x320] sm:$0xff]
  %v4761 = vld [vmem:[#allocation3 + $0x1] sm:$0xff]
  %v4762 = vld [vmem:[#allocation3 + $0x9] sm:$0xff]
  %v4763 = vld [vmem:[#allocation3 + $0x19] sm:$0xff]
  %v4764 = vld [vmem:[#allocation3 + $0x21] sm:$0xff]
  %v4765 = vld [vmem:[#allocation3 + $0x31] sm:$0xff]
  %v4766 = vld [vmem:[#allocation3 + $0x39] sm:$0xff]
  %v4767 = vld [vmem:[#allocation3 + $0x49] sm:$0xff]
  %v4768 = vld [vmem:[#allocation3 + $0x51] sm:$0xff]
  %v4769 = vld [vmem:[#allocation3 + $0x61] sm:$0xff]
  %v4770 = vld [vmem:[#allocation3 + $0x69] sm:$0xff]
  %v4771 = vld [vmem:[#allocation3 + $0x79] sm:$0xff]
  %v4772 = vld [vmem:[#allocation3 + $0x81] sm:$0xff]
  %v4773 = vld [vmem:[#allocation3 + $0x91] sm:$0xff]
  %v4774 = vld [vmem:[#allocation3 + $0x99] sm:$0xff]
  %v4775 = vld [vmem:[#allocation3 + $0xa9] sm:$0xff]
  %v4776 = vld [vmem:[#allocation3 + $0xb1] sm:$0xff]
  %v4777 = vld [vmem:[#allocation3 + $0xc1] sm:$0xff]
  %v4778 = vld [vmem:[#allocation3 + $0xc9] sm:$0xff]
  %v4779 = vld [vmem:[#allocation3 + $0xd9] sm:$0xff]
  %v4780 = vld [vmem:[#allocation3 + $0xe1] sm:$0xff]
  %v4781 = vld [vmem:[#allocation3 + $0xf1] sm:$0xff]
  %v4782 = vld [vmem:[#allocation3 + $0xf9] sm:$0xff]
  %v4783 = vld [vmem:[#allocation3 + $0x109] sm:$0xff]
  %v4784 = vld [vmem:[#allocation3 + $0x111] sm:$0xff]
  %v4785 = vld [vmem:[#allocation3 + $0x121] sm:$0xff]
  %v4786 = vld [vmem:[#allocation3 + $0x129] sm:$0xff]
  %v4787 = vld [vmem:[#allocation3 + $0x139] sm:$0xff]
  %v4788 = vld [vmem:[#allocation3 + $0x141] sm:$0xff]
  %v4789 = vld [vmem:[#allocation3 + $0x151] sm:$0xff]
  %v4790 = vld [vmem:[#allocation3 + $0x159] sm:$0xff]
  %v4791 = vld [vmem:[#allocation3 + $0x169] sm:$0xff]
  %v4792 = vld [vmem:[#allocation3 + $0x171] sm:$0xff]
  %v4793 = vld [vmem:[#allocation3 + $0x1b1] sm:$0xff]
  %v4794 = vld [vmem:[#allocation3 + $0x1b9] sm:$0xff]
  %v4795 = vld [vmem:[#allocation3 + $0x1c9] sm:$0xff]
  %v4796 = vld [vmem:[#allocation3 + $0x1d1] sm:$0xff]
  %v4797 = vld [vmem:[#allocation3 + $0x1e1] sm:$0xff]
  %v4798 = vld [vmem:[#allocation3 + $0x1e9] sm:$0xff]
  %v4799 = vld [vmem:[#allocation3 + $0x1f9] sm:$0xff]
  %v4800 = vld [vmem:[#allocation3 + $0x201] sm:$0xff]
  %v4801 = vld [vmem:[#allocation3 + $0x211] sm:$0xff]
  %v4802 = vld [vmem:[#allocation3 + $0x219] sm:$0xff]
  %v4803 = vld [vmem:[#allocation3 + $0x229] sm:$0xff]
  %v4804 = vld [vmem:[#allocation3 + $0x231] sm:$0xff]
  %v4805 = vld [vmem:[#allocation3 + $0x241] sm:$0xff]
  %v4806 = vld [vmem:[#allocation3 + $0x249] sm:$0xff]
  %v4807 = vld [vmem:[#allocation3 + $0x259] sm:$0xff]
  %v4808 = vld [vmem:[#allocation3 + $0x261] sm:$0xff]
  %v4809 = vld [vmem:[#allocation3 + $0x271] sm:$0xff]
  %v4810 = vld [vmem:[#allocation3 + $0x279] sm:$0xff]
  %v4811 = vld [vmem:[#allocation3 + $0x289] sm:$0xff]
  %v4812 = vld [vmem:[#allocation3 + $0x291] sm:$0xff]
  %v4813 = vld [vmem:[#allocation3 + $0x2a1] sm:$0xff]
  %v4814 = vld [vmem:[#allocation3 + $0x2a9] sm:$0xff]
  %v4815 = vld [vmem:[#allocation3 + $0x2b9] sm:$0xff]
  %v4816 = vld [vmem:[#allocation3 + $0x2c1] sm:$0xff]
  %v4817 = vld [vmem:[#allocation3 + $0x2d1] sm:$0xff]
  %v4818 = vld [vmem:[#allocation3 + $0x2d9] sm:$0xff]
  %v4819 = vld [vmem:[#allocation3 + $0x2e9] sm:$0xff]
  %v4820 = vld [vmem:[#allocation3 + $0x2f1] sm:$0xff]
  %v4821 = vld [vmem:[#allocation3 + $0x301] sm:$0xff]
  %v4822 = vld [vmem:[#allocation3 + $0x309] sm:$0xff]
  %v4823 = vld [vmem:[#allocation3 + $0x319] sm:$0xff]
  %v4824 = vld [vmem:[#allocation3 + $0x321] sm:$0xff]
  %v4825 = vld [vmem:[#allocation3 + $0x2] sm:$0xff]
  %v4826 = vld [vmem:[#allocation3 + $0xa] sm:$0xff]
  %v4827 = vld [vmem:[#allocation3 + $0x1a] sm:$0xff]
  %v4828 = vld [vmem:[#allocation3 + $0x22] sm:$0xff]
  %v4829 = vld [vmem:[#allocation3 + $0x32] sm:$0xff]
  %v4830 = vld [vmem:[#allocation3 + $0x3a] sm:$0xff]
  %v4831 = vld [vmem:[#allocation3 + $0x4a] sm:$0xff]
  %v4832 = vld [vmem:[#allocation3 + $0x52] sm:$0xff]
  %v4833 = vld [vmem:[#allocation3 + $0x62] sm:$0xff]
  %v4834 = vld [vmem:[#allocation3 + $0x6a] sm:$0xff]
  %v4835 = vld [vmem:[#allocation3 + $0x7a] sm:$0xff]
  %v4836 = vld [vmem:[#allocation3 + $0x82] sm:$0xff]
  %v4837 = vld [vmem:[#allocation3 + $0x92] sm:$0xff]
  %v4838 = vld [vmem:[#allocation3 + $0x9a] sm:$0xff]
  %v4839 = vld [vmem:[#allocation3 + $0xaa] sm:$0xff]
  %v4840 = vld [vmem:[#allocation3 + $0xb2] sm:$0xff]
  %v4841 = vld [vmem:[#allocation3 + $0xc2] sm:$0xff]
  %v4842 = vld [vmem:[#allocation3 + $0xca] sm:$0xff]
  %v4843 = vld [vmem:[#allocation3 + $0xda] sm:$0xff]
  %v4844 = vld [vmem:[#allocation3 + $0xe2] sm:$0xff]
  %v4845 = vld [vmem:[#allocation3 + $0xf2] sm:$0xff]
  %v4846 = vld [vmem:[#allocation3 + $0xfa] sm:$0xff]
  %v4847 = vld [vmem:[#allocation3 + $0x10a] sm:$0xff]
  %v4848 = vld [vmem:[#allocation3 + $0x112] sm:$0xff]
  %v4849 = vld [vmem:[#allocation3 + $0x122] sm:$0xff]
  %v4850 = vld [vmem:[#allocation3 + $0x12a] sm:$0xff]
  %v4851 = vld [vmem:[#allocation3 + $0x13a] sm:$0xff]
  %v4852 = vld [vmem:[#allocation3 + $0x142] sm:$0xff]
  %v4853 = vld [vmem:[#allocation3 + $0x152] sm:$0xff]
  %v4854 = vld [vmem:[#allocation3 + $0x15a] sm:$0xff]
  %v4855 = vld [vmem:[#allocation3 + $0x16a] sm:$0xff]
  %v4856 = vld [vmem:[#allocation3 + $0x172] sm:$0xff]
  %v4857 = vld [vmem:[#allocation3 + $0x1b2] sm:$0xff]
  %v4858 = vld [vmem:[#allocation3 + $0x1ba] sm:$0xff]
  %v4859 = vld [vmem:[#allocation3 + $0x1ca] sm:$0xff]
  %v4860 = vld [vmem:[#allocation3 + $0x1d2] sm:$0xff]
  %v4861 = vld [vmem:[#allocation3 + $0x1e2] sm:$0xff]
  %v4862 = vld [vmem:[#allocation3 + $0x1ea] sm:$0xff]
  %v4863 = vld [vmem:[#allocation3 + $0x1fa] sm:$0xff]
  %v4864 = vld [vmem:[#allocation3 + $0x202] sm:$0xff]
  %v4865 = vld [vmem:[#allocation3 + $0x212] sm:$0xff]
  %v4866 = vld [vmem:[#allocation3 + $0x21a] sm:$0xff]
  %v4867 = vld [vmem:[#allocation3 + $0x22a] sm:$0xff]
  %v4868 = vld [vmem:[#allocation3 + $0x232] sm:$0xff]
  %v4869 = vld [vmem:[#allocation3 + $0x242] sm:$0xff]
  %v4870 = vld [vmem:[#allocation3 + $0x24a] sm:$0xff]
  %v4871 = vld [vmem:[#allocation3 + $0x25a] sm:$0xff]
  %v4872 = vld [vmem:[#allocation3 + $0x262] sm:$0xff]
  %v4873 = vld [vmem:[#allocation3 + $0x272] sm:$0xff]
  %v4874 = vld [vmem:[#allocation3 + $0x27a] sm:$0xff]
  %v4875 = vld [vmem:[#allocation3 + $0x28a] sm:$0xff]
  %v4876 = vld [vmem:[#allocation3 + $0x292] sm:$0xff]
  %v4877 = vld [vmem:[#allocation3 + $0x2a2] sm:$0xff]
  %v4878 = vld [vmem:[#allocation3 + $0x2aa] sm:$0xff]
  %v4879 = vld [vmem:[#allocation3 + $0x2ba] sm:$0xff]
  %v4880 = vld [vmem:[#allocation3 + $0x2c2] sm:$0xff]
  %v4881 = vld [vmem:[#allocation3 + $0x2d2] sm:$0xff]
  %v4882 = vld [vmem:[#allocation3 + $0x2da] sm:$0xff]
  %v4883 = vld [vmem:[#allocation3 + $0x2ea] sm:$0xff]
  %v4884 = vld [vmem:[#allocation3 + $0x2f2] sm:$0xff]
  %v4885 = vld [vmem:[#allocation3 + $0x302] sm:$0xff]
  %v4886 = vld [vmem:[#allocation3 + $0x30a] sm:$0xff]
  %v4887 = vld [vmem:[#allocation3 + $0x31a] sm:$0xff]
  %v4888 = vld [vmem:[#allocation3 + $0x322] sm:$0xff]
  %v4889 = vld [vmem:[%s4632] sm:$0xff]
  %v4890 = vld [vmem:[%s4632 + $0x8] sm:$0xff]
  %v4891 = vld [vmem:[%s4632 + $0x18] sm:$0xff]
  %v4892 = vld [vmem:[%s4632 + $0x20] sm:$0xff]
  %v4893 = vld [vmem:[%s4632 + $0x30] sm:$0xff]
  %v4894 = vld [vmem:[%s4632 + $0x38] sm:$0xff]
  %v4895 = vld [vmem:[%s4632 + $0x48] sm:$0xff]
  %v4896 = vld [vmem:[%s4632 + $0x50] sm:$0xff]
  %v4897 = vld [vmem:[%s4632 + $0x60] sm:$0xff]
  %v4898 = vld [vmem:[%s4632 + $0x68] sm:$0xff]
  %v4899 = vld [vmem:[%s4632 + $0x78] sm:$0xff]
  %v4900 = vld [vmem:[%s4632 + $0x80] sm:$0xff]
  %v4901 = vld [vmem:[%s4632 + $0x90] sm:$0xff]
  %v4902 = vld [vmem:[%s4632 + $0x98] sm:$0xff]
  %v4903 = vld [vmem:[%s4632 + $0xa8] sm:$0xff]
  %v4904 = vld [vmem:[%s4632 + $0xb0] sm:$0xff]
  %v4905 = vld [vmem:[%s4632 + $0xc0] sm:$0xff]
  %v4906 = vld [vmem:[%s4632 + $0xc8] sm:$0xff]
  %v4907 = vld [vmem:[%s4632 + $0xd8] sm:$0xff]
  %v4908 = vld [vmem:[%s4632 + $0xe0] sm:$0xff]
  %v4909 = vld [vmem:[%s4632 + $0xf0] sm:$0xff]
  %v4910 = vld [vmem:[%s4632 + $0xf8] sm:$0xff]
  %v4911 = vld [vmem:[%s4632 + $0x108] sm:$0xff]
  %v4912 = vld [vmem:[%s4632 + $0x110] sm:$0xff]
  %v4913 = vld [vmem:[%s4632 + $0x120] sm:$0xff]
  %v4914 = vld [vmem:[%s4632 + $0x128] sm:$0xff]
  %v4915 = vld [vmem:[%s4632 + $0x138] sm:$0xff]
  %v4916 = vld [vmem:[%s4632 + $0x140] sm:$0xff]
  %v4917 = vld [vmem:[%s4632 + $0x150] sm:$0xff]
  %v4918 = vld [vmem:[%s4632 + $0x158] sm:$0xff]
  %v4919 = vld [vmem:[%s4632 + $0x168] sm:$0xff]
  %v4920 = vld [vmem:[%s4632 + $0x170] sm:$0xff]
  %v4921 = vld [vmem:[%s4632 + $0x1b0] sm:$0xff]
  %v4922 = vld [vmem:[%s4632 + $0x1b8] sm:$0xff]
  %v4923 = vld [vmem:[%s4632 + $0x1c8] sm:$0xff]
  %v4924 = vld [vmem:[%s4632 + $0x1d0] sm:$0xff]
  %v4925 = vld [vmem:[%s4632 + $0x1e0] sm:$0xff]
  %v4926 = vld [vmem:[%s4632 + $0x1e8] sm:$0xff]
  %v4927 = vld [vmem:[%s4632 + $0x1f8] sm:$0xff]
  %v4928 = vld [vmem:[%s4632 + $0x200] sm:$0xff]
  %v4929 = vld [vmem:[%s4632 + $0x210] sm:$0xff]
  %v4930 = vld [vmem:[%s4632 + $0x218] sm:$0xff]
  %v4931 = vld [vmem:[%s4632 + $0x228] sm:$0xff]
  %v4932 = vld [vmem:[%s4632 + $0x230] sm:$0xff]
  %v4933 = vld [vmem:[%s4632 + $0x240] sm:$0xff]
  %v4934 = vld [vmem:[%s4632 + $0x248] sm:$0xff]
  %v4935 = vld [vmem:[%s4632 + $0x258] sm:$0xff]
  %v4936 = vld [vmem:[%s4632 + $0x260] sm:$0xff]
  %v4937 = vld [vmem:[%s4632 + $0x270] sm:$0xff]
  %v4938 = vld [vmem:[%s4632 + $0x278] sm:$0xff]
  %v4939 = vld [vmem:[%s4632 + $0x288] sm:$0xff]
  %v4940 = vld [vmem:[%s4632 + $0x290] sm:$0xff]
  %v4941 = vld [vmem:[%s4632 + $0x2a0] sm:$0xff]
  %v4942 = vld [vmem:[%s4632 + $0x2a8] sm:$0xff]
  %v4943 = vld [vmem:[%s4632 + $0x2b8] sm:$0xff]
  %v4944 = vld [vmem:[%s4632 + $0x2c0] sm:$0xff]
  %v4945 = vld [vmem:[%s4632 + $0x2d0] sm:$0xff]
  %v4946 = vld [vmem:[%s4632 + $0x2d8] sm:$0xff]
  %v4947 = vld [vmem:[%s4632 + $0x2e8] sm:$0xff]
  %v4948 = vld [vmem:[%s4632 + $0x2f0] sm:$0xff]
  %v4949 = vld [vmem:[%s4632 + $0x300] sm:$0xff]
  %v4950 = vld [vmem:[%s4632 + $0x308] sm:$0xff]
  %v4951 = vld [vmem:[%s4632 + $0x318] sm:$0xff]
  %v4952 = vld [vmem:[%s4632 + $0x320] sm:$0xff]
  %v4953 = vld [vmem:[%s4632 + $0x1] sm:$0xff]
  %v4954 = vld [vmem:[%s4632 + $0x9] sm:$0xff]
  %v4955 = vld [vmem:[%s4632 + $0x19] sm:$0xff]
  %v4956 = vld [vmem:[%s4632 + $0x21] sm:$0xff]
  %v4957 = vld [vmem:[%s4632 + $0x31] sm:$0xff]
  %v4958 = vld [vmem:[%s4632 + $0x39] sm:$0xff]
  %v4959 = vld [vmem:[%s4632 + $0x49] sm:$0xff]
  %v4960 = vld [vmem:[%s4632 + $0x51] sm:$0xff]
  %v4961 = vld [vmem:[%s4632 + $0x61] sm:$0xff]
  %v4962 = vld [vmem:[%s4632 + $0x69] sm:$0xff]
  %v4963 = vld [vmem:[%s4632 + $0x79] sm:$0xff]
  %v4964 = vld [vmem:[%s4632 + $0x81] sm:$0xff]
  %v4965 = vld [vmem:[%s4632 + $0x91] sm:$0xff]
  %v4966 = vld [vmem:[%s4632 + $0x99] sm:$0xff]
  %v4967 = vld [vmem:[%s4632 + $0xa9] sm:$0xff]
  %v4968 = vld [vmem:[%s4632 + $0xb1] sm:$0xff]
  %v4969 = vld [vmem:[%s4632 + $0xc1] sm:$0xff]
  %v4970 = vld [vmem:[%s4632 + $0xc9] sm:$0xff]
  %v4971 = vld [vmem:[%s4632 + $0xd9] sm:$0xff]
  %v4972 = vld [vmem:[%s4632 + $0xe1] sm:$0xff]
  %v4973 = vld [vmem:[%s4632 + $0xf1] sm:$0xff]
  %v4974 = vld [vmem:[%s4632 + $0xf9] sm:$0xff]
  %v4975 = vld [vmem:[%s4632 + $0x109] sm:$0xff]
  %v4976 = vld [vmem:[%s4632 + $0x111] sm:$0xff]
  %v4977 = vld [vmem:[%s4632 + $0x121] sm:$0xff]
  %v4978 = vld [vmem:[%s4632 + $0x129] sm:$0xff]
  %v4979 = vld [vmem:[%s4632 + $0x139] sm:$0xff]
  %v4980 = vld [vmem:[%s4632 + $0x141] sm:$0xff]
  %v4981 = vld [vmem:[%s4632 + $0x151] sm:$0xff]
  %v4982 = vld [vmem:[%s4632 + $0x159] sm:$0xff]
  %v4983 = vld [vmem:[%s4632 + $0x169] sm:$0xff]
  %v4984 = vld [vmem:[%s4632 + $0x171] sm:$0xff]
  %v4985 = vld [vmem:[%s4632 + $0x1b1] sm:$0xff]
  %v4986 = vld [vmem:[%s4632 + $0x1b9] sm:$0xff]
  %v4987 = vld [vmem:[%s4632 + $0x1c9] sm:$0xff]
  %v4988 = vld [vmem:[%s4632 + $0x1d1] sm:$0xff]
  %v4989 = vld [vmem:[%s4632 + $0x1e1] sm:$0xff]
  %v4990 = vld [vmem:[%s4632 + $0x1e9] sm:$0xff]
  %v4991 = vld [vmem:[%s4632 + $0x1f9] sm:$0xff]
  %v4992 = vld [vmem:[%s4632 + $0x201] sm:$0xff]
  %v4993 = vld [vmem:[%s4632 + $0x211] sm:$0xff]
  %v4994 = vld [vmem:[%s4632 + $0x219] sm:$0xff]
  %v4995 = vld [vmem:[%s4632 + $0x229] sm:$0xff]
  %v4996 = vld [vmem:[%s4632 + $0x231] sm:$0xff]
  %v4997 = vld [vmem:[%s4632 + $0x241] sm:$0xff]
  %v4998 = vld [vmem:[%s4632 + $0x249] sm:$0xff]
  %v4999 = vld [vmem:[%s4632 + $0x259] sm:$0xff]
  %v5000 = vld [vmem:[%s4632 + $0x261] sm:$0xff]
  %v5001 = vld [vmem:[%s4632 + $0x271] sm:$0xff]
  %v5002 = vld [vmem:[%s4632 + $0x279] sm:$0xff]
  %v5003 = vld [vmem:[%s4632 + $0x289] sm:$0xff]
  %v5004 = vld [vmem:[%s4632 + $0x291] sm:$0xff]
  %v5005 = vld [vmem:[%s4632 + $0x2a1] sm:$0xff]
  %v5006 = vld [vmem:[%s4632 + $0x2a9] sm:$0xff]
  %v5007 = vld [vmem:[%s4632 + $0x2b9] sm:$0xff]
  %v5008 = vld [vmem:[%s4632 + $0x2c1] sm:$0xff]
  %v5009 = vld [vmem:[%s4632 + $0x2d1] sm:$0xff]
  %v5010 = vld [vmem:[%s4632 + $0x2d9] sm:$0xff]
  %v5011 = vld [vmem:[%s4632 + $0x2e9] sm:$0xff]
  %v5012 = vld [vmem:[%s4632 + $0x2f1] sm:$0xff]
  %v5013 = vld [vmem:[%s4632 + $0x301] sm:$0xff]
  %v5014 = vld [vmem:[%s4632 + $0x309] sm:$0xff]
  %v5015 = vld [vmem:[%s4632 + $0x319] sm:$0xff]
  %v5016 = vld [vmem:[%s4632 + $0x321] sm:$0xff]
  %v5017 = vld [vmem:[%s4632 + $0x2] sm:$0xff]
  %v5018 = vld [vmem:[%s4632 + $0xa] sm:$0xff]
  %v5019 = vld [vmem:[%s4632 + $0x1a] sm:$0xff]
  %v5020 = vld [vmem:[%s4632 + $0x22] sm:$0xff]
  %v5021 = vld [vmem:[%s4632 + $0x32] sm:$0xff]
  %v5022 = vld [vmem:[%s4632 + $0x3a] sm:$0xff]
  %v5023 = vld [vmem:[%s4632 + $0x4a] sm:$0xff]
  %v5024 = vld [vmem:[%s4632 + $0x52] sm:$0xff]
  %v5025 = vld [vmem:[%s4632 + $0x62] sm:$0xff]
  %v5026 = vld [vmem:[%s4632 + $0x6a] sm:$0xff]
  %v5027 = vld [vmem:[%s4632 + $0x7a] sm:$0xff]
  %v5028 = vld [vmem:[%s4632 + $0x82] sm:$0xff]
  %v5029 = vld [vmem:[%s4632 + $0x92] sm:$0xff]
  %v5030 = vld [vmem:[%s4632 + $0x9a] sm:$0xff]
  %v5031 = vld [vmem:[%s4632 + $0xaa] sm:$0xff]
  %v5032 = vld [vmem:[%s4632 + $0xb2] sm:$0xff]
  %v5033 = vld [vmem:[%s4632 + $0xc2] sm:$0xff]
  %v5034 = vld [vmem:[%s4632 + $0xca] sm:$0xff]
  %v5035 = vld [vmem:[%s4632 + $0xda] sm:$0xff]
  %v5036 = vld [vmem:[%s4632 + $0xe2] sm:$0xff]
  %v5037 = vld [vmem:[%s4632 + $0xf2] sm:$0xff]
  %v5038 = vld [vmem:[%s4632 + $0xfa] sm:$0xff]
  %v5039 = vld [vmem:[%s4632 + $0x10a] sm:$0xff]
  %v5040 = vld [vmem:[%s4632 + $0x112] sm:$0xff]
  %v5041 = vld [vmem:[%s4632 + $0x122] sm:$0xff]
  %v5042 = vld [vmem:[%s4632 + $0x12a] sm:$0xff]
  %v5043 = vld [vmem:[%s4632 + $0x13a] sm:$0xff]
  %v5044 = vld [vmem:[%s4632 + $0x142] sm:$0xff]
  %v5045 = vld [vmem:[%s4632 + $0x152] sm:$0xff]
  %v5046 = vld [vmem:[%s4632 + $0x15a] sm:$0xff]
  %v5047 = vld [vmem:[%s4632 + $0x16a] sm:$0xff]
  %v5048 = vld [vmem:[%s4632 + $0x172] sm:$0xff]
  %v5049 = vld [vmem:[%s4632 + $0x1b2] sm:$0xff]
  %v5050 = vld [vmem:[%s4632 + $0x1ba] sm:$0xff]
  %v5051 = vld [vmem:[%s4632 + $0x1ca] sm:$0xff]
  %v5052 = vld [vmem:[%s4632 + $0x1d2] sm:$0xff]
  %v5053 = vld [vmem:[%s4632 + $0x1e2] sm:$0xff]
  %v5054 = vld [vmem:[%s4632 + $0x1ea] sm:$0xff]
  %v5055 = vld [vmem:[%s4632 + $0x1fa] sm:$0xff]
  %v5056 = vld [vmem:[%s4632 + $0x202] sm:$0xff]
  %v5057 = vld [vmem:[%s4632 + $0x212] sm:$0xff]
  %v5058 = vld [vmem:[%s4632 + $0x21a] sm:$0xff]
  %v5059 = vld [vmem:[%s4632 + $0x22a] sm:$0xff]
  %v5060 = vld [vmem:[%s4632 + $0x232] sm:$0xff]
  %v5061 = vld [vmem:[%s4632 + $0x242] sm:$0xff]
  %v5062 = vld [vmem:[%s4632 + $0x24a] sm:$0xff]
  %v5063 = vld [vmem:[%s4632 + $0x25a] sm:$0xff]
  %v5064 = vld [vmem:[%s4632 + $0x262] sm:$0xff]
  %v5065 = vld [vmem:[%s4632 + $0x272] sm:$0xff]
  %v5066 = vld [vmem:[%s4632 + $0x27a] sm:$0xff]
  %v5067 = vld [vmem:[%s4632 + $0x28a] sm:$0xff]
  %v5068 = vld [vmem:[%s4632 + $0x292] sm:$0xff]
  %v5069 = vld [vmem:[%s4632 + $0x2a2] sm:$0xff]
  %v5070 = vld [vmem:[%s4632 + $0x2aa] sm:$0xff]
  %v5071 = vld [vmem:[%s4632 + $0x2ba] sm:$0xff]
  %v5072 = vld [vmem:[%s4632 + $0x2c2] sm:$0xff]
  %v5073 = vld [vmem:[%s4632 + $0x2d2] sm:$0xff]
  %v5074 = vld [vmem:[%s4632 + $0x2da] sm:$0xff]
  %v5075 = vld [vmem:[%s4632 + $0x2ea] sm:$0xff]
  %v5076 = vld [vmem:[%s4632 + $0x2f2] sm:$0xff]
  %v5077 = vld [vmem:[%s4632 + $0x302] sm:$0xff]
  %v5078 = vld [vmem:[%s4632 + $0x30a] sm:$0xff]
  %v5079 = vld [vmem:[%s4632 + $0x31a] sm:$0xff]
  %v5080 = vld [vmem:[%s4632 + $0x322] sm:$0xff]
  %s5081 = scalar_lea.vmem [#allocation3], 48
  %v5082 = vld [vmem:[%s5081] sm:$0xff]
  %v5083 = vld [vmem:[%s5081 + $0x8] sm:$0xff]
  %v5084 = vld [vmem:[%s5081 + $0x18] sm:$0xff]
  %v5085 = vld [vmem:[%s5081 + $0x20] sm:$0xff]
  %v5086 = vld [vmem:[%s5081 + $0x30] sm:$0xff]
  %v5087 = vld [vmem:[%s5081 + $0x38] sm:$0xff]
  %v5088 = vld [vmem:[%s5081 + $0x48] sm:$0xff]
  %v5089 = vld [vmem:[%s5081 + $0x50] sm:$0xff]
  %v5090 = vld [vmem:[%s5081 + $0x60] sm:$0xff]
  %v5091 = vld [vmem:[%s5081 + $0x68] sm:$0xff]
  %v5092 = vld [vmem:[%s5081 + $0x78] sm:$0xff]
  %v5093 = vld [vmem:[%s5081 + $0x80] sm:$0xff]
  %v5094 = vld [vmem:[%s5081 + $0x90] sm:$0xff]
  %v5095 = vld [vmem:[%s5081 + $0x98] sm:$0xff]
  %v5096 = vld [vmem:[%s5081 + $0xa8] sm:$0xff]
  %v5097 = vld [vmem:[%s5081 + $0xb0] sm:$0xff]
  %v5098 = vld [vmem:[%s5081 + $0xc0] sm:$0xff]
  %v5099 = vld [vmem:[%s5081 + $0xc8] sm:$0xff]
  %v5100 = vld [vmem:[%s5081 + $0xd8] sm:$0xff]
  %v5101 = vld [vmem:[%s5081 + $0xe0] sm:$0xff]
  %v5102 = vld [vmem:[%s5081 + $0xf0] sm:$0xff]
  %v5103 = vld [vmem:[%s5081 + $0xf8] sm:$0xff]
  %v5104 = vld [vmem:[%s5081 + $0x108] sm:$0xff]
  %v5105 = vld [vmem:[%s5081 + $0x110] sm:$0xff]
  %v5106 = vld [vmem:[%s5081 + $0x120] sm:$0xff]
  %v5107 = vld [vmem:[%s5081 + $0x128] sm:$0xff]
  %v5108 = vld [vmem:[%s5081 + $0x138] sm:$0xff]
  %v5109 = vld [vmem:[%s5081 + $0x140] sm:$0xff]
  %v5110 = vld [vmem:[%s5081 + $0x150] sm:$0xff]
  %v5111 = vld [vmem:[%s5081 + $0x158] sm:$0xff]
  %v5112 = vld [vmem:[%s5081 + $0x168] sm:$0xff]
  %v5113 = vld [vmem:[%s5081 + $0x170] sm:$0xff]
  %v5114 = vld [vmem:[%s5081 + $0x1b0] sm:$0xff]
  %v5115 = vld [vmem:[%s5081 + $0x1b8] sm:$0xff]
  %v5116 = vld [vmem:[%s5081 + $0x1c8] sm:$0xff]
  %v5117 = vld [vmem:[%s5081 + $0x1d0] sm:$0xff]
  %v5118 = vld [vmem:[%s5081 + $0x1e0] sm:$0xff]
  %v5119 = vld [vmem:[%s5081 + $0x1e8] sm:$0xff]
  %v5120 = vld [vmem:[%s5081 + $0x1f8] sm:$0xff]
  %v5121 = vld [vmem:[%s5081 + $0x200] sm:$0xff]
  %v5122 = vld [vmem:[%s5081 + $0x210] sm:$0xff]
  %v5123 = vld [vmem:[%s5081 + $0x218] sm:$0xff]
  %v5124 = vld [vmem:[%s5081 + $0x228] sm:$0xff]
  %v5125 = vld [vmem:[%s5081 + $0x230] sm:$0xff]
  %v5126 = vld [vmem:[%s5081 + $0x240] sm:$0xff]
  %v5127 = vld [vmem:[%s5081 + $0x248] sm:$0xff]
  %v5128 = vld [vmem:[%s5081 + $0x258] sm:$0xff]
  %v5129 = vld [vmem:[%s5081 + $0x260] sm:$0xff]
  %v5130 = vld [vmem:[%s5081 + $0x270] sm:$0xff]
  %v5131 = vld [vmem:[%s5081 + $0x278] sm:$0xff]
  %v5132 = vld [vmem:[%s5081 + $0x288] sm:$0xff]
  %v5133 = vld [vmem:[%s5081 + $0x290] sm:$0xff]
  %v5134 = vld [vmem:[%s5081 + $0x2a0] sm:$0xff]
  %v5135 = vld [vmem:[%s5081 + $0x2a8] sm:$0xff]
  %v5136 = vld [vmem:[%s5081 + $0x2b8] sm:$0xff]
  %v5137 = vld [vmem:[%s5081 + $0x2c0] sm:$0xff]
  %v5138 = vld [vmem:[%s5081 + $0x2d0] sm:$0xff]
  %v5139 = vld [vmem:[%s5081 + $0x2d8] sm:$0xff]
  %v5140 = vld [vmem:[%s5081 + $0x2e8] sm:$0xff]
  %v5141 = vld [vmem:[%s5081 + $0x2f0] sm:$0xff]
  %v5142 = vld [vmem:[%s5081 + $0x300] sm:$0xff]
  %v5143 = vld [vmem:[%s5081 + $0x308] sm:$0xff]
  %v5144 = vld [vmem:[%s5081 + $0x318] sm:$0xff]
  %v5145 = vld [vmem:[%s5081 + $0x320] sm:$0xff]
  %v5146 = vld [vmem:[%s5081 + $0x1] sm:$0xff]
  %v5147 = vld [vmem:[%s5081 + $0x9] sm:$0xff]
  %v5148 = vld [vmem:[%s5081 + $0x19] sm:$0xff]
  %v5149 = vld [vmem:[%s5081 + $0x21] sm:$0xff]
  %v5150 = vld [vmem:[%s5081 + $0x31] sm:$0xff]
  %v5151 = vld [vmem:[%s5081 + $0x39] sm:$0xff]
  %v5152 = vld [vmem:[%s5081 + $0x49] sm:$0xff]
  %v5153 = vld [vmem:[%s5081 + $0x51] sm:$0xff]
  %v5154 = vld [vmem:[%s5081 + $0x61] sm:$0xff]
  %v5155 = vld [vmem:[%s5081 + $0x69] sm:$0xff]
  %v5156 = vld [vmem:[%s5081 + $0x79] sm:$0xff]
  %v5157 = vld [vmem:[%s5081 + $0x81] sm:$0xff]
  %v5158 = vld [vmem:[%s5081 + $0x91] sm:$0xff]
  %v5159 = vld [vmem:[%s5081 + $0x99] sm:$0xff]
  %v5160 = vld [vmem:[%s5081 + $0xa9] sm:$0xff]
  %v5161 = vld [vmem:[%s5081 + $0xb1] sm:$0xff]
  %v5162 = vld [vmem:[%s5081 + $0xc1] sm:$0xff]
  %v5163 = vld [vmem:[%s5081 + $0xc9] sm:$0xff]
  %v5164 = vld [vmem:[%s5081 + $0xd9] sm:$0xff]
  %v5165 = vld [vmem:[%s5081 + $0xe1] sm:$0xff]
  %v5166 = vld [vmem:[%s5081 + $0xf1] sm:$0xff]
  %v5167 = vld [vmem:[%s5081 + $0xf9] sm:$0xff]
  %v5168 = vld [vmem:[%s5081 + $0x109] sm:$0xff]
  %v5169 = vld [vmem:[%s5081 + $0x111] sm:$0xff]
  %v5170 = vld [vmem:[%s5081 + $0x121] sm:$0xff]
  %v5171 = vld [vmem:[%s5081 + $0x129] sm:$0xff]
  %v5172 = vld [vmem:[%s5081 + $0x139] sm:$0xff]
  %v5173 = vld [vmem:[%s5081 + $0x141] sm:$0xff]
  %v5174 = vld [vmem:[%s5081 + $0x151] sm:$0xff]
  %v5175 = vld [vmem:[%s5081 + $0x159] sm:$0xff]
  %v5176 = vld [vmem:[%s5081 + $0x169] sm:$0xff]
  %v5177 = vld [vmem:[%s5081 + $0x171] sm:$0xff]
  %v5178 = vld [vmem:[%s5081 + $0x1b1] sm:$0xff]
  %v5179 = vld [vmem:[%s5081 + $0x1b9] sm:$0xff]
  %v5180 = vld [vmem:[%s5081 + $0x1c9] sm:$0xff]
  %v5181 = vld [vmem:[%s5081 + $0x1d1] sm:$0xff]
  %v5182 = vld [vmem:[%s5081 + $0x1e1] sm:$0xff]
  %v5183 = vld [vmem:[%s5081 + $0x1e9] sm:$0xff]
  %v5184 = vld [vmem:[%s5081 + $0x1f9] sm:$0xff]
  %v5185 = vld [vmem:[%s5081 + $0x201] sm:$0xff]
  %v5186 = vld [vmem:[%s5081 + $0x211] sm:$0xff]
  %v5187 = vld [vmem:[%s5081 + $0x219] sm:$0xff]
  %v5188 = vld [vmem:[%s5081 + $0x229] sm:$0xff]
  %v5189 = vld [vmem:[%s5081 + $0x231] sm:$0xff]
  %v5190 = vld [vmem:[%s5081 + $0x241] sm:$0xff]
  %v5191 = vld [vmem:[%s5081 + $0x249] sm:$0xff]
  %v5192 = vld [vmem:[%s5081 + $0x259] sm:$0xff]
  %v5193 = vld [vmem:[%s5081 + $0x261] sm:$0xff]
  %v5194 = vld [vmem:[%s5081 + $0x271] sm:$0xff]
  %v5195 = vld [vmem:[%s5081 + $0x279] sm:$0xff]
  %v5196 = vld [vmem:[%s5081 + $0x289] sm:$0xff]
  %v5197 = vld [vmem:[%s5081 + $0x291] sm:$0xff]
  %v5198 = vld [vmem:[%s5081 + $0x2a1] sm:$0xff]
  %v5199 = vld [vmem:[%s5081 + $0x2a9] sm:$0xff]
  %v5200 = vld [vmem:[%s5081 + $0x2b9] sm:$0xff]
  %v5201 = vld [vmem:[%s5081 + $0x2c1] sm:$0xff]
  %v5202 = vld [vmem:[%s5081 + $0x2d1] sm:$0xff]
  %v5203 = vld [vmem:[%s5081 + $0x2d9] sm:$0xff]
  %v5204 = vld [vmem:[%s5081 + $0x2e9] sm:$0xff]
  %v5205 = vld [vmem:[%s5081 + $0x2f1] sm:$0xff]
  %v5206 = vld [vmem:[%s5081 + $0x301] sm:$0xff]
  %v5207 = vld [vmem:[%s5081 + $0x309] sm:$0xff]
  %v5208 = vld [vmem:[%s5081 + $0x319] sm:$0xff]
  %v5209 = vld [vmem:[%s5081 + $0x321] sm:$0xff]
  %v5210 = vld [vmem:[%s5081 + $0x2] sm:$0xff]
  %v5211 = vld [vmem:[%s5081 + $0xa] sm:$0xff]
  %v5212 = vld [vmem:[%s5081 + $0x1a] sm:$0xff]
  %v5213 = vld [vmem:[%s5081 + $0x22] sm:$0xff]
  %v5214 = vld [vmem:[%s5081 + $0x32] sm:$0xff]
  %v5215 = vld [vmem:[%s5081 + $0x3a] sm:$0xff]
  %v5216 = vld [vmem:[%s5081 + $0x4a] sm:$0xff]
  %v5217 = vld [vmem:[%s5081 + $0x52] sm:$0xff]
  %v5218 = vld [vmem:[%s5081 + $0x62] sm:$0xff]
  %v5219 = vld [vmem:[%s5081 + $0x6a] sm:$0xff]
  %v5220 = vld [vmem:[%s5081 + $0x7a] sm:$0xff]
  %v5221 = vld [vmem:[%s5081 + $0x82] sm:$0xff]
  %v5222 = vld [vmem:[%s5081 + $0x92] sm:$0xff]
  %v5223 = vld [vmem:[%s5081 + $0x9a] sm:$0xff]
  %v5224 = vld [vmem:[%s5081 + $0xaa] sm:$0xff]
  %v5225 = vld [vmem:[%s5081 + $0xb2] sm:$0xff]
  %v5226 = vld [vmem:[%s5081 + $0xc2] sm:$0xff]
  %v5227 = vld [vmem:[%s5081 + $0xca] sm:$0xff]
  %v5228 = vld [vmem:[%s5081 + $0xda] sm:$0xff]
  %v5229 = vld [vmem:[%s5081 + $0xe2] sm:$0xff]
  %v5230 = vld [vmem:[%s5081 + $0xf2] sm:$0xff]
  %v5231 = vld [vmem:[%s5081 + $0xfa] sm:$0xff]
  %v5232 = vld [vmem:[%s5081 + $0x10a] sm:$0xff]
  %v5233 = vld [vmem:[%s5081 + $0x112] sm:$0xff]
  %v5234 = vld [vmem:[%s5081 + $0x122] sm:$0xff]
  %v5235 = vld [vmem:[%s5081 + $0x12a] sm:$0xff]
  %v5236 = vld [vmem:[%s5081 + $0x13a] sm:$0xff]
  %v5237 = vld [vmem:[%s5081 + $0x142] sm:$0xff]
  %v5238 = vld [vmem:[%s5081 + $0x152] sm:$0xff]
  %v5239 = vld [vmem:[%s5081 + $0x15a] sm:$0xff]
  %v5240 = vld [vmem:[%s5081 + $0x16a] sm:$0xff]
  %v5241 = vld [vmem:[%s5081 + $0x172] sm:$0xff]
  %v5242 = vld [vmem:[%s5081 + $0x1b2] sm:$0xff]
  %v5243 = vld [vmem:[%s5081 + $0x1ba] sm:$0xff]
  %v5244 = vld [vmem:[%s5081 + $0x1ca] sm:$0xff]
  %v5245 = vld [vmem:[%s5081 + $0x1d2] sm:$0xff]
  %v5246 = vld [vmem:[%s5081 + $0x1e2] sm:$0xff]
  %v5247 = vld [vmem:[%s5081 + $0x1ea] sm:$0xff]
  %v5248 = vld [vmem:[%s5081 + $0x1fa] sm:$0xff]
  %v5249 = vld [vmem:[%s5081 + $0x202] sm:$0xff]
  %v5250 = vld [vmem:[%s5081 + $0x212] sm:$0xff]
  %v5251 = vld [vmem:[%s5081 + $0x21a] sm:$0xff]
  %v5252 = vld [vmem:[%s5081 + $0x22a] sm:$0xff]
  %v5253 = vld [vmem:[%s5081 + $0x232] sm:$0xff]
  %v5254 = vld [vmem:[%s5081 + $0x242] sm:$0xff]
  %v5255 = vld [vmem:[%s5081 + $0x24a] sm:$0xff]
  %v5256 = vld [vmem:[%s5081 + $0x25a] sm:$0xff]
  %v5257 = vld [vmem:[%s5081 + $0x262] sm:$0xff]
  %v5258 = vld [vmem:[%s5081 + $0x272] sm:$0xff]
  %v5259 = vld [vmem:[%s5081 + $0x27a] sm:$0xff]
  %v5260 = vld [vmem:[%s5081 + $0x28a] sm:$0xff]
  %v5261 = vld [vmem:[%s5081 + $0x292] sm:$0xff]
  %v5262 = vld [vmem:[%s5081 + $0x2a2] sm:$0xff]
  %v5263 = vld [vmem:[%s5081 + $0x2aa] sm:$0xff]
  %v5264 = vld [vmem:[%s5081 + $0x2ba] sm:$0xff]
  %v5265 = vld [vmem:[%s5081 + $0x2c2] sm:$0xff]
  %v5266 = vld [vmem:[%s5081 + $0x2d2] sm:$0xff]
  %v5267 = vld [vmem:[%s5081 + $0x2da] sm:$0xff]
  %v5268 = vld [vmem:[%s5081 + $0x2ea] sm:$0xff]
  %v5269 = vld [vmem:[%s5081 + $0x2f2] sm:$0xff]
  %v5270 = vld [vmem:[%s5081 + $0x302] sm:$0xff]
  %v5271 = vld [vmem:[%s5081 + $0x30a] sm:$0xff]
  %v5272 = vld [vmem:[%s5081 + $0x31a] sm:$0xff]
  %v5273 = vld [vmem:[%s5081 + $0x322] sm:$0xff]
  %5338 = vrot.lane.b32.xlu0 %v4761, 8
  %v5339 = vpop.permute.xlu0 %5338
  %5340 = vrot.lane.b32.xlu0 %v4762, 8
  %v5341 = vpop.permute.xlu0 %5340
  %5342 = vrot.lane.b32.xlu0 %v4763, 8
  %v5343 = vpop.permute.xlu0 %5342
  %5344 = vrot.lane.b32.xlu0 %v4764, 8
  %v5345 = vpop.permute.xlu0 %5344
  %5346 = vrot.lane.b32.xlu0 %v4765, 8
  %v5347 = vpop.permute.xlu0 %5346
  %5348 = vrot.lane.b32.xlu0 %v4766, 8
  %v5349 = vpop.permute.xlu0 %5348
  %5350 = vrot.lane.b32.xlu0 %v4767, 8
  %v5351 = vpop.permute.xlu0 %5350
  %5352 = vrot.lane.b32.xlu0 %v4768, 8
  %v5353 = vpop.permute.xlu0 %5352
  %5354 = vrot.lane.b32.xlu0 %v4769, 8
  %v5355 = vpop.permute.xlu0 %5354
  %5356 = vrot.lane.b32.xlu0 %v4770, 8
  %v5357 = vpop.permute.xlu0 %5356
  %5358 = vrot.lane.b32.xlu0 %v4771, 8
  %v5359 = vpop.permute.xlu0 %5358
  %5360 = vrot.lane.b32.xlu0 %v4772, 8
  %v5361 = vpop.permute.xlu0 %5360
  %5362 = vrot.lane.b32.xlu0 %v4773, 8
  %v5363 = vpop.permute.xlu0 %5362
  %5364 = vrot.lane.b32.xlu0 %v4774, 8
  %v5365 = vpop.permute.xlu0 %5364
  %5366 = vrot.lane.b32.xlu0 %v4775, 8
  %v5367 = vpop.permute.xlu0 %5366
  %5368 = vrot.lane.b32.xlu0 %v4776, 8
  %v5369 = vpop.permute.xlu0 %5368
  %5370 = vrot.lane.b32.xlu0 %v4777, 8
  %v5371 = vpop.permute.xlu0 %5370
  %5372 = vrot.lane.b32.xlu0 %v4778, 8
  %v5373 = vpop.permute.xlu0 %5372
  %5374 = vrot.lane.b32.xlu0 %v4779, 8
  %v5375 = vpop.permute.xlu0 %5374
  %5376 = vrot.lane.b32.xlu0 %v4780, 8
  %v5377 = vpop.permute.xlu0 %5376
  %5378 = vrot.lane.b32.xlu0 %v4781, 8
  %v5379 = vpop.permute.xlu0 %5378
  %5380 = vrot.lane.b32.xlu0 %v4782, 8
  %v5381 = vpop.permute.xlu0 %5380
  %5382 = vrot.lane.b32.xlu0 %v4783, 8
  %v5383 = vpop.permute.xlu0 %5382
  %5384 = vrot.lane.b32.xlu0 %v4784, 8
  %v5385 = vpop.permute.xlu0 %5384
  %5386 = vrot.lane.b32.xlu0 %v4785, 8
  %v5387 = vpop.permute.xlu0 %5386
  %5388 = vrot.lane.b32.xlu0 %v4786, 8
  %v5389 = vpop.permute.xlu0 %5388
  %5390 = vrot.lane.b32.xlu0 %v4787, 8
  %v5391 = vpop.permute.xlu0 %5390
  %5392 = vrot.lane.b32.xlu0 %v4788, 8
  %v5393 = vpop.permute.xlu0 %5392
  %5394 = vrot.lane.b32.xlu0 %v4789, 8
  %v5395 = vpop.permute.xlu0 %5394
  %5396 = vrot.lane.b32.xlu0 %v4790, 8
  %v5397 = vpop.permute.xlu0 %5396
  %5398 = vrot.lane.b32.xlu0 %v4791, 8
  %v5399 = vpop.permute.xlu0 %5398
  %5400 = vrot.lane.b32.xlu0 %v4792, 8
  %v5401 = vpop.permute.xlu0 %5400
  %5402 = vrot.lane.b32.xlu0 %v4793, 8
  %v5403 = vpop.permute.xlu0 %5402
  %5404 = vrot.lane.b32.xlu0 %v4794, 8
  %v5405 = vpop.permute.xlu0 %5404
  %5406 = vrot.lane.b32.xlu0 %v4795, 8
  %v5407 = vpop.permute.xlu0 %5406
  %5408 = vrot.lane.b32.xlu0 %v4796, 8
  %v5409 = vpop.permute.xlu0 %5408
  %5410 = vrot.lane.b32.xlu0 %v4797, 8
  %v5411 = vpop.permute.xlu0 %5410
  %5412 = vrot.lane.b32.xlu0 %v4798, 8
  %v5413 = vpop.permute.xlu0 %5412
  %5414 = vrot.lane.b32.xlu0 %v4799, 8
  %v5415 = vpop.permute.xlu0 %5414
  %5416 = vrot.lane.b32.xlu0 %v4800, 8
  %v5417 = vpop.permute.xlu0 %5416
  %5418 = vrot.lane.b32.xlu0 %v4801, 8
  %v5419 = vpop.permute.xlu0 %5418
  %5420 = vrot.lane.b32.xlu0 %v4802, 8
  %v5421 = vpop.permute.xlu0 %5420
  %5422 = vrot.lane.b32.xlu0 %v4803, 8
  %v5423 = vpop.permute.xlu0 %5422
  %5424 = vrot.lane.b32.xlu0 %v4804, 8
  %v5425 = vpop.permute.xlu0 %5424
  %5426 = vrot.lane.b32.xlu0 %v4805, 8
  %v5427 = vpop.permute.xlu0 %5426
  %5428 = vrot.lane.b32.xlu0 %v4806, 8
  %v5429 = vpop.permute.xlu0 %5428
  %5430 = vrot.lane.b32.xlu0 %v4807, 8
  %v5431 = vpop.permute.xlu0 %5430
  %5432 = vrot.lane.b32.xlu0 %v4808, 8
  %v5433 = vpop.permute.xlu0 %5432
  %5434 = vrot.lane.b32.xlu0 %v4809, 8
  %v5435 = vpop.permute.xlu0 %5434
  %5436 = vrot.lane.b32.xlu0 %v4810, 8
  %v5437 = vpop.permute.xlu0 %5436
  %5438 = vrot.lane.b32.xlu0 %v4811, 8
  %v5439 = vpop.permute.xlu0 %5438
  %5440 = vrot.lane.b32.xlu0 %v4812, 8
  %v5441 = vpop.permute.xlu0 %5440
  %5442 = vrot.lane.b32.xlu0 %v4813, 8
  %v5443 = vpop.permute.xlu0 %5442
  %5444 = vrot.lane.b32.xlu0 %v4814, 8
  %v5445 = vpop.permute.xlu0 %5444
  %5446 = vrot.lane.b32.xlu0 %v4815, 8
  %v5447 = vpop.permute.xlu0 %5446
  %5448 = vrot.lane.b32.xlu0 %v4816, 8
  %v5449 = vpop.permute.xlu0 %5448
  %5450 = vrot.lane.b32.xlu0 %v4817, 8
  %v5451 = vpop.permute.xlu0 %5450
  %5452 = vrot.lane.b32.xlu0 %v4818, 8
  %v5453 = vpop.permute.xlu0 %5452
  %5454 = vrot.lane.b32.xlu0 %v4819, 8
  %v5455 = vpop.permute.xlu0 %5454
  %5456 = vrot.lane.b32.xlu0 %v4820, 8
  %v5457 = vpop.permute.xlu0 %5456
  %5458 = vrot.lane.b32.xlu0 %v4821, 8
  %v5459 = vpop.permute.xlu0 %5458
  %5460 = vrot.lane.b32.xlu0 %v4822, 8
  %v5461 = vpop.permute.xlu0 %5460
  %5462 = vrot.lane.b32.xlu0 %v4823, 8
  %v5463 = vpop.permute.xlu0 %5462
  %5464 = vrot.lane.b32.xlu0 %v4824, 8
  %v5465 = vpop.permute.xlu0 %5464
  %5594 = vrot.lane.b32.xlu0 %v4825, 16
  %v5595 = vpop.permute.xlu0 %5594
  %5596 = vrot.lane.b32.xlu0 %v4826, 16
  %v5597 = vpop.permute.xlu0 %5596
  %5598 = vrot.lane.b32.xlu0 %v4827, 16
  %v5599 = vpop.permute.xlu0 %5598
  %5600 = vrot.lane.b32.xlu0 %v4828, 16
  %v5601 = vpop.permute.xlu0 %5600
  %5602 = vrot.lane.b32.xlu0 %v4829, 16
  %v5603 = vpop.permute.xlu0 %5602
  %5604 = vrot.lane.b32.xlu0 %v4830, 16
  %v5605 = vpop.permute.xlu0 %5604
  %5606 = vrot.lane.b32.xlu0 %v4831, 16
  %v5607 = vpop.permute.xlu0 %5606
  %5608 = vrot.lane.b32.xlu0 %v4832, 16
  %v5609 = vpop.permute.xlu0 %5608
  %5610 = vrot.lane.b32.xlu0 %v4833, 16
  %v5611 = vpop.permute.xlu0 %5610
  %5612 = vrot.lane.b32.xlu0 %v4834, 16
  %v5613 = vpop.permute.xlu0 %5612
  %5614 = vrot.lane.b32.xlu0 %v4835, 16
  %v5615 = vpop.permute.xlu0 %5614
  %5616 = vrot.lane.b32.xlu0 %v4836, 16
  %v5617 = vpop.permute.xlu0 %5616
  %5618 = vrot.lane.b32.xlu0 %v4837, 16
  %v5619 = vpop.permute.xlu0 %5618
  %5620 = vrot.lane.b32.xlu0 %v4838, 16
  %v5621 = vpop.permute.xlu0 %5620
  %5622 = vrot.lane.b32.xlu0 %v4839, 16
  %v5623 = vpop.permute.xlu0 %5622
  %5624 = vrot.lane.b32.xlu0 %v4840, 16
  %v5625 = vpop.permute.xlu0 %5624
  %5626 = vrot.lane.b32.xlu0 %v4841, 16
  %v5627 = vpop.permute.xlu0 %5626
  %5628 = vrot.lane.b32.xlu0 %v4842, 16
  %v5629 = vpop.permute.xlu0 %5628
  %5630 = vrot.lane.b32.xlu0 %v4843, 16
  %v5631 = vpop.permute.xlu0 %5630
  %5632 = vrot.lane.b32.xlu0 %v4844, 16
  %v5633 = vpop.permute.xlu0 %5632
  %5634 = vrot.lane.b32.xlu0 %v4845, 16
  %v5635 = vpop.permute.xlu0 %5634
  %5636 = vrot.lane.b32.xlu0 %v4846, 16
  %v5637 = vpop.permute.xlu0 %5636
  %5638 = vrot.lane.b32.xlu0 %v4847, 16
  %v5639 = vpop.permute.xlu0 %5638
  %5640 = vrot.lane.b32.xlu0 %v4848, 16
  %v5641 = vpop.permute.xlu0 %5640
  %5642 = vrot.lane.b32.xlu0 %v4849, 16
  %v5643 = vpop.permute.xlu0 %5642
  %5644 = vrot.lane.b32.xlu0 %v4850, 16
  %v5645 = vpop.permute.xlu0 %5644
  %5646 = vrot.lane.b32.xlu0 %v4851, 16
  %v5647 = vpop.permute.xlu0 %5646
  %5648 = vrot.lane.b32.xlu0 %v4852, 16
  %v5649 = vpop.permute.xlu0 %5648
  %5650 = vrot.lane.b32.xlu0 %v4853, 16
  %v5651 = vpop.permute.xlu0 %5650
  %5652 = vrot.lane.b32.xlu0 %v4854, 16
  %v5653 = vpop.permute.xlu0 %5652
  %5654 = vrot.lane.b32.xlu0 %v4855, 16
  %v5655 = vpop.permute.xlu0 %5654
  %5656 = vrot.lane.b32.xlu0 %v4856, 16
  %v5657 = vpop.permute.xlu0 %5656
  %5658 = vrot.lane.b32.xlu0 %v4857, 16
  %v5659 = vpop.permute.xlu0 %5658
  %5660 = vrot.lane.b32.xlu0 %v4858, 16
  %v5661 = vpop.permute.xlu0 %5660
  %5662 = vrot.lane.b32.xlu0 %v4859, 16
  %v5663 = vpop.permute.xlu0 %5662
  %5664 = vrot.lane.b32.xlu0 %v4860, 16
  %v5665 = vpop.permute.xlu0 %5664
  %5666 = vrot.lane.b32.xlu0 %v4861, 16
  %v5667 = vpop.permute.xlu0 %5666
  %5668 = vrot.lane.b32.xlu0 %v4862, 16
  %v5669 = vpop.permute.xlu0 %5668
  %5670 = vrot.lane.b32.xlu0 %v4863, 16
  %v5671 = vpop.permute.xlu0 %5670
  %5672 = vrot.lane.b32.xlu0 %v4864, 16
  %v5673 = vpop.permute.xlu0 %5672
  %5674 = vrot.lane.b32.xlu0 %v4865, 16
  %v5675 = vpop.permute.xlu0 %5674
  %5676 = vrot.lane.b32.xlu0 %v4866, 16
  %v5677 = vpop.permute.xlu0 %5676
  %5678 = vrot.lane.b32.xlu0 %v4867, 16
  %v5679 = vpop.permute.xlu0 %5678
  %5680 = vrot.lane.b32.xlu0 %v4868, 16
  %v5681 = vpop.permute.xlu0 %5680
  %5682 = vrot.lane.b32.xlu0 %v4869, 16
  %v5683 = vpop.permute.xlu0 %5682
  %5684 = vrot.lane.b32.xlu0 %v4870, 16
  %v5685 = vpop.permute.xlu0 %5684
  %5686 = vrot.lane.b32.xlu0 %v4871, 16
  %v5687 = vpop.permute.xlu0 %5686
  %5688 = vrot.lane.b32.xlu0 %v4872, 16
  %v5689 = vpop.permute.xlu0 %5688
  %5690 = vrot.lane.b32.xlu0 %v4873, 16
  %v5691 = vpop.permute.xlu0 %5690
  %5692 = vrot.lane.b32.xlu0 %v4874, 16
  %v5693 = vpop.permute.xlu0 %5692
  %5694 = vrot.lane.b32.xlu0 %v4875, 16
  %v5695 = vpop.permute.xlu0 %5694
  %5696 = vrot.lane.b32.xlu0 %v4876, 16
  %v5697 = vpop.permute.xlu0 %5696
  %5698 = vrot.lane.b32.xlu0 %v4877, 16
  %v5699 = vpop.permute.xlu0 %5698
  %5700 = vrot.lane.b32.xlu0 %v4878, 16
  %v5701 = vpop.permute.xlu0 %5700
  %5702 = vrot.lane.b32.xlu0 %v4879, 16
  %v5703 = vpop.permute.xlu0 %5702
  %5704 = vrot.lane.b32.xlu0 %v4880, 16
  %v5705 = vpop.permute.xlu0 %5704
  %5706 = vrot.lane.b32.xlu0 %v4881, 16
  %v5707 = vpop.permute.xlu0 %5706
  %5708 = vrot.lane.b32.xlu0 %v4882, 16
  %v5709 = vpop.permute.xlu0 %5708
  %5710 = vrot.lane.b32.xlu0 %v4883, 16
  %v5711 = vpop.permute.xlu0 %5710
  %5712 = vrot.lane.b32.xlu0 %v4884, 16
  %v5713 = vpop.permute.xlu0 %5712
  %5714 = vrot.lane.b32.xlu0 %v4885, 16
  %v5715 = vpop.permute.xlu0 %5714
  %5716 = vrot.lane.b32.xlu0 %v4886, 16
  %v5717 = vpop.permute.xlu0 %5716
  %5718 = vrot.lane.b32.xlu0 %v4887, 16
  %v5719 = vpop.permute.xlu0 %5718
  %5720 = vrot.lane.b32.xlu0 %v4888, 16
  %v5721 = vpop.permute.xlu0 %5720
  %5850 = vrot.lane.b32.xlu0 %v4889, 24
  %v5851 = vpop.permute.xlu0 %5850
  %5852 = vrot.lane.b32.xlu0 %v4890, 24
  %v5853 = vpop.permute.xlu0 %5852
  %5854 = vrot.lane.b32.xlu0 %v4891, 24
  %v5855 = vpop.permute.xlu0 %5854
  %5856 = vrot.lane.b32.xlu0 %v4892, 24
  %v5857 = vpop.permute.xlu0 %5856
  %5858 = vrot.lane.b32.xlu0 %v4893, 24
  %v5859 = vpop.permute.xlu0 %5858
  %5860 = vrot.lane.b32.xlu0 %v4894, 24
  %v5861 = vpop.permute.xlu0 %5860
  %5862 = vrot.lane.b32.xlu0 %v4895, 24
  %v5863 = vpop.permute.xlu0 %5862
  %5864 = vrot.lane.b32.xlu0 %v4896, 24
  %v5865 = vpop.permute.xlu0 %5864
  %5866 = vrot.lane.b32.xlu0 %v4897, 24
  %v5867 = vpop.permute.xlu0 %5866
  %5868 = vrot.lane.b32.xlu0 %v4898, 24
  %v5869 = vpop.permute.xlu0 %5868
  %5870 = vrot.lane.b32.xlu0 %v4899, 24
  %v5871 = vpop.permute.xlu0 %5870
  %5872 = vrot.lane.b32.xlu0 %v4900, 24
  %v5873 = vpop.permute.xlu0 %5872
  %5874 = vrot.lane.b32.xlu0 %v4901, 24
  %v5875 = vpop.permute.xlu0 %5874
  %5876 = vrot.lane.b32.xlu0 %v4902, 24
  %v5877 = vpop.permute.xlu0 %5876
  %5878 = vrot.lane.b32.xlu0 %v4903, 24
  %v5879 = vpop.permute.xlu0 %5878
  %5880 = vrot.lane.b32.xlu0 %v4904, 24
  %v5881 = vpop.permute.xlu0 %5880
  %5882 = vrot.lane.b32.xlu0 %v4905, 24
  %v5883 = vpop.permute.xlu0 %5882
  %5884 = vrot.lane.b32.xlu0 %v4906, 24
  %v5885 = vpop.permute.xlu0 %5884
  %5886 = vrot.lane.b32.xlu0 %v4907, 24
  %v5887 = vpop.permute.xlu0 %5886
  %5888 = vrot.lane.b32.xlu0 %v4908, 24
  %v5889 = vpop.permute.xlu0 %5888
  %5890 = vrot.lane.b32.xlu0 %v4909, 24
  %v5891 = vpop.permute.xlu0 %5890
  %5892 = vrot.lane.b32.xlu0 %v4910, 24
  %v5893 = vpop.permute.xlu0 %5892
  %5894 = vrot.lane.b32.xlu0 %v4911, 24
  %v5895 = vpop.permute.xlu0 %5894
  %5896 = vrot.lane.b32.xlu0 %v4912, 24
  %v5897 = vpop.permute.xlu0 %5896
  %5898 = vrot.lane.b32.xlu0 %v4913, 24
  %v5899 = vpop.permute.xlu0 %5898
  %5900 = vrot.lane.b32.xlu0 %v4914, 24
  %v5901 = vpop.permute.xlu0 %5900
  %5902 = vrot.lane.b32.xlu0 %v4915, 24
  %v5903 = vpop.permute.xlu0 %5902
  %5904 = vrot.lane.b32.xlu0 %v4916, 24
  %v5905 = vpop.permute.xlu0 %5904
  %5906 = vrot.lane.b32.xlu0 %v4917, 24
  %v5907 = vpop.permute.xlu0 %5906
  %5908 = vrot.lane.b32.xlu0 %v4918, 24
  %v5909 = vpop.permute.xlu0 %5908
  %5910 = vrot.lane.b32.xlu0 %v4919, 24
  %v5911 = vpop.permute.xlu0 %5910
  %5912 = vrot.lane.b32.xlu0 %v4920, 24
  %v5913 = vpop.permute.xlu0 %5912
  %5914 = vrot.lane.b32.xlu0 %v4921, 24
  %v5915 = vpop.permute.xlu0 %5914
  %5916 = vrot.lane.b32.xlu0 %v4922, 24
  %v5917 = vpop.permute.xlu0 %5916
  %5918 = vrot.lane.b32.xlu0 %v4923, 24
  %v5919 = vpop.permute.xlu0 %5918
  %5920 = vrot.lane.b32.xlu0 %v4924, 24
  %v5921 = vpop.permute.xlu0 %5920
  %5922 = vrot.lane.b32.xlu0 %v4925, 24
  %v5923 = vpop.permute.xlu0 %5922
  %5924 = vrot.lane.b32.xlu0 %v4926, 24
  %v5925 = vpop.permute.xlu0 %5924
  %5926 = vrot.lane.b32.xlu0 %v4927, 24
  %v5927 = vpop.permute.xlu0 %5926
  %5928 = vrot.lane.b32.xlu0 %v4928, 24
  %v5929 = vpop.permute.xlu0 %5928
  %5930 = vrot.lane.b32.xlu0 %v4929, 24
  %v5931 = vpop.permute.xlu0 %5930
  %5932 = vrot.lane.b32.xlu0 %v4930, 24
  %v5933 = vpop.permute.xlu0 %5932
  %5934 = vrot.lane.b32.xlu0 %v4931, 24
  %v5935 = vpop.permute.xlu0 %5934
  %5936 = vrot.lane.b32.xlu0 %v4932, 24
  %v5937 = vpop.permute.xlu0 %5936
  %5938 = vrot.lane.b32.xlu0 %v4933, 24
  %v5939 = vpop.permute.xlu0 %5938
  %5940 = vrot.lane.b32.xlu0 %v4934, 24
  %v5941 = vpop.permute.xlu0 %5940
  %5942 = vrot.lane.b32.xlu0 %v4935, 24
  %v5943 = vpop.permute.xlu0 %5942
  %5944 = vrot.lane.b32.xlu0 %v4936, 24
  %v5945 = vpop.permute.xlu0 %5944
  %5946 = vrot.lane.b32.xlu0 %v4937, 24
  %v5947 = vpop.permute.xlu0 %5946
  %5948 = vrot.lane.b32.xlu0 %v4938, 24
  %v5949 = vpop.permute.xlu0 %5948
  %5950 = vrot.lane.b32.xlu0 %v4939, 24
  %v5951 = vpop.permute.xlu0 %5950
  %5952 = vrot.lane.b32.xlu0 %v4940, 24
  %v5953 = vpop.permute.xlu0 %5952
  %5954 = vrot.lane.b32.xlu0 %v4941, 24
  %v5955 = vpop.permute.xlu0 %5954
  %5956 = vrot.lane.b32.xlu0 %v4942, 24
  %v5957 = vpop.permute.xlu0 %5956
  %5958 = vrot.lane.b32.xlu0 %v4943, 24
  %v5959 = vpop.permute.xlu0 %5958
  %5960 = vrot.lane.b32.xlu0 %v4944, 24
  %v5961 = vpop.permute.xlu0 %5960
  %5962 = vrot.lane.b32.xlu0 %v4945, 24
  %v5963 = vpop.permute.xlu0 %5962
  %5964 = vrot.lane.b32.xlu0 %v4946, 24
  %v5965 = vpop.permute.xlu0 %5964
  %5966 = vrot.lane.b32.xlu0 %v4947, 24
  %v5967 = vpop.permute.xlu0 %5966
  %5968 = vrot.lane.b32.xlu0 %v4948, 24
  %v5969 = vpop.permute.xlu0 %5968
  %5970 = vrot.lane.b32.xlu0 %v4949, 24
  %v5971 = vpop.permute.xlu0 %5970
  %5972 = vrot.lane.b32.xlu0 %v4950, 24
  %v5973 = vpop.permute.xlu0 %5972
  %5974 = vrot.lane.b32.xlu0 %v4951, 24
  %v5975 = vpop.permute.xlu0 %5974
  %5976 = vrot.lane.b32.xlu0 %v4952, 24
  %v5977 = vpop.permute.xlu0 %5976
  %6106 = vrot.lane.b32.xlu0 %v4953, 32
  %v6107 = vpop.permute.xlu0 %6106
  %6108 = vrot.lane.b32.xlu0 %v4954, 32
  %v6109 = vpop.permute.xlu0 %6108
  %6110 = vrot.lane.b32.xlu0 %v4955, 32
  %v6111 = vpop.permute.xlu0 %6110
  %6112 = vrot.lane.b32.xlu0 %v4956, 32
  %v6113 = vpop.permute.xlu0 %6112
  %6114 = vrot.lane.b32.xlu0 %v4957, 32
  %v6115 = vpop.permute.xlu0 %6114
  %6116 = vrot.lane.b32.xlu0 %v4958, 32
  %v6117 = vpop.permute.xlu0 %6116
  %6118 = vrot.lane.b32.xlu0 %v4959, 32
  %v6119 = vpop.permute.xlu0 %6118
  %6120 = vrot.lane.b32.xlu0 %v4960, 32
  %v6121 = vpop.permute.xlu0 %6120
  %6122 = vrot.lane.b32.xlu0 %v4961, 32
  %v6123 = vpop.permute.xlu0 %6122
  %6124 = vrot.lane.b32.xlu0 %v4962, 32
  %v6125 = vpop.permute.xlu0 %6124
  %6126 = vrot.lane.b32.xlu0 %v4963, 32
  %v6127 = vpop.permute.xlu0 %6126
  %6128 = vrot.lane.b32.xlu0 %v4964, 32
  %v6129 = vpop.permute.xlu0 %6128
  %6130 = vrot.lane.b32.xlu0 %v4965, 32
  %v6131 = vpop.permute.xlu0 %6130
  %6132 = vrot.lane.b32.xlu0 %v4966, 32
  %v6133 = vpop.permute.xlu0 %6132
  %6134 = vrot.lane.b32.xlu0 %v4967, 32
  %v6135 = vpop.permute.xlu0 %6134
  %6136 = vrot.lane.b32.xlu0 %v4968, 32
  %v6137 = vpop.permute.xlu0 %6136
  %6138 = vrot.lane.b32.xlu0 %v4969, 32
  %v6139 = vpop.permute.xlu0 %6138
  %6140 = vrot.lane.b32.xlu0 %v4970, 32
  %v6141 = vpop.permute.xlu0 %6140
  %6142 = vrot.lane.b32.xlu0 %v4971, 32
  %v6143 = vpop.permute.xlu0 %6142
  %6144 = vrot.lane.b32.xlu0 %v4972, 32
  %v6145 = vpop.permute.xlu0 %6144
  %6146 = vrot.lane.b32.xlu0 %v4973, 32
  %v6147 = vpop.permute.xlu0 %6146
  %6148 = vrot.lane.b32.xlu0 %v4974, 32
  %v6149 = vpop.permute.xlu0 %6148
  %6150 = vrot.lane.b32.xlu0 %v4975, 32
  %v6151 = vpop.permute.xlu0 %6150
  %6152 = vrot.lane.b32.xlu0 %v4976, 32
  %v6153 = vpop.permute.xlu0 %6152
  %6154 = vrot.lane.b32.xlu0 %v4977, 32
  %v6155 = vpop.permute.xlu0 %6154
  %6156 = vrot.lane.b32.xlu0 %v4978, 32
  %v6157 = vpop.permute.xlu0 %6156
  %6158 = vrot.lane.b32.xlu0 %v4979, 32
  %v6159 = vpop.permute.xlu0 %6158
  %6160 = vrot.lane.b32.xlu0 %v4980, 32
  %v6161 = vpop.permute.xlu0 %6160
  %6162 = vrot.lane.b32.xlu0 %v4981, 32
  %v6163 = vpop.permute.xlu0 %6162
  %6164 = vrot.lane.b32.xlu0 %v4982, 32
  %v6165 = vpop.permute.xlu0 %6164
  %6166 = vrot.lane.b32.xlu0 %v4983, 32
  %v6167 = vpop.permute.xlu0 %6166
  %6168 = vrot.lane.b32.xlu0 %v4984, 32
  %v6169 = vpop.permute.xlu0 %6168
  %6170 = vrot.lane.b32.xlu0 %v4985, 32
  %v6171 = vpop.permute.xlu0 %6170
  %6172 = vrot.lane.b32.xlu0 %v4986, 32
  %v6173 = vpop.permute.xlu0 %6172
  %6174 = vrot.lane.b32.xlu0 %v4987, 32
  %v6175 = vpop.permute.xlu0 %6174
  %6176 = vrot.lane.b32.xlu0 %v4988, 32
  %v6177 = vpop.permute.xlu0 %6176
  %6178 = vrot.lane.b32.xlu0 %v4989, 32
  %v6179 = vpop.permute.xlu0 %6178
  %6180 = vrot.lane.b32.xlu0 %v4990, 32
  %v6181 = vpop.permute.xlu0 %6180
  %6182 = vrot.lane.b32.xlu0 %v4991, 32
  %v6183 = vpop.permute.xlu0 %6182
  %6184 = vrot.lane.b32.xlu0 %v4992, 32
  %v6185 = vpop.permute.xlu0 %6184
  %6186 = vrot.lane.b32.xlu0 %v4993, 32
  %v6187 = vpop.permute.xlu0 %6186
  %6188 = vrot.lane.b32.xlu0 %v4994, 32
  %v6189 = vpop.permute.xlu0 %6188
  %6190 = vrot.lane.b32.xlu0 %v4995, 32
  %v6191 = vpop.permute.xlu0 %6190
  %6192 = vrot.lane.b32.xlu0 %v4996, 32
  %v6193 = vpop.permute.xlu0 %6192
  %6194 = vrot.lane.b32.xlu0 %v4997, 32
  %v6195 = vpop.permute.xlu0 %6194
  %6196 = vrot.lane.b32.xlu0 %v4998, 32
  %v6197 = vpop.permute.xlu0 %6196
  %6198 = vrot.lane.b32.xlu0 %v4999, 32
  %v6199 = vpop.permute.xlu0 %6198
  %6200 = vrot.lane.b32.xlu0 %v5000, 32
  %v6201 = vpop.permute.xlu0 %6200
  %6202 = vrot.lane.b32.xlu0 %v5001, 32
  %v6203 = vpop.permute.xlu0 %6202
  %6204 = vrot.lane.b32.xlu0 %v5002, 32
  %v6205 = vpop.permute.xlu0 %6204
  %6206 = vrot.lane.b32.xlu0 %v5003, 32
  %v6207 = vpop.permute.xlu0 %6206
  %6208 = vrot.lane.b32.xlu0 %v5004, 32
  %v6209 = vpop.permute.xlu0 %6208
  %6210 = vrot.lane.b32.xlu0 %v5005, 32
  %v6211 = vpop.permute.xlu0 %6210
  %6212 = vrot.lane.b32.xlu0 %v5006, 32
  %v6213 = vpop.permute.xlu0 %6212
  %6214 = vrot.lane.b32.xlu0 %v5007, 32
  %v6215 = vpop.permute.xlu0 %6214
  %6216 = vrot.lane.b32.xlu0 %v5008, 32
  %v6217 = vpop.permute.xlu0 %6216
  %6218 = vrot.lane.b32.xlu0 %v5009, 32
  %v6219 = vpop.permute.xlu0 %6218
  %6220 = vrot.lane.b32.xlu0 %v5010, 32
  %v6221 = vpop.permute.xlu0 %6220
  %6222 = vrot.lane.b32.xlu0 %v5011, 32
  %v6223 = vpop.permute.xlu0 %6222
  %6224 = vrot.lane.b32.xlu0 %v5012, 32
  %v6225 = vpop.permute.xlu0 %6224
  %6226 = vrot.lane.b32.xlu0 %v5013, 32
  %v6227 = vpop.permute.xlu0 %6226
  %6228 = vrot.lane.b32.xlu0 %v5014, 32
  %v6229 = vpop.permute.xlu0 %6228
  %6230 = vrot.lane.b32.xlu0 %v5015, 32
  %v6231 = vpop.permute.xlu0 %6230
  %6232 = vrot.lane.b32.xlu0 %v5016, 32
  %v6233 = vpop.permute.xlu0 %6232
  %6362 = vrot.lane.b32.xlu0 %v5017, 40
  %v6363 = vpop.permute.xlu0 %6362
  %6364 = vrot.lane.b32.xlu0 %v5018, 40
  %v6365 = vpop.permute.xlu0 %6364
  %6366 = vrot.lane.b32.xlu0 %v5019, 40
  %v6367 = vpop.permute.xlu0 %6366
  %6368 = vrot.lane.b32.xlu0 %v5020, 40
  %v6369 = vpop.permute.xlu0 %6368
  %6370 = vrot.lane.b32.xlu0 %v5021, 40
  %v6371 = vpop.permute.xlu0 %6370
  %6372 = vrot.lane.b32.xlu0 %v5022, 40
  %v6373 = vpop.permute.xlu0 %6372
  %6374 = vrot.lane.b32.xlu0 %v5023, 40
  %v6375 = vpop.permute.xlu0 %6374
  %6376 = vrot.lane.b32.xlu0 %v5024, 40
  %v6377 = vpop.permute.xlu0 %6376
  %6378 = vrot.lane.b32.xlu0 %v5025, 40
  %v6379 = vpop.permute.xlu0 %6378
  %6380 = vrot.lane.b32.xlu0 %v5026, 40
  %v6381 = vpop.permute.xlu0 %6380
  %6382 = vrot.lane.b32.xlu0 %v5027, 40
  %v6383 = vpop.permute.xlu0 %6382
  %6384 = vrot.lane.b32.xlu0 %v5028, 40
  %v6385 = vpop.permute.xlu0 %6384
  %6386 = vrot.lane.b32.xlu0 %v5029, 40
  %v6387 = vpop.permute.xlu0 %6386
  %6388 = vrot.lane.b32.xlu0 %v5030, 40
  %v6389 = vpop.permute.xlu0 %6388
  %6390 = vrot.lane.b32.xlu0 %v5031, 40
  %v6391 = vpop.permute.xlu0 %6390
  %6392 = vrot.lane.b32.xlu0 %v5032, 40
  %v6393 = vpop.permute.xlu0 %6392
  %6394 = vrot.lane.b32.xlu0 %v5033, 40
  %v6395 = vpop.permute.xlu0 %6394
  %6396 = vrot.lane.b32.xlu0 %v5034, 40
  %v6397 = vpop.permute.xlu0 %6396
  %6398 = vrot.lane.b32.xlu0 %v5035, 40
  %v6399 = vpop.permute.xlu0 %6398
  %6400 = vrot.lane.b32.xlu0 %v5036, 40
  %v6401 = vpop.permute.xlu0 %6400
  %6402 = vrot.lane.b32.xlu0 %v5037, 40
  %v6403 = vpop.permute.xlu0 %6402
  %6404 = vrot.lane.b32.xlu0 %v5038, 40
  %v6405 = vpop.permute.xlu0 %6404
  %6406 = vrot.lane.b32.xlu0 %v5039, 40
  %v6407 = vpop.permute.xlu0 %6406
  %6408 = vrot.lane.b32.xlu0 %v5040, 40
  %v6409 = vpop.permute.xlu0 %6408
  %6410 = vrot.lane.b32.xlu0 %v5041, 40
  %v6411 = vpop.permute.xlu0 %6410
  %6412 = vrot.lane.b32.xlu0 %v5042, 40
  %v6413 = vpop.permute.xlu0 %6412
  %6414 = vrot.lane.b32.xlu0 %v5043, 40
  %v6415 = vpop.permute.xlu0 %6414
  %6416 = vrot.lane.b32.xlu0 %v5044, 40
  %v6417 = vpop.permute.xlu0 %6416
  %6418 = vrot.lane.b32.xlu0 %v5045, 40
  %v6419 = vpop.permute.xlu0 %6418
  %6420 = vrot.lane.b32.xlu0 %v5046, 40
  %v6421 = vpop.permute.xlu0 %6420
  %6422 = vrot.lane.b32.xlu0 %v5047, 40
  %v6423 = vpop.permute.xlu0 %6422
  %6424 = vrot.lane.b32.xlu0 %v5048, 40
  %v6425 = vpop.permute.xlu0 %6424
  %6426 = vrot.lane.b32.xlu0 %v5049, 40
  %v6427 = vpop.permute.xlu0 %6426
  %6428 = vrot.lane.b32.xlu0 %v5050, 40
  %v6429 = vpop.permute.xlu0 %6428
  %6430 = vrot.lane.b32.xlu0 %v5051, 40
  %v6431 = vpop.permute.xlu0 %6430
  %6432 = vrot.lane.b32.xlu0 %v5052, 40
  %v6433 = vpop.permute.xlu0 %6432
  %6434 = vrot.lane.b32.xlu0 %v5053, 40
  %v6435 = vpop.permute.xlu0 %6434
  %6436 = vrot.lane.b32.xlu0 %v5054, 40
  %v6437 = vpop.permute.xlu0 %6436
  %6438 = vrot.lane.b32.xlu0 %v5055, 40
  %v6439 = vpop.permute.xlu0 %6438
  %6440 = vrot.lane.b32.xlu0 %v5056, 40
  %v6441 = vpop.permute.xlu0 %6440
  %6442 = vrot.lane.b32.xlu0 %v5057, 40
  %v6443 = vpop.permute.xlu0 %6442
  %6444 = vrot.lane.b32.xlu0 %v5058, 40
  %v6445 = vpop.permute.xlu0 %6444
  %6446 = vrot.lane.b32.xlu0 %v5059, 40
  %v6447 = vpop.permute.xlu0 %6446
  %6448 = vrot.lane.b32.xlu0 %v5060, 40
  %v6449 = vpop.permute.xlu0 %6448
  %6450 = vrot.lane.b32.xlu0 %v5061, 40
  %v6451 = vpop.permute.xlu0 %6450
  %6452 = vrot.lane.b32.xlu0 %v5062, 40
  %v6453 = vpop.permute.xlu0 %6452
  %6454 = vrot.lane.b32.xlu0 %v5063, 40
  %v6455 = vpop.permute.xlu0 %6454
  %6456 = vrot.lane.b32.xlu0 %v5064, 40
  %v6457 = vpop.permute.xlu0 %6456
  %6458 = vrot.lane.b32.xlu0 %v5065, 40
  %v6459 = vpop.permute.xlu0 %6458
  %6460 = vrot.lane.b32.xlu0 %v5066, 40
  %v6461 = vpop.permute.xlu0 %6460
  %6462 = vrot.lane.b32.xlu0 %v5067, 40
  %v6463 = vpop.permute.xlu0 %6462
  %6464 = vrot.lane.b32.xlu0 %v5068, 40
  %v6465 = vpop.permute.xlu0 %6464
  %6466 = vrot.lane.b32.xlu0 %v5069, 40
  %v6467 = vpop.permute.xlu0 %6466
  %6468 = vrot.lane.b32.xlu0 %v5070, 40
  %v6469 = vpop.permute.xlu0 %6468
  %6470 = vrot.lane.b32.xlu0 %v5071, 40
  %v6471 = vpop.permute.xlu0 %6470
  %6472 = vrot.lane.b32.xlu0 %v5072, 40
  %v6473 = vpop.permute.xlu0 %6472
  %6474 = vrot.lane.b32.xlu0 %v5073, 40
  %v6475 = vpop.permute.xlu0 %6474
  %6476 = vrot.lane.b32.xlu0 %v5074, 40
  %v6477 = vpop.permute.xlu0 %6476
  %6478 = vrot.lane.b32.xlu0 %v5075, 40
  %v6479 = vpop.permute.xlu0 %6478
  %6480 = vrot.lane.b32.xlu0 %v5076, 40
  %v6481 = vpop.permute.xlu0 %6480
  %6482 = vrot.lane.b32.xlu0 %v5077, 40
  %v6483 = vpop.permute.xlu0 %6482
  %6484 = vrot.lane.b32.xlu0 %v5078, 40
  %v6485 = vpop.permute.xlu0 %6484
  %6486 = vrot.lane.b32.xlu0 %v5079, 40
  %v6487 = vpop.permute.xlu0 %6486
  %6488 = vrot.lane.b32.xlu0 %v5080, 40
  %v6489 = vpop.permute.xlu0 %6488
  %6618 = vrot.lane.b32.xlu0 %v5082, 48
  %v6619 = vpop.permute.xlu0 %6618
  %6620 = vrot.lane.b32.xlu0 %v5083, 48
  %v6621 = vpop.permute.xlu0 %6620
  %6622 = vrot.lane.b32.xlu0 %v5084, 48
  %v6623 = vpop.permute.xlu0 %6622
  %6624 = vrot.lane.b32.xlu0 %v5085, 48
  %v6625 = vpop.permute.xlu0 %6624
  %6626 = vrot.lane.b32.xlu0 %v5086, 48
  %v6627 = vpop.permute.xlu0 %6626
  %6628 = vrot.lane.b32.xlu0 %v5087, 48
  %v6629 = vpop.permute.xlu0 %6628
  %6630 = vrot.lane.b32.xlu0 %v5088, 48
  %v6631 = vpop.permute.xlu0 %6630
  %6632 = vrot.lane.b32.xlu0 %v5089, 48
  %v6633 = vpop.permute.xlu0 %6632
  %6634 = vrot.lane.b32.xlu0 %v5090, 48
  %v6635 = vpop.permute.xlu0 %6634
  %6636 = vrot.lane.b32.xlu0 %v5091, 48
  %v6637 = vpop.permute.xlu0 %6636
  %6638 = vrot.lane.b32.xlu0 %v5092, 48
  %v6639 = vpop.permute.xlu0 %6638
  %6640 = vrot.lane.b32.xlu0 %v5093, 48
  %v6641 = vpop.permute.xlu0 %6640
  %6642 = vrot.lane.b32.xlu0 %v5094, 48
  %v6643 = vpop.permute.xlu0 %6642
  %6644 = vrot.lane.b32.xlu0 %v5095, 48
  %v6645 = vpop.permute.xlu0 %6644
  %6646 = vrot.lane.b32.xlu0 %v5096, 48
  %v6647 = vpop.permute.xlu0 %6646
  %6648 = vrot.lane.b32.xlu0 %v5097, 48
  %v6649 = vpop.permute.xlu0 %6648
  %6650 = vrot.lane.b32.xlu0 %v5098, 48
  %v6651 = vpop.permute.xlu0 %6650
  %6652 = vrot.lane.b32.xlu0 %v5099, 48
  %v6653 = vpop.permute.xlu0 %6652
  %6654 = vrot.lane.b32.xlu0 %v5100, 48
  %v6655 = vpop.permute.xlu0 %6654
  %6656 = vrot.lane.b32.xlu0 %v5101, 48
  %v6657 = vpop.permute.xlu0 %6656
  %6658 = vrot.lane.b32.xlu0 %v5102, 48
  %v6659 = vpop.permute.xlu0 %6658
  %6660 = vrot.lane.b32.xlu0 %v5103, 48
  %v6661 = vpop.permute.xlu0 %6660
  %6662 = vrot.lane.b32.xlu0 %v5104, 48
  %v6663 = vpop.permute.xlu0 %6662
  %6664 = vrot.lane.b32.xlu0 %v5105, 48
  %v6665 = vpop.permute.xlu0 %6664
  %6666 = vrot.lane.b32.xlu0 %v5106, 48
  %v6667 = vpop.permute.xlu0 %6666
  %6668 = vrot.lane.b32.xlu0 %v5107, 48
  %v6669 = vpop.permute.xlu0 %6668
  %6670 = vrot.lane.b32.xlu0 %v5108, 48
  %v6671 = vpop.permute.xlu0 %6670
  %6672 = vrot.lane.b32.xlu0 %v5109, 48
  %v6673 = vpop.permute.xlu0 %6672
  %6674 = vrot.lane.b32.xlu0 %v5110, 48
  %v6675 = vpop.permute.xlu0 %6674
  %6676 = vrot.lane.b32.xlu0 %v5111, 48
  %v6677 = vpop.permute.xlu0 %6676
  %6678 = vrot.lane.b32.xlu0 %v5112, 48
  %v6679 = vpop.permute.xlu0 %6678
  %6680 = vrot.lane.b32.xlu0 %v5113, 48
  %v6681 = vpop.permute.xlu0 %6680
  %6682 = vrot.lane.b32.xlu0 %v5114, 48
  %v6683 = vpop.permute.xlu0 %6682
  %6684 = vrot.lane.b32.xlu0 %v5115, 48
  %v6685 = vpop.permute.xlu0 %6684
  %6686 = vrot.lane.b32.xlu0 %v5116, 48
  %v6687 = vpop.permute.xlu0 %6686
  %6688 = vrot.lane.b32.xlu0 %v5117, 48
  %v6689 = vpop.permute.xlu0 %6688
  %6690 = vrot.lane.b32.xlu0 %v5118, 48
  %v6691 = vpop.permute.xlu0 %6690
  %6692 = vrot.lane.b32.xlu0 %v5119, 48
  %v6693 = vpop.permute.xlu0 %6692
  %6694 = vrot.lane.b32.xlu0 %v5120, 48
  %v6695 = vpop.permute.xlu0 %6694
  %6696 = vrot.lane.b32.xlu0 %v5121, 48
  %v6697 = vpop.permute.xlu0 %6696
  %6698 = vrot.lane.b32.xlu0 %v5122, 48
  %v6699 = vpop.permute.xlu0 %6698
  %6700 = vrot.lane.b32.xlu0 %v5123, 48
  %v6701 = vpop.permute.xlu0 %6700
  %6702 = vrot.lane.b32.xlu0 %v5124, 48
  %v6703 = vpop.permute.xlu0 %6702
  %6704 = vrot.lane.b32.xlu0 %v5125, 48
  %v6705 = vpop.permute.xlu0 %6704
  %6706 = vrot.lane.b32.xlu0 %v5126, 48
  %v6707 = vpop.permute.xlu0 %6706
  %6708 = vrot.lane.b32.xlu0 %v5127, 48
  %v6709 = vpop.permute.xlu0 %6708
  %6710 = vrot.lane.b32.xlu0 %v5128, 48
  %v6711 = vpop.permute.xlu0 %6710
  %6712 = vrot.lane.b32.xlu0 %v5129, 48
  %v6713 = vpop.permute.xlu0 %6712
  %6714 = vrot.lane.b32.xlu0 %v5130, 48
  %v6715 = vpop.permute.xlu0 %6714
  %6716 = vrot.lane.b32.xlu0 %v5131, 48
  %v6717 = vpop.permute.xlu0 %6716
  %6718 = vrot.lane.b32.xlu0 %v5132, 48
  %v6719 = vpop.permute.xlu0 %6718
  %6720 = vrot.lane.b32.xlu0 %v5133, 48
  %v6721 = vpop.permute.xlu0 %6720
  %6722 = vrot.lane.b32.xlu0 %v5134, 48
  %v6723 = vpop.permute.xlu0 %6722
  %6724 = vrot.lane.b32.xlu0 %v5135, 48
  %v6725 = vpop.permute.xlu0 %6724
  %6726 = vrot.lane.b32.xlu0 %v5136, 48
  %v6727 = vpop.permute.xlu0 %6726
  %6728 = vrot.lane.b32.xlu0 %v5137, 48
  %v6729 = vpop.permute.xlu0 %6728
  %6730 = vrot.lane.b32.xlu0 %v5138, 48
  %v6731 = vpop.permute.xlu0 %6730
  %6732 = vrot.lane.b32.xlu0 %v5139, 48
  %v6733 = vpop.permute.xlu0 %6732
  %6734 = vrot.lane.b32.xlu0 %v5140, 48
  %v6735 = vpop.permute.xlu0 %6734
  %6736 = vrot.lane.b32.xlu0 %v5141, 48
  %v6737 = vpop.permute.xlu0 %6736
  %6738 = vrot.lane.b32.xlu0 %v5142, 48
  %v6739 = vpop.permute.xlu0 %6738
  %6740 = vrot.lane.b32.xlu0 %v5143, 48
  %v6741 = vpop.permute.xlu0 %6740
  %6742 = vrot.lane.b32.xlu0 %v5144, 48
  %v6743 = vpop.permute.xlu0 %6742
  %6744 = vrot.lane.b32.xlu0 %v5145, 48
  %v6745 = vpop.permute.xlu0 %6744
  %6874 = vrot.lane.b32.xlu0 %v5146, 56
  %v6875 = vpop.permute.xlu0 %6874
  %6876 = vrot.lane.b32.xlu0 %v5147, 56
  %v6877 = vpop.permute.xlu0 %6876
  %6878 = vrot.lane.b32.xlu0 %v5148, 56
  %v6879 = vpop.permute.xlu0 %6878
  %6880 = vrot.lane.b32.xlu0 %v5149, 56
  %v6881 = vpop.permute.xlu0 %6880
  %6882 = vrot.lane.b32.xlu0 %v5150, 56
  %v6883 = vpop.permute.xlu0 %6882
  %6884 = vrot.lane.b32.xlu0 %v5151, 56
  %v6885 = vpop.permute.xlu0 %6884
  %6886 = vrot.lane.b32.xlu0 %v5152, 56
  %v6887 = vpop.permute.xlu0 %6886
  %6888 = vrot.lane.b32.xlu0 %v5153, 56
  %v6889 = vpop.permute.xlu0 %6888
  %6890 = vrot.lane.b32.xlu0 %v5154, 56
  %v6891 = vpop.permute.xlu0 %6890
  %6892 = vrot.lane.b32.xlu0 %v5155, 56
  %v6893 = vpop.permute.xlu0 %6892
  %6894 = vrot.lane.b32.xlu0 %v5156, 56
  %v6895 = vpop.permute.xlu0 %6894
  %6896 = vrot.lane.b32.xlu0 %v5157, 56
  %v6897 = vpop.permute.xlu0 %6896
  %6898 = vrot.lane.b32.xlu0 %v5158, 56
  %v6899 = vpop.permute.xlu0 %6898
  %6900 = vrot.lane.b32.xlu0 %v5159, 56
  %v6901 = vpop.permute.xlu0 %6900
  %6902 = vrot.lane.b32.xlu0 %v5160, 56
  %v6903 = vpop.permute.xlu0 %6902
  %6904 = vrot.lane.b32.xlu0 %v5161, 56
  %v6905 = vpop.permute.xlu0 %6904
  %6906 = vrot.lane.b32.xlu0 %v5162, 56
  %v6907 = vpop.permute.xlu0 %6906
  %6908 = vrot.lane.b32.xlu0 %v5163, 56
  %v6909 = vpop.permute.xlu0 %6908
  %6910 = vrot.lane.b32.xlu0 %v5164, 56
  %v6911 = vpop.permute.xlu0 %6910
  %6912 = vrot.lane.b32.xlu0 %v5165, 56
  %v6913 = vpop.permute.xlu0 %6912
  %6914 = vrot.lane.b32.xlu0 %v5166, 56
  %v6915 = vpop.permute.xlu0 %6914
  %6916 = vrot.lane.b32.xlu0 %v5167, 56
  %v6917 = vpop.permute.xlu0 %6916
  %6918 = vrot.lane.b32.xlu0 %v5168, 56
  %v6919 = vpop.permute.xlu0 %6918
  %6920 = vrot.lane.b32.xlu0 %v5169, 56
  %v6921 = vpop.permute.xlu0 %6920
  %6922 = vrot.lane.b32.xlu0 %v5170, 56
  %v6923 = vpop.permute.xlu0 %6922
  %6924 = vrot.lane.b32.xlu0 %v5171, 56
  %v6925 = vpop.permute.xlu0 %6924
  %6926 = vrot.lane.b32.xlu0 %v5172, 56
  %v6927 = vpop.permute.xlu0 %6926
  %6928 = vrot.lane.b32.xlu0 %v5173, 56
  %v6929 = vpop.permute.xlu0 %6928
  %6930 = vrot.lane.b32.xlu0 %v5174, 56
  %v6931 = vpop.permute.xlu0 %6930
  %6932 = vrot.lane.b32.xlu0 %v5175, 56
  %v6933 = vpop.permute.xlu0 %6932
  %6934 = vrot.lane.b32.xlu0 %v5176, 56
  %v6935 = vpop.permute.xlu0 %6934
  %6936 = vrot.lane.b32.xlu0 %v5177, 56
  %v6937 = vpop.permute.xlu0 %6936
  %6938 = vrot.lane.b32.xlu0 %v5178, 56
  %v6939 = vpop.permute.xlu0 %6938
  %6940 = vrot.lane.b32.xlu0 %v5179, 56
  %v6941 = vpop.permute.xlu0 %6940
  %6942 = vrot.lane.b32.xlu0 %v5180, 56
  %v6943 = vpop.permute.xlu0 %6942
  %6944 = vrot.lane.b32.xlu0 %v5181, 56
  %v6945 = vpop.permute.xlu0 %6944
  %6946 = vrot.lane.b32.xlu0 %v5182, 56
  %v6947 = vpop.permute.xlu0 %6946
  %6948 = vrot.lane.b32.xlu0 %v5183, 56
  %v6949 = vpop.permute.xlu0 %6948
  %6950 = vrot.lane.b32.xlu0 %v5184, 56
  %v6951 = vpop.permute.xlu0 %6950
  %6952 = vrot.lane.b32.xlu0 %v5185, 56
  %v6953 = vpop.permute.xlu0 %6952
  %6954 = vrot.lane.b32.xlu0 %v5186, 56
  %v6955 = vpop.permute.xlu0 %6954
  %6956 = vrot.lane.b32.xlu0 %v5187, 56
  %v6957 = vpop.permute.xlu0 %6956
  %6958 = vrot.lane.b32.xlu0 %v5188, 56
  %v6959 = vpop.permute.xlu0 %6958
  %6960 = vrot.lane.b32.xlu0 %v5189, 56
  %v6961 = vpop.permute.xlu0 %6960
  %6962 = vrot.lane.b32.xlu0 %v5190, 56
  %v6963 = vpop.permute.xlu0 %6962
  %6964 = vrot.lane.b32.xlu0 %v5191, 56
  %v6965 = vpop.permute.xlu0 %6964
  %6966 = vrot.lane.b32.xlu0 %v5192, 56
  %v6967 = vpop.permute.xlu0 %6966
  %6968 = vrot.lane.b32.xlu0 %v5193, 56
  %v6969 = vpop.permute.xlu0 %6968
  %6970 = vrot.lane.b32.xlu0 %v5194, 56
  %v6971 = vpop.permute.xlu0 %6970
  %6972 = vrot.lane.b32.xlu0 %v5195, 56
  %v6973 = vpop.permute.xlu0 %6972
  %6974 = vrot.lane.b32.xlu0 %v5196, 56
  %v6975 = vpop.permute.xlu0 %6974
  %6976 = vrot.lane.b32.xlu0 %v5197, 56
  %v6977 = vpop.permute.xlu0 %6976
  %6978 = vrot.lane.b32.xlu0 %v5198, 56
  %v6979 = vpop.permute.xlu0 %6978
  %6980 = vrot.lane.b32.xlu0 %v5199, 56
  %v6981 = vpop.permute.xlu0 %6980
  %6982 = vrot.lane.b32.xlu0 %v5200, 56
  %v6983 = vpop.permute.xlu0 %6982
  %6984 = vrot.lane.b32.xlu0 %v5201, 56
  %v6985 = vpop.permute.xlu0 %6984
  %6986 = vrot.lane.b32.xlu0 %v5202, 56
  %v6987 = vpop.permute.xlu0 %6986
  %6988 = vrot.lane.b32.xlu0 %v5203, 56
  %v6989 = vpop.permute.xlu0 %6988
  %6990 = vrot.lane.b32.xlu0 %v5204, 56
  %v6991 = vpop.permute.xlu0 %6990
  %6992 = vrot.lane.b32.xlu0 %v5205, 56
  %v6993 = vpop.permute.xlu0 %6992
  %6994 = vrot.lane.b32.xlu0 %v5206, 56
  %v6995 = vpop.permute.xlu0 %6994
  %6996 = vrot.lane.b32.xlu0 %v5207, 56
  %v6997 = vpop.permute.xlu0 %6996
  %6998 = vrot.lane.b32.xlu0 %v5208, 56
  %v6999 = vpop.permute.xlu0 %6998
  %7000 = vrot.lane.b32.xlu0 %v5209, 56
  %v7001 = vpop.permute.xlu0 %7000
  %7130 = vrot.lane.b32.xlu0 %v5210, 64
  %v7131 = vpop.permute.xlu0 %7130
  %7132 = vrot.lane.b32.xlu0 %v5211, 64
  %v7133 = vpop.permute.xlu0 %7132
  %7134 = vrot.lane.b32.xlu0 %v5212, 64
  %v7135 = vpop.permute.xlu0 %7134
  %7136 = vrot.lane.b32.xlu0 %v5213, 64
  %v7137 = vpop.permute.xlu0 %7136
  %7138 = vrot.lane.b32.xlu0 %v5214, 64
  %v7139 = vpop.permute.xlu0 %7138
  %7140 = vrot.lane.b32.xlu0 %v5215, 64
  %v7141 = vpop.permute.xlu0 %7140
  %7142 = vrot.lane.b32.xlu0 %v5216, 64
  %v7143 = vpop.permute.xlu0 %7142
  %7144 = vrot.lane.b32.xlu0 %v5217, 64
  %v7145 = vpop.permute.xlu0 %7144
  %7146 = vrot.lane.b32.xlu0 %v5218, 64
  %v7147 = vpop.permute.xlu0 %7146
  %7148 = vrot.lane.b32.xlu0 %v5219, 64
  %v7149 = vpop.permute.xlu0 %7148
  %7150 = vrot.lane.b32.xlu0 %v5220, 64
  %v7151 = vpop.permute.xlu0 %7150
  %7152 = vrot.lane.b32.xlu0 %v5221, 64
  %v7153 = vpop.permute.xlu0 %7152
  %7154 = vrot.lane.b32.xlu0 %v5222, 64
  %v7155 = vpop.permute.xlu0 %7154
  %7156 = vrot.lane.b32.xlu0 %v5223, 64
  %v7157 = vpop.permute.xlu0 %7156
  %7158 = vrot.lane.b32.xlu0 %v5224, 64
  %v7159 = vpop.permute.xlu0 %7158
  %7160 = vrot.lane.b32.xlu0 %v5225, 64
  %v7161 = vpop.permute.xlu0 %7160
  %7162 = vrot.lane.b32.xlu0 %v5226, 64
  %v7163 = vpop.permute.xlu0 %7162
  %7164 = vrot.lane.b32.xlu0 %v5227, 64
  %v7165 = vpop.permute.xlu0 %7164
  %7166 = vrot.lane.b32.xlu0 %v5228, 64
  %v7167 = vpop.permute.xlu0 %7166
  %7168 = vrot.lane.b32.xlu0 %v5229, 64
  %v7169 = vpop.permute.xlu0 %7168
  %7170 = vrot.lane.b32.xlu0 %v5230, 64
  %v7171 = vpop.permute.xlu0 %7170
  %7172 = vrot.lane.b32.xlu0 %v5231, 64
  %v7173 = vpop.permute.xlu0 %7172
  %7174 = vrot.lane.b32.xlu0 %v5232, 64
  %v7175 = vpop.permute.xlu0 %7174
  %7176 = vrot.lane.b32.xlu0 %v5233, 64
  %v7177 = vpop.permute.xlu0 %7176
  %7178 = vrot.lane.b32.xlu0 %v5234, 64
  %v7179 = vpop.permute.xlu0 %7178
  %7180 = vrot.lane.b32.xlu0 %v5235, 64
  %v7181 = vpop.permute.xlu0 %7180
  %7182 = vrot.lane.b32.xlu0 %v5236, 64
  %v7183 = vpop.permute.xlu0 %7182
  %7184 = vrot.lane.b32.xlu0 %v5237, 64
  %v7185 = vpop.permute.xlu0 %7184
  %7186 = vrot.lane.b32.xlu0 %v5238, 64
  %v7187 = vpop.permute.xlu0 %7186
  %7188 = vrot.lane.b32.xlu0 %v5239, 64
  %v7189 = vpop.permute.xlu0 %7188
  %7190 = vrot.lane.b32.xlu0 %v5240, 64
  %v7191 = vpop.permute.xlu0 %7190
  %7192 = vrot.lane.b32.xlu0 %v5241, 64
  %v7193 = vpop.permute.xlu0 %7192
  %7194 = vrot.lane.b32.xlu0 %v5242, 64
  %v7195 = vpop.permute.xlu0 %7194
  %7196 = vrot.lane.b32.xlu0 %v5243, 64
  %v7197 = vpop.permute.xlu0 %7196
  %7198 = vrot.lane.b32.xlu0 %v5244, 64
  %v7199 = vpop.permute.xlu0 %7198
  %7200 = vrot.lane.b32.xlu0 %v5245, 64
  %v7201 = vpop.permute.xlu0 %7200
  %7202 = vrot.lane.b32.xlu0 %v5246, 64
  %v7203 = vpop.permute.xlu0 %7202
  %7204 = vrot.lane.b32.xlu0 %v5247, 64
  %v7205 = vpop.permute.xlu0 %7204
  %7206 = vrot.lane.b32.xlu0 %v5248, 64
  %v7207 = vpop.permute.xlu0 %7206
  %7208 = vrot.lane.b32.xlu0 %v5249, 64
  %v7209 = vpop.permute.xlu0 %7208
  %7210 = vrot.lane.b32.xlu0 %v5250, 64
  %v7211 = vpop.permute.xlu0 %7210
  %7212 = vrot.lane.b32.xlu0 %v5251, 64
  %v7213 = vpop.permute.xlu0 %7212
  %7214 = vrot.lane.b32.xlu0 %v5252, 64
  %v7215 = vpop.permute.xlu0 %7214
  %7216 = vrot.lane.b32.xlu0 %v5253, 64
  %v7217 = vpop.permute.xlu0 %7216
  %7218 = vrot.lane.b32.xlu0 %v5254, 64
  %v7219 = vpop.permute.xlu0 %7218
  %7220 = vrot.lane.b32.xlu0 %v5255, 64
  %v7221 = vpop.permute.xlu0 %7220
  %7222 = vrot.lane.b32.xlu0 %v5256, 64
  %v7223 = vpop.permute.xlu0 %7222
  %7224 = vrot.lane.b32.xlu0 %v5257, 64
  %v7225 = vpop.permute.xlu0 %7224
  %7226 = vrot.lane.b32.xlu0 %v5258, 64
  %v7227 = vpop.permute.xlu0 %7226
  %7228 = vrot.lane.b32.xlu0 %v5259, 64
  %v7229 = vpop.permute.xlu0 %7228
  %7230 = vrot.lane.b32.xlu0 %v5260, 64
  %v7231 = vpop.permute.xlu0 %7230
  %7232 = vrot.lane.b32.xlu0 %v5261, 64
  %v7233 = vpop.permute.xlu0 %7232
  %7234 = vrot.lane.b32.xlu0 %v5262, 64
  %v7235 = vpop.permute.xlu0 %7234
  %7236 = vrot.lane.b32.xlu0 %v5263, 64
  %v7237 = vpop.permute.xlu0 %7236
  %7238 = vrot.lane.b32.xlu0 %v5264, 64
  %v7239 = vpop.permute.xlu0 %7238
  %7240 = vrot.lane.b32.xlu0 %v5265, 64
  %v7241 = vpop.permute.xlu0 %7240
  %7242 = vrot.lane.b32.xlu0 %v5266, 64
  %v7243 = vpop.permute.xlu0 %7242
  %7244 = vrot.lane.b32.xlu0 %v5267, 64
  %v7245 = vpop.permute.xlu0 %7244
  %7246 = vrot.lane.b32.xlu0 %v5268, 64
  %v7247 = vpop.permute.xlu0 %7246
  %7248 = vrot.lane.b32.xlu0 %v5269, 64
  %v7249 = vpop.permute.xlu0 %7248
  %7250 = vrot.lane.b32.xlu0 %v5270, 64
  %v7251 = vpop.permute.xlu0 %7250
  %7252 = vrot.lane.b32.xlu0 %v5271, 64
  %v7253 = vpop.permute.xlu0 %7252
  %7254 = vrot.lane.b32.xlu0 %v5272, 64
  %v7255 = vpop.permute.xlu0 %7254
  %7256 = vrot.lane.b32.xlu0 %v5273, 64
  %v7257 = vpop.permute.xlu0 %7256
  %v7322 = vsel %vm2955, %v4697, %v5339
  %v7323 = vsel %vm2955, %v4698, %v5341
  %v7324 = vsel %vm2955, %v4699, %v5343
  %v7325 = vsel %vm2955, %v4700, %v5345
  %v7326 = vsel %vm2955, %v4701, %v5347
  %v7327 = vsel %vm2955, %v4702, %v5349
  %v7328 = vsel %vm2955, %v4703, %v5351
  %v7329 = vsel %vm2955, %v4704, %v5353
  %v7330 = vsel %vm2955, %v4705, %v5355
  %v7331 = vsel %vm2955, %v4706, %v5357
  %v7332 = vsel %vm2955, %v4707, %v5359
  %v7333 = vsel %vm2955, %v4708, %v5361
  %v7334 = vsel %vm2955, %v4709, %v5363
  %v7335 = vsel %vm2955, %v4710, %v5365
  %v7336 = vsel %vm2955, %v4711, %v5367
  %v7337 = vsel %vm2955, %v4712, %v5369
  %v7338 = vsel %vm2955, %v4713, %v5371
  %v7339 = vsel %vm2955, %v4714, %v5373
  %v7340 = vsel %vm2955, %v4715, %v5375
  %v7341 = vsel %vm2955, %v4716, %v5377
  %v7342 = vsel %vm2955, %v4717, %v5379
  %v7343 = vsel %vm2955, %v4718, %v5381
  %v7344 = vsel %vm2955, %v4719, %v5383
  %v7345 = vsel %vm2955, %v4720, %v5385
  %v7346 = vsel %vm2955, %v4721, %v5387
  %v7347 = vsel %vm2955, %v4722, %v5389
  %v7348 = vsel %vm2955, %v4723, %v5391
  %v7349 = vsel %vm2955, %v4724, %v5393
  %v7350 = vsel %vm2955, %v4725, %v5395
  %v7351 = vsel %vm2955, %v4726, %v5397
  %v7352 = vsel %vm2955, %v4727, %v5399
  %v7353 = vsel %vm2955, %v4728, %v5401
  %v7354 = vsel %vm2955, %v4729, %v5403
  %v7355 = vsel %vm2955, %v4730, %v5405
  %v7356 = vsel %vm2955, %v4731, %v5407
  %v7357 = vsel %vm2955, %v4732, %v5409
  %v7358 = vsel %vm2955, %v4733, %v5411
  %v7359 = vsel %vm2955, %v4734, %v5413
  %v7360 = vsel %vm2955, %v4735, %v5415
  %v7361 = vsel %vm2955, %v4736, %v5417
  %v7362 = vsel %vm2955, %v4737, %v5419
  %v7363 = vsel %vm2955, %v4738, %v5421
  %v7364 = vsel %vm2955, %v4739, %v5423
  %v7365 = vsel %vm2955, %v4740, %v5425
  %v7366 = vsel %vm2955, %v4741, %v5427
  %v7367 = vsel %vm2955, %v4742, %v5429
  %v7368 = vsel %vm2955, %v4743, %v5431
  %v7369 = vsel %vm2955, %v4744, %v5433
  %v7370 = vsel %vm2955, %v4745, %v5435
  %v7371 = vsel %vm2955, %v4746, %v5437
  %v7372 = vsel %vm2955, %v4747, %v5439
  %v7373 = vsel %vm2955, %v4748, %v5441
  %v7374 = vsel %vm2955, %v4749, %v5443
  %v7375 = vsel %vm2955, %v4750, %v5445
  %v7376 = vsel %vm2955, %v4751, %v5447
  %v7377 = vsel %vm2955, %v4752, %v5449
  %v7378 = vsel %vm2955, %v4753, %v5451
  %v7379 = vsel %vm2955, %v4754, %v5453
  %v7380 = vsel %vm2955, %v4755, %v5455
  %v7381 = vsel %vm2955, %v4756, %v5457
  %v7382 = vsel %vm2955, %v4757, %v5459
  %v7383 = vsel %vm2955, %v4758, %v5461
  %v7384 = vsel %vm2955, %v4759, %v5463
  %v7385 = vsel %vm2955, %v4760, %v5465
  %v7386 = vsel %vm3085, %v7322, %v5595
  %v7387 = vsel %vm3085, %v7323, %v5597
  %v7388 = vsel %vm3085, %v7324, %v5599
  %v7389 = vsel %vm3085, %v7325, %v5601
  %v7390 = vsel %vm3085, %v7326, %v5603
  %v7391 = vsel %vm3085, %v7327, %v5605
  %v7392 = vsel %vm3085, %v7328, %v5607
  %v7393 = vsel %vm3085, %v7329, %v5609
  %v7394 = vsel %vm3085, %v7330, %v5611
  %v7395 = vsel %vm3085, %v7331, %v5613
  %v7396 = vsel %vm3085, %v7332, %v5615
  %v7397 = vsel %vm3085, %v7333, %v5617
  %v7398 = vsel %vm3085, %v7334, %v5619
  %v7399 = vsel %vm3085, %v7335, %v5621
  %v7400 = vsel %vm3085, %v7336, %v5623
  %v7401 = vsel %vm3085, %v7337, %v5625
  %v7402 = vsel %vm3085, %v7338, %v5627
  %v7403 = vsel %vm3085, %v7339, %v5629
  %v7404 = vsel %vm3085, %v7340, %v5631
  %v7405 = vsel %vm3085, %v7341, %v5633
  %v7406 = vsel %vm3085, %v7342, %v5635
  %v7407 = vsel %vm3085, %v7343, %v5637
  %v7408 = vsel %vm3085, %v7344, %v5639
  %v7409 = vsel %vm3085, %v7345, %v5641
  %v7410 = vsel %vm3085, %v7346, %v5643
  %v7411 = vsel %vm3085, %v7347, %v5645
  %v7412 = vsel %vm3085, %v7348, %v5647
  %v7413 = vsel %vm3085, %v7349, %v5649
  %v7414 = vsel %vm3085, %v7350, %v5651
  %v7415 = vsel %vm3085, %v7351, %v5653
  %v7416 = vsel %vm3085, %v7352, %v5655
  %v7417 = vsel %vm3085, %v7353, %v5657
  %v7418 = vsel %vm3085, %v7354, %v5659
  %v7419 = vsel %vm3085, %v7355, %v5661
  %v7420 = vsel %vm3085, %v7356, %v5663
  %v7421 = vsel %vm3085, %v7357, %v5665
  %v7422 = vsel %vm3085, %v7358, %v5667
  %v7423 = vsel %vm3085, %v7359, %v5669
  %v7424 = vsel %vm3085, %v7360, %v5671
  %v7425 = vsel %vm3085, %v7361, %v5673
  %v7426 = vsel %vm3085, %v7362, %v5675
  %v7427 = vsel %vm3085, %v7363, %v5677
  %v7428 = vsel %vm3085, %v7364, %v5679
  %v7429 = vsel %vm3085, %v7365, %v5681
  %v7430 = vsel %vm3085, %v7366, %v5683
  %v7431 = vsel %vm3085, %v7367, %v5685
  %v7432 = vsel %vm3085, %v7368, %v5687
  %v7433 = vsel %vm3085, %v7369, %v5689
  %v7434 = vsel %vm3085, %v7370, %v5691
  %v7435 = vsel %vm3085, %v7371, %v5693
  %v7436 = vsel %vm3085, %v7372, %v5695
  %v7437 = vsel %vm3085, %v7373, %v5697
  %v7438 = vsel %vm3085, %v7374, %v5699
  %v7439 = vsel %vm3085, %v7375, %v5701
  %v7440 = vsel %vm3085, %v7376, %v5703
  %v7441 = vsel %vm3085, %v7377, %v5705
  %v7442 = vsel %vm3085, %v7378, %v5707
  %v7443 = vsel %vm3085, %v7379, %v5709
  %v7444 = vsel %vm3085, %v7380, %v5711
  %v7445 = vsel %vm3085, %v7381, %v5713
  %v7446 = vsel %vm3085, %v7382, %v5715
  %v7447 = vsel %vm3085, %v7383, %v5717
  %v7448 = vsel %vm3085, %v7384, %v5719
  %v7449 = vsel %vm3085, %v7385, %v5721
  %v7450 = vsel %vm3215, %v7386, %v5851
  %v7451 = vsel %vm3215, %v7387, %v5853
  %v7452 = vsel %vm3215, %v7388, %v5855
  %v7453 = vsel %vm3215, %v7389, %v5857
  %v7454 = vsel %vm3215, %v7390, %v5859
  %v7455 = vsel %vm3215, %v7391, %v5861
  %v7456 = vsel %vm3215, %v7392, %v5863
  %v7457 = vsel %vm3215, %v7393, %v5865
  %v7458 = vsel %vm3215, %v7394, %v5867
  %v7459 = vsel %vm3215, %v7395, %v5869
  %v7460 = vsel %vm3215, %v7396, %v5871
  %v7461 = vsel %vm3215, %v7397, %v5873
  %v7462 = vsel %vm3215, %v7398, %v5875
  %v7463 = vsel %vm3215, %v7399, %v5877
  %v7464 = vsel %vm3215, %v7400, %v5879
  %v7465 = vsel %vm3215, %v7401, %v5881
  %v7466 = vsel %vm3215, %v7402, %v5883
  %v7467 = vsel %vm3215, %v7403, %v5885
  %v7468 = vsel %vm3215, %v7404, %v5887
  %v7469 = vsel %vm3215, %v7405, %v5889
  %v7470 = vsel %vm3215, %v7406, %v5891
  %v7471 = vsel %vm3215, %v7407, %v5893
  %v7472 = vsel %vm3215, %v7408, %v5895
  %v7473 = vsel %vm3215, %v7409, %v5897
  %v7474 = vsel %vm3215, %v7410, %v5899
  %v7475 = vsel %vm3215, %v7411, %v5901
  %v7476 = vsel %vm3215, %v7412, %v5903
  %v7477 = vsel %vm3215, %v7413, %v5905
  %v7478 = vsel %vm3215, %v7414, %v5907
  %v7479 = vsel %vm3215, %v7415, %v5909
  %v7480 = vsel %vm3215, %v7416, %v5911
  %v7481 = vsel %vm3215, %v7417, %v5913
  %v7482 = vsel %vm3215, %v7418, %v5915
  %v7483 = vsel %vm3215, %v7419, %v5917
  %v7484 = vsel %vm3215, %v7420, %v5919
  %v7485 = vsel %vm3215, %v7421, %v5921
  %v7486 = vsel %vm3215, %v7422, %v5923
  %v7487 = vsel %vm3215, %v7423, %v5925
  %v7488 = vsel %vm3215, %v7424, %v5927
  %v7489 = vsel %vm3215, %v7425, %v5929
  %v7490 = vsel %vm3215, %v7426, %v5931
  %v7491 = vsel %vm3215, %v7427, %v5933
  %v7492 = vsel %vm3215, %v7428, %v5935
  %v7493 = vsel %vm3215, %v7429, %v5937
  %v7494 = vsel %vm3215, %v7430, %v5939
  %v7495 = vsel %vm3215, %v7431, %v5941
  %v7496 = vsel %vm3215, %v7432, %v5943
  %v7497 = vsel %vm3215, %v7433, %v5945
  %v7498 = vsel %vm3215, %v7434, %v5947
  %v7499 = vsel %vm3215, %v7435, %v5949
  %v7500 = vsel %vm3215, %v7436, %v5951
  %v7501 = vsel %vm3215, %v7437, %v5953
  %v7502 = vsel %vm3215, %v7438, %v5955
  %v7503 = vsel %vm3215, %v7439, %v5957
  %v7504 = vsel %vm3215, %v7440, %v5959
  %v7505 = vsel %vm3215, %v7441, %v5961
  %v7506 = vsel %vm3215, %v7442, %v5963
  %v7507 = vsel %vm3215, %v7443, %v5965
  %v7508 = vsel %vm3215, %v7444, %v5967
  %v7509 = vsel %vm3215, %v7445, %v5969
  %v7510 = vsel %vm3215, %v7446, %v5971
  %v7511 = vsel %vm3215, %v7447, %v5973
  %v7512 = vsel %vm3215, %v7448, %v5975
  %v7513 = vsel %vm3215, %v7449, %v5977
  %v7514 = vsel %vm3345, %v7450, %v6107
  %v7515 = vsel %vm3345, %v7451, %v6109
  %v7516 = vsel %vm3345, %v7452, %v6111
  %v7517 = vsel %vm3345, %v7453, %v6113
  %v7518 = vsel %vm3345, %v7454, %v6115
  %v7519 = vsel %vm3345, %v7455, %v6117
  %v7520 = vsel %vm3345, %v7456, %v6119
  %v7521 = vsel %vm3345, %v7457, %v6121
  %v7522 = vsel %vm3345, %v7458, %v6123
  %v7523 = vsel %vm3345, %v7459, %v6125
  %v7524 = vsel %vm3345, %v7460, %v6127
  %v7525 = vsel %vm3345, %v7461, %v6129
  %v7526 = vsel %vm3345, %v7462, %v6131
  %v7527 = vsel %vm3345, %v7463, %v6133
  %v7528 = vsel %vm3345, %v7464, %v6135
  %v7529 = vsel %vm3345, %v7465, %v6137
  %v7530 = vsel %vm3345, %v7466, %v6139
  %v7531 = vsel %vm3345, %v7467, %v6141
  %v7532 = vsel %vm3345, %v7468, %v6143
  %v7533 = vsel %vm3345, %v7469, %v6145
  %v7534 = vsel %vm3345, %v7470, %v6147
  %v7535 = vsel %vm3345, %v7471, %v6149
  %v7536 = vsel %vm3345, %v7472, %v6151
  %v7537 = vsel %vm3345, %v7473, %v6153
  %v7538 = vsel %vm3345, %v7474, %v6155
  %v7539 = vsel %vm3345, %v7475, %v6157
  %v7540 = vsel %vm3345, %v7476, %v6159
  %v7541 = vsel %vm3345, %v7477, %v6161
  %v7542 = vsel %vm3345, %v7478, %v6163
  %v7543 = vsel %vm3345, %v7479, %v6165
  %v7544 = vsel %vm3345, %v7480, %v6167
  %v7545 = vsel %vm3345, %v7481, %v6169
  %v7546 = vsel %vm3345, %v7482, %v6171
  %v7547 = vsel %vm3345, %v7483, %v6173
  %v7548 = vsel %vm3345, %v7484, %v6175
  %v7549 = vsel %vm3345, %v7485, %v6177
  %v7550 = vsel %vm3345, %v7486, %v6179
  %v7551 = vsel %vm3345, %v7487, %v6181
  %v7552 = vsel %vm3345, %v7488, %v6183
  %v7553 = vsel %vm3345, %v7489, %v6185
  %v7554 = vsel %vm3345, %v7490, %v6187
  %v7555 = vsel %vm3345, %v7491, %v6189
  %v7556 = vsel %vm3345, %v7492, %v6191
  %v7557 = vsel %vm3345, %v7493, %v6193
  %v7558 = vsel %vm3345, %v7494, %v6195
  %v7559 = vsel %vm3345, %v7495, %v6197
  %v7560 = vsel %vm3345, %v7496, %v6199
  %v7561 = vsel %vm3345, %v7497, %v6201
  %v7562 = vsel %vm3345, %v7498, %v6203
  %v7563 = vsel %vm3345, %v7499, %v6205
  %v7564 = vsel %vm3345, %v7500, %v6207
  %v7565 = vsel %vm3345, %v7501, %v6209
  %v7566 = vsel %vm3345, %v7502, %v6211
  %v7567 = vsel %vm3345, %v7503, %v6213
  %v7568 = vsel %vm3345, %v7504, %v6215
  %v7569 = vsel %vm3345, %v7505, %v6217
  %v7570 = vsel %vm3345, %v7506, %v6219
  %v7571 = vsel %vm3345, %v7507, %v6221
  %v7572 = vsel %vm3345, %v7508, %v6223
  %v7573 = vsel %vm3345, %v7509, %v6225
  %v7574 = vsel %vm3345, %v7510, %v6227
  %v7575 = vsel %vm3345, %v7511, %v6229
  %v7576 = vsel %vm3345, %v7512, %v6231
  %v7577 = vsel %vm3345, %v7513, %v6233
  %vm7578 = vcmask 326656
  %v7579 = vsel %vm7578, %v7514, %v6363
  %v7580 = vsel %vm7578, %v7515, %v6365
  %v7581 = vsel %vm7578, %v7516, %v6367
  %v7582 = vsel %vm7578, %v7517, %v6369
  %v7583 = vsel %vm7578, %v7518, %v6371
  %v7584 = vsel %vm7578, %v7519, %v6373
  %v7585 = vsel %vm7578, %v7520, %v6375
  %v7586 = vsel %vm7578, %v7521, %v6377
  %v7587 = vsel %vm7578, %v7522, %v6379
  %v7588 = vsel %vm7578, %v7523, %v6381
  %v7589 = vsel %vm7578, %v7524, %v6383
  %v7590 = vsel %vm7578, %v7525, %v6385
  %v7591 = vsel %vm7578, %v7526, %v6387
  %v7592 = vsel %vm7578, %v7527, %v6389
  %v7593 = vsel %vm7578, %v7528, %v6391
  %v7594 = vsel %vm7578, %v7529, %v6393
  %v7595 = vsel %vm7578, %v7530, %v6395
  %v7596 = vsel %vm7578, %v7531, %v6397
  %v7597 = vsel %vm7578, %v7532, %v6399
  %v7598 = vsel %vm7578, %v7533, %v6401
  %v7599 = vsel %vm7578, %v7534, %v6403
  %v7600 = vsel %vm7578, %v7535, %v6405
  %v7601 = vsel %vm7578, %v7536, %v6407
  %v7602 = vsel %vm7578, %v7537, %v6409
  %v7603 = vsel %vm7578, %v7538, %v6411
  %v7604 = vsel %vm7578, %v7539, %v6413
  %v7605 = vsel %vm7578, %v7540, %v6415
  %v7606 = vsel %vm7578, %v7541, %v6417
  %v7607 = vsel %vm7578, %v7542, %v6419
  %v7608 = vsel %vm7578, %v7543, %v6421
  %v7609 = vsel %vm7578, %v7544, %v6423
  %v7610 = vsel %vm7578, %v7545, %v6425
  %v7611 = vsel %vm7578, %v7546, %v6427
  %v7612 = vsel %vm7578, %v7547, %v6429
  %v7613 = vsel %vm7578, %v7548, %v6431
  %v7614 = vsel %vm7578, %v7549, %v6433
  %v7615 = vsel %vm7578, %v7550, %v6435
  %v7616 = vsel %vm7578, %v7551, %v6437
  %v7617 = vsel %vm7578, %v7552, %v6439
  %v7618 = vsel %vm7578, %v7553, %v6441
  %v7619 = vsel %vm7578, %v7554, %v6443
  %v7620 = vsel %vm7578, %v7555, %v6445
  %v7621 = vsel %vm7578, %v7556, %v6447
  %v7622 = vsel %vm7578, %v7557, %v6449
  %v7623 = vsel %vm7578, %v7558, %v6451
  %v7624 = vsel %vm7578, %v7559, %v6453
  %v7625 = vsel %vm7578, %v7560, %v6455
  %v7626 = vsel %vm7578, %v7561, %v6457
  %v7627 = vsel %vm7578, %v7562, %v6459
  %v7628 = vsel %vm7578, %v7563, %v6461
  %v7629 = vsel %vm7578, %v7564, %v6463
  %v7630 = vsel %vm7578, %v7565, %v6465
  %v7631 = vsel %vm7578, %v7566, %v6467
  %v7632 = vsel %vm7578, %v7567, %v6469
  %v7633 = vsel %vm7578, %v7568, %v6471
  %v7634 = vsel %vm7578, %v7569, %v6473
  %v7635 = vsel %vm7578, %v7570, %v6475
  %v7636 = vsel %vm7578, %v7571, %v6477
  %v7637 = vsel %vm7578, %v7572, %v6479
  %v7638 = vsel %vm7578, %v7573, %v6481
  %v7639 = vsel %vm7578, %v7574, %v6483
  %v7640 = vsel %vm7578, %v7575, %v6485
  %v7641 = vsel %vm7578, %v7576, %v6487
  %v7642 = vsel %vm7578, %v7577, %v6489
  %vm7643 = vcmask 392192
  %v7644 = vsel %vm7643, %v7579, %v6619
  %v7645 = vsel %vm7643, %v7580, %v6621
  %v7646 = vsel %vm7643, %v7581, %v6623
  %v7647 = vsel %vm7643, %v7582, %v6625
  %v7648 = vsel %vm7643, %v7583, %v6627
  %v7649 = vsel %vm7643, %v7584, %v6629
  %v7650 = vsel %vm7643, %v7585, %v6631
  %v7651 = vsel %vm7643, %v7586, %v6633
  %v7652 = vsel %vm7643, %v7587, %v6635
  %v7653 = vsel %vm7643, %v7588, %v6637
  %v7654 = vsel %vm7643, %v7589, %v6639
  %v7655 = vsel %vm7643, %v7590, %v6641
  %v7656 = vsel %vm7643, %v7591, %v6643
  %v7657 = vsel %vm7643, %v7592, %v6645
  %v7658 = vsel %vm7643, %v7593, %v6647
  %v7659 = vsel %vm7643, %v7594, %v6649
  %v7660 = vsel %vm7643, %v7595, %v6651
  %v7661 = vsel %vm7643, %v7596, %v6653
  %v7662 = vsel %vm7643, %v7597, %v6655
  %v7663 = vsel %vm7643, %v7598, %v6657
  %v7664 = vsel %vm7643, %v7599, %v6659
  %v7665 = vsel %vm7643, %v7600, %v6661
  %v7666 = vsel %vm7643, %v7601, %v6663
  %v7667 = vsel %vm7643, %v7602, %v6665
  %v7668 = vsel %vm7643, %v7603, %v6667
  %v7669 = vsel %vm7643, %v7604, %v6669
  %v7670 = vsel %vm7643, %v7605, %v6671
  %v7671 = vsel %vm7643, %v7606, %v6673
  %v7672 = vsel %vm7643, %v7607, %v6675
  %v7673 = vsel %vm7643, %v7608, %v6677
  %v7674 = vsel %vm7643, %v7609, %v6679
  %v7675 = vsel %vm7643, %v7610, %v6681
  %v7676 = vsel %vm7643, %v7611, %v6683
  %v7677 = vsel %vm7643, %v7612, %v6685
  %v7678 = vsel %vm7643, %v7613, %v6687
  %v7679 = vsel %vm7643, %v7614, %v6689
  %v7680 = vsel %vm7643, %v7615, %v6691
  %v7681 = vsel %vm7643, %v7616, %v6693
  %v7682 = vsel %vm7643, %v7617, %v6695
  %v7683 = vsel %vm7643, %v7618, %v6697
  %v7684 = vsel %vm7643, %v7619, %v6699
  %v7685 = vsel %vm7643, %v7620, %v6701
  %v7686 = vsel %vm7643, %v7621, %v6703
  %v7687 = vsel %vm7643, %v7622, %v6705
  %v7688 = vsel %vm7643, %v7623, %v6707
  %v7689 = vsel %vm7643, %v7624, %v6709
  %v7690 = vsel %vm7643, %v7625, %v6711
  %v7691 = vsel %vm7643, %v7626, %v6713
  %v7692 = vsel %vm7643, %v7627, %v6715
  %v7693 = vsel %vm7643, %v7628, %v6717
  %v7694 = vsel %vm7643, %v7629, %v6719
  %v7695 = vsel %vm7643, %v7630, %v6721
  %v7696 = vsel %vm7643, %v7631, %v6723
  %v7697 = vsel %vm7643, %v7632, %v6725
  %v7698 = vsel %vm7643, %v7633, %v6727
  %v7699 = vsel %vm7643, %v7634, %v6729
  %v7700 = vsel %vm7643, %v7635, %v6731
  %v7701 = vsel %vm7643, %v7636, %v6733
  %v7702 = vsel %vm7643, %v7637, %v6735
  %v7703 = vsel %vm7643, %v7638, %v6737
  %v7704 = vsel %vm7643, %v7639, %v6739
  %v7705 = vsel %vm7643, %v7640, %v6741
  %v7706 = vsel %vm7643, %v7641, %v6743
  %v7707 = vsel %vm7643, %v7642, %v6745
  %vm7708 = vcmask 457728
  %v7709 = vsel %vm7708, %v7644, %v6875
  %v7710 = vsel %vm7708, %v7645, %v6877
  %v7711 = vsel %vm7708, %v7646, %v6879
  %v7712 = vsel %vm7708, %v7647, %v6881
  %v7713 = vsel %vm7708, %v7648, %v6883
  %v7714 = vsel %vm7708, %v7649, %v6885
  %v7715 = vsel %vm7708, %v7650, %v6887
  %v7716 = vsel %vm7708, %v7651, %v6889
  %v7717 = vsel %vm7708, %v7652, %v6891
  %v7718 = vsel %vm7708, %v7653, %v6893
  %v7719 = vsel %vm7708, %v7654, %v6895
  %v7720 = vsel %vm7708, %v7655, %v6897
  %v7721 = vsel %vm7708, %v7656, %v6899
  %v7722 = vsel %vm7708, %v7657, %v6901
  %v7723 = vsel %vm7708, %v7658, %v6903
  %v7724 = vsel %vm7708, %v7659, %v6905
  %v7725 = vsel %vm7708, %v7660, %v6907
  %v7726 = vsel %vm7708, %v7661, %v6909
  %v7727 = vsel %vm7708, %v7662, %v6911
  %v7728 = vsel %vm7708, %v7663, %v6913
  %v7729 = vsel %vm7708, %v7664, %v6915
  %v7730 = vsel %vm7708, %v7665, %v6917
  %v7731 = vsel %vm7708, %v7666, %v6919
  %v7732 = vsel %vm7708, %v7667, %v6921
  %v7733 = vsel %vm7708, %v7668, %v6923
  %v7734 = vsel %vm7708, %v7669, %v6925
  %v7735 = vsel %vm7708, %v7670, %v6927
  %v7736 = vsel %vm7708, %v7671, %v6929
  %v7737 = vsel %vm7708, %v7672, %v6931
  %v7738 = vsel %vm7708, %v7673, %v6933
  %v7739 = vsel %vm7708, %v7674, %v6935
  %v7740 = vsel %vm7708, %v7675, %v6937
  %v7741 = vsel %vm7708, %v7676, %v6939
  %v7742 = vsel %vm7708, %v7677, %v6941
  %v7743 = vsel %vm7708, %v7678, %v6943
  %v7744 = vsel %vm7708, %v7679, %v6945
  %v7745 = vsel %vm7708, %v7680, %v6947
  %v7746 = vsel %vm7708, %v7681, %v6949
  %v7747 = vsel %vm7708, %v7682, %v6951
  %v7748 = vsel %vm7708, %v7683, %v6953
  %v7749 = vsel %vm7708, %v7684, %v6955
  %v7750 = vsel %vm7708, %v7685, %v6957
  %v7751 = vsel %vm7708, %v7686, %v6959
  %v7752 = vsel %vm7708, %v7687, %v6961
  %v7753 = vsel %vm7708, %v7688, %v6963
  %v7754 = vsel %vm7708, %v7689, %v6965
  %v7755 = vsel %vm7708, %v7690, %v6967
  %v7756 = vsel %vm7708, %v7691, %v6969
  %v7757 = vsel %vm7708, %v7692, %v6971
  %v7758 = vsel %vm7708, %v7693, %v6973
  %v7759 = vsel %vm7708, %v7694, %v6975
  %v7760 = vsel %vm7708, %v7695, %v6977
  %v7761 = vsel %vm7708, %v7696, %v6979
  %v7762 = vsel %vm7708, %v7697, %v6981
  %v7763 = vsel %vm7708, %v7698, %v6983
  %v7764 = vsel %vm7708, %v7699, %v6985
  %v7765 = vsel %vm7708, %v7700, %v6987
  %v7766 = vsel %vm7708, %v7701, %v6989
  %v7767 = vsel %vm7708, %v7702, %v6991
  %v7768 = vsel %vm7708, %v7703, %v6993
  %v7769 = vsel %vm7708, %v7704, %v6995
  %v7770 = vsel %vm7708, %v7705, %v6997
  %v7771 = vsel %vm7708, %v7706, %v6999
  %v7772 = vsel %vm7708, %v7707, %v7001
  %vm7773 = vcmask 523264
  %v7774 = vsel %vm7773, %v7709, %v7131
  %v7775 = vsel %vm7773, %v7710, %v7133
  %v7776 = vsel %vm7773, %v7711, %v7135
  %v7777 = vsel %vm7773, %v7712, %v7137
  %v7778 = vsel %vm7773, %v7713, %v7139
  %v7779 = vsel %vm7773, %v7714, %v7141
  %v7780 = vsel %vm7773, %v7715, %v7143
  %v7781 = vsel %vm7773, %v7716, %v7145
  %v7782 = vsel %vm7773, %v7717, %v7147
  %v7783 = vsel %vm7773, %v7718, %v7149
  %v7784 = vsel %vm7773, %v7719, %v7151
  %v7785 = vsel %vm7773, %v7720, %v7153
  %v7786 = vsel %vm7773, %v7721, %v7155
  %v7787 = vsel %vm7773, %v7722, %v7157
  %v7788 = vsel %vm7773, %v7723, %v7159
  %v7789 = vsel %vm7773, %v7724, %v7161
  %v7790 = vsel %vm7773, %v7725, %v7163
  %v7791 = vsel %vm7773, %v7726, %v7165
  %v7792 = vsel %vm7773, %v7727, %v7167
  %v7793 = vsel %vm7773, %v7728, %v7169
  %v7794 = vsel %vm7773, %v7729, %v7171
  %v7795 = vsel %vm7773, %v7730, %v7173
  %v7796 = vsel %vm7773, %v7731, %v7175
  %v7797 = vsel %vm7773, %v7732, %v7177
  %v7798 = vsel %vm7773, %v7733, %v7179
  %v7799 = vsel %vm7773, %v7734, %v7181
  %v7800 = vsel %vm7773, %v7735, %v7183
  %v7801 = vsel %vm7773, %v7736, %v7185
  %v7802 = vsel %vm7773, %v7737, %v7187
  %v7803 = vsel %vm7773, %v7738, %v7189
  %v7804 = vsel %vm7773, %v7739, %v7191
  %v7805 = vsel %vm7773, %v7740, %v7193
  %v7806 = vsel %vm7773, %v7741, %v7195
  %v7807 = vsel %vm7773, %v7742, %v7197
  %v7808 = vsel %vm7773, %v7743, %v7199
  %v7809 = vsel %vm7773, %v7744, %v7201
  %v7810 = vsel %vm7773, %v7745, %v7203
  %v7811 = vsel %vm7773, %v7746, %v7205
  %v7812 = vsel %vm7773, %v7747, %v7207
  %v7813 = vsel %vm7773, %v7748, %v7209
  %v7814 = vsel %vm7773, %v7749, %v7211
  %v7815 = vsel %vm7773, %v7750, %v7213
  %v7816 = vsel %vm7773, %v7751, %v7215
  %v7817 = vsel %vm7773, %v7752, %v7217
  %v7818 = vsel %vm7773, %v7753, %v7219
  %v7819 = vsel %vm7773, %v7754, %v7221
  %v7820 = vsel %vm7773, %v7755, %v7223
  %v7821 = vsel %vm7773, %v7756, %v7225
  %v7822 = vsel %vm7773, %v7757, %v7227
  %v7823 = vsel %vm7773, %v7758, %v7229
  %v7824 = vsel %vm7773, %v7759, %v7231
  %v7825 = vsel %vm7773, %v7760, %v7233
  %v7826 = vsel %vm7773, %v7761, %v7235
  %v7827 = vsel %vm7773, %v7762, %v7237
  %v7828 = vsel %vm7773, %v7763, %v7239
  %v7829 = vsel %vm7773, %v7764, %v7241
  %v7830 = vsel %vm7773, %v7765, %v7243
  %v7831 = vsel %vm7773, %v7766, %v7245
  %v7832 = vsel %vm7773, %v7767, %v7247
  %v7833 = vsel %vm7773, %v7768, %v7249
  %v7834 = vsel %vm7773, %v7769, %v7251
  %v7835 = vsel %vm7773, %v7770, %v7253
  %v7836 = vsel %vm7773, %v7771, %v7255
  %v7837 = vsel %vm7773, %v7772, %v7257
  %v7838 = vpack.c.bf16 %v7775, %v7774
  %v7839 = vpack.c.bf16 %v7777, %v7776
  %v7840 = vpack.c.bf16 %v7779, %v7778
  %v7841 = vpack.c.bf16 %v7781, %v7780
  %v7842 = vpack.c.bf16 %v7783, %v7782
  %v7843 = vpack.c.bf16 %v7785, %v7784
  %v7844 = vpack.c.bf16 %v7787, %v7786
  %v7845 = vpack.c.bf16 %v7789, %v7788
  %v7846 = vpack.c.bf16 %v7791, %v7790
  %v7847 = vpack.c.bf16 %v7793, %v7792
  %v7848 = vpack.c.bf16 %v7795, %v7794
  %v7849 = vpack.c.bf16 %v7797, %v7796
  %v7850 = vpack.c.bf16 %v7799, %v7798
  %v7851 = vpack.c.bf16 %v7801, %v7800
  %v7852 = vpack.c.bf16 %v7803, %v7802
  %v7853 = vpack.c.bf16 %v7805, %v7804
  %v7854 = vpack.c.bf16 %v7807, %v7806
  %v7855 = vpack.c.bf16 %v7809, %v7808
  %v7856 = vpack.c.bf16 %v7811, %v7810
  %v7857 = vpack.c.bf16 %v7813, %v7812
  %v7858 = vpack.c.bf16 %v7815, %v7814
  %v7859 = vpack.c.bf16 %v7817, %v7816
  %v7860 = vpack.c.bf16 %v7819, %v7818
  %v7861 = vpack.c.bf16 %v7821, %v7820
  %v7862 = vpack.c.bf16 %v7823, %v7822
  %v7863 = vpack.c.bf16 %v7825, %v7824
  %v7864 = vpack.c.bf16 %v7827, %v7826
  %v7865 = vpack.c.bf16 %v7829, %v7828
  %v7866 = vpack.c.bf16 %v7831, %v7830
  %v7867 = vpack.c.bf16 %v7833, %v7832
  %v7868 = vpack.c.bf16 %v7835, %v7834
  %v7869 = vpack.c.bf16 %v7837, %v7836
  %v7870 = vld [vmem:[%s4] sm:$0xf]
  %v7871 = vld [vmem:[%s4 + $0x4] sm:$0xf]
  %v7872 = vld [vmem:[%s4 + $0x8] sm:$0xf]
  %v7873 = vld [vmem:[%s4 + $0xc] sm:$0xf]
  %v7874 = vld [vmem:[%s4 + $0x10] sm:$0xf]
  %v7875 = vld [vmem:[%s4 + $0x14] sm:$0xf]
  %v7876 = vld [vmem:[%s4 + $0x18] sm:$0xf]
  %v7877 = vld [vmem:[%s4 + $0x1c] sm:$0xf]
  %v7878 = vld [vmem:[%s4 + $0x20] sm:$0xf]
  %v7888 = vunpack.c.l.b16 %v7870
  %v7889 = vunpack.c.l.b16 %v7871
  %v7890 = vunpack.c.l.b16 %v7872
  %v7891 = vunpack.c.l.b16 %v7873
  %v7892 = vunpack.c.l.b16 %v7874
  %v7893 = vunpack.c.l.b16 %v7875
  %v7894 = vunpack.c.l.b16 %v7876
  %v7895 = vunpack.c.l.b16 %v7877
  %v7896 = vunpack.c.l.b16 %v7878
  %v7897 = vpack.c.b16 %v7889, %v7888
  %v7898 = vpack.c.b16 %v7891, %v7890
  %v7899 = vpack.c.b16 %v7893, %v7892
  %v7900 = vpack.c.b16 %v7895, %v7894
  %v7901 = vpack.c.b16 %v7896, %v7896
  %vm7906 = vcmask 588800
  %v7908 = vsel %vm7906, %v7838, 0
  %v7911 = vsel %vm7906, %v7839, 0
  %v7914 = vsel %vm7906, %v7840, 0
  %v7917 = vsel %vm7906, %v7841, 0
  %v7920 = vsel %vm7906, %v7842, 0
  %v7923 = vsel %vm7906, %v7843, 0
  %v7926 = vsel %vm7906, %v7844, 0
  %v7929 = vsel %vm7906, %v7845, 0
  %v7932 = vsel %vm7906, %v7846, 0
  %v7935 = vsel %vm7906, %v7847, 0
  %v7938 = vsel %vm7906, %v7848, 0
  %v7941 = vsel %vm7906, %v7849, 0
  %v7944 = vsel %vm7906, %v7850, 0
  %v7947 = vsel %vm7906, %v7851, 0
  %v7950 = vsel %vm7906, %v7852, 0
  %v7953 = vsel %vm7906, %v7853, 0
  %v7956 = vsel %vm7906, %v7854, 0
  %v7959 = vsel %vm7906, %v7855, 0
  %v7962 = vsel %vm7906, %v7856, 0
  %v7965 = vsel %vm7906, %v7857, 0
  %v7968 = vsel %vm7906, %v7858, 0
  %v7971 = vsel %vm7906, %v7859, 0
  %v7974 = vsel %vm7906, %v7860, 0
  %v7977 = vsel %vm7906, %v7861, 0
  %v7980 = vsel %vm7906, %v7862, 0
  %v7983 = vsel %vm7906, %v7863, 0
  %v7986 = vsel %vm7906, %v7864, 0
  %v7989 = vsel %vm7906, %v7865, 0
  %v7992 = vsel %vm7906, %v7866, 0
  %v7995 = vsel %vm7906, %v7867, 0
  %v7998 = vsel %vm7906, %v7868, 0
  %v8001 = vsel %vm7906, %v7869, 0
  %vm8003 = vcmask 1043456
  %v8005 = vsel %vm8003, %v7901, 0
  %8007 = vmatprep.subr.bf16.mxu0 0
  %8008 = vmatpush1.bf16.msra.mxu0 %v7897
  %8009 = vmatprep.subr.bf16.mxu0 0
  %8010 = vmatpush1.bf16.msra.mxu0 %v7898
  %8011 = vmatprep.subr.bf16.mxu0 0
  %8012 = vmatpush1.bf16.msra.mxu0 %v7899
  %8013 = vmatprep.subr.bf16.mxu0 0
  %8014 = vmatpush1.bf16.msra.mxu0 %v7900
  %8015 = vmatprep.subr.bf16.mxu0 0
  %8016 = vmatpush1.bf16.msra.mxu0 %v8005
  %8017 = vmatprep.subr.bf16.mxu0 0
  %8018 = vmatpush1.bf16.msra.mxu0 0
  %8019 = vmatprep.subr.bf16.mxu0 0
  %8020 = vmatpush1.bf16.msra.mxu0 0
  %8021 = vmatprep.subr.bf16.mxu0 0
  %8022 = vmatpush1.bf16.msra.mxu0 0
  %8023 = vmatprep.subr.bf16.mxu0 0
  %8024 = vmatpush1.bf16.msra.mxu0 0
  %8025 = vmatprep.subr.bf16.mxu0 0
  %8026 = vmatpush1.bf16.msra.mxu0 0
  %8027 = vmatprep.subr.bf16.mxu0 0
  %8028 = vmatpush1.bf16.msra.mxu0 0
  %8029 = vmatprep.subr.bf16.mxu0 0
  %8030 = vmatpush1.bf16.msra.mxu0 0
  %8031 = vmatprep.subr.bf16.mxu0 0
  %8032 = vmatpush1.bf16.msra.mxu0 0
  %8033 = vmatprep.subr.bf16.mxu0 0
  %8034 = vmatpush1.bf16.msra.mxu0 0
  %8035 = vmatprep.subr.bf16.mxu0 0
  %8036 = vmatpush1.bf16.msra.mxu0 0
  %8037 = vmatprep.subr.bf16.mxu0 0
  %8038 = vmatpush1.bf16.msra.mxu0 0
  %8039 = vmatprep.mubr.bf16.mxu0 0
  %8040 = vmatmul.mubr.bf16.gmra.mrb[0].mxu0 %v7908
  %v8041 = vpop.f32.mrb[0].mxu0
  %v8042 = vadd.f32 0.0, %v8041
  %v8043 = vpop.f32.mrb[0].mxu0
  %v8044 = vpop.f32.mrb[0].mxu0
  %v8045 = vadd.f32 0.0, %v8044
  %v8046 = vpop.f32.mrb[0].mxu0
  %8047 = vmatprep.mubr.bf16.mxu0 0
  %8048 = vmatmul.mubr.bf16.gmra.mrb[0].mxu0 %v7911
  %v8049 = vpop.f32.mrb[0].mxu0
  %v8050 = vadd.f32 0.0, %v8049
  %v8051 = vpop.f32.mrb[0].mxu0
  %v8052 = vpop.f32.mrb[0].mxu0
  %v8053 = vadd.f32 0.0, %v8052
  %v8054 = vpop.f32.mrb[0].mxu0
  %8055 = vmatprep.mubr.bf16.mxu0 0
  %8056 = vmatmul.mubr.bf16.gmra.mrb[0].mxu0 %v7914
  %v8057 = vpop.f32.mrb[0].mxu0
  %v8058 = vadd.f32 0.0, %v8057
  %v8059 = vpop.f32.mrb[0].mxu0
  %v8060 = vpop.f32.mrb[0].mxu0
  %v8061 = vadd.f32 0.0, %v8060
  %v8062 = vpop.f32.mrb[0].mxu0
  %8063 = vmatprep.mubr.bf16.mxu0 0
  %8064 = vmatmul.mubr.bf16.gmra.mrb[0].mxu0 %v7917
  %v8065 = vpop.f32.mrb[0].mxu0
  %v8066 = vadd.f32 0.0, %v8065
  %v8067 = vpop.f32.mrb[0].mxu0
  %v8068 = vpop.f32.mrb[0].mxu0
  %v8069 = vadd.f32 0.0, %v8068
  %v8070 = vpop.f32.mrb[0].mxu0
  %8071 = vmatprep.mubr.bf16.mxu0 0
  %8072 = vmatmul.mubr.bf16.gmra.mrb[0].mxu0 %v7920
  %v8073 = vpop.f32.mrb[0].mxu0
  %v8074 = vadd.f32 0.0, %v8073
  %v8075 = vpop.f32.mrb[0].mxu0
  %v8076 = vpop.f32.mrb[0].mxu0
  %v8077 = vadd.f32 0.0, %v8076
  %v8078 = vpop.f32.mrb[0].mxu0
  %8079 = vmatprep.mubr.bf16.mxu0 0
  %8080 = vmatmul.mubr.bf16.gmra.mrb[0].mxu0 %v7923
  %v8081 = vpop.f32.mrb[0].mxu0
  %v8082 = vadd.f32 0.0, %v8081
  %v8083 = vpop.f32.mrb[0].mxu0
  %v8084 = vpop.f32.mrb[0].mxu0
  %v8085 = vadd.f32 0.0, %v8084
  %v8086 = vpop.f32.mrb[0].mxu0
  %8087 = vmatprep.mubr.bf16.mxu0 0
  %8088 = vmatmul.mubr.bf16.gmra.mrb[0].mxu0 %v7926
  %v8089 = vpop.f32.mrb[0].mxu0
  %v8090 = vadd.f32 0.0, %v8089
  %v8091 = vpop.f32.mrb[0].mxu0
  %v8092 = vpop.f32.mrb[0].mxu0
  %v8093 = vadd.f32 0.0, %v8092
  %v8094 = vpop.f32.mrb[0].mxu0
  %8095 = vmatprep.mubr.bf16.mxu0 0
  %8096 = vmatmul.mubr.bf16.gmra.mrb[0].mxu0 %v7929
  %v8097 = vpop.f32.mrb[0].mxu0
  %v8098 = vadd.f32 0.0, %v8097
  %v8099 = vpop.f32.mrb[0].mxu0
  %v8100 = vpop.f32.mrb[0].mxu0
  %v8101 = vadd.f32 0.0, %v8100
  %v8102 = vpop.f32.mrb[0].mxu0
  %8103 = vmatprep.mubr.bf16.mxu0 0
  %8104 = vmatmul.mubr.bf16.gmra.mrb[0].mxu0 %v7932
  %v8105 = vpop.f32.mrb[0].mxu0
  %v8106 = vadd.f32 0.0, %v8105
  %v8107 = vpop.f32.mrb[0].mxu0
  %v8108 = vpop.f32.mrb[0].mxu0
  %v8109 = vadd.f32 0.0, %v8108
  %v8110 = vpop.f32.mrb[0].mxu0
  %8111 = vmatprep.mubr.bf16.mxu0 0
  %8112 = vmatmul.mubr.bf16.gmra.mrb[0].mxu0 %v7935
  %v8113 = vpop.f32.mrb[0].mxu0
  %v8114 = vadd.f32 0.0, %v8113
  %v8115 = vpop.f32.mrb[0].mxu0
  %v8116 = vpop.f32.mrb[0].mxu0
  %v8117 = vadd.f32 0.0, %v8116
  %v8118 = vpop.f32.mrb[0].mxu0
  %8119 = vmatprep.mubr.bf16.mxu0 0
  %8120 = vmatmul.mubr.bf16.gmra.mrb[0].mxu0 %v7938
  %v8121 = vpop.f32.mrb[0].mxu0
  %v8122 = vadd.f32 0.0, %v8121
  %v8123 = vpop.f32.mrb[0].mxu0
  %v8124 = vpop.f32.mrb[0].mxu0
  %v8125 = vadd.f32 0.0, %v8124
  %v8126 = vpop.f32.mrb[0].mxu0
  %8127 = vmatprep.mubr.bf16.mxu0 0
  %8128 = vmatmul.mubr.bf16.gmra.mrb[0].mxu0 %v7941
  %v8129 = vpop.f32.mrb[0].mxu0
  %v8130 = vadd.f32 0.0, %v8129
  %v8131 = vpop.f32.mrb[0].mxu0
  %v8132 = vpop.f32.mrb[0].mxu0
  %v8133 = vadd.f32 0.0, %v8132
  %v8134 = vpop.f32.mrb[0].mxu0
  %8135 = vmatprep.mubr.bf16.mxu0 0
  %8136 = vmatmul.mubr.bf16.gmra.mrb[0].mxu0 %v7944
  %v8137 = vpop.f32.mrb[0].mxu0
  %v8138 = vadd.f32 0.0, %v8137
  %v8139 = vpop.f32.mrb[0].mxu0
  %v8140 = vpop.f32.mrb[0].mxu0
  %v8141 = vadd.f32 0.0, %v8140
  %v8142 = vpop.f32.mrb[0].mxu0
  %8143 = vmatprep.mubr.bf16.mxu0 0
  %8144 = vmatmul.mubr.bf16.gmra.mrb[0].mxu0 %v7947
  %v8145 = vpop.f32.mrb[0].mxu0
  %v8146 = vadd.f32 0.0, %v8145
  %v8147 = vpop.f32.mrb[0].mxu0
  %v8148 = vpop.f32.mrb[0].mxu0
  %v8149 = vadd.f32 0.0, %v8148
  %v8150 = vpop.f32.mrb[0].mxu0
  %8151 = vmatprep.mubr.bf16.mxu0 0
  %8152 = vmatmul.mubr.bf16.gmra.mrb[0].mxu0 %v7950
  %v8153 = vpop.f32.mrb[0].mxu0
  %v8154 = vadd.f32 0.0, %v8153
  %v8155 = vpop.f32.mrb[0].mxu0
  %v8156 = vpop.f32.mrb[0].mxu0
  %v8157 = vadd.f32 0.0, %v8156
  %v8158 = vpop.f32.mrb[0].mxu0
  %8159 = vmatprep.mubr.bf16.mxu0 0
  %8160 = vmatmul.mubr.bf16.gmra.mrb[0].mxu0 %v7953
  %v8161 = vpop.f32.mrb[0].mxu0
  %v8162 = vadd.f32 0.0, %v8161
  %v8163 = vpop.f32.mrb[0].mxu0
  %v8164 = vpop.f32.mrb[0].mxu0
  %v8165 = vadd.f32 0.0, %v8164
  %v8166 = vpop.f32.mrb[0].mxu0
  %8167 = vmatprep.mubr.bf16.mxu0 0
  %8168 = vmatmul.mubr.bf16.gmra.mrb[0].mxu0 %v7956
  %v8169 = vpop.f32.mrb[0].mxu0
  %v8170 = vadd.f32 0.0, %v8169
  %v8171 = vpop.f32.mrb[0].mxu0
  %v8172 = vpop.f32.mrb[0].mxu0
  %v8173 = vadd.f32 0.0, %v8172
  %v8174 = vpop.f32.mrb[0].mxu0
  %8175 = vmatprep.mubr.bf16.mxu0 0
  %8176 = vmatmul.mubr.bf16.gmra.mrb[0].mxu0 %v7959
  %v8177 = vpop.f32.mrb[0].mxu0
  %v8178 = vadd.f32 0.0, %v8177
  %v8179 = vpop.f32.mrb[0].mxu0
  %v8180 = vpop.f32.mrb[0].mxu0
  %v8181 = vadd.f32 0.0, %v8180
  %v8182 = vpop.f32.mrb[0].mxu0
  %8183 = vmatprep.mubr.bf16.mxu0 0
  %8184 = vmatmul.mubr.bf16.gmra.mrb[0].mxu0 %v7962
  %v8185 = vpop.f32.mrb[0].mxu0
  %v8186 = vadd.f32 0.0, %v8185
  %v8187 = vpop.f32.mrb[0].mxu0
  %v8188 = vpop.f32.mrb[0].mxu0
  %v8189 = vadd.f32 0.0, %v8188
  %v8190 = vpop.f32.mrb[0].mxu0
  %8191 = vmatprep.mubr.bf16.mxu0 0
  %8192 = vmatmul.mubr.bf16.gmra.mrb[0].mxu0 %v7965
  %v8193 = vpop.f32.mrb[0].mxu0
  %v8194 = vadd.f32 0.0, %v8193
  %v8195 = vpop.f32.mrb[0].mxu0
  %v8196 = vpop.f32.mrb[0].mxu0
  %v8197 = vadd.f32 0.0, %v8196
  %v8198 = vpop.f32.mrb[0].mxu0
  %8199 = vmatprep.mubr.bf16.mxu0 0
  %8200 = vmatmul.mubr.bf16.gmra.mrb[0].mxu0 %v7968
  %v8201 = vpop.f32.mrb[0].mxu0
  %v8202 = vadd.f32 0.0, %v8201
  %v8203 = vpop.f32.mrb[0].mxu0
  %v8204 = vpop.f32.mrb[0].mxu0
  %v8205 = vadd.f32 0.0, %v8204
  %v8206 = vpop.f32.mrb[0].mxu0
  %8207 = vmatprep.mubr.bf16.mxu0 0
  %8208 = vmatmul.mubr.bf16.gmra.mrb[0].mxu0 %v7971
  %v8209 = vpop.f32.mrb[0].mxu0
  %v8210 = vadd.f32 0.0, %v8209
  %v8211 = vpop.f32.mrb[0].mxu0
  %v8212 = vpop.f32.mrb[0].mxu0
  %v8213 = vadd.f32 0.0, %v8212
  %v8214 = vpop.f32.mrb[0].mxu0
  %8215 = vmatprep.mubr.bf16.mxu0 0
  %8216 = vmatmul.mubr.bf16.gmra.mrb[0].mxu0 %v7974
  %v8217 = vpop.f32.mrb[0].mxu0
  %v8218 = vadd.f32 0.0, %v8217
  %v8219 = vpop.f32.mrb[0].mxu0
  %v8220 = vpop.f32.mrb[0].mxu0
  %v8221 = vadd.f32 0.0, %v8220
  %v8222 = vpop.f32.mrb[0].mxu0
  %8223 = vmatprep.mubr.bf16.mxu0 0
  %8224 = vmatmul.mubr.bf16.gmra.mrb[0].mxu0 %v7977
  %v8225 = vpop.f32.mrb[0].mxu0
  %v8226 = vadd.f32 0.0, %v8225
  %v8227 = vpop.f32.mrb[0].mxu0
  %v8228 = vpop.f32.mrb[0].mxu0
  %v8229 = vadd.f32 0.0, %v8228
  %v8230 = vpop.f32.mrb[0].mxu0
  %8231 = vmatprep.mubr.bf16.mxu0 0
  %8232 = vmatmul.mubr.bf16.gmra.mrb[0].mxu0 %v7980
  %v8233 = vpop.f32.mrb[0].mxu0
  %v8234 = vadd.f32 0.0, %v8233
  %v8235 = vpop.f32.mrb[0].mxu0
  %v8236 = vpop.f32.mrb[0].mxu0
  %v8237 = vadd.f32 0.0, %v8236
  %v8238 = vpop.f32.mrb[0].mxu0
  %8239 = vmatprep.mubr.bf16.mxu0 0
  %8240 = vmatmul.mubr.bf16.gmra.mrb[0].mxu0 %v7983
  %v8241 = vpop.f32.mrb[0].mxu0
  %v8242 = vadd.f32 0.0, %v8241
  %v8243 = vpop.f32.mrb[0].mxu0
  %v8244 = vpop.f32.mrb[0].mxu0
  %v8245 = vadd.f32 0.0, %v8244
  %v8246 = vpop.f32.mrb[0].mxu0
  %8247 = vmatprep.mubr.bf16.mxu0 0
  %8248 = vmatmul.mubr.bf16.gmra.mrb[0].mxu0 %v7986
  %v8249 = vpop.f32.mrb[0].mxu0
  %v8250 = vadd.f32 0.0, %v8249
  %v8251 = vpop.f32.mrb[0].mxu0
  %v8252 = vpop.f32.mrb[0].mxu0
  %v8253 = vadd.f32 0.0, %v8252
  %v8254 = vpop.f32.mrb[0].mxu0
  %8255 = vmatprep.mubr.bf16.mxu0 0
  %8256 = vmatmul.mubr.bf16.gmra.mrb[0].mxu0 %v7989
  %v8257 = vpop.f32.mrb[0].mxu0
  %v8258 = vadd.f32 0.0, %v8257
  %v8259 = vpop.f32.mrb[0].mxu0
  %v8260 = vpop.f32.mrb[0].mxu0
  %v8261 = vadd.f32 0.0, %v8260
  %v8262 = vpop.f32.mrb[0].mxu0
  %8263 = vmatprep.mubr.bf16.mxu0 0
  %8264 = vmatmul.mubr.bf16.gmra.mrb[0].mxu0 %v7992
  %v8265 = vpop.f32.mrb[0].mxu0
  %v8266 = vadd.f32 0.0, %v8265
  %v8267 = vpop.f32.mrb[0].mxu0
  %v8268 = vpop.f32.mrb[0].mxu0
  %v8269 = vadd.f32 0.0, %v8268
  %v8270 = vpop.f32.mrb[0].mxu0
  %8271 = vmatprep.mubr.bf16.mxu0 0
  %8272 = vmatmul.mubr.bf16.gmra.mrb[0].mxu0 %v7995
  %v8273 = vpop.f32.mrb[0].mxu0
  %v8274 = vadd.f32 0.0, %v8273
  %v8275 = vpop.f32.mrb[0].mxu0
  %v8276 = vpop.f32.mrb[0].mxu0
  %v8277 = vadd.f32 0.0, %v8276
  %v8278 = vpop.f32.mrb[0].mxu0
  %8279 = vmatprep.mubr.bf16.mxu0 0
  %8280 = vmatmul.mubr.bf16.gmra.mrb[0].mxu0 %v7998
  %v8281 = vpop.f32.mrb[0].mxu0
  %v8282 = vadd.f32 0.0, %v8281
  %v8283 = vpop.f32.mrb[0].mxu0
  %v8284 = vpop.f32.mrb[0].mxu0
  %v8285 = vadd.f32 0.0, %v8284
  %v8286 = vpop.f32.mrb[0].mxu0
  %8287 = vmatprep.mubr.bf16.mxu0 0
  %8288 = vmatmul.mubr.bf16.gmra.mrb[0].mxu0 %v8001
  %v8289 = vpop.f32.mrb[0].mxu0
  %v8290 = vadd.f32 0.0, %v8289
  %v8291 = vpop.f32.mrb[0].mxu0
  %v8292 = vpop.f32.mrb[0].mxu0
  %v8293 = vadd.f32 0.0, %v8292
  %v8294 = vpop.f32.mrb[0].mxu0
  %8295 = vdwg.mxu0
  %v8296 = vld [vmem:[%s5] sm:$0x1]
  %v8297 = vld [vmem:[%s6] sm:$0x1]
  %v8298 = vsel %vm2955, %v8042, 0.0
  %v8299 = vsel %vm2955, %v8045, 0.0
  %v8300 = vadd.f32 %v8298, %v8299
  %v8301 = vsel %vm2955, %v8050, 0.0
  %v8302 = vadd.f32 %v8300, %v8301
  %v8303 = vsel %vm2955, %v8053, 0.0
  %v8304 = vadd.f32 %v8302, %v8303
  %v8305 = vsel %vm2955, %v8058, 0.0
  %v8306 = vadd.f32 %v8304, %v8305
  %v8307 = vsel %vm2955, %v8061, 0.0
  %v8308 = vadd.f32 %v8306, %v8307
  %v8309 = vsel %vm2955, %v8066, 0.0
  %v8310 = vadd.f32 %v8308, %v8309
  %v8311 = vsel %vm2955, %v8069, 0.0
  %v8312 = vadd.f32 %v8310, %v8311
  %v8313 = vsel %vm2955, %v8074, 0.0
  %v8314 = vadd.f32 %v8312, %v8313
  %v8315 = vsel %vm2955, %v8077, 0.0
  %v8316 = vadd.f32 %v8314, %v8315
  %v8317 = vsel %vm2955, %v8082, 0.0
  %v8318 = vadd.f32 %v8316, %v8317
  %v8319 = vsel %vm2955, %v8085, 0.0
  %v8320 = vadd.f32 %v8318, %v8319
  %v8321 = vsel %vm2955, %v8090, 0.0
  %v8322 = vadd.f32 %v8320, %v8321
  %v8323 = vsel %vm2955, %v8093, 0.0
  %v8324 = vadd.f32 %v8322, %v8323
  %v8325 = vsel %vm2955, %v8098, 0.0
  %v8326 = vadd.f32 %v8324, %v8325
  %v8327 = vsel %vm2955, %v8101, 0.0
  %v8328 = vadd.f32 %v8326, %v8327
  %v8329 = vsel %vm2955, %v8106, 0.0
  %v8330 = vadd.f32 %v8328, %v8329
  %v8331 = vsel %vm2955, %v8109, 0.0
  %v8332 = vadd.f32 %v8330, %v8331
  %v8333 = vsel %vm2955, %v8114, 0.0
  %v8334 = vadd.f32 %v8332, %v8333
  %v8335 = vsel %vm2955, %v8117, 0.0
  %v8336 = vadd.f32 %v8334, %v8335
  %v8337 = vsel %vm2955, %v8122, 0.0
  %v8338 = vadd.f32 %v8336, %v8337
  %v8339 = vsel %vm2955, %v8125, 0.0
  %v8340 = vadd.f32 %v8338, %v8339
  %v8341 = vsel %vm2955, %v8130, 0.0
  %v8342 = vadd.f32 %v8340, %v8341
  %v8343 = vsel %vm2955, %v8133, 0.0
  %v8344 = vadd.f32 %v8342, %v8343
  %v8345 = vsel %vm2955, %v8138, 0.0
  %v8346 = vadd.f32 %v8344, %v8345
  %v8347 = vsel %vm2955, %v8141, 0.0
  %v8348 = vadd.f32 %v8346, %v8347
  %v8349 = vsel %vm2955, %v8146, 0.0
  %v8350 = vadd.f32 %v8348, %v8349
  %v8351 = vsel %vm2955, %v8149, 0.0
  %v8352 = vadd.f32 %v8350, %v8351
  %v8353 = vsel %vm2955, %v8154, 0.0
  %v8354 = vadd.f32 %v8352, %v8353
  %v8355 = vsel %vm2955, %v8157, 0.0
  %v8356 = vadd.f32 %v8354, %v8355
  %v8357 = vsel %vm2955, %v8162, 0.0
  %v8358 = vadd.f32 %v8356, %v8357
  %v8359 = vsel %vm2955, %v8165, 0.0
  %v8360 = vadd.f32 %v8358, %v8359
  %v8361 = vsel %vm2955, %v8170, 0.0
  %v8362 = vadd.f32 %v8360, %v8361
  %v8363 = vsel %vm2955, %v8173, 0.0
  %v8364 = vadd.f32 %v8362, %v8363
  %v8365 = vsel %vm2955, %v8178, 0.0
  %v8366 = vadd.f32 %v8364, %v8365
  %v8367 = vsel %vm2955, %v8181, 0.0
  %v8368 = vadd.f32 %v8366, %v8367
  %v8369 = vsel %vm2955, %v8186, 0.0
  %v8370 = vadd.f32 %v8368, %v8369
  %v8371 = vsel %vm2955, %v8189, 0.0
  %v8372 = vadd.f32 %v8370, %v8371
  %v8373 = vsel %vm2955, %v8194, 0.0
  %v8374 = vadd.f32 %v8372, %v8373
  %v8375 = vsel %vm2955, %v8197, 0.0
  %v8376 = vadd.f32 %v8374, %v8375
  %v8377 = vsel %vm2955, %v8202, 0.0
  %v8378 = vadd.f32 %v8376, %v8377
  %v8379 = vsel %vm2955, %v8205, 0.0
  %v8380 = vadd.f32 %v8378, %v8379
  %v8381 = vsel %vm2955, %v8210, 0.0
  %v8382 = vadd.f32 %v8380, %v8381
  %v8383 = vsel %vm2955, %v8213, 0.0
  %v8384 = vadd.f32 %v8382, %v8383
  %v8385 = vsel %vm2955, %v8218, 0.0
  %v8386 = vadd.f32 %v8384, %v8385
  %v8387 = vsel %vm2955, %v8221, 0.0
  %v8388 = vadd.f32 %v8386, %v8387
  %v8389 = vsel %vm2955, %v8226, 0.0
  %v8390 = vadd.f32 %v8388, %v8389
  %v8391 = vsel %vm2955, %v8229, 0.0
  %v8392 = vadd.f32 %v8390, %v8391
  %v8393 = vsel %vm2955, %v8234, 0.0
  %v8394 = vadd.f32 %v8392, %v8393
  %v8395 = vsel %vm2955, %v8237, 0.0
  %v8396 = vadd.f32 %v8394, %v8395
  %v8397 = vsel %vm2955, %v8242, 0.0
  %v8398 = vadd.f32 %v8396, %v8397
  %v8399 = vsel %vm2955, %v8245, 0.0
  %v8400 = vadd.f32 %v8398, %v8399
  %v8401 = vsel %vm2955, %v8250, 0.0
  %v8402 = vadd.f32 %v8400, %v8401
  %v8403 = vsel %vm2955, %v8253, 0.0
  %v8404 = vadd.f32 %v8402, %v8403
  %v8405 = vsel %vm2955, %v8258, 0.0
  %v8406 = vadd.f32 %v8404, %v8405
  %v8407 = vsel %vm2955, %v8261, 0.0
  %v8408 = vadd.f32 %v8406, %v8407
  %v8409 = vsel %vm2955, %v8266, 0.0
  %v8410 = vadd.f32 %v8408, %v8409
  %v8411 = vsel %vm2955, %v8269, 0.0
  %v8412 = vadd.f32 %v8410, %v8411
  %v8413 = vsel %vm2955, %v8274, 0.0
  %v8414 = vadd.f32 %v8412, %v8413
  %v8415 = vsel %vm2955, %v8277, 0.0
  %v8416 = vadd.f32 %v8414, %v8415
  %v8417 = vsel %vm2955, %v8282, 0.0
  %v8418 = vadd.f32 %v8416, %v8417
  %v8419 = vsel %vm2955, %v8285, 0.0
  %v8420 = vadd.f32 %v8418, %v8419
  %v8421 = vsel %vm2955, %v8290, 0.0
  %v8422 = vadd.f32 %v8420, %v8421
  %v8423 = vsel %vm2955, %v8293, 0.0
  %v8424 = vadd.f32 %v8422, %v8423
  %v8425 = vrot.slane %v8424, 4
  %v8426 = vadd.f32 %v8424, %v8425
  %v8427 = vrot.slane %v8426, 2
  %v8428 = vadd.f32 %v8426, %v8427
  %v8429 = vrot.slane %v8428, 1
  %v8430 = vadd.f32 %v8428, %v8429
  %v8431 = vmul.f32 %v8430, 0.001953125
  %v8432 = vmul.f32 %v8042, %v8042
  %v8433 = vmul.f32 %v8045, %v8045
  %v8434 = vmul.f32 %v8050, %v8050
  %v8435 = vmul.f32 %v8053, %v8053
  %v8436 = vmul.f32 %v8058, %v8058
  %v8437 = vmul.f32 %v8061, %v8061
  %v8438 = vmul.f32 %v8066, %v8066
  %v8439 = vmul.f32 %v8069, %v8069
  %v8440 = vmul.f32 %v8074, %v8074
  %v8441 = vmul.f32 %v8077, %v8077
  %v8442 = vmul.f32 %v8082, %v8082
  %v8443 = vmul.f32 %v8085, %v8085
  %v8444 = vmul.f32 %v8090, %v8090
  %v8445 = vmul.f32 %v8093, %v8093
  %v8446 = vmul.f32 %v8098, %v8098
  %v8447 = vmul.f32 %v8101, %v8101
  %v8448 = vmul.f32 %v8106, %v8106
  %v8449 = vmul.f32 %v8109, %v8109
  %v8450 = vmul.f32 %v8114, %v8114
  %v8451 = vmul.f32 %v8117, %v8117
  %v8452 = vmul.f32 %v8122, %v8122
  %v8453 = vmul.f32 %v8125, %v8125
  %v8454 = vmul.f32 %v8130, %v8130
  %v8455 = vmul.f32 %v8133, %v8133
  %v8456 = vmul.f32 %v8138, %v8138
  %v8457 = vmul.f32 %v8141, %v8141
  %v8458 = vmul.f32 %v8146, %v8146
  %v8459 = vmul.f32 %v8149, %v8149
  %v8460 = vmul.f32 %v8154, %v8154
  %v8461 = vmul.f32 %v8157, %v8157
  %v8462 = vmul.f32 %v8162, %v8162
  %v8463 = vmul.f32 %v8165, %v8165
  %v8464 = vmul.f32 %v8170, %v8170
  %v8465 = vmul.f32 %v8173, %v8173
  %v8466 = vmul.f32 %v8178, %v8178
  %v8467 = vmul.f32 %v8181, %v8181
  %v8468 = vmul.f32 %v8186, %v8186
  %v8469 = vmul.f32 %v8189, %v8189
  %v8470 = vmul.f32 %v8194, %v8194
  %v8471 = vmul.f32 %v8197, %v8197
  %v8472 = vmul.f32 %v8202, %v8202
  %v8473 = vmul.f32 %v8205, %v8205
  %v8474 = vmul.f32 %v8210, %v8210
  %v8475 = vmul.f32 %v8213, %v8213
  %v8476 = vmul.f32 %v8218, %v8218
  %v8477 = vmul.f32 %v8221, %v8221
  %v8478 = vmul.f32 %v8226, %v8226
  %v8479 = vmul.f32 %v8229, %v8229
  %v8480 = vmul.f32 %v8234, %v8234
  %v8481 = vmul.f32 %v8237, %v8237
  %v8482 = vmul.f32 %v8242, %v8242
  %v8483 = vmul.f32 %v8245, %v8245
  %v8484 = vmul.f32 %v8250, %v8250
  %v8485 = vmul.f32 %v8253, %v8253
  %v8486 = vmul.f32 %v8258, %v8258
  %v8487 = vmul.f32 %v8261, %v8261
  %v8488 = vmul.f32 %v8266, %v8266
  %v8489 = vmul.f32 %v8269, %v8269
  %v8490 = vmul.f32 %v8274, %v8274
  %v8491 = vmul.f32 %v8277, %v8277
  %v8492 = vmul.f32 %v8282, %v8282
  %v8493 = vmul.f32 %v8285, %v8285
  %v8494 = vmul.f32 %v8290, %v8290
  %v8495 = vmul.f32 %v8293, %v8293
  %v8496 = vsel %vm2955, %v8432, 0.0
  %v8497 = vsel %vm2955, %v8433, 0.0
  %v8498 = vadd.f32 %v8496, %v8497
  %v8499 = vsel %vm2955, %v8434, 0.0
  %v8500 = vadd.f32 %v8498, %v8499
  %v8501 = vsel %vm2955, %v8435, 0.0
  %v8502 = vadd.f32 %v8500, %v8501
  %v8503 = vsel %vm2955, %v8436, 0.0
  %v8504 = vadd.f32 %v8502, %v8503
  %v8505 = vsel %vm2955, %v8437, 0.0
  %v8506 = vadd.f32 %v8504, %v8505
  %v8507 = vsel %vm2955, %v8438, 0.0
  %v8508 = vadd.f32 %v8506, %v8507
  %v8509 = vsel %vm2955, %v8439, 0.0
  %v8510 = vadd.f32 %v8508, %v8509
  %v8511 = vsel %vm2955, %v8440, 0.0
  %v8512 = vadd.f32 %v8510, %v8511
  %v8513 = vsel %vm2955, %v8441, 0.0
  %v8514 = vadd.f32 %v8512, %v8513
  %v8515 = vsel %vm2955, %v8442, 0.0
  %v8516 = vadd.f32 %v8514, %v8515
  %v8517 = vsel %vm2955, %v8443, 0.0
  %v8518 = vadd.f32 %v8516, %v8517
  %v8519 = vsel %vm2955, %v8444, 0.0
  %v8520 = vadd.f32 %v8518, %v8519
  %v8521 = vsel %vm2955, %v8445, 0.0
  %v8522 = vadd.f32 %v8520, %v8521
  %v8523 = vsel %vm2955, %v8446, 0.0
  %v8524 = vadd.f32 %v8522, %v8523
  %v8525 = vsel %vm2955, %v8447, 0.0
  %v8526 = vadd.f32 %v8524, %v8525
  %v8527 = vsel %vm2955, %v8448, 0.0
  %v8528 = vadd.f32 %v8526, %v8527
  %v8529 = vsel %vm2955, %v8449, 0.0
  %v8530 = vadd.f32 %v8528, %v8529
  %v8531 = vsel %vm2955, %v8450, 0.0
  %v8532 = vadd.f32 %v8530, %v8531
  %v8533 = vsel %vm2955, %v8451, 0.0
  %v8534 = vadd.f32 %v8532, %v8533
  %v8535 = vsel %vm2955, %v8452, 0.0
  %v8536 = vadd.f32 %v8534, %v8535
  %v8537 = vsel %vm2955, %v8453, 0.0
  %v8538 = vadd.f32 %v8536, %v8537
  %v8539 = vsel %vm2955, %v8454, 0.0
  %v8540 = vadd.f32 %v8538, %v8539
  %v8541 = vsel %vm2955, %v8455, 0.0
  %v8542 = vadd.f32 %v8540, %v8541
  %v8543 = vsel %vm2955, %v8456, 0.0
  %v8544 = vadd.f32 %v8542, %v8543
  %v8545 = vsel %vm2955, %v8457, 0.0
  %v8546 = vadd.f32 %v8544, %v8545
  %v8547 = vsel %vm2955, %v8458, 0.0
  %v8548 = vadd.f32 %v8546, %v8547
  %v8549 = vsel %vm2955, %v8459, 0.0
  %v8550 = vadd.f32 %v8548, %v8549
  %v8551 = vsel %vm2955, %v8460, 0.0
  %v8552 = vadd.f32 %v8550, %v8551
  %v8553 = vsel %vm2955, %v8461, 0.0
  %v8554 = vadd.f32 %v8552, %v8553
  %v8555 = vsel %vm2955, %v8462, 0.0
  %v8556 = vadd.f32 %v8554, %v8555
  %v8557 = vsel %vm2955, %v8463, 0.0
  %v8558 = vadd.f32 %v8556, %v8557
  %v8559 = vsel %vm2955, %v8464, 0.0
  %v8560 = vadd.f32 %v8558, %v8559
  %v8561 = vsel %vm2955, %v8465, 0.0
  %v8562 = vadd.f32 %v8560, %v8561
  %v8563 = vsel %vm2955, %v8466, 0.0
  %v8564 = vadd.f32 %v8562, %v8563
  %v8565 = vsel %vm2955, %v8467, 0.0
  %v8566 = vadd.f32 %v8564, %v8565
  %v8567 = vsel %vm2955, %v8468, 0.0
  %v8568 = vadd.f32 %v8566, %v8567
  %v8569 = vsel %vm2955, %v8469, 0.0
  %v8570 = vadd.f32 %v8568, %v8569
  %v8571 = vsel %vm2955, %v8470, 0.0
  %v8572 = vadd.f32 %v8570, %v8571
  %v8573 = vsel %vm2955, %v8471, 0.0
  %v8574 = vadd.f32 %v8572, %v8573
  %v8575 = vsel %vm2955, %v8472, 0.0
  %v8576 = vadd.f32 %v8574, %v8575
  %v8577 = vsel %vm2955, %v8473, 0.0
  %v8578 = vadd.f32 %v8576, %v8577
  %v8579 = vsel %vm2955, %v8474, 0.0
  %v8580 = vadd.f32 %v8578, %v8579
  %v8581 = vsel %vm2955, %v8475, 0.0
  %v8582 = vadd.f32 %v8580, %v8581
  %v8583 = vsel %vm2955, %v8476, 0.0
  %v8584 = vadd.f32 %v8582, %v8583
  %v8585 = vsel %vm2955, %v8477, 0.0
  %v8586 = vadd.f32 %v8584, %v8585
  %v8587 = vsel %vm2955, %v8478, 0.0
  %v8588 = vadd.f32 %v8586, %v8587
  %v8589 = vsel %vm2955, %v8479, 0.0
  %v8590 = vadd.f32 %v8588, %v8589
  %v8591 = vsel %vm2955, %v8480, 0.0
  %v8592 = vadd.f32 %v8590, %v8591
  %v8593 = vsel %vm2955, %v8481, 0.0
  %v8594 = vadd.f32 %v8592, %v8593
  %v8595 = vsel %vm2955, %v8482, 0.0
  %v8596 = vadd.f32 %v8594, %v8595
  %v8597 = vsel %vm2955, %v8483, 0.0
  %v8598 = vadd.f32 %v8596, %v8597
  %v8599 = vsel %vm2955, %v8484, 0.0
  %v8600 = vadd.f32 %v8598, %v8599
  %v8601 = vsel %vm2955, %v8485, 0.0
  %v8602 = vadd.f32 %v8600, %v8601
  %v8603 = vsel %vm2955, %v8486, 0.0
  %v8604 = vadd.f32 %v8602, %v8603
  %v8605 = vsel %vm2955, %v8487, 0.0
  %v8606 = vadd.f32 %v8604, %v8605
  %v8607 = vsel %vm2955, %v8488, 0.0
  %v8608 = vadd.f32 %v8606, %v8607
  %v8609 = vsel %vm2955, %v8489, 0.0
  %v8610 = vadd.f32 %v8608, %v8609
  %v8611 = vsel %vm2955, %v8490, 0.0
  %v8612 = vadd.f32 %v8610, %v8611
  %v8613 = vsel %vm2955, %v8491, 0.0
  %v8614 = vadd.f32 %v8612, %v8613
  %v8615 = vsel %vm2955, %v8492, 0.0
  %v8616 = vadd.f32 %v8614, %v8615
  %v8617 = vsel %vm2955, %v8493, 0.0
  %v8618 = vadd.f32 %v8616, %v8617
  %v8619 = vsel %vm2955, %v8494, 0.0
  %v8620 = vadd.f32 %v8618, %v8619
  %v8621 = vsel %vm2955, %v8495, 0.0
  %v8622 = vadd.f32 %v8620, %v8621
  %v8623 = vrot.slane %v8622, 4
  %v8624 = vadd.f32 %v8622, %v8623
  %v8625 = vrot.slane %v8624, 2
  %v8626 = vadd.f32 %v8624, %v8625
  %v8627 = vrot.slane %v8626, 1
  %v8628 = vadd.f32 %v8626, %v8627
  %v8629 = vmul.f32 %v8628, 0.001953125
  %v8630 = vmul.f32 %v8431, %v8431
  %v8631 = vsub.f32 %v8629, %v8630
  %v8632 = vmax.f32 %v8631, 0.0
  %v8633 = vsub.f32 %v8042, %v8431
  %v8634 = vsub.f32 %v8045, %v8431
  %v8635 = vsub.f32 %v8050, %v8431
  %v8636 = vsub.f32 %v8053, %v8431
  %v8637 = vsub.f32 %v8058, %v8431
  %v8638 = vsub.f32 %v8061, %v8431
  %v8639 = vsub.f32 %v8066, %v8431
  %v8640 = vsub.f32 %v8069, %v8431
  %v8641 = vsub.f32 %v8074, %v8431
  %v8642 = vsub.f32 %v8077, %v8431
  %v8643 = vsub.f32 %v8082, %v8431
  %v8644 = vsub.f32 %v8085, %v8431
  %v8645 = vsub.f32 %v8090, %v8431
  %v8646 = vsub.f32 %v8093, %v8431
  %v8647 = vsub.f32 %v8098, %v8431
  %v8648 = vsub.f32 %v8101, %v8431
  %v8649 = vsub.f32 %v8106, %v8431
  %v8650 = vsub.f32 %v8109, %v8431
  %v8651 = vsub.f32 %v8114, %v8431
  %v8652 = vsub.f32 %v8117, %v8431
  %v8653 = vsub.f32 %v8122, %v8431
  %v8654 = vsub.f32 %v8125, %v8431
  %v8655 = vsub.f32 %v8130, %v8431
  %v8656 = vsub.f32 %v8133, %v8431
  %v8657 = vsub.f32 %v8138, %v8431
  %v8658 = vsub.f32 %v8141, %v8431
  %v8659 = vsub.f32 %v8146, %v8431
  %v8660 = vsub.f32 %v8149, %v8431
  %v8661 = vsub.f32 %v8154, %v8431
  %v8662 = vsub.f32 %v8157, %v8431
  %v8663 = vsub.f32 %v8162, %v8431
  %v8664 = vsub.f32 %v8165, %v8431
  %v8665 = vsub.f32 %v8170, %v8431
  %v8666 = vsub.f32 %v8173, %v8431
  %v8667 = vsub.f32 %v8178, %v8431
  %v8668 = vsub.f32 %v8181, %v8431
  %v8669 = vsub.f32 %v8186, %v8431
  %v8670 = vsub.f32 %v8189, %v8431
  %v8671 = vsub.f32 %v8194, %v8431
  %v8672 = vsub.f32 %v8197, %v8431
  %v8673 = vsub.f32 %v8202, %v8431
  %v8674 = vsub.f32 %v8205, %v8431
  %v8675 = vsub.f32 %v8210, %v8431
  %v8676 = vsub.f32 %v8213, %v8431
  %v8677 = vsub.f32 %v8218, %v8431
  %v8678 = vsub.f32 %v8221, %v8431
  %v8679 = vsub.f32 %v8226, %v8431
  %v8680 = vsub.f32 %v8229, %v8431
  %v8681 = vsub.f32 %v8234, %v8431
  %v8682 = vsub.f32 %v8237, %v8431
  %v8683 = vsub.f32 %v8242, %v8431
  %v8684 = vsub.f32 %v8245, %v8431
  %v8685 = vsub.f32 %v8250, %v8431
  %v8686 = vsub.f32 %v8253, %v8431
  %v8687 = vsub.f32 %v8258, %v8431
  %v8688 = vsub.f32 %v8261, %v8431
  %v8689 = vsub.f32 %v8266, %v8431
  %v8690 = vsub.f32 %v8269, %v8431
  %v8691 = vsub.f32 %v8274, %v8431
  %v8692 = vsub.f32 %v8277, %v8431
  %v8693 = vsub.f32 %v8282, %v8431
  %v8694 = vsub.f32 %v8285, %v8431
  %v8695 = vsub.f32 %v8290, %v8431
  %v8696 = vsub.f32 %v8293, %v8431
  %v8697 = vadd.f32 %v8632, 1e-05
  %v8698 = vrsqrt.pop %v8697
  %v8699 = vmul.f32 %v8633, %v8698
  %v8700 = vmul.f32 %v8634, %v8698
  %v8701 = vmul.f32 %v8635, %v8698
  %v8702 = vmul.f32 %v8636, %v8698
  %v8703 = vmul.f32 %v8637, %v8698
  %v8704 = vmul.f32 %v8638, %v8698
  %v8705 = vmul.f32 %v8639, %v8698
  %v8706 = vmul.f32 %v8640, %v8698
  %v8707 = vmul.f32 %v8641, %v8698
  %v8708 = vmul.f32 %v8642, %v8698
  %v8709 = vmul.f32 %v8643, %v8698
  %v8710 = vmul.f32 %v8644, %v8698
  %v8711 = vmul.f32 %v8645, %v8698
  %v8712 = vmul.f32 %v8646, %v8698
  %v8713 = vmul.f32 %v8647, %v8698
  %v8714 = vmul.f32 %v8648, %v8698
  %v8715 = vmul.f32 %v8649, %v8698
  %v8716 = vmul.f32 %v8650, %v8698
  %v8717 = vmul.f32 %v8651, %v8698
  %v8718 = vmul.f32 %v8652, %v8698
  %v8719 = vmul.f32 %v8653, %v8698
  %v8720 = vmul.f32 %v8654, %v8698
  %v8721 = vmul.f32 %v8655, %v8698
  %v8722 = vmul.f32 %v8656, %v8698
  %v8723 = vmul.f32 %v8657, %v8698
  %v8724 = vmul.f32 %v8658, %v8698
  %v8725 = vmul.f32 %v8659, %v8698
  %v8726 = vmul.f32 %v8660, %v8698
  %v8727 = vmul.f32 %v8661, %v8698
  %v8728 = vmul.f32 %v8662, %v8698
  %v8729 = vmul.f32 %v8663, %v8698
  %v8730 = vmul.f32 %v8664, %v8698
  %v8731 = vmul.f32 %v8665, %v8698
  %v8732 = vmul.f32 %v8666, %v8698
  %v8733 = vmul.f32 %v8667, %v8698
  %v8734 = vmul.f32 %v8668, %v8698
  %v8735 = vmul.f32 %v8669, %v8698
  %v8736 = vmul.f32 %v8670, %v8698
  %v8737 = vmul.f32 %v8671, %v8698
  %v8738 = vmul.f32 %v8672, %v8698
  %v8739 = vmul.f32 %v8673, %v8698
  %v8740 = vmul.f32 %v8674, %v8698
  %v8741 = vmul.f32 %v8675, %v8698
  %v8742 = vmul.f32 %v8676, %v8698
  %v8743 = vmul.f32 %v8677, %v8698
  %v8744 = vmul.f32 %v8678, %v8698
  %v8745 = vmul.f32 %v8679, %v8698
  %v8746 = vmul.f32 %v8680, %v8698
  %v8747 = vmul.f32 %v8681, %v8698
  %v8748 = vmul.f32 %v8682, %v8698
  %v8749 = vmul.f32 %v8683, %v8698
  %v8750 = vmul.f32 %v8684, %v8698
  %v8751 = vmul.f32 %v8685, %v8698
  %v8752 = vmul.f32 %v8686, %v8698
  %v8753 = vmul.f32 %v8687, %v8698
  %v8754 = vmul.f32 %v8688, %v8698
  %v8755 = vmul.f32 %v8689, %v8698
  %v8756 = vmul.f32 %v8690, %v8698
  %v8757 = vmul.f32 %v8691, %v8698
  %v8758 = vmul.f32 %v8692, %v8698
  %v8759 = vmul.f32 %v8693, %v8698
  %v8760 = vmul.f32 %v8694, %v8698
  %v8761 = vmul.f32 %v8695, %v8698
  %v8762 = vmul.f32 %v8696, %v8698
  %v8764 = vlaneseq
  %v8765 = vshrl.u32 %v8764, 7
  %v8766 = vsub.s32 0, %v8765
  %v8767 = vrot.slane %v8296, %v8766
  %v8769 = vmul.f32 %v8699, %v8767
  %v8770 = vmul.f32 %v8700, %v8767
  %v8771 = vmul.f32 %v8701, %v8767
  %v8772 = vmul.f32 %v8702, %v8767
  %v8773 = vmul.f32 %v8703, %v8767
  %v8774 = vmul.f32 %v8704, %v8767
  %v8775 = vmul.f32 %v8705, %v8767
  %v8776 = vmul.f32 %v8706, %v8767
  %v8777 = vmul.f32 %v8707, %v8767
  %v8778 = vmul.f32 %v8708, %v8767
  %v8779 = vmul.f32 %v8709, %v8767
  %v8780 = vmul.f32 %v8710, %v8767
  %v8781 = vmul.f32 %v8711, %v8767
  %v8782 = vmul.f32 %v8712, %v8767
  %v8783 = vmul.f32 %v8713, %v8767
  %v8784 = vmul.f32 %v8714, %v8767
  %v8785 = vmul.f32 %v8715, %v8767
  %v8786 = vmul.f32 %v8716, %v8767
  %v8787 = vmul.f32 %v8717, %v8767
  %v8788 = vmul.f32 %v8718, %v8767
  %v8789 = vmul.f32 %v8719, %v8767
  %v8790 = vmul.f32 %v8720, %v8767
  %v8791 = vmul.f32 %v8721, %v8767
  %v8792 = vmul.f32 %v8722, %v8767
  %v8793 = vmul.f32 %v8723, %v8767
  %v8794 = vmul.f32 %v8724, %v8767
  %v8795 = vmul.f32 %v8725, %v8767
  %v8796 = vmul.f32 %v8726, %v8767
  %v8797 = vmul.f32 %v8727, %v8767
  %v8798 = vmul.f32 %v8728, %v8767
  %v8799 = vmul.f32 %v8729, %v8767
  %v8800 = vmul.f32 %v8730, %v8767
  %v8801 = vmul.f32 %v8731, %v8767
  %v8802 = vmul.f32 %v8732, %v8767
  %v8803 = vmul.f32 %v8733, %v8767
  %v8804 = vmul.f32 %v8734, %v8767
  %v8805 = vmul.f32 %v8735, %v8767
  %v8806 = vmul.f32 %v8736, %v8767
  %v8807 = vmul.f32 %v8737, %v8767
  %v8808 = vmul.f32 %v8738, %v8767
  %v8809 = vmul.f32 %v8739, %v8767
  %v8810 = vmul.f32 %v8740, %v8767
  %v8811 = vmul.f32 %v8741, %v8767
  %v8812 = vmul.f32 %v8742, %v8767
  %v8813 = vmul.f32 %v8743, %v8767
  %v8814 = vmul.f32 %v8744, %v8767
  %v8815 = vmul.f32 %v8745, %v8767
  %v8816 = vmul.f32 %v8746, %v8767
  %v8817 = vmul.f32 %v8747, %v8767
  %v8818 = vmul.f32 %v8748, %v8767
  %v8819 = vmul.f32 %v8749, %v8767
  %v8820 = vmul.f32 %v8750, %v8767
  %v8821 = vmul.f32 %v8751, %v8767
  %v8822 = vmul.f32 %v8752, %v8767
  %v8823 = vmul.f32 %v8753, %v8767
  %v8824 = vmul.f32 %v8754, %v8767
  %v8825 = vmul.f32 %v8755, %v8767
  %v8826 = vmul.f32 %v8756, %v8767
  %v8827 = vmul.f32 %v8757, %v8767
  %v8828 = vmul.f32 %v8758, %v8767
  %v8829 = vmul.f32 %v8759, %v8767
  %v8830 = vmul.f32 %v8760, %v8767
  %v8831 = vmul.f32 %v8761, %v8767
  %v8832 = vmul.f32 %v8762, %v8767
  %v8834 = vlaneseq
  %v8835 = vshrl.u32 %v8834, 7
  %v8836 = vsub.s32 0, %v8835
  %v8837 = vrot.slane %v8297, %v8836
  %v8839 = vadd.f32 %v8769, %v8837
  %v8840 = vadd.f32 %v8770, %v8837
  %v8841 = vadd.f32 %v8771, %v8837
  %v8842 = vadd.f32 %v8772, %v8837
  %v8843 = vadd.f32 %v8773, %v8837
  %v8844 = vadd.f32 %v8774, %v8837
  %v8845 = vadd.f32 %v8775, %v8837
  %v8846 = vadd.f32 %v8776, %v8837
  %v8847 = vadd.f32 %v8777, %v8837
  %v8848 = vadd.f32 %v8778, %v8837
  %v8849 = vadd.f32 %v8779, %v8837
  %v8850 = vadd.f32 %v8780, %v8837
  %v8851 = vadd.f32 %v8781, %v8837
  %v8852 = vadd.f32 %v8782, %v8837
  %v8853 = vadd.f32 %v8783, %v8837
  %v8854 = vadd.f32 %v8784, %v8837
  %v8855 = vadd.f32 %v8785, %v8837
  %v8856 = vadd.f32 %v8786, %v8837
  %v8857 = vadd.f32 %v8787, %v8837
  %v8858 = vadd.f32 %v8788, %v8837
  %v8859 = vadd.f32 %v8789, %v8837
  %v8860 = vadd.f32 %v8790, %v8837
  %v8861 = vadd.f32 %v8791, %v8837
  %v8862 = vadd.f32 %v8792, %v8837
  %v8863 = vadd.f32 %v8793, %v8837
  %v8864 = vadd.f32 %v8794, %v8837
  %v8865 = vadd.f32 %v8795, %v8837
  %v8866 = vadd.f32 %v8796, %v8837
  %v8867 = vadd.f32 %v8797, %v8837
  %v8868 = vadd.f32 %v8798, %v8837
  %v8869 = vadd.f32 %v8799, %v8837
  %v8870 = vadd.f32 %v8800, %v8837
  %v8871 = vadd.f32 %v8801, %v8837
  %v8872 = vadd.f32 %v8802, %v8837
  %v8873 = vadd.f32 %v8803, %v8837
  %v8874 = vadd.f32 %v8804, %v8837
  %v8875 = vadd.f32 %v8805, %v8837
  %v8876 = vadd.f32 %v8806, %v8837
  %v8877 = vadd.f32 %v8807, %v8837
  %v8878 = vadd.f32 %v8808, %v8837
  %v8879 = vadd.f32 %v8809, %v8837
  %v8880 = vadd.f32 %v8810, %v8837
  %v8881 = vadd.f32 %v8811, %v8837
  %v8882 = vadd.f32 %v8812, %v8837
  %v8883 = vadd.f32 %v8813, %v8837
  %v8884 = vadd.f32 %v8814, %v8837
  %v8885 = vadd.f32 %v8815, %v8837
  %v8886 = vadd.f32 %v8816, %v8837
  %v8887 = vadd.f32 %v8817, %v8837
  %v8888 = vadd.f32 %v8818, %v8837
  %v8889 = vadd.f32 %v8819, %v8837
  %v8890 = vadd.f32 %v8820, %v8837
  %v8891 = vadd.f32 %v8821, %v8837
  %v8892 = vadd.f32 %v8822, %v8837
  %v8893 = vadd.f32 %v8823, %v8837
  %v8894 = vadd.f32 %v8824, %v8837
  %v8895 = vadd.f32 %v8825, %v8837
  %v8896 = vadd.f32 %v8826, %v8837
  %v8897 = vadd.f32 %v8827, %v8837
  %v8898 = vadd.f32 %v8828, %v8837
  %v8899 = vadd.f32 %v8829, %v8837
  %v8900 = vadd.f32 %v8830, %v8837
  %v8901 = vadd.f32 %v8831, %v8837
  %v8902 = vadd.f32 %v8832, %v8837
  %8967 = vrot.lane.b32.xlu0 %v4395, 120
  %v8968 = vpop.permute.xlu0 %8967
  %8969 = vrot.lane.b32.xlu0 %v4396, 120
  %v8970 = vpop.permute.xlu0 %8969
  %8971 = vrot.lane.b32.xlu0 %v4397, 120
  %v8972 = vpop.permute.xlu0 %8971
  %8973 = vrot.lane.b32.xlu0 %v4398, 120
  %v8974 = vpop.permute.xlu0 %8973
  %8975 = vrot.lane.b32.xlu0 %v4399, 120
  %v8976 = vpop.permute.xlu0 %8975
  %8977 = vrot.lane.b32.xlu0 %v4400, 120
  %v8978 = vpop.permute.xlu0 %8977
  %8979 = vrot.lane.b32.xlu0 %v4401, 120
  %v8980 = vpop.permute.xlu0 %8979
  %8981 = vrot.lane.b32.xlu0 %v4402, 120
  %v8982 = vpop.permute.xlu0 %8981
  %8983 = vrot.lane.b32.xlu0 %v4403, 120
  %v8984 = vpop.permute.xlu0 %8983
  %8985 = vrot.lane.b32.xlu0 %v4404, 120
  %v8986 = vpop.permute.xlu0 %8985
  %8987 = vrot.lane.b32.xlu0 %v4405, 120
  %v8988 = vpop.permute.xlu0 %8987
  %8989 = vrot.lane.b32.xlu0 %v4406, 120
  %v8990 = vpop.permute.xlu0 %8989
  %8991 = vrot.lane.b32.xlu0 %v4407, 120
  %v8992 = vpop.permute.xlu0 %8991
  %8993 = vrot.lane.b32.xlu0 %v4408, 120
  %v8994 = vpop.permute.xlu0 %8993
  %8995 = vrot.lane.b32.xlu0 %v4409, 120
  %v8996 = vpop.permute.xlu0 %8995
  %8997 = vrot.lane.b32.xlu0 %v4410, 120
  %v8998 = vpop.permute.xlu0 %8997
  %8999 = vrot.lane.b32.xlu0 %v4411, 120
  %v9000 = vpop.permute.xlu0 %8999
  %9001 = vrot.lane.b32.xlu0 %v4412, 120
  %v9002 = vpop.permute.xlu0 %9001
  %9003 = vrot.lane.b32.xlu0 %v4413, 120
  %v9004 = vpop.permute.xlu0 %9003
  %9005 = vrot.lane.b32.xlu0 %v4414, 120
  %v9006 = vpop.permute.xlu0 %9005
  %9007 = vrot.lane.b32.xlu0 %v4415, 120
  %v9008 = vpop.permute.xlu0 %9007
  %9009 = vrot.lane.b32.xlu0 %v4416, 120
  %v9010 = vpop.permute.xlu0 %9009
  %9011 = vrot.lane.b32.xlu0 %v4417, 120
  %v9012 = vpop.permute.xlu0 %9011
  %9013 = vrot.lane.b32.xlu0 %v4418, 120
  %v9014 = vpop.permute.xlu0 %9013
  %9015 = vrot.lane.b32.xlu0 %v4419, 120
  %v9016 = vpop.permute.xlu0 %9015
  %9017 = vrot.lane.b32.xlu0 %v4420, 120
  %v9018 = vpop.permute.xlu0 %9017
  %9019 = vrot.lane.b32.xlu0 %v4421, 120
  %v9020 = vpop.permute.xlu0 %9019
  %9021 = vrot.lane.b32.xlu0 %v4422, 120
  %v9022 = vpop.permute.xlu0 %9021
  %9023 = vrot.lane.b32.xlu0 %v4423, 120
  %v9024 = vpop.permute.xlu0 %9023
  %9025 = vrot.lane.b32.xlu0 %v4424, 120
  %v9026 = vpop.permute.xlu0 %9025
  %9027 = vrot.lane.b32.xlu0 %v4425, 120
  %v9028 = vpop.permute.xlu0 %9027
  %9029 = vrot.lane.b32.xlu0 %v4426, 120
  %v9030 = vpop.permute.xlu0 %9029
  %9031 = vrot.lane.b32.xlu0 %v4427, 120
  %v9032 = vpop.permute.xlu0 %9031
  %9033 = vrot.lane.b32.xlu0 %v4428, 120
  %v9034 = vpop.permute.xlu0 %9033
  %9035 = vrot.lane.b32.xlu0 %v4429, 120
  %v9036 = vpop.permute.xlu0 %9035
  %9037 = vrot.lane.b32.xlu0 %v4430, 120
  %v9038 = vpop.permute.xlu0 %9037
  %9039 = vrot.lane.b32.xlu0 %v4431, 120
  %v9040 = vpop.permute.xlu0 %9039
  %9041 = vrot.lane.b32.xlu0 %v4432, 120
  %v9042 = vpop.permute.xlu0 %9041
  %9043 = vrot.lane.b32.xlu0 %v4433, 120
  %v9044 = vpop.permute.xlu0 %9043
  %9045 = vrot.lane.b32.xlu0 %v4434, 120
  %v9046 = vpop.permute.xlu0 %9045
  %9047 = vrot.lane.b32.xlu0 %v4435, 120
  %v9048 = vpop.permute.xlu0 %9047
  %9049 = vrot.lane.b32.xlu0 %v4436, 120
  %v9050 = vpop.permute.xlu0 %9049
  %9051 = vrot.lane.b32.xlu0 %v4437, 120
  %v9052 = vpop.permute.xlu0 %9051
  %9053 = vrot.lane.b32.xlu0 %v4438, 120
  %v9054 = vpop.permute.xlu0 %9053
  %9055 = vrot.lane.b32.xlu0 %v4439, 120
  %v9056 = vpop.permute.xlu0 %9055
  %9057 = vrot.lane.b32.xlu0 %v4440, 120
  %v9058 = vpop.permute.xlu0 %9057
  %9059 = vrot.lane.b32.xlu0 %v4441, 120
  %v9060 = vpop.permute.xlu0 %9059
  %9061 = vrot.lane.b32.xlu0 %v4442, 120
  %v9062 = vpop.permute.xlu0 %9061
  %9063 = vrot.lane.b32.xlu0 %v4443, 120
  %v9064 = vpop.permute.xlu0 %9063
  %9065 = vrot.lane.b32.xlu0 %v4444, 120
  %v9066 = vpop.permute.xlu0 %9065
  %9067 = vrot.lane.b32.xlu0 %v4445, 120
  %v9068 = vpop.permute.xlu0 %9067
  %9069 = vrot.lane.b32.xlu0 %v4446, 120
  %v9070 = vpop.permute.xlu0 %9069
  %9071 = vrot.lane.b32.xlu0 %v4447, 120
  %v9072 = vpop.permute.xlu0 %9071
  %9073 = vrot.lane.b32.xlu0 %v4448, 120
  %v9074 = vpop.permute.xlu0 %9073
  %9075 = vrot.lane.b32.xlu0 %v4449, 120
  %v9076 = vpop.permute.xlu0 %9075
  %9077 = vrot.lane.b32.xlu0 %v4450, 120
  %v9078 = vpop.permute.xlu0 %9077
  %9079 = vrot.lane.b32.xlu0 %v4451, 120
  %v9080 = vpop.permute.xlu0 %9079
  %9081 = vrot.lane.b32.xlu0 %v4452, 120
  %v9082 = vpop.permute.xlu0 %9081
  %9083 = vrot.lane.b32.xlu0 %v4453, 120
  %v9084 = vpop.permute.xlu0 %9083
  %9085 = vrot.lane.b32.xlu0 %v4454, 120
  %v9086 = vpop.permute.xlu0 %9085
  %9087 = vrot.lane.b32.xlu0 %v4455, 120
  %v9088 = vpop.permute.xlu0 %9087
  %9089 = vrot.lane.b32.xlu0 %v4456, 120
  %v9090 = vpop.permute.xlu0 %9089
  %9091 = vrot.lane.b32.xlu0 %v4457, 120
  %v9092 = vpop.permute.xlu0 %9091
  %9093 = vrot.lane.b32.xlu0 %v4458, 120
  %v9094 = vpop.permute.xlu0 %9093
  %v9159 = vadd.f32 %v8839, %v8968
  %v9160 = vadd.f32 %v8840, %v8970
  %v9161 = vadd.f32 %v8841, %v8972
  %v9162 = vadd.f32 %v8842, %v8974
  %v9163 = vadd.f32 %v8843, %v8976
  %v9164 = vadd.f32 %v8844, %v8978
  %v9165 = vadd.f32 %v8845, %v8980
  %v9166 = vadd.f32 %v8846, %v8982
  %v9167 = vadd.f32 %v8847, %v8984
  %v9168 = vadd.f32 %v8848, %v8986
  %v9169 = vadd.f32 %v8849, %v8988
  %v9170 = vadd.f32 %v8850, %v8990
  %v9171 = vadd.f32 %v8851, %v8992
  %v9172 = vadd.f32 %v8852, %v8994
  %v9173 = vadd.f32 %v8853, %v8996
  %v9174 = vadd.f32 %v8854, %v8998
  %v9175 = vadd.f32 %v8855, %v9000
  %v9176 = vadd.f32 %v8856, %v9002
  %v9177 = vadd.f32 %v8857, %v9004
  %v9178 = vadd.f32 %v8858, %v9006
  %v9179 = vadd.f32 %v8859, %v9008
  %v9180 = vadd.f32 %v8860, %v9010
  %v9181 = vadd.f32 %v8861, %v9012
  %v9182 = vadd.f32 %v8862, %v9014
  %v9183 = vadd.f32 %v8863, %v9016
  %v9184 = vadd.f32 %v8864, %v9018
  %v9185 = vadd.f32 %v8865, %v9020
  %v9186 = vadd.f32 %v8866, %v9022
  %v9187 = vadd.f32 %v8867, %v9024
  %v9188 = vadd.f32 %v8868, %v9026
  %v9189 = vadd.f32 %v8869, %v9028
  %v9190 = vadd.f32 %v8870, %v9030
  %v9191 = vadd.f32 %v8871, %v9032
  %v9192 = vadd.f32 %v8872, %v9034
  %v9193 = vadd.f32 %v8873, %v9036
  %v9194 = vadd.f32 %v8874, %v9038
  %v9195 = vadd.f32 %v8875, %v9040
  %v9196 = vadd.f32 %v8876, %v9042
  %v9197 = vadd.f32 %v8877, %v9044
  %v9198 = vadd.f32 %v8878, %v9046
  %v9199 = vadd.f32 %v8879, %v9048
  %v9200 = vadd.f32 %v8880, %v9050
  %v9201 = vadd.f32 %v8881, %v9052
  %v9202 = vadd.f32 %v8882, %v9054
  %v9203 = vadd.f32 %v8883, %v9056
  %v9204 = vadd.f32 %v8884, %v9058
  %v9205 = vadd.f32 %v8885, %v9060
  %v9206 = vadd.f32 %v8886, %v9062
  %v9207 = vadd.f32 %v8887, %v9064
  %v9208 = vadd.f32 %v8888, %v9066
  %v9209 = vadd.f32 %v8889, %v9068
  %v9210 = vadd.f32 %v8890, %v9070
  %v9211 = vadd.f32 %v8891, %v9072
  %v9212 = vadd.f32 %v8892, %v9074
  %v9213 = vadd.f32 %v8893, %v9076
  %v9214 = vadd.f32 %v8894, %v9078
  %v9215 = vadd.f32 %v8895, %v9080
  %v9216 = vadd.f32 %v8896, %v9082
  %v9217 = vadd.f32 %v8897, %v9084
  %v9218 = vadd.f32 %v8898, %v9086
  %v9219 = vadd.f32 %v8899, %v9088
  %v9220 = vadd.f32 %v8900, %v9090
  %v9221 = vadd.f32 %v8901, %v9092
  %v9222 = vadd.f32 %v8902, %v9094
  %v9223 = vmax.f32 %v9159, 0.0
  %v9224 = vmax.f32 %v9160, 0.0
  %v9225 = vmax.f32 %v9161, 0.0
  %v9226 = vmax.f32 %v9162, 0.0
  %v9227 = vmax.f32 %v9163, 0.0
  %v9228 = vmax.f32 %v9164, 0.0
  %v9229 = vmax.f32 %v9165, 0.0
  %v9230 = vmax.f32 %v9166, 0.0
  %v9231 = vmax.f32 %v9167, 0.0
  %v9232 = vmax.f32 %v9168, 0.0
  %v9233 = vmax.f32 %v9169, 0.0
  %v9234 = vmax.f32 %v9170, 0.0
  %v9235 = vmax.f32 %v9171, 0.0
  %v9236 = vmax.f32 %v9172, 0.0
  %v9237 = vmax.f32 %v9173, 0.0
  %v9238 = vmax.f32 %v9174, 0.0
  %v9239 = vmax.f32 %v9175, 0.0
  %v9240 = vmax.f32 %v9176, 0.0
  %v9241 = vmax.f32 %v9177, 0.0
  %v9242 = vmax.f32 %v9178, 0.0
  %v9243 = vmax.f32 %v9179, 0.0
  %v9244 = vmax.f32 %v9180, 0.0
  %v9245 = vmax.f32 %v9181, 0.0
  %v9246 = vmax.f32 %v9182, 0.0
  %v9247 = vmax.f32 %v9183, 0.0
  %v9248 = vmax.f32 %v9184, 0.0
  %v9249 = vmax.f32 %v9185, 0.0
  %v9250 = vmax.f32 %v9186, 0.0
  %v9251 = vmax.f32 %v9187, 0.0
  %v9252 = vmax.f32 %v9188, 0.0
  %v9253 = vmax.f32 %v9189, 0.0
  %v9254 = vmax.f32 %v9190, 0.0
  %v9255 = vmax.f32 %v9191, 0.0
  %v9256 = vmax.f32 %v9192, 0.0
  %v9257 = vmax.f32 %v9193, 0.0
  %v9258 = vmax.f32 %v9194, 0.0
  %v9259 = vmax.f32 %v9195, 0.0
  %v9260 = vmax.f32 %v9196, 0.0
  %v9261 = vmax.f32 %v9197, 0.0
  %v9262 = vmax.f32 %v9198, 0.0
  %v9263 = vmax.f32 %v9199, 0.0
  %v9264 = vmax.f32 %v9200, 0.0
  %v9265 = vmax.f32 %v9201, 0.0
  %v9266 = vmax.f32 %v9202, 0.0
  %v9267 = vmax.f32 %v9203, 0.0
  %v9268 = vmax.f32 %v9204, 0.0
  %v9269 = vmax.f32 %v9205, 0.0
  %v9270 = vmax.f32 %v9206, 0.0
  %v9271 = vmax.f32 %v9207, 0.0
  %v9272 = vmax.f32 %v9208, 0.0
  %v9273 = vmax.f32 %v9209, 0.0
  %v9274 = vmax.f32 %v9210, 0.0
  %v9275 = vmax.f32 %v9211, 0.0
  %v9276 = vmax.f32 %v9212, 0.0
  %v9277 = vmax.f32 %v9213, 0.0
  %v9278 = vmax.f32 %v9214, 0.0
  %v9279 = vmax.f32 %v9215, 0.0
  %v9280 = vmax.f32 %v9216, 0.0
  %v9281 = vmax.f32 %v9217, 0.0
  %v9282 = vmax.f32 %v9218, 0.0
  %v9283 = vmax.f32 %v9219, 0.0
  %v9284 = vmax.f32 %v9220, 0.0
  %v9285 = vmax.f32 %v9221, 0.0
  %v9286 = vmax.f32 %v9222, 0.0
  %9287 = vst.msk [vmem:[%s7] sm:$0xff] %vm2955, %v9223
  %9288 = vst.msk [vmem:[%s7 + $0x8] sm:$0xff] %vm2955, %v9224
  %9289 = vst.msk [vmem:[%s7 + $0x10] sm:$0xff] %vm2955, %v9225
  %9290 = vst.msk [vmem:[%s7 + $0x18] sm:$0xff] %vm2955, %v9226
  %9291 = vst.msk [vmem:[%s7 + $0x20] sm:$0xff] %vm2955, %v9227
  %9292 = vst.msk [vmem:[%s7 + $0x28] sm:$0xff] %vm2955, %v9228
  %9293 = vst.msk [vmem:[%s7 + $0x30] sm:$0xff] %vm2955, %v9229
  %9294 = vst.msk [vmem:[%s7 + $0x38] sm:$0xff] %vm2955, %v9230
  %9295 = vst.msk [vmem:[%s7 + $0x40] sm:$0xff] %vm2955, %v9231
  %9296 = vst.msk [vmem:[%s7 + $0x48] sm:$0xff] %vm2955, %v9232
  %9297 = vst.msk [vmem:[%s7 + $0x50] sm:$0xff] %vm2955, %v9233
  %9298 = vst.msk [vmem:[%s7 + $0x58] sm:$0xff] %vm2955, %v9234
  %9299 = vst.msk [vmem:[%s7 + $0x60] sm:$0xff] %vm2955, %v9235
  %9300 = vst.msk [vmem:[%s7 + $0x68] sm:$0xff] %vm2955, %v9236
  %9301 = vst.msk [vmem:[%s7 + $0x70] sm:$0xff] %vm2955, %v9237
  %9302 = vst.msk [vmem:[%s7 + $0x78] sm:$0xff] %vm2955, %v9238
  %9303 = vst.msk [vmem:[%s7 + $0x80] sm:$0xff] %vm2955, %v9239
  %9304 = vst.msk [vmem:[%s7 + $0x88] sm:$0xff] %vm2955, %v9240
  %9305 = vst.msk [vmem:[%s7 + $0x90] sm:$0xff] %vm2955, %v9241
  %9306 = vst.msk [vmem:[%s7 + $0x98] sm:$0xff] %vm2955, %v9242
  %9307 = vst.msk [vmem:[%s7 + $0xa0] sm:$0xff] %vm2955, %v9243
  %9308 = vst.msk [vmem:[%s7 + $0xa8] sm:$0xff] %vm2955, %v9244
  %9309 = vst.msk [vmem:[%s7 + $0xb0] sm:$0xff] %vm2955, %v9245
  %9310 = vst.msk [vmem:[%s7 + $0xb8] sm:$0xff] %vm2955, %v9246
  %9311 = vst.msk [vmem:[%s7 + $0xc0] sm:$0xff] %vm2955, %v9247
  %9312 = vst.msk [vmem:[%s7 + $0xc8] sm:$0xff] %vm2955, %v9248
  %9313 = vst.msk [vmem:[%s7 + $0xd0] sm:$0xff] %vm2955, %v9249
  %9314 = vst.msk [vmem:[%s7 + $0xd8] sm:$0xff] %vm2955, %v9250
  %9315 = vst.msk [vmem:[%s7 + $0xe0] sm:$0xff] %vm2955, %v9251
  %9316 = vst.msk [vmem:[%s7 + $0xe8] sm:$0xff] %vm2955, %v9252
  %9317 = vst.msk [vmem:[%s7 + $0xf0] sm:$0xff] %vm2955, %v9253
  %9318 = vst.msk [vmem:[%s7 + $0xf8] sm:$0xff] %vm2955, %v9254
  %9319 = vst.msk [vmem:[%s7 + $0x100] sm:$0xff] %vm2955, %v9255
  %9320 = vst.msk [vmem:[%s7 + $0x108] sm:$0xff] %vm2955, %v9256
  %9321 = vst.msk [vmem:[%s7 + $0x110] sm:$0xff] %vm2955, %v9257
  %9322 = vst.msk [vmem:[%s7 + $0x118] sm:$0xff] %vm2955, %v9258
  %9323 = vst.msk [vmem:[%s7 + $0x120] sm:$0xff] %vm2955, %v9259
  %9324 = vst.msk [vmem:[%s7 + $0x128] sm:$0xff] %vm2955, %v9260
  %9325 = vst.msk [vmem:[%s7 + $0x130] sm:$0xff] %vm2955, %v9261
  %9326 = vst.msk [vmem:[%s7 + $0x138] sm:$0xff] %vm2955, %v9262
  %9327 = vst.msk [vmem:[%s7 + $0x140] sm:$0xff] %vm2955, %v9263
  %9328 = vst.msk [vmem:[%s7 + $0x148] sm:$0xff] %vm2955, %v9264
  %9329 = vst.msk [vmem:[%s7 + $0x150] sm:$0xff] %vm2955, %v9265
  %9330 = vst.msk [vmem:[%s7 + $0x158] sm:$0xff] %vm2955, %v9266
  %9331 = vst.msk [vmem:[%s7 + $0x160] sm:$0xff] %vm2955, %v9267
  %9332 = vst.msk [vmem:[%s7 + $0x168] sm:$0xff] %vm2955, %v9268
  %9333 = vst.msk [vmem:[%s7 + $0x170] sm:$0xff] %vm2955, %v9269
  %9334 = vst.msk [vmem:[%s7 + $0x178] sm:$0xff] %vm2955, %v9270
  %9335 = vst.msk [vmem:[%s7 + $0x180] sm:$0xff] %vm2955, %v9271
  %9336 = vst.msk [vmem:[%s7 + $0x188] sm:$0xff] %vm2955, %v9272
  %9337 = vst.msk [vmem:[%s7 + $0x190] sm:$0xff] %vm2955, %v9273
  %9338 = vst.msk [vmem:[%s7 + $0x198] sm:$0xff] %vm2955, %v9274
  %9339 = vst.msk [vmem:[%s7 + $0x1a0] sm:$0xff] %vm2955, %v9275
  %9340 = vst.msk [vmem:[%s7 + $0x1a8] sm:$0xff] %vm2955, %v9276
  %9341 = vst.msk [vmem:[%s7 + $0x1b0] sm:$0xff] %vm2955, %v9277
  %9342 = vst.msk [vmem:[%s7 + $0x1b8] sm:$0xff] %vm2955, %v9278
  %9343 = vst.msk [vmem:[%s7 + $0x1c0] sm:$0xff] %vm2955, %v9279
  %9344 = vst.msk [vmem:[%s7 + $0x1c8] sm:$0xff] %vm2955, %v9280
  %9345 = vst.msk [vmem:[%s7 + $0x1d0] sm:$0xff] %vm2955, %v9281
  %9346 = vst.msk [vmem:[%s7 + $0x1d8] sm:$0xff] %vm2955, %v9282
  %9347 = vst.msk [vmem:[%s7 + $0x1e0] sm:$0xff] %vm2955, %v9283
  %9348 = vst.msk [vmem:[%s7 + $0x1e8] sm:$0xff] %vm2955, %v9284
  %9349 = vst.msk [vmem:[%s7 + $0x1f0] sm:$0xff] %vm2955, %v9285
  %9350 = vst.msk [vmem:[%s7 + $0x1f8] sm:$0xff] %vm2955, %v9286
  // Predicated region
  $region30: #{resblock_forward.1} parent=0 // pred_check
    _
  $region31: #{resblock_forward.1} parent=0 // pred_check_branch
    %9352 = sbr.rel (0) target = $region33
  $region32: #{resblock_forward.1} parent=0 // pred_region
    _
  $region33: #{resblock_forward.1} parent=0 // pred_fallthru
    _
  // Predicated region
  $region34: #{resblock_forward.1} parent=0 // pred_check
    _
  $region35: #{resblock_forward.1} parent=0 // pred_check_branch
    %9354 = sbr.rel (0) target = $region37
  $region36: #{resblock_forward.1} parent=0 // pred_region
    _
  $region37: #{resblock_forward.1} parent=0 // pred_fallthru
    _

</llo_original>
